<compile_context>
chip_gen: v5e
topology: v5e:2x2
jax: 0.10.0
libtpu: 0.0.40
codegen_flags: <defaults>
</compile_context>

<pallas_src>
import functools

import jax
import jax.numpy as jnp
from jax import lax
from jax.experimental import pallas as pl
from jax.experimental.pallas import tpu as pltpu


def _round_up(x, m):
    return (x + m - 1) // m * m


# --------------------------------------------------------------------------
# Pallas kernel 1: generic tiled matmul + bias.
#   bf16 operands, f32 scratch accumulator, output cast at the last K step.
#   (ConvTranspose3d(k=2,s=2) and the final 1x1x1 conv lower onto this.)
# --------------------------------------------------------------------------
def _matmul_bias_kernel(x_ref, w_ref, b_ref, o_ref, acc_ref):
    k = pl.program_id(2)

    @pl.when(k == 0)
    def _():
        acc_ref[...] = jnp.broadcast_to(b_ref[...], acc_ref.shape)

    acc_ref[...] += jnp.dot(x_ref[...], w_ref[...],
                            preferred_element_type=jnp.float32)

    @pl.when(k == pl.num_programs(2) - 1)
    def _():
        o_ref[...] = acc_ref[...].astype(o_ref.dtype)


def matmul_bias(x, w, b, out_dtype=jnp.float32):
    """y = x @ w + b.  x: (M, K), w: (K, N), b: (N,)."""
    M, K = x.shape
    K2, N = w.shape
    assert K == K2
    # Full-dim blocks when dims are small (no padded HBM copies); otherwise
    # large 128-aligned tiles (still only a few MiB of VMEM per step).
    tm = min(1024, _round_up(M, 8))
    tk = K if K <= 512 else 512
    tn = N if N <= 512 else 512
    Mp, Kp, Np = _round_up(M, tm), _round_up(K, tk), _round_up(N, tn)

    xb = x.astype(jnp.bfloat16)
    wb = w.astype(jnp.bfloat16)
    if (Mp, Kp) != (M, K):
        xb = jnp.pad(xb, ((0, Mp - M), (0, Kp - K)))
    if (Kp, Np) != (K, N):
        wb = jnp.pad(wb, ((0, Kp - K), (0, Np - N)))
    bb = b.reshape(1, N).astype(jnp.float32)
    if Np != N:
        bb = jnp.pad(bb, ((0, 0), (0, Np - N)))

    out = pl.pallas_call(
        _matmul_bias_kernel,
        out_shape=jax.ShapeDtypeStruct((Mp, Np), out_dtype),
        grid_spec=pltpu.PrefetchScalarGridSpec(
            num_scalar_prefetch=0,
            grid=(Mp // tm, Np // tn, Kp // tk),
            in_specs=[
                pl.BlockSpec((tm, tk), lambda i, j, k: (i, k)),
                pl.BlockSpec((tk, tn), lambda i, j, k: (k, j)),
                pl.BlockSpec((1, tn), lambda i, j, k: (0, j)),
            ],
            out_specs=pl.BlockSpec((tm, tn), lambda i, j, k: (i, j)),
            scratch_shapes=[pltpu.VMEM((tm, tn), jnp.float32)],
        ),
        compiler_params=pltpu.CompilerParams(
            dimension_semantics=("parallel", "parallel", "arbitrary")),
    )(xb, wb, bb)
    return out[:M, :N]


# --------------------------------------------------------------------------
# Pallas kernel 2: fused 3x3x3 conv (padding=1) + InstanceNorm statistics.
#   grid = (N, D).  The three depth planes arrive as three operands of the
#   flattened padded plane; the 9 (kh, kw) taps are static slices of each
#   VMEM-resident plane -> 27 bf16 MXU matmuls with a local f32 accumulator.
#   Output written once (bf16).  Masked per-(n,c) sum / sum-of-squares are
#   emitted as resident (1, C) accumulators across the d axis.
# --------------------------------------------------------------------------
def _conv3_kernel(x0_ref, x1_ref, x2_ref, w_ref, b_ref, m_ref,
                  o_ref, s_ref, q_ref, *, Wp, Lr):
    planes = (x0_ref, x1_ref, x2_ref)
    acc = None
    for kd in range(3):
        xr = planes[kd]
        for j in range(9):
            kh, kw = divmod(j, 3)
            off = kh * Wp + kw
            a = xr[off:off + Lr, :]                        # bf16 (Lr, Cin)
            p = jnp.dot(a, w_ref[kd * 9 + j],
                        preferred_element_type=jnp.float32)
            acc = p if acc is None else acc + p

    y = acc + b_ref[...]                                   # f32 (Lr, Cout)
    o_ref[...] = y.astype(o_ref.dtype)

    # Fused InstanceNorm statistics over valid rows/cols only (the flattened
    # plane trick leaves wrap-around garbage in the last 2 columns + pad rows).
    d = pl.program_id(1)

    @pl.when(d == 0)
    def _():
        s_ref[...] = jnp.zeros_like(s_ref)
        q_ref[...] = jnp.zeros_like(q_ref)

    ym = y * m_ref[...]                                    # (Lr,1) mask bcast
    s_ref[...] += jnp.sum(ym, axis=0, keepdims=True)
    q_ref[...] += jnp.sum(ym * y, axis=0, keepdims=True)


def conv3x3x3_in_stats(x, w, b):
    """3D conv, kernel 3, padding 1, NDHWC, plus fused per-(n,c) stats.

    x: (N, D, H, W, Cin); w: torch layout (Cout, Cin, 3, 3, 3); b: (Cout,).
    Returns (y bf16 (N,D,H,W,Cout), sums f32 (N,1,Cout), sqs f32 (N,1,Cout)).
    """
    N, D, H, W, Cin = x.shape
    Cout = w.shape[0]
    Wp = W + 2
    Lout = H * Wp                        # rows computed per (n, d) slice
    Lr = _round_up(Lout, 8)
    Sin = (H + 2) * Wp                   # flattened padded plane length
    Sp = _round_up(2 * Wp + 2 + Lr, 8)   # >= Sin + 2 always (slice headroom)
    Cin_p = max(Cin, 8)                  # pad tiny channel counts (1st layer)

    xb = x.astype(jnp.bfloat16)
    xp = jnp.pad(xb, ((0, 0), (1, 1), (1, 1), (1, 1), (0, Cin_p - Cin)))
    xf = xp.reshape(N, D + 2, Sin, Cin_p)
    xf = jnp.pad(xf, ((0, 0), (0, 0), (0, Sp - Sin), (0, 0)))

    wr = jnp.transpose(w, (2, 3, 4, 1, 0))                 # (3,3,3,Cin,Cout)
    if Cin_p != Cin:
        wr = jnp.pad(wr, ((0, 0), (0, 0), (0, 0), (0, Cin_p - Cin), (0, 0)))
    wr = wr.reshape(27, Cin_p, Cout).astype(jnp.bfloat16)
    bb = b.reshape(1, Cout).astype(jnp.float32)

    # (Lr, 1) validity mask (built on host; avoids in-kernel iota/mod).
    rows = jnp.arange(Lr)
    mask = ((rows < Lout) & ((rows % Wp) < W)).astype(jnp.float32)
    mask = mask.reshape(Lr, 1)

    # Explicit VMEM budget (resident 27-tap weights + 3 plane buffers + out).
    est = (3 * 2 * Sp * Cin_p * 2            # 3 plane inputs, double-buffered
           + 2 * 27 * Cin_p * Cout * 2       # resident weights (2 buffers)
           + 2 * Lr * Cout * 2               # bf16 output block
           + 2 * Lr * Cout * 4               # f32 local accumulator + temps
           + Lr * 4 + 8 * Cout * 4)          # mask + stats blocks
    vmem_limit = int(min(max(2 * est, 32 * 1024 * 1024), 64 * 1024 * 1024))

    kernel = functools.partial(_conv3_kernel, Wp=Wp, Lr=Lr)
    y_flat, sums, sqs = pl.pallas_call(
        kernel,
        out_shape=(jax.ShapeDtypeStruct((N, D, Lr, Cout), jnp.bfloat16),
                   jax.ShapeDtypeStruct((N, 1, Cout), jnp.float32),
                   jax.ShapeDtypeStruct((N, 1, Cout), jnp.float32)),
        grid_spec=pltpu.PrefetchScalarGridSpec(
            num_scalar_prefetch=0,
            grid=(N, D),
            in_specs=[
                # three overlapping depth planes of the same padded tensor
                pl.BlockSpec((None, None, Sp, Cin_p),
                             lambda n, d: (n, d, 0, 0)),
                pl.BlockSpec((None, None, Sp, Cin_p),
                             lambda n, d: (n, d + 1, 0, 0)),
                pl.BlockSpec((None, None, Sp, Cin_p),
                             lambda n, d: (n, d + 2, 0, 0)),
                # full 27-tap weight slab, constant index -> DMA'd once
                pl.BlockSpec((27, Cin_p, Cout), lambda n, d: (0, 0, 0)),
                pl.BlockSpec((1, Cout), lambda n, d: (0, 0)),
                pl.BlockSpec((Lr, 1), lambda n, d: (0, 0)),
            ],
            out_specs=[
                pl.BlockSpec((None, None, Lr, Cout), lambda n, d: (n, d, 0, 0)),
                pl.BlockSpec((None, 1, Cout), lambda n, d: (n, 0, 0)),
                pl.BlockSpec((None, 1, Cout), lambda n, d: (n, 0, 0)),
            ],
        ),
        compiler_params=pltpu.CompilerParams(
            # d must be "arbitrary": the stats blocks are resident across d.
            dimension_semantics=("parallel", "arbitrary"),
            vmem_limit_bytes=vmem_limit),
    )(xf, xf, xf, wr, bb, mask)

    y = y_flat[:, :, :Lout, :].reshape(N, D, H, Wp, Cout)[:, :, :, :W, :]
    return y, sums, sqs


# --------------------------------------------------------------------------
# Pallas kernel 3: InstanceNorm3d apply (+ ReLU) from precomputed statistics.
# --------------------------------------------------------------------------
def _in_apply_kernel(x_ref, sc_ref, sh_ref, o_ref):
    x = x_ref[...].astype(jnp.float32)
    o_ref[...] = jnp.maximum(x * sc_ref[...] + sh_ref[...], 0.0).astype(o_ref.dtype)


def instance_norm_relu(y, sums, sqs, eps=1e-5):
    """InstanceNorm3d (biased var, no affine) + ReLU using stats fused into
    the preceding conv.  y: (N,D,H,W,C) bf16; sums/sqs: (N,1,C) f32."""
    N, D, H, W, C = y.shape
    S = D * H * W
    mean = sums / float(S)
    var = jnp.maximum(sqs / float(S) - mean * mean, 0.0)
    rstd = lax.rsqrt(var + eps)
    scale = rstd                                           # (N, 1, C) f32
    shift = -mean * rstd                                   # (N, 1, C) f32

    xr = y.reshape(N, S, C)
    # ~2 MiB bf16 blocks: amortizes grid-step overhead, fits v5e scoped VMEM.
    ts = max(8, min(_round_up(S, 8),
                    _round_up((2 * 1024 * 1024) // (2 * C), 8)))
    T = -(-S // ts)
    Spad = T * ts
    if Spad != S:
        xr = jnp.pad(xr, ((0, 0), (0, Spad - S), (0, 0)))

    out = pl.pallas_call(
        _in_apply_kernel,
        out_shape=jax.ShapeDtypeStruct((N, Spad, C), jnp.bfloat16),
        grid_spec=pltpu.PrefetchScalarGridSpec(
            num_scalar_prefetch=0,
            grid=(N, T),
            in_specs=[pl.BlockSpec((None, ts, C), lambda n, t: (n, t, 0)),
                      pl.BlockSpec((None, 1, C), lambda n, t: (n, 0, 0)),
                      pl.BlockSpec((None, 1, C), lambda n, t: (n, 0, 0))],
            out_specs=pl.BlockSpec((None, ts, C), lambda n, t: (n, t, 0)),
        ),
        compiler_params=pltpu.CompilerParams(
            dimension_semantics=("parallel", "parallel")),
    )(xr, scale, shift)
    return out[:, :S, :].reshape(N, D, H, W, C)


# --------------------------------------------------------------------------
# Conv building blocks (pure data-movement glue stays in plain JAX)
# --------------------------------------------------------------------------
def conv_transpose2(x, w, b):
    """ConvTranspose3d k=2 s=2.  x: (N,D,H,W,Cin); w: torch (Cin,Cout,2,2,2)."""
    N, D, H, W, Cin = x.shape
    Cout = w.shape[1]
    w_all = jnp.transpose(w, (0, 2, 3, 4, 1)).reshape(Cin, 8 * Cout)
    b_all = jnp.tile(b, 8)
    y = matmul_bias(x.reshape(N * D * H * W, Cin), w_all, b_all,
                    out_dtype=jnp.bfloat16)
    y = y.reshape(N, D, H, W, 2, 2, 2, Cout)
    # TODO(synk): sub-voxel interleave is an XLA relayout (bf16 now); fusing it
    # into the next conv's plane build would save one HBM pass.
    y = jnp.transpose(y, (0, 1, 4, 2, 5, 3, 6, 7))
    return y.reshape(N, 2 * D, 2 * H, 2 * W, Cout)


def conv1x1(x, w, b, out_dtype=jnp.float32):
    """1x1x1 conv.  w: torch (Cout, Cin, 1, 1, 1)."""
    N, D, H, W, Cin = x.shape
    Cout = w.shape[0]
    wm = w.reshape(Cout, Cin).T
    y = matmul_bias(x.reshape(N * D * H * W, Cin), wm, b, out_dtype=out_dtype)
    return y.reshape(N, D, H, W, Cout)


def maxpool2(x):
    # glue: MaxPool3d(2) via reshape + max (exact in bf16)
    N, D, H, W, C = x.shape
    return x.reshape(N, D // 2, 2, H // 2, 2, W // 2, 2, C).max(axis=(2, 4, 6))


def trilinear_resize(x, size):
    # F.interpolate(mode='trilinear', align_corners=False).  With spatial dims
    # divisible by 16 the ConvTranspose output already matches `size`, so this
    # is an identity; the general path uses jax.image.resize (glue).
    N, D, H, W, C = x.shape
    if (D, H, W) == tuple(size):
        return x
    return jax.image.resize(x, (N,) + tuple(size) + (C,), method="trilinear")


def double_conv(x, p):
    (w1, b1), (w2, b2) = p
    y, s, q = conv3x3x3_in_stats(x, w1, b1)
    x = instance_norm_relu(y, s, q)
    y, s, q = conv3x3x3_in_stats(x, w2, b2)
    return instance_norm_relu(y, s, q)


# --------------------------------------------------------------------------
# Parameter init (deterministic, PyTorch-like uniform(-1/sqrt(fan_in), +))
# --------------------------------------------------------------------------
def _init_conv(key, cin, cout, k):
    kw, kb = jax.random.split(key)
    bound = 1.0 / float(cin * k * k * k) ** 0.5
    w = jax.random.uniform(kw, (cout, cin, k, k, k), jnp.float32, -bound, bound)
    b = jax.random.uniform(kb, (cout,), jnp.float32, -bound, bound)
    return w, b


def _init_convT(key, cin, cout, k):
    kw, kb = jax.random.split(key)
    bound = 1.0 / float(cin * k * k * k) ** 0.5
    w = jax.random.uniform(kw, (cin, cout, k, k, k), jnp.float32, -bound, bound)
    b = jax.random.uniform(kb, (cout,), jnp.float32, -bound, bound)
    return w, b


def init_unet3d_params(key, in_channels, out_channels):
    keys = iter(jax.random.split(key, 32))

    def dc(cin, cout):
        return (_init_conv(next(keys), cin, cout, 3),
                _init_conv(next(keys), cout, cout, 3))

    params = {
        "enc1": dc(in_channels, 32),
        "enc2": dc(32, 64),
        "enc3": dc(64, 128),
        "enc4": dc(128, 256),
        "bottleneck": dc(256, 512),
        "up4": _init_convT(next(keys), 512, 256, 2),
        "dec4": dc(512, 256),
        "up3": _init_convT(next(keys), 256, 128, 2),
        "dec3": dc(256, 128),
        "up2": _init_convT(next(keys), 128, 64, 2),
        "dec2": dc(128, 64),
        "up1": _init_convT(next(keys), 64, 32, 2),
        "dec1": dc(64, 32),
        "final": _init_conv(next(keys), 32, out_channels, 1),
    }
    return params


# --------------------------------------------------------------------------
# Forward pass (mirrors UNet3D.forward); activations bf16 NDHWC end-to-end.
# --------------------------------------------------------------------------
def unet3d_forward(params, x_ncdhw):
    x = jnp.transpose(x_ncdhw, (0, 2, 3, 4, 1)).astype(jnp.bfloat16)

    enc1 = double_conv(x, params["enc1"])
    enc2 = double_conv(maxpool2(enc1), params["enc2"])
    enc3 = double_conv(maxpool2(enc2), params["enc3"])
    enc4 = double_conv(maxpool2(enc3), params["enc4"])
    bott = double_conv(maxpool2(enc4), params["bottleneck"])

    # TODO(synk): the decoder concats are XLA relayouts; splitting each first
    # dec conv's weight along Cin (y = up@W_up + enc@W_enc) would remove them.
    up4 = conv_transpose2(bott, *params["up4"])
    up4 = trilinear_resize(up4, enc4.shape[1:4])
    dec4 = double_conv(jnp.concatenate([up4, enc4], axis=-1), params["dec4"])

    up3 = conv_transpose2(dec4, *params["up3"])
    up3 = trilinear_resize(up3, enc3.shape[1:4])
    dec3 = double_conv(jnp.concatenate([up3, enc3], axis=-1), params["dec3"])

    up2 = conv_transpose2(dec3, *params["up2"])
    up2 = trilinear_resize(up2, enc2.shape[1:4])
    dec2 = double_conv(jnp.concatenate([up2, enc2], axis=-1), params["dec2"])

    up1 = conv_transpose2(dec2, *params["up1"])
    up1 = trilinear_resize(up1, enc1.shape[1:4])
    dec1 = double_conv(jnp.concatenate([up1, enc1], axis=-1), params["dec1"])

    wf, bf = params["final"]
    y = conv1x1(dec1, wf, bf, out_dtype=jnp.float32)       # f32 logits
    return jnp.transpose(y, (0, 4, 1, 2, 3))               # NDHWC -> NCDHW


if __name__ == "__main__":
    key = jax.random.PRNGKey(0)
    k_params, k_x = jax.random.split(key)

    in_channels, out_channels = 1, 2
    # small input consistent with 4 levels of MaxPool3d(2): spatial 16 -> 1
    x = jax.random.normal(k_x, (2, in_channels, 16, 16, 16), jnp.float32)

    params = init_unet3d_params(k_params, in_channels, out_channels)
    out = unet3d_forward(params, x)
    out = jax.block_until_ready(out)

    assert out.shape == (2, out_channels, 16, 16, 16), out.shape
    assert bool(jnp.all(jnp.isfinite(out)))
    print("KERNEL_OK")
</pallas_src>

<mosaic_0001>
module attributes {stable_mosaic.version = 11 : i64} {
  func.func @_conv3_kernel(%arg0: i32, %arg1: i32, %arg2: memref<1x1x328x8xbf16, #tpu.memory_space<vmem>>, %arg3: memref<1x1x328x8xbf16, #tpu.memory_space<vmem>>, %arg4: memref<1x1x328x8xbf16, #tpu.memory_space<vmem>>, %arg5: memref<27x8x32xbf16, #tpu.memory_space<vmem>>, %arg6: memref<1x32xf32, #tpu.memory_space<vmem>>, %arg7: memref<288x1xf32, #tpu.memory_space<vmem>>, %arg8: memref<1x1x288x32xbf16, #tpu.memory_space<vmem>>, %arg9: memref<1x1x32xf32, #tpu.memory_space<vmem>>, %arg10: memref<1x1x32xf32, #tpu.memory_space<vmem>>) attributes {dimension_semantics = [#tpu.dimension_semantics<parallel>, #tpu.dimension_semantics<arbitrary>], iteration_bounds = array<i64: 2, 16>, scalar_prefetch = 0 : i64, scratch_operands = 0 : i64, tpu.core_type = #tpu.core_type<tc>, window_params = [{transform_indices = @transform_0, window_bounds = array<i64: 1, 1, 328, 8>}, {transform_indices = @transform_1, window_bounds = array<i64: 1, 1, 328, 8>}, {transform_indices = @transform_2, window_bounds = array<i64: 1, 1, 328, 8>}, {pipeline_mode = #tpu.pipeline_mode<synchronous>, transform_indices = @transform_3, window_bounds = array<i64: 27, 8, 32>}, {pipeline_mode = #tpu.pipeline_mode<synchronous>, transform_indices = @transform_4, window_bounds = array<i64: 1, 32>}, {pipeline_mode = #tpu.pipeline_mode<synchronous>, transform_indices = @transform_5, window_bounds = array<i64: 288, 1>}, {transform_indices = @transform_6, window_bounds = array<i64: 1, 1, 288, 32>}, {transform_indices = @transform_7, window_bounds = array<i64: 1, 1, 32>}, {transform_indices = @transform_8, window_bounds = array<i64: 1, 1, 32>}]} {
    %c0 = arith.constant 0 : index
    %c0_0 = arith.constant 0 : index
    %c0_1 = arith.constant 0 : index
    %c0_2 = arith.constant 0 : index
    %0 = vector.load %arg2[%c0, %c0_0, %c0_1, %c0_2] : memref<1x1x328x8xbf16, #tpu.memory_space<vmem>>, vector<1x1x288x8xbf16>
    %1 = vector.shape_cast %0 : vector<1x1x288x8xbf16> to vector<288x8xbf16>
    %c0_3 = arith.constant 0 : index
    %c0_4 = arith.constant 0 : index
    %c0_5 = arith.constant 0 : index
    %2 = vector.load %arg5[%c0_3, %c0_4, %c0_5] : memref<27x8x32xbf16, #tpu.memory_space<vmem>>, vector<1x8x32xbf16>
    %3 = vector.shape_cast %2 : vector<1x8x32xbf16> to vector<8x32xbf16>
    %cst = arith.constant dense<0.000000e+00> : vector<288x32xf32>
    %4 = tpu.matmul %1, %3, %cst {dimension_numbers = #tpu.dot_dimension_numbers<[1], [0], [0], [1], [0, 0, 1, 1], [], []>} : vector<288x8xbf16>, vector<8x32xbf16>, vector<288x32xf32> -> vector<288x32xf32>
    %c0_6 = arith.constant 0 : index
    %c0_7 = arith.constant 0 : index
    %c1 = arith.constant 1 : index
    %c0_8 = arith.constant 0 : index
    %5 = vector.load %arg2[%c0_6, %c0_7, %c1, %c0_8] : memref<1x1x328x8xbf16, #tpu.memory_space<vmem>>, vector<1x1x288x8xbf16>
    %6 = vector.shape_cast %5 : vector<1x1x288x8xbf16> to vector<288x8xbf16>
    %c1_9 = arith.constant 1 : index
    %c0_10 = arith.constant 0 : index
    %c0_11 = arith.constant 0 : index
    %7 = vector.load %arg5[%c1_9, %c0_10, %c0_11] : memref<27x8x32xbf16, #tpu.memory_space<vmem>>, vector<1x8x32xbf16>
    %8 = vector.shape_cast %7 : vector<1x8x32xbf16> to vector<8x32xbf16>
    %cst_12 = arith.constant dense<0.000000e+00> : vector<288x32xf32>
    %9 = tpu.matmul %6, %8, %cst_12 {dimension_numbers = #tpu.dot_dimension_numbers<[1], [0], [0], [1], [0, 0, 1, 1], [], []>} : vector<288x8xbf16>, vector<8x32xbf16>, vector<288x32xf32> -> vector<288x32xf32>
    %10 = arith.addf %4, %9 : vector<288x32xf32>
    %c0_13 = arith.constant 0 : index
    %c0_14 = arith.constant 0 : index
    %c2 = arith.constant 2 : index
    %c0_15 = arith.constant 0 : index
    %11 = vector.load %arg2[%c0_13, %c0_14, %c2, %c0_15] : memref<1x1x328x8xbf16, #tpu.memory_space<vmem>>, vector<1x1x288x8xbf16>
    %12 = vector.shape_cast %11 : vector<1x1x288x8xbf16> to vector<288x8xbf16>
    %c2_16 = arith.constant 2 : index
    %c0_17 = arith.constant 0 : index
    %c0_18 = arith.constant 0 : index
    %13 = vector.load %arg5[%c2_16, %c0_17, %c0_18] : memref<27x8x32xbf16, #tpu.memory_space<vmem>>, vector<1x8x32xbf16>
    %14 = vector.shape_cast %13 : vector<1x8x32xbf16> to vector<8x32xbf16>
    %cst_19 = arith.constant dense<0.000000e+00> : vector<288x32xf32>
    %15 = tpu.matmul %12, %14, %cst_19 {dimension_numbers = #tpu.dot_dimension_numbers<[1], [0], [0], [1], [0, 0, 1, 1], [], []>} : vector<288x8xbf16>, vector<8x32xbf16>, vector<288x32xf32> -> vector<288x32xf32>
    %16 = arith.addf %10, %15 : vector<288x32xf32>
    %c0_20 = arith.constant 0 : index
    %c0_21 = arith.constant 0 : index
    %c18 = arith.constant 18 : index
    %c0_22 = arith.constant 0 : index
    %17 = vector.load %arg2[%c0_20, %c0_21, %c18, %c0_22] : memref<1x1x328x8xbf16, #tpu.memory_space<vmem>>, vector<1x1x288x8xbf16>
    %18 = vector.shape_cast %17 : vector<1x1x288x8xbf16> to vector<288x8xbf16>
    %c3 = arith.constant 3 : index
    %c0_23 = arith.constant 0 : index
    %c0_24 = arith.constant 0 : index
    %19 = vector.load %arg5[%c3, %c0_23, %c0_24] : memref<27x8x32xbf16, #tpu.memory_space<vmem>>, vector<1x8x32xbf16>
    %20 = vector.shape_cast %19 : vector<1x8x32xbf16> to vector<8x32xbf16>
    %cst_25 = arith.constant dense<0.000000e+00> : vector<288x32xf32>
    %21 = tpu.matmul %18, %20, %cst_25 {dimension_numbers = #tpu.dot_dimension_numbers<[1], [0], [0], [1], [0, 0, 1, 1], [], []>} : vector<288x8xbf16>, vector<8x32xbf16>, vector<288x32xf32> -> vector<288x32xf32>
    %22 = arith.addf %16, %21 : vector<288x32xf32>
    %c0_26 = arith.constant 0 : index
    %c0_27 = arith.constant 0 : index
    %c19 = arith.constant 19 : index
    %c0_28 = arith.constant 0 : index
    %23 = vector.load %arg2[%c0_26, %c0_27, %c19, %c0_28] : memref<1x1x328x8xbf16, #tpu.memory_space<vmem>>, vector<1x1x288x8xbf16>
    %24 = vector.shape_cast %23 : vector<1x1x288x8xbf16> to vector<288x8xbf16>
    %c4 = arith.constant 4 : index
    %c0_29 = arith.constant 0 : index
    %c0_30 = arith.constant 0 : index
    %25 = vector.load %arg5[%c4, %c0_29, %c0_30] : memref<27x8x32xbf16, #tpu.memory_space<vmem>>, vector<1x8x32xbf16>
    %26 = vector.shape_cast %25 : vector<1x8x32xbf16> to vector<8x32xbf16>
    %cst_31 = arith.constant dense<0.000000e+00> : vector<288x32xf32>
    %27 = tpu.matmul %24, %26, %cst_31 {dimension_numbers = #tpu.dot_dimension_numbers<[1], [0], [0], [1], [0, 0, 1, 1], [], []>} : vector<288x8xbf16>, vector<8x32xbf16>, vector<288x32xf32> -> vector<288x32xf32>
    %28 = arith.addf %22, %27 : vector<288x32xf32>
    %c0_32 = arith.constant 0 : index
    %c0_33 = arith.constant 0 : index
    %c20 = arith.constant 20 : index
    %c0_34 = arith.constant 0 : index
    %29 = vector.load %arg2[%c0_32, %c0_33, %c20, %c0_34] : memref<1x1x328x8xbf16, #tpu.memory_space<vmem>>, vector<1x1x288x8xbf16>
    %30 = vector.shape_cast %29 : vector<1x1x288x8xbf16> to vector<288x8xbf16>
    %c5 = arith.constant 5 : index
    %c0_35 = arith.constant 0 : index
    %c0_36 = arith.constant 0 : index
    %31 = vector.load %arg5[%c5, %c0_35, %c0_36] : memref<27x8x32xbf16, #tpu.memory_space<vmem>>, vector<1x8x32xbf16>
    %32 = vector.shape_cast %31 : vector<1x8x32xbf16> to vector<8x32xbf16>
    %cst_37 = arith.constant dense<0.000000e+00> : vector<288x32xf32>
    %33 = tpu.matmul %30, %32, %cst_37 {dimension_numbers = #tpu.dot_dimension_numbers<[1], [0], [0], [1], [0, 0, 1, 1], [], []>} : vector<288x8xbf16>, vector<8x32xbf16>, vector<288x32xf32> -> vector<288x32xf32>
    %34 = arith.addf %28, %33 : vector<288x32xf32>
    %c0_38 = arith.constant 0 : index
    %c0_39 = arith.constant 0 : index
    %c36 = arith.constant 36 : index
    %c0_40 = arith.constant 0 : index
    %35 = vector.load %arg2[%c0_38, %c0_39, %c36, %c0_40] : memref<1x1x328x8xbf16, #tpu.memory_space<vmem>>, vector<1x1x288x8xbf16>
    %36 = vector.shape_cast %35 : vector<1x1x288x8xbf16> to vector<288x8xbf16>
    %c6 = arith.constant 6 : index
    %c0_41 = arith.constant 0 : index
    %c0_42 = arith.constant 0 : index
    %37 = vector.load %arg5[%c6, %c0_41, %c0_42] : memref<27x8x32xbf16, #tpu.memory_space<vmem>>, vector<1x8x32xbf16>
    %38 = vector.shape_cast %37 : vector<1x8x32xbf16> to vector<8x32xbf16>
    %cst_43 = arith.constant dense<0.000000e+00> : vector<288x32xf32>
    %39 = tpu.matmul %36, %38, %cst_43 {dimension_numbers = #tpu.dot_dimension_numbers<[1], [0], [0], [1], [0, 0, 1, 1], [], []>} : vector<288x8xbf16>, vector<8x32xbf16>, vector<288x32xf32> -> vector<288x32xf32>
    %40 = arith.addf %34, %39 : vector<288x32xf32>
    %c0_44 = arith.constant 0 : index
    %c0_45 = arith.constant 0 : index
    %c37 = arith.constant 37 : index
    %c0_46 = arith.constant 0 : index
    %41 = vector.load %arg2[%c0_44, %c0_45, %c37, %c0_46] : memref<1x1x328x8xbf16, #tpu.memory_space<vmem>>, vector<1x1x288x8xbf16>
    %42 = vector.shape_cast %41 : vector<1x1x288x8xbf16> to vector<288x8xbf16>
    %c7 = arith.constant 7 : index
    %c0_47 = arith.constant 0 : index
    %c0_48 = arith.constant 0 : index
    %43 = vector.load %arg5[%c7, %c0_47, %c0_48] : memref<27x8x32xbf16, #tpu.memory_space<vmem>>, vector<1x8x32xbf16>
    %44 = vector.shape_cast %43 : vector<1x8x32xbf16> to vector<8x32xbf16>
    %cst_49 = arith.constant dense<0.000000e+00> : vector<288x32xf32>
    %45 = tpu.matmul %42, %44, %cst_49 {dimension_numbers = #tpu.dot_dimension_numbers<[1], [0], [0], [1], [0, 0, 1, 1], [], []>} : vector<288x8xbf16>, vector<8x32xbf16>, vector<288x32xf32> -> vector<288x32xf32>
    %46 = arith.addf %40, %45 : vector<288x32xf32>
    %c0_50 = arith.constant 0 : index
    %c0_51 = arith.constant 0 : index
    %c38 = arith.constant 38 : index
    %c0_52 = arith.constant 0 : index
    %47 = vector.load %arg2[%c0_50, %c0_51, %c38, %c0_52] : memref<1x1x328x8xbf16, #tpu.memory_space<vmem>>, vector<1x1x288x8xbf16>
    %48 = vector.shape_cast %47 : vector<1x1x288x8xbf16> to vector<288x8xbf16>
    %c8 = arith.constant 8 : index
    %c0_53 = arith.constant 0 : index
    %c0_54 = arith.constant 0 : index
    %49 = vector.load %arg5[%c8, %c0_53, %c0_54] : memref<27x8x32xbf16, #tpu.memory_space<vmem>>, vector<1x8x32xbf16>
    %50 = vector.shape_cast %49 : vector<1x8x32xbf16> to vector<8x32xbf16>
    %cst_55 = arith.constant dense<0.000000e+00> : vector<288x32xf32>
    %51 = tpu.matmul %48, %50, %cst_55 {dimension_numbers = #tpu.dot_dimension_numbers<[1], [0], [0], [1], [0, 0, 1, 1], [], []>} : vector<288x8xbf16>, vector<8x32xbf16>, vector<288x32xf32> -> vector<288x32xf32>
    %52 = arith.addf %46, %51 : vector<288x32xf32>
    %c0_56 = arith.constant 0 : index
    %c0_57 = arith.constant 0 : index
    %c0_58 = arith.constant 0 : index
    %c0_59 = arith.constant 0 : index
    %53 = vector.load %arg3[%c0_56, %c0_57, %c0_58, %c0_59] : memref<1x1x328x8xbf16, #tpu.memory_space<vmem>>, vector<1x1x288x8xbf16>
    %54 = vector.shape_cast %53 : vector<1x1x288x8xbf16> to vector<288x8xbf16>
    %c9 = arith.constant 9 : index
    %c0_60 = arith.constant 0 : index
    %c0_61 = arith.constant 0 : index
    %55 = vector.load %arg5[%c9, %c0_60, %c0_61] : memref<27x8x32xbf16, #tpu.memory_space<vmem>>, vector<1x8x32xbf16>
    %56 = vector.shape_cast %55 : vector<1x8x32xbf16> to vector<8x32xbf16>
    %cst_62 = arith.constant dense<0.000000e+00> : vector<288x32xf32>
    %57 = tpu.matmul %54, %56, %cst_62 {dimension_numbers = #tpu.dot_dimension_numbers<[1], [0], [0], [1], [0, 0, 1, 1], [], []>} : vector<288x8xbf16>, vector<8x32xbf16>, vector<288x32xf32> -> vector<288x32xf32>
    %58 = arith.addf %52, %57 : vector<288x32xf32>
    %c0_63 = arith.constant 0 : index
    %c0_64 = arith.constant 0 : index
    %c1_65 = arith.constant 1 : index
    %c0_66 = arith.constant 0 : index
    %59 = vector.load %arg3[%c0_63, %c0_64, %c1_65, %c0_66] : memref<1x1x328x8xbf16, #tpu.memory_space<vmem>>, vector<1x1x288x8xbf16>
    %60 = vector.shape_cast %59 : vector<1x1x288x8xbf16> to vector<288x8xbf16>
    %c10 = arith.constant 10 : index
    %c0_67 = arith.constant 0 : index
    %c0_68 = arith.constant 0 : index
    %61 = vector.load %arg5[%c10, %c0_67, %c0_68] : memref<27x8x32xbf16, #tpu.memory_space<vmem>>, vector<1x8x32xbf16>
    %62 = vector.shape_cast %61 : vector<1x8x32xbf16> to vector<8x32xbf16>
    %cst_69 = arith.constant dense<0.000000e+00> : vector<288x32xf32>
    %63 = tpu.matmul %60, %62, %cst_69 {dimension_numbers = #tpu.dot_dimension_numbers<[1], [0], [0], [1], [0, 0, 1, 1], [], []>} : vector<288x8xbf16>, vector<8x32xbf16>, vector<288x32xf32> -> vector<288x32xf32>
    %64 = arith.addf %58, %63 : vector<288x32xf32>
    %c0_70 = arith.constant 0 : index
    %c0_71 = arith.constant 0 : index
    %c2_72 = arith.constant 2 : index
    %c0_73 = arith.constant 0 : index
    %65 = vector.load %arg3[%c0_70, %c0_71, %c2_72, %c0_73] : memref<1x1x328x8xbf16, #tpu.memory_space<vmem>>, vector<1x1x288x8xbf16>
    %66 = vector.shape_cast %65 : vector<1x1x288x8xbf16> to vector<288x8xbf16>
    %c11 = arith.constant 11 : index
    %c0_74 = arith.constant 0 : index
    %c0_75 = arith.constant 0 : index
    %67 = vector.load %arg5[%c11, %c0_74, %c0_75] : memref<27x8x32xbf16, #tpu.memory_space<vmem>>, vector<1x8x32xbf16>
    %68 = vector.shape_cast %67 : vector<1x8x32xbf16> to vector<8x32xbf16>
    %cst_76 = arith.constant dense<0.000000e+00> : vector<288x32xf32>
    %69 = tpu.matmul %66, %68, %cst_76 {dimension_numbers = #tpu.dot_dimension_numbers<[1], [0], [0], [1], [0, 0, 1, 1], [], []>} : vector<288x8xbf16>, vector<8x32xbf16>, vector<288x32xf32> -> vector<288x32xf32>
    %70 = arith.addf %64, %69 : vector<288x32xf32>
    %c0_77 = arith.constant 0 : index
    %c0_78 = arith.constant 0 : index
    %c18_79 = arith.constant 18 : index
    %c0_80 = arith.constant 0 : index
    %71 = vector.load %arg3[%c0_77, %c0_78, %c18_79, %c0_80] : memref<1x1x328x8xbf16, #tpu.memory_space<vmem>>, vector<1x1x288x8xbf16>
    %72 = vector.shape_cast %71 : vector<1x1x288x8xbf16> to vector<288x8xbf16>
    %c12 = arith.constant 12 : index
    %c0_81 = arith.constant 0 : index
    %c0_82 = arith.constant 0 : index
    %73 = vector.load %arg5[%c12, %c0_81, %c0_82] : memref<27x8x32xbf16, #tpu.memory_space<vmem>>, vector<1x8x32xbf16>
    %74 = vector.shape_cast %73 : vector<1x8x32xbf16> to vector<8x32xbf16>
    %cst_83 = arith.constant dense<0.000000e+00> : vector<288x32xf32>
    %75 = tpu.matmul %72, %74, %cst_83 {dimension_numbers = #tpu.dot_dimension_numbers<[1], [0], [0], [1], [0, 0, 1, 1], [], []>} : vector<288x8xbf16>, vector<8x32xbf16>, vector<288x32xf32> -> vector<288x32xf32>
    %76 = arith.addf %70, %75 : vector<288x32xf32>
    %c0_84 = arith.constant 0 : index
    %c0_85 = arith.constant 0 : index
    %c19_86 = arith.constant 19 : index
    %c0_87 = arith.constant 0 : index
    %77 = vector.load %arg3[%c0_84, %c0_85, %c19_86, %c0_87] : memref<1x1x328x8xbf16, #tpu.memory_space<vmem>>, vector<1x1x288x8xbf16>
    %78 = vector.shape_cast %77 : vector<1x1x288x8xbf16> to vector<288x8xbf16>
    %c13 = arith.constant 13 : index
    %c0_88 = arith.constant 0 : index
    %c0_89 = arith.constant 0 : index
    %79 = vector.load %arg5[%c13, %c0_88, %c0_89] : memref<27x8x32xbf16, #tpu.memory_space<vmem>>, vector<1x8x32xbf16>
    %80 = vector.shape_cast %79 : vector<1x8x32xbf16> to vector<8x32xbf16>
    %cst_90 = arith.constant dense<0.000000e+00> : vector<288x32xf32>
    %81 = tpu.matmul %78, %80, %cst_90 {dimension_numbers = #tpu.dot_dimension_numbers<[1], [0], [0], [1], [0, 0, 1, 1], [], []>} : vector<288x8xbf16>, vector<8x32xbf16>, vector<288x32xf32> -> vector<288x32xf32>
    %82 = arith.addf %76, %81 : vector<288x32xf32>
    %c0_91 = arith.constant 0 : index
    %c0_92 = arith.constant 0 : index
    %c20_93 = arith.constant 20 : index
    %c0_94 = arith.constant 0 : index
    %83 = vector.load %arg3[%c0_91, %c0_92, %c20_93, %c0_94] : memref<1x1x328x8xbf16, #tpu.memory_space<vmem>>, vector<1x1x288x8xbf16>
    %84 = vector.shape_cast %83 : vector<1x1x288x8xbf16> to vector<288x8xbf16>
    %c14 = arith.constant 14 : index
    %c0_95 = arith.constant 0 : index
    %c0_96 = arith.constant 0 : index
    %85 = vector.load %arg5[%c14, %c0_95, %c0_96] : memref<27x8x32xbf16, #tpu.memory_space<vmem>>, vector<1x8x32xbf16>
    %86 = vector.shape_cast %85 : vector<1x8x32xbf16> to vector<8x32xbf16>
    %cst_97 = arith.constant dense<0.000000e+00> : vector<288x32xf32>
    %87 = tpu.matmul %84, %86, %cst_97 {dimension_numbers = #tpu.dot_dimension_numbers<[1], [0], [0], [1], [0, 0, 1, 1], [], []>} : vector<288x8xbf16>, vector<8x32xbf16>, vector<288x32xf32> -> vector<288x32xf32>
    %88 = arith.addf %82, %87 : vector<288x32xf32>
    %c0_98 = arith.constant 0 : index
    %c0_99 = arith.constant 0 : index
    %c36_100 = arith.constant 36 : index
    %c0_101 = arith.constant 0 : index
    %89 = vector.load %arg3[%c0_98, %c0_99, %c36_100, %c0_101] : memref<1x1x328x8xbf16, #tpu.memory_space<vmem>>, vector<1x1x288x8xbf16>
    %90 = vector.shape_cast %89 : vector<1x1x288x8xbf16> to vector<288x8xbf16>
    %c15 = arith.constant 15 : index
    %c0_102 = arith.constant 0 : index
    %c0_103 = arith.constant 0 : index
    %91 = vector.load %arg5[%c15, %c0_102, %c0_103] : memref<27x8x32xbf16, #tpu.memory_space<vmem>>, vector<1x8x32xbf16>
    %92 = vector.shape_cast %91 : vector<1x8x32xbf16> to vector<8x32xbf16>
    %cst_104 = arith.constant dense<0.000000e+00> : vector<288x32xf32>
    %93 = tpu.matmul %90, %92, %cst_104 {dimension_numbers = #tpu.dot_dimension_numbers<[1], [0], [0], [1], [0, 0, 1, 1], [], []>} : vector<288x8xbf16>, vector<8x32xbf16>, vector<288x32xf32> -> vector<288x32xf32>
    %94 = arith.addf %88, %93 : vector<288x32xf32>
    %c0_105 = arith.constant 0 : index
    %c0_106 = arith.constant 0 : index
    %c37_107 = arith.constant 37 : index
    %c0_108 = arith.constant 0 : index
    %95 = vector.load %arg3[%c0_105, %c0_106, %c37_107, %c0_108] : memref<1x1x328x8xbf16, #tpu.memory_space<vmem>>, vector<1x1x288x8xbf16>
    %96 = vector.shape_cast %95 : vector<1x1x288x8xbf16> to vector<288x8xbf16>
    %c16 = arith.constant 16 : index
    %c0_109 = arith.constant 0 : index
    %c0_110 = arith.constant 0 : index
    %97 = vector.load %arg5[%c16, %c0_109, %c0_110] : memref<27x8x32xbf16, #tpu.memory_space<vmem>>, vector<1x8x32xbf16>
    %98 = vector.shape_cast %97 : vector<1x8x32xbf16> to vector<8x32xbf16>
    %cst_111 = arith.constant dense<0.000000e+00> : vector<288x32xf32>
    %99 = tpu.matmul %96, %98, %cst_111 {dimension_numbers = #tpu.dot_dimension_numbers<[1], [0], [0], [1], [0, 0, 1, 1], [], []>} : vector<288x8xbf16>, vector<8x32xbf16>, vector<288x32xf32> -> vector<288x32xf32>
    %100 = arith.addf %94, %99 : vector<288x32xf32>
    %c0_112 = arith.constant 0 : index
    %c0_113 = arith.constant 0 : index
    %c38_114 = arith.constant 38 : index
    %c0_115 = arith.constant 0 : index
    %101 = vector.load %arg3[%c0_112, %c0_113, %c38_114, %c0_115] : memref<1x1x328x8xbf16, #tpu.memory_space<vmem>>, vector<1x1x288x8xbf16>
    %102 = vector.shape_cast %101 : vector<1x1x288x8xbf16> to vector<288x8xbf16>
    %c17 = arith.constant 17 : index
    %c0_116 = arith.constant 0 : index
    %c0_117 = arith.constant 0 : index
    %103 = vector.load %arg5[%c17, %c0_116, %c0_117] : memref<27x8x32xbf16, #tpu.memory_space<vmem>>, vector<1x8x32xbf16>
    %104 = vector.shape_cast %103 : vector<1x8x32xbf16> to vector<8x32xbf16>
    %cst_118 = arith.constant dense<0.000000e+00> : vector<288x32xf32>
    %105 = tpu.matmul %102, %104, %cst_118 {dimension_numbers = #tpu.dot_dimension_numbers<[1], [0], [0], [1], [0, 0, 1, 1], [], []>} : vector<288x8xbf16>, vector<8x32xbf16>, vector<288x32xf32> -> vector<288x32xf32>
    %106 = arith.addf %100, %105 : vector<288x32xf32>
    %c0_119 = arith.constant 0 : index
    %c0_120 = arith.constant 0 : index
    %c0_121 = arith.constant 0 : index
    %c0_122 = arith.constant 0 : index
    %107 = vector.load %arg4[%c0_119, %c0_120, %c0_121, %c0_122] : memref<1x1x328x8xbf16, #tpu.memory_space<vmem>>, vector<1x1x288x8xbf16>
    %108 = vector.shape_cast %107 : vector<1x1x288x8xbf16> to vector<288x8xbf16>
    %c18_123 = arith.constant 18 : index
    %c0_124 = arith.constant 0 : index
    %c0_125 = arith.constant 0 : index
    %109 = vector.load %arg5[%c18_123, %c0_124, %c0_125] : memref<27x8x32xbf16, #tpu.memory_space<vmem>>, vector<1x8x32xbf16>
    %110 = vector.shape_cast %109 : vector<1x8x32xbf16> to vector<8x32xbf16>
    %cst_126 = arith.constant dense<0.000000e+00> : vector<288x32xf32>
    %111 = tpu.matmul %108, %110, %cst_126 {dimension_numbers = #tpu.dot_dimension_numbers<[1], [0], [0], [1], [0, 0, 1, 1], [], []>} : vector<288x8xbf16>, vector<8x32xbf16>, vector<288x32xf32> -> vector<288x32xf32>
    %112 = arith.addf %106, %111 : vector<288x32xf32>
    %c0_127 = arith.constant 0 : index
    %c0_128 = arith.constant 0 : index
    %c1_129 = arith.constant 1 : index
    %c0_130 = arith.constant 0 : index
    %113 = vector.load %arg4[%c0_127, %c0_128, %c1_129, %c0_130] : memref<1x1x328x8xbf16, #tpu.memory_space<vmem>>, vector<1x1x288x8xbf16>
    %114 = vector.shape_cast %113 : vector<1x1x288x8xbf16> to vector<288x8xbf16>
    %c19_131 = arith.constant 19 : index
    %c0_132 = arith.constant 0 : index
    %c0_133 = arith.constant 0 : index
    %115 = vector.load %arg5[%c19_131, %c0_132, %c0_133] : memref<27x8x32xbf16, #tpu.memory_space<vmem>>, vector<1x8x32xbf16>
    %116 = vector.shape_cast %115 : vector<1x8x32xbf16> to vector<8x32xbf16>
    %cst_134 = arith.constant dense<0.000000e+00> : vector<288x32xf32>
    %117 = tpu.matmul %114, %116, %cst_134 {dimension_numbers = #tpu.dot_dimension_numbers<[1], [0], [0], [1], [0, 0, 1, 1], [], []>} : vector<288x8xbf16>, vector<8x32xbf16>, vector<288x32xf32> -> vector<288x32xf32>
    %118 = arith.addf %112, %117 : vector<288x32xf32>
    %c0_135 = arith.constant 0 : index
    %c0_136 = arith.constant 0 : index
    %c2_137 = arith.constant 2 : index
    %c0_138 = arith.constant 0 : index
    %119 = vector.load %arg4[%c0_135, %c0_136, %c2_137, %c0_138] : memref<1x1x328x8xbf16, #tpu.memory_space<vmem>>, vector<1x1x288x8xbf16>
    %120 = vector.shape_cast %119 : vector<1x1x288x8xbf16> to vector<288x8xbf16>
    %c20_139 = arith.constant 20 : index
    %c0_140 = arith.constant 0 : index
    %c0_141 = arith.constant 0 : index
    %121 = vector.load %arg5[%c20_139, %c0_140, %c0_141] : memref<27x8x32xbf16, #tpu.memory_space<vmem>>, vector<1x8x32xbf16>
    %122 = vector.shape_cast %121 : vector<1x8x32xbf16> to vector<8x32xbf16>
    %cst_142 = arith.constant dense<0.000000e+00> : vector<288x32xf32>
    %123 = tpu.matmul %120, %122, %cst_142 {dimension_numbers = #tpu.dot_dimension_numbers<[1], [0], [0], [1], [0, 0, 1, 1], [], []>} : vector<288x8xbf16>, vector<8x32xbf16>, vector<288x32xf32> -> vector<288x32xf32>
    %124 = arith.addf %118, %123 : vector<288x32xf32>
    %c0_143 = arith.constant 0 : index
    %c0_144 = arith.constant 0 : index
    %c18_145 = arith.constant 18 : index
    %c0_146 = arith.constant 0 : index
    %125 = vector.load %arg4[%c0_143, %c0_144, %c18_145, %c0_146] : memref<1x1x328x8xbf16, #tpu.memory_space<vmem>>, vector<1x1x288x8xbf16>
    %126 = vector.shape_cast %125 : vector<1x1x288x8xbf16> to vector<288x8xbf16>
    %c21 = arith.constant 21 : index
    %c0_147 = arith.constant 0 : index
    %c0_148 = arith.constant 0 : index
    %127 = vector.load %arg5[%c21, %c0_147, %c0_148] : memref<27x8x32xbf16, #tpu.memory_space<vmem>>, vector<1x8x32xbf16>
    %128 = vector.shape_cast %127 : vector<1x8x32xbf16> to vector<8x32xbf16>
    %cst_149 = arith.constant dense<0.000000e+00> : vector<288x32xf32>
    %129 = tpu.matmul %126, %128, %cst_149 {dimension_numbers = #tpu.dot_dimension_numbers<[1], [0], [0], [1], [0, 0, 1, 1], [], []>} : vector<288x8xbf16>, vector<8x32xbf16>, vector<288x32xf32> -> vector<288x32xf32>
    %130 = arith.addf %124, %129 : vector<288x32xf32>
    %c0_150 = arith.constant 0 : index
    %c0_151 = arith.constant 0 : index
    %c19_152 = arith.constant 19 : index
    %c0_153 = arith.constant 0 : index
    %131 = vector.load %arg4[%c0_150, %c0_151, %c19_152, %c0_153] : memref<1x1x328x8xbf16, #tpu.memory_space<vmem>>, vector<1x1x288x8xbf16>
    %132 = vector.shape_cast %131 : vector<1x1x288x8xbf16> to vector<288x8xbf16>
    %c22 = arith.constant 22 : index
    %c0_154 = arith.constant 0 : index
    %c0_155 = arith.constant 0 : index
    %133 = vector.load %arg5[%c22, %c0_154, %c0_155] : memref<27x8x32xbf16, #tpu.memory_space<vmem>>, vector<1x8x32xbf16>
    %134 = vector.shape_cast %133 : vector<1x8x32xbf16> to vector<8x32xbf16>
    %cst_156 = arith.constant dense<0.000000e+00> : vector<288x32xf32>
    %135 = tpu.matmul %132, %134, %cst_156 {dimension_numbers = #tpu.dot_dimension_numbers<[1], [0], [0], [1], [0, 0, 1, 1], [], []>} : vector<288x8xbf16>, vector<8x32xbf16>, vector<288x32xf32> -> vector<288x32xf32>
    %136 = arith.addf %130, %135 : vector<288x32xf32>
    %c0_157 = arith.constant 0 : index
    %c0_158 = arith.constant 0 : index
    %c20_159 = arith.constant 20 : index
    %c0_160 = arith.constant 0 : index
    %137 = vector.load %arg4[%c0_157, %c0_158, %c20_159, %c0_160] : memref<1x1x328x8xbf16, #tpu.memory_space<vmem>>, vector<1x1x288x8xbf16>
    %138 = vector.shape_cast %137 : vector<1x1x288x8xbf16> to vector<288x8xbf16>
    %c23 = arith.constant 23 : index
    %c0_161 = arith.constant 0 : index
    %c0_162 = arith.constant 0 : index
    %139 = vector.load %arg5[%c23, %c0_161, %c0_162] : memref<27x8x32xbf16, #tpu.memory_space<vmem>>, vector<1x8x32xbf16>
    %140 = vector.shape_cast %139 : vector<1x8x32xbf16> to vector<8x32xbf16>
    %cst_163 = arith.constant dense<0.000000e+00> : vector<288x32xf32>
    %141 = tpu.matmul %138, %140, %cst_163 {dimension_numbers = #tpu.dot_dimension_numbers<[1], [0], [0], [1], [0, 0, 1, 1], [], []>} : vector<288x8xbf16>, vector<8x32xbf16>, vector<288x32xf32> -> vector<288x32xf32>
    %142 = arith.addf %136, %141 : vector<288x32xf32>
    %c0_164 = arith.constant 0 : index
    %c0_165 = arith.constant 0 : index
    %c36_166 = arith.constant 36 : index
    %c0_167 = arith.constant 0 : index
    %143 = vector.load %arg4[%c0_164, %c0_165, %c36_166, %c0_167] : memref<1x1x328x8xbf16, #tpu.memory_space<vmem>>, vector<1x1x288x8xbf16>
    %144 = vector.shape_cast %143 : vector<1x1x288x8xbf16> to vector<288x8xbf16>
    %c24 = arith.constant 24 : index
    %c0_168 = arith.constant 0 : index
    %c0_169 = arith.constant 0 : index
    %145 = vector.load %arg5[%c24, %c0_168, %c0_169] : memref<27x8x32xbf16, #tpu.memory_space<vmem>>, vector<1x8x32xbf16>
    %146 = vector.shape_cast %145 : vector<1x8x32xbf16> to vector<8x32xbf16>
    %cst_170 = arith.constant dense<0.000000e+00> : vector<288x32xf32>
    %147 = tpu.matmul %144, %146, %cst_170 {dimension_numbers = #tpu.dot_dimension_numbers<[1], [0], [0], [1], [0, 0, 1, 1], [], []>} : vector<288x8xbf16>, vector<8x32xbf16>, vector<288x32xf32> -> vector<288x32xf32>
    %148 = arith.addf %142, %147 : vector<288x32xf32>
    %c0_171 = arith.constant 0 : index
    %c0_172 = arith.constant 0 : index
    %c37_173 = arith.constant 37 : index
    %c0_174 = arith.constant 0 : index
    %149 = vector.load %arg4[%c0_171, %c0_172, %c37_173, %c0_174] : memref<1x1x328x8xbf16, #tpu.memory_space<vmem>>, vector<1x1x288x8xbf16>
    %150 = vector.shape_cast %149 : vector<1x1x288x8xbf16> to vector<288x8xbf16>
    %c25 = arith.constant 25 : index
    %c0_175 = arith.constant 0 : index
    %c0_176 = arith.constant 0 : index
    %151 = vector.load %arg5[%c25, %c0_175, %c0_176] : memref<27x8x32xbf16, #tpu.memory_space<vmem>>, vector<1x8x32xbf16>
    %152 = vector.shape_cast %151 : vector<1x8x32xbf16> to vector<8x32xbf16>
    %cst_177 = arith.constant dense<0.000000e+00> : vector<288x32xf32>
    %153 = tpu.matmul %150, %152, %cst_177 {dimension_numbers = #tpu.dot_dimension_numbers<[1], [0], [0], [1], [0, 0, 1, 1], [], []>} : vector<288x8xbf16>, vector<8x32xbf16>, vector<288x32xf32> -> vector<288x32xf32>
    %154 = arith.addf %148, %153 : vector<288x32xf32>
    %c0_178 = arith.constant 0 : index
    %c0_179 = arith.constant 0 : index
    %c38_180 = arith.constant 38 : index
    %c0_181 = arith.constant 0 : index
    %155 = vector.load %arg4[%c0_178, %c0_179, %c38_180, %c0_181] : memref<1x1x328x8xbf16, #tpu.memory_space<vmem>>, vector<1x1x288x8xbf16>
    %156 = vector.shape_cast %155 : vector<1x1x288x8xbf16> to vector<288x8xbf16>
    %c26 = arith.constant 26 : index
    %c0_182 = arith.constant 0 : index
    %c0_183 = arith.constant 0 : index
    %157 = vector.load %arg5[%c26, %c0_182, %c0_183] : memref<27x8x32xbf16, #tpu.memory_space<vmem>>, vector<1x8x32xbf16>
    %158 = vector.shape_cast %157 : vector<1x8x32xbf16> to vector<8x32xbf16>
    %cst_184 = arith.constant dense<0.000000e+00> : vector<288x32xf32>
    %159 = tpu.matmul %156, %158, %cst_184 {dimension_numbers = #tpu.dot_dimension_numbers<[1], [0], [0], [1], [0, 0, 1, 1], [], []>} : vector<288x8xbf16>, vector<8x32xbf16>, vector<288x32xf32> -> vector<288x32xf32>
    %160 = arith.addf %154, %159 : vector<288x32xf32>
    %c0_185 = arith.constant 0 : index
    %c0_186 = arith.constant 0 : index
    %161 = vector.load %arg6[%c0_185, %c0_186] : memref<1x32xf32, #tpu.memory_space<vmem>>, vector<1x32xf32>
    %162 = vector.broadcast %161 : vector<1x32xf32> to vector<288x32xf32>
    %163 = arith.addf %160, %162 : vector<288x32xf32>
    %164 = arith.truncf %163 : vector<288x32xf32> to vector<288x32xbf16>
    %c0_187 = arith.constant 0 : index
    %c0_188 = arith.constant 0 : index
    %c0_189 = arith.constant 0 : index
    %c0_190 = arith.constant 0 : index
    %165 = vector.load %arg8[%c0_187, %c0_188, %c0_189, %c0_190] : memref<1x1x288x32xbf16, #tpu.memory_space<vmem>>, vector<1x1x288x32xbf16>
    %166 = vector.shape_cast %165 : vector<1x1x288x32xbf16> to vector<288x32xbf16>
    %167 = vector.shape_cast %164 : vector<288x32xbf16> to vector<1x1x288x32xbf16>
    tpu.vector_store %arg8[%c0_187, %c0_188, %c0_189, %c0_190], %167 {strides = array<i32>} : memref<1x1x288x32xbf16, #tpu.memory_space<vmem>>, vector<1x1x288x32xbf16>,
    %c0_i32 = arith.constant 0 : i32
    %168 = arith.cmpi eq, %arg1, %c0_i32 : i32
    %169 = arith.extui %168 : i1 to i32
    %c0_i32_191 = arith.constant 0 : i32
    %170 = arith.cmpi ne, %169, %c0_i32_191 : i32
    scf.if %170 {
      %cst_208 = arith.constant 0.000000e+00 : f32
      %191 = vector.broadcast %cst_208 : f32 to vector<1x32xf32>
      %c0_209 = arith.constant 0 : index
      %c0_210 = arith.constant 0 : index
      %c0_211 = arith.constant 0 : index
      %192 = vector.load %arg9[%c0_209, %c0_210, %c0_211] : memref<1x1x32xf32, #tpu.memory_space<vmem>>, vector<1x1x32xf32>
      %193 = vector.shape_cast %192 : vector<1x1x32xf32> to vector<1x32xf32>
      %194 = vector.shape_cast %191 : vector<1x32xf32> to vector<1x1x32xf32>
      tpu.vector_store %arg9[%c0_209, %c0_210, %c0_211], %194 {strides = array<i32>} : memref<1x1x32xf32, #tpu.memory_space<vmem>>, vector<1x1x32xf32>,
      %cst_212 = arith.constant 0.000000e+00 : f32
      %195 = vector.broadcast %cst_212 : f32 to vector<1x32xf32>
      %c0_213 = arith.constant 0 : index
      %c0_214 = arith.constant 0 : index
      %c0_215 = arith.constant 0 : index
      %196 = vector.load %arg10[%c0_213, %c0_214, %c0_215] : memref<1x1x32xf32, #tpu.memory_space<vmem>>, vector<1x1x32xf32>
      %197 = vector.shape_cast %196 : vector<1x1x32xf32> to vector<1x32xf32>
      %198 = vector.shape_cast %195 : vector<1x32xf32> to vector<1x1x32xf32>
      tpu.vector_store %arg10[%c0_213, %c0_214, %c0_215], %198 {strides = array<i32>} : memref<1x1x32xf32, #tpu.memory_space<vmem>>, vector<1x1x32xf32>,
    } else {
    }
    %c0_192 = arith.constant 0 : index
    %c0_193 = arith.constant 0 : index
    %171 = vector.load %arg7[%c0_192, %c0_193] : memref<288x1xf32, #tpu.memory_space<vmem>>, vector<288x1xf32>
    %172 = vector.broadcast %171 : vector<288x1xf32> to vector<288x32xf32>
    %173 = arith.mulf %163, %172 : vector<288x32xf32>
    %c0_194 = arith.constant 0 : index
    %c0_195 = arith.constant 0 : index
    %c0_196 = arith.constant 0 : index
    %174 = vector.load %arg9[%c0_194, %c0_195, %c0_196] : memref<1x1x32xf32, #tpu.memory_space<vmem>>, vector<1x1x32xf32>
    %175 = vector.shape_cast %174 : vector<1x1x32xf32> to vector<1x32xf32>
    %cst_197 = arith.constant dense<0.000000e+00> : vector<32xf32>
    %176 = vector.multi_reduction <add>, %173, %cst_197 [0] : vector<288x32xf32> to vector<32xf32>
    %177 = vector.shape_cast %176 : vector<32xf32> to vector<1x32xf32>
    %178 = arith.addf %175, %177 : vector<1x32xf32>
    %c0_198 = arith.constant 0 : index
    %c0_199 = arith.constant 0 : index
    %c0_200 = arith.constant 0 : index
    %179 = vector.load %arg9[%c0_198, %c0_199, %c0_200] : memref<1x1x32xf32, #tpu.memory_space<vmem>>, vector<1x1x32xf32>
    %180 = vector.shape_cast %179 : vector<1x1x32xf32> to vector<1x32xf32>
    %181 = vector.shape_cast %178 : vector<1x32xf32> to vector<1x1x32xf32>
    tpu.vector_store %arg9[%c0_198, %c0_199, %c0_200], %181 {strides = array<i32>} : memref<1x1x32xf32, #tpu.memory_space<vmem>>, vector<1x1x32xf32>,
    %c0_201 = arith.constant 0 : index
    %c0_202 = arith.constant 0 : index
    %c0_203 = arith.constant 0 : index
    %182 = vector.load %arg10[%c0_201, %c0_202, %c0_203] : memref<1x1x32xf32, #tpu.memory_space<vmem>>, vector<1x1x32xf32>
    %183 = vector.shape_cast %182 : vector<1x1x32xf32> to vector<1x32xf32>
    %184 = arith.mulf %173, %163 : vector<288x32xf32>
    %cst_204 = arith.constant dense<0.000000e+00> : vector<32xf32>
    %185 = vector.multi_reduction <add>, %184, %cst_204 [0] : vector<288x32xf32> to vector<32xf32>
    %186 = vector.shape_cast %185 : vector<32xf32> to vector<1x32xf32>
    %187 = arith.addf %183, %186 : vector<1x32xf32>
    %c0_205 = arith.constant 0 : index
    %c0_206 = arith.constant 0 : index
    %c0_207 = arith.constant 0 : index
    %188 = vector.load %arg10[%c0_205, %c0_206, %c0_207] : memref<1x1x32xf32, #tpu.memory_space<vmem>>, vector<1x1x32xf32>
    %189 = vector.shape_cast %188 : vector<1x1x32xf32> to vector<1x32xf32>
    %190 = vector.shape_cast %187 : vector<1x32xf32> to vector<1x1x32xf32>
    tpu.vector_store %arg10[%c0_205, %c0_206, %c0_207], %190 {strides = array<i32>} : memref<1x1x32xf32, #tpu.memory_space<vmem>>, vector<1x1x32xf32>,
    return
  }
  func.func @transform_0(%arg0: i32, %arg1: i32) -> (i32, i32, i32, i32) {
    %c0_i32 = arith.constant 0 : i32
    %c0_i32_0 = arith.constant 0 : i32
    %c0_i32_1 = arith.constant 0 : i32
    return %arg0, %arg1, %c0_i32, %c0_i32_0 : i32, i32, i32, i32
  }
  func.func @transform_1(%arg0: i32, %arg1: i32) -> (i32, i32, i32, i32) {
    %c1_i32 = arith.constant 1 : i32
    %0 = arith.addi %arg1, %c1_i32 : i32
    %c0_i32 = arith.constant 0 : i32
    %c0_i32_0 = arith.constant 0 : i32
    %c0_i32_1 = arith.constant 0 : i32
    return %arg0, %0, %c0_i32, %c0_i32_0 : i32, i32, i32, i32
  }
  func.func @transform_2(%arg0: i32, %arg1: i32) -> (i32, i32, i32, i32) {
    %c2_i32 = arith.constant 2 : i32
    %0 = arith.addi %arg1, %c2_i32 : i32
    %c0_i32 = arith.constant 0 : i32
    %c0_i32_0 = arith.constant 0 : i32
    %c0_i32_1 = arith.constant 0 : i32
    return %arg0, %0, %c0_i32, %c0_i32_0 : i32, i32, i32, i32
  }
  func.func @transform_3(%arg0: i32, %arg1: i32) -> (i32, i32, i32) {
    %c0_i32 = arith.constant 0 : i32
    %c0_i32_0 = arith.constant 0 : i32
    %c0_i32_1 = arith.constant 0 : i32
    %c0_i32_2 = arith.constant 0 : i32
    return %c0_i32, %c0_i32_0, %c0_i32_1 : i32, i32, i32
  }
  func.func @transform_4(%arg0: i32, %arg1: i32) -> (i32, i32) {
    %c0_i32 = arith.constant 0 : i32
    %c0_i32_0 = arith.constant 0 : i32
    %c0_i32_1 = arith.constant 0 : i32
    return %c0_i32, %c0_i32_0 : i32, i32
  }
  func.func @transform_5(%arg0: i32, %arg1: i32) -> (i32, i32) {
    %c0_i32 = arith.constant 0 : i32
    %c0_i32_0 = arith.constant 0 : i32
    %c0_i32_1 = arith.constant 0 : i32
    return %c0_i32, %c0_i32_0 : i32, i32
  }
  func.func @transform_6(%arg0: i32, %arg1: i32) -> (i32, i32, i32, i32) {
    %c0_i32 = arith.constant 0 : i32
    %c0_i32_0 = arith.constant 0 : i32
    %c0_i32_1 = arith.constant 0 : i32
    return %arg0, %arg1, %c0_i32, %c0_i32_0 : i32, i32, i32, i32
  }
  func.func @transform_7(%arg0: i32, %arg1: i32) -> (i32, i32, i32) {
    %c0_i32 = arith.constant 0 : i32
    %c0_i32_0 = arith.constant 0 : i32
    %c0_i32_1 = arith.constant 0 : i32
    return %arg0, %c0_i32, %c0_i32_0 : i32, i32, i32
  }
  func.func @transform_8(%arg0: i32, %arg1: i32) -> (i32, i32, i32) {
    %c0_i32 = arith.constant 0 : i32
    %c0_i32_0 = arith.constant 0 : i32
    %c0_i32_1 = arith.constant 0 : i32
    return %arg0, %c0_i32, %c0_i32_0 : i32, i32, i32
  }
}

</mosaic_0001>

<llo_original>
// kernel: tpu_custom_call.1
$region0: #{tpu_custom_call.1}
  #allocation0 [shape = 'u32[]', space=smem, size = 0x4, offset = 0x4, fixed_abs, tag = 'smem constant byte address 0x4 - core index']
  #allocation1 [shape = 'u32[72,128]{1,0:T(1,128)}', space=vmem, size = 0x9000, scoped, tag = 'internal scratch']
  %s0 = inlined_call_operand.vmem [shape: bf16[2,18,328,8], index: 0, kind: input, shape index: {}]
  %s1 = inlined_call_operand.vmem [shape: bf16[2,18,328,8], index: 1, kind: input, shape index: {}]
  %s2 = inlined_call_operand.vmem [shape: bf16[2,18,328,8], index: 2, kind: input, shape index: {}]
  %s3 = inlined_call_operand.vmem [shape: bf16[27,8,32], index: 3, kind: input, shape index: {}]
  %s4 = inlined_call_operand.vmem [shape: f32[1,32], index: 4, kind: input, shape index: {}]
  %s5 = inlined_call_operand.vmem [shape: f32[288,1], index: 5, kind: input, shape index: {}]
  %s6 = inlined_call_operand.vmem [shape: bf16[2,16,288,32], index: 6, kind: output, shape index: {0}]
  %s7 = inlined_call_operand.hbm [shape: f32[2,1,32], index: 7, kind: output, shape index: {1}]
  %s8 = inlined_call_operand.hbm [shape: f32[2,1,32], index: 8, kind: output, shape index: {2}]
  %9 = xla_tuple %s6, %s7, %s8
  %s10 = sld [smem:[#allocation0]]
  $region77: #{tpu_custom_call.1} parent=0
    _
  %s12 = ssub.s32 1, %s10
  %s13 = scalar_select 0, %s12, %s10
  $region1: #{tpu_custom_call.1} parent=0
    #allocation2 [shape = 'u8[1024]{0}', space=vmem, size = 0x400, scoped, tag = 'output window, operand 1']
    #allocation3 [shape = 's32[2]{0}', space=sflag, size = 0x8, scoped, tag = 'scoped memory for tpu_custom_call.1']
    #allocation4 [shape = 'u8[1024]{0}', space=vmem, size = 0x400, scoped, tag = 'output window, operand 2']
    #allocation5 [shape = 's32[2]{0}', space=sflag, size = 0x8, scoped, tag = 'scoped memory for tpu_custom_call.1']
    %14 = vsyncpa [#allocation3], 0
    %s15 = scalar_lea.sflag [#allocation3], 1
    %16 = vsyncpa %s15, 0
    %17 = vsyncpa [#allocation5], 0
    %s18 = scalar_lea.sflag [#allocation5], 1
    %19 = vsyncpa %s18, 0
    loop: start=0, step=1, limit=34
    $region2: #{tpu_custom_call.1} parent=1 // loop_pre_header
      _
    $region3: #{tpu_custom_call.1} parent=1 // loop_header
      %s21 = sphi 0, %s25
      %p22 = scmp.ge.s32.totalorder %s21, 34
      %s28 = sphi 0, %s40
      %s29 = sphi 0, %s36
      %s30 = sphi 0, %s28
      %s31 = sphi 0, %s29
      %s32 = sphi 0, %s30
      %s33 = sphi 0, %s31
      %s45 = sphi 0, %s47
      %s48 = sphi 0, %s45
      %s49 = sphi 0, %s48
      %s65 = sphi 0, %s49
      %s75 = sphi 0, %s77
      %s78 = sphi 0, %s75
      %s79 = sphi 0, %s78
      %s95 = sphi 0, %s79
      %s105 = sphi 0, %s107
      %s108 = sphi 0, %s105
      %s109 = sphi 0, %s108
      %s125 = sphi 0, %s109
      %s129 = sphi 0, %s129
      %s131 = sphi 0, %s129
      %s132 = sphi 0, %s131
      %s146 = sphi 0, %s132
      %s150 = sphi 0, %s150
      %s152 = sphi 0, %s150
      %s153 = sphi 0, %s152
      %s167 = sphi 0, %s153
      %s171 = sphi 0, %s171
      %s173 = sphi 0, %s171
      %s174 = sphi 0, %s173
      %s188 = sphi 0, %s174
      %s196 = sphi 0, %s198
      %s199 = sphi 0, %s196
      %s200 = sphi 0, %s199
      %s216 = sphi 0, %s200
      %s222 = sphi 0, %s224
      %s225 = sphi 0, %s222
      %s226 = sphi 0, %s225
      %s242 = sphi 0, %s226
      %s248 = sphi 0, %s250
      %s251 = sphi 0, %s248
      %s252 = sphi 0, %s251
      %s268 = sphi 0, %s252
    $region4: #{tpu_custom_call.1} parent=1 // loop_header_branch
      %24 = sbr.rel (%p22) target = $region8
    $region5: #{tpu_custom_call.1} parent=1 // loop_body
      %s26 = ssub.s32 %s21, 1
      %s27 = ssub.s32 %s21, 2
      %s34 = sadd.s32 1, %s29
      %p35 = scmp.ge.s32.totalorder %s34, 16
      %s36 = scalar_select %p35, 0, %s34
      %s37 = sadd.s32 1, %s28
      %s38 = scalar_select %p35, %s37, %s28
      %p39 = scmp.ge.s32.totalorder %s38, 2
      %s40 = scalar_select %p39, 0, %s38
      %s41 = ssub.s32 %s28, %s40
      %s42 = ssub.s32 %s29, %s36
      %s43 = sor.u32 %s41, %s42
      %p44 = scmp.eq.s32.totalorder %s43, 0
      %s46 = sadd.s32 %s45, 1
      %s47 = scalar_select %p44, %s45, %s46
      %p50 = pneg %p44
      %p51 = scmp.eq.s32.totalorder %s21, 31
      %p52 = por %p50, %p51
      %p53 = scmp.ne.s32.totalorder %s45, %s48
      %p54 = scmp.eq.s32.totalorder %s21, 0
      %p55 = por %p53, %p54
      %p56 = scmp.ne.s32.totalorder %s45, %s48
      %p57 = scmp.eq.s32.totalorder %s26, 31
      %p58 = por %p56, %p57
      %p59 = scmp.ne.s32.totalorder %s48, %s49
      %p60 = scmp.eq.s32.totalorder %s26, 0
      %p61 = por %p59, %p60
      %p62 = scmp.ne.s32.totalorder %s48, %s49
      %p63 = scmp.eq.s32.totalorder %s27, 31
      %p64 = por %p62, %p63
      %p66 = scmp.ne.s32.totalorder %s49, %s65
      %p67 = scmp.eq.s32.totalorder %s27, 0
      %p68 = por %p66, %p67
      %s69 = sadd.s32 %s29, 1
      %s70 = sadd.s32 %s36, 1
      %s71 = ssub.s32 %s28, %s40
      %s72 = ssub.s32 %s69, %s70
      %s73 = sor.u32 %s71, %s72
      %p74 = scmp.eq.s32.totalorder %s73, 0
      %s76 = sadd.s32 %s75, 1
      %s77 = scalar_select %p74, %s75, %s76
      %p80 = pneg %p74
      %p81 = scmp.eq.s32.totalorder %s21, 31
      %p82 = por %p80, %p81
      %p83 = scmp.ne.s32.totalorder %s75, %s78
      %p84 = scmp.eq.s32.totalorder %s21, 0
      %p85 = por %p83, %p84
      %p86 = scmp.ne.s32.totalorder %s75, %s78
      %p87 = scmp.eq.s32.totalorder %s26, 31
      %p88 = por %p86, %p87
      %p89 = scmp.ne.s32.totalorder %s78, %s79
      %p90 = scmp.eq.s32.totalorder %s26, 0
      %p91 = por %p89, %p90
      %p92 = scmp.ne.s32.totalorder %s78, %s79
      %p93 = scmp.eq.s32.totalorder %s27, 31
      %p94 = por %p92, %p93
      %p96 = scmp.ne.s32.totalorder %s79, %s95
      %p97 = scmp.eq.s32.totalorder %s27, 0
      %p98 = por %p96, %p97
      %s99 = sadd.s32 %s29, 2
      %s100 = sadd.s32 %s36, 2
      %s101 = ssub.s32 %s28, %s40
      %s102 = ssub.s32 %s99, %s100
      %s103 = sor.u32 %s101, %s102
      %p104 = scmp.eq.s32.totalorder %s103, 0
      %s106 = sadd.s32 %s105, 1
      %s107 = scalar_select %p104, %s105, %s106
      %p110 = pneg %p104
      %p111 = scmp.eq.s32.totalorder %s21, 31
      %p112 = por %p110, %p111
      %p113 = scmp.ne.s32.totalorder %s105, %s108
      %p114 = scmp.eq.s32.totalorder %s21, 0
      %p115 = por %p113, %p114
      %p116 = scmp.ne.s32.totalorder %s105, %s108
      %p117 = scmp.eq.s32.totalorder %s26, 31
      %p118 = por %p116, %p117
      %p119 = scmp.ne.s32.totalorder %s108, %s109
      %p120 = scmp.eq.s32.totalorder %s26, 0
      %p121 = por %p119, %p120
      %p122 = scmp.ne.s32.totalorder %s108, %s109
      %p123 = scmp.eq.s32.totalorder %s27, 31
      %p124 = por %p122, %p123
      %p126 = scmp.ne.s32.totalorder %s109, %s125
      %p127 = scmp.eq.s32.totalorder %s27, 0
      %p128 = por %p126, %p127
      %s130 = sadd.s32 %s129, 1
      %p133 = scmp.eq.s32.totalorder %s21, 31
      %p134 = scmp.ne.s32.totalorder %s129, %s131
      %p135 = scmp.eq.s32.totalorder %s21, 0
      %p136 = por %p134, %p135
      %p137 = scmp.ne.s32.totalorder %s129, %s131
      %p138 = scmp.eq.s32.totalorder %s26, 31
      %p139 = por %p137, %p138
      %p140 = scmp.ne.s32.totalorder %s131, %s132
      %p141 = scmp.eq.s32.totalorder %s26, 0
      %p142 = por %p140, %p141
      %p143 = scmp.ne.s32.totalorder %s131, %s132
      %p144 = scmp.eq.s32.totalorder %s27, 31
      %p145 = por %p143, %p144
      %p147 = scmp.ne.s32.totalorder %s132, %s146
      %p148 = scmp.eq.s32.totalorder %s27, 0
      %p149 = por %p147, %p148
      %s151 = sadd.s32 %s150, 1
      %p154 = scmp.eq.s32.totalorder %s21, 31
      %p155 = scmp.ne.s32.totalorder %s150, %s152
      %p156 = scmp.eq.s32.totalorder %s21, 0
      %p157 = por %p155, %p156
      %p158 = scmp.ne.s32.totalorder %s150, %s152
      %p159 = scmp.eq.s32.totalorder %s26, 31
      %p160 = por %p158, %p159
      %p161 = scmp.ne.s32.totalorder %s152, %s153
      %p162 = scmp.eq.s32.totalorder %s26, 0
      %p163 = por %p161, %p162
      %p164 = scmp.ne.s32.totalorder %s152, %s153
      %p165 = scmp.eq.s32.totalorder %s27, 31
      %p166 = por %p164, %p165
      %p168 = scmp.ne.s32.totalorder %s153, %s167
      %p169 = scmp.eq.s32.totalorder %s27, 0
      %p170 = por %p168, %p169
      %s172 = sadd.s32 %s171, 1
      %p175 = scmp.eq.s32.totalorder %s21, 31
      %p176 = scmp.ne.s32.totalorder %s171, %s173
      %p177 = scmp.eq.s32.totalorder %s21, 0
      %p178 = por %p176, %p177
      %p179 = scmp.ne.s32.totalorder %s171, %s173
      %p180 = scmp.eq.s32.totalorder %s26, 31
      %p181 = por %p179, %p180
      %p182 = scmp.ne.s32.totalorder %s173, %s174
      %p183 = scmp.eq.s32.totalorder %s26, 0
      %p184 = por %p182, %p183
      %p185 = scmp.ne.s32.totalorder %s173, %s174
      %p186 = scmp.eq.s32.totalorder %s27, 31
      %p187 = por %p185, %p186
      %p189 = scmp.ne.s32.totalorder %s174, %s188
      %p190 = scmp.eq.s32.totalorder %s27, 0
      %p191 = por %p189, %p190
      %s192 = ssub.s32 %s28, %s40
      %s193 = ssub.s32 %s29, %s36
      %s194 = sor.u32 %s192, %s193
      %p195 = scmp.eq.s32.totalorder %s194, 0
      %s197 = sadd.s32 %s196, 1
      %s198 = scalar_select %p195, %s196, %s197
      %p201 = pneg %p195
      %p202 = scmp.eq.s32.totalorder %s21, 31
      %p203 = por %p201, %p202
      %p204 = scmp.ne.s32.totalorder %s196, %s199
      %p205 = scmp.eq.s32.totalorder %s21, 0
      %p206 = por %p204, %p205
      %p207 = scmp.ne.s32.totalorder %s196, %s199
      %p208 = scmp.eq.s32.totalorder %s26, 31
      %p209 = por %p207, %p208
      %p210 = scmp.ne.s32.totalorder %s199, %s200
      %p211 = scmp.eq.s32.totalorder %s26, 0
      %p212 = por %p210, %p211
      %p213 = scmp.ne.s32.totalorder %s199, %s200
      %p214 = scmp.eq.s32.totalorder %s27, 31
      %p215 = por %p213, %p214
      %p217 = scmp.ne.s32.totalorder %s200, %s216
      %p218 = scmp.eq.s32.totalorder %s27, 0
      %p219 = por %p217, %p218
      %s220 = ssub.s32 %s28, %s40
      %p221 = scmp.eq.s32.totalorder %s220, 0
      %s223 = sadd.s32 %s222, 1
      %s224 = scalar_select %p221, %s222, %s223
      %p227 = pneg %p221
      %p228 = scmp.eq.s32.totalorder %s21, 31
      %p229 = por %p227, %p228
      %p230 = scmp.ne.s32.totalorder %s222, %s225
      %p231 = scmp.eq.s32.totalorder %s21, 0
      %p232 = por %p230, %p231
      %p233 = scmp.ne.s32.totalorder %s222, %s225
      %p234 = scmp.eq.s32.totalorder %s26, 31
      %p235 = por %p233, %p234
      %p236 = scmp.ne.s32.totalorder %s225, %s226
      %p237 = scmp.eq.s32.totalorder %s26, 0
      %p238 = por %p236, %p237
      %p239 = scmp.ne.s32.totalorder %s225, %s226
      %p240 = scmp.eq.s32.totalorder %s27, 31
      %p241 = por %p239, %p240
      %p243 = scmp.ne.s32.totalorder %s226, %s242
      %p244 = scmp.eq.s32.totalorder %s27, 0
      %p245 = por %p243, %p244
      %s246 = ssub.s32 %s28, %s40
      %p247 = scmp.eq.s32.totalorder %s246, 0
      %s249 = sadd.s32 %s248, 1
      %s250 = scalar_select %p247, %s248, %s249
      %p253 = pneg %p247
      %p254 = scmp.eq.s32.totalorder %s21, 31
      %p255 = por %p253, %p254
      %p256 = scmp.ne.s32.totalorder %s248, %s251
      %p257 = scmp.eq.s32.totalorder %s21, 0
      %p258 = por %p256, %p257
      %p259 = scmp.ne.s32.totalorder %s248, %s251
      %p260 = scmp.eq.s32.totalorder %s26, 31
      %p261 = por %p259, %p260
      %p262 = scmp.ne.s32.totalorder %s251, %s252
      %p263 = scmp.eq.s32.totalorder %s26, 0
      %p264 = por %p262, %p263
      %p265 = scmp.ne.s32.totalorder %s251, %s252
      %p266 = scmp.eq.s32.totalorder %s27, 31
      %p267 = por %p265, %p266
      %p269 = scmp.ne.s32.totalorder %s252, %s268
      %p270 = scmp.eq.s32.totalorder %s27, 0
      %p271 = por %p269, %p270
      %p272 = scmp.le.s32.totalorder 1, %s21
      %p273 = scmp.lt.s32.totalorder %s21, 33
      %p274 = pnand %p272, %p273
      %p275 = pneg %p274
      // Predicated region
      $region9: #{tpu_custom_call.1} parent=5 // pred_check
        _
      $region10: #{tpu_custom_call.1} parent=5 // pred_check_branch
        %277 = sbr.rel (%p274) target = $region12
      $region11: #{tpu_custom_call.1} parent=5 // pred_region
        %s278 = ssub.s32 %s21, 1
        // Predicated region
        $region13: #{tpu_custom_call.1} parent=11 // pred_check
          %p279 = pneg %p142
        $region14: #{tpu_custom_call.1} parent=11 // pred_check_branch
          %281 = sbr.rel (%p279) target = $region16
        $region15: #{tpu_custom_call.1} parent=11 // pred_region
          _
        $region16: #{tpu_custom_call.1} parent=11 // pred_fallthru
          _
        // Predicated region
        $region17: #{tpu_custom_call.1} parent=11 // pred_check
          %p282 = pneg %p163
        $region18: #{tpu_custom_call.1} parent=11 // pred_check_branch
          %284 = sbr.rel (%p282) target = $region20
        $region19: #{tpu_custom_call.1} parent=11 // pred_region
          _
        $region20: #{tpu_custom_call.1} parent=11 // pred_fallthru
          _
        // Predicated region
        $region21: #{tpu_custom_call.1} parent=11 // pred_check
          %p285 = pneg %p184
        $region22: #{tpu_custom_call.1} parent=11 // pred_check_branch
          %287 = sbr.rel (%p285) target = $region24
        $region23: #{tpu_custom_call.1} parent=11 // pred_region
          _
        $region24: #{tpu_custom_call.1} parent=11 // pred_fallthru
          _
      $region12: #{tpu_custom_call.1} parent=5 // pred_fallthru
        _
      %p288 = scmp.lt.s32.totalorder %s21, 32
      // Predicated region
      $region25: #{tpu_custom_call.1} parent=5 // pred_check
        %p289 = pneg %p288
      $region26: #{tpu_custom_call.1} parent=5 // pred_check_branch
        %291 = sbr.rel (%p289) target = $region28
      $region27: #{tpu_custom_call.1} parent=5 // pred_region
        // Predicated region
        $region29: #{tpu_custom_call.1} parent=27 // pred_check
          %p292 = pneg %p55
        $region30: #{tpu_custom_call.1} parent=27 // pred_check_branch
          %294 = sbr.rel (%p292) target = $region32
        $region31: #{tpu_custom_call.1} parent=27 // pred_region
          %p295 = scmp.lt.s32.totalorder %s28, 1
          %s296 = scalar_select %p295, %s28, 1
          %p297 = scmp.lt.s32.totalorder %s29, 17
          %s298 = scalar_select %p297, %s29, 17
          %s299 = smul.addr %s298, 41
          %s300 = smul.addr %s296, 738
          %s301 = sadd.s32 %s299, %s300
          %s302 = smul.addr %s301, 4
          %s303 = scalar_lea.vmem %s0, %s302
        $region32: #{tpu_custom_call.1} parent=27 // pred_fallthru
          _
        // Predicated region
        $region33: #{tpu_custom_call.1} parent=27 // pred_check
          %p304 = pneg %p85
        $region34: #{tpu_custom_call.1} parent=27 // pred_check_branch
          %306 = sbr.rel (%p304) target = $region36
        $region35: #{tpu_custom_call.1} parent=27 // pred_region
          %s307 = sadd.s32 %s29, 1
          %p308 = scmp.lt.s32.totalorder %s28, 1
          %s309 = scalar_select %p308, %s28, 1
          %p310 = scmp.lt.s32.totalorder %s307, 17
          %s311 = scalar_select %p310, %s307, 17
          %s312 = smul.addr %s311, 41
          %s313 = smul.addr %s309, 738
          %s314 = sadd.s32 %s312, %s313
          %s315 = smul.addr %s314, 4
          %s316 = scalar_lea.vmem %s1, %s315
          %s317 = sadd.s32 %s29, 1
        $region36: #{tpu_custom_call.1} parent=27 // pred_fallthru
          _
        // Predicated region
        $region37: #{tpu_custom_call.1} parent=27 // pred_check
          %p318 = pneg %p115
        $region38: #{tpu_custom_call.1} parent=27 // pred_check_branch
          %320 = sbr.rel (%p318) target = $region40
        $region39: #{tpu_custom_call.1} parent=27 // pred_region
          %s321 = sadd.s32 %s29, 2
          %p322 = scmp.lt.s32.totalorder %s28, 1
          %s323 = scalar_select %p322, %s28, 1
          %p324 = scmp.lt.s32.totalorder %s321, 17
          %s325 = scalar_select %p324, %s321, 17
          %s326 = smul.addr %s325, 41
          %s327 = smul.addr %s323, 738
          %s328 = sadd.s32 %s326, %s327
          %s329 = smul.addr %s328, 4
          %s330 = scalar_lea.vmem %s2, %s329
          %s331 = sadd.s32 %s29, 2
        $region40: #{tpu_custom_call.1} parent=27 // pred_fallthru
          _
      $region28: #{tpu_custom_call.1} parent=5 // pred_fallthru
        _
      %p332 = scmp.le.s32.totalorder 1, %s21
      %p333 = scmp.lt.s32.totalorder %s21, 33
      %p334 = pnand %p332, %p333
      %p335 = pneg %p334
      // Predicated region
      $region41: #{tpu_custom_call.1} parent=5 // pred_check
        _
      $region42: #{tpu_custom_call.1} parent=5 // pred_check_branch
        %337 = sbr.rel (%p334) target = $region44
      $region43: #{tpu_custom_call.1} parent=5 // pred_region
        %s338 = ssub.s32 %s21, 1
        %p339 = scmp.lt.s32.totalorder %s30, 1
        %s340 = scalar_select %p339, %s30, 1
        %p341 = scmp.lt.s32.totalorder %s31, 17
        %s342 = scalar_select %p341, %s31, 17
        %s343 = smul.addr %s342, 41
        %s344 = smul.addr %s340, 738
        %s345 = sadd.s32 %s343, %s344
        %s346 = smul.addr %s345, 4
        %s347 = scalar_lea.vmem %s0, %s346
        %p348 = pneg %p61
        %p349 = pneg %p58
        %s350 = sadd.s32 %s31, 1
        %p351 = scmp.lt.s32.totalorder %s30, 1
        %s352 = scalar_select %p351, %s30, 1
        %p353 = scmp.lt.s32.totalorder %s350, 17
        %s354 = scalar_select %p353, %s350, 17
        %s355 = smul.addr %s354, 41
        %s356 = smul.addr %s352, 738
        %s357 = sadd.s32 %s355, %s356
        %s358 = smul.addr %s357, 4
        %s359 = scalar_lea.vmem %s1, %s358
        %p360 = pneg %p91
        %p361 = pneg %p88
        %s362 = sadd.s32 %s31, 2
        %p363 = scmp.lt.s32.totalorder %s30, 1
        %s364 = scalar_select %p363, %s30, 1
        %p365 = scmp.lt.s32.totalorder %s362, 17
        %s366 = scalar_select %p365, %s362, 17
        %s367 = smul.addr %s366, 41
        %s368 = smul.addr %s364, 738
        %s369 = sadd.s32 %s367, %s368
        %s370 = smul.addr %s369, 4
        %s371 = scalar_lea.vmem %s2, %s370
        %p372 = pneg %p121
        %p373 = pneg %p118
        %p374 = pneg %p142
        %p375 = pneg %p139
        %p376 = pneg %p163
        %p377 = pneg %p160
        %p378 = pneg %p184
        %p379 = pneg %p181
        %p380 = pneg %p212
        %p381 = pneg %p209
        %p382 = scmp.lt.s32.totalorder %s30, 1
        %s383 = scalar_select %p382, %s30, 1
        %p384 = scmp.lt.s32.totalorder %s31, 15
        %s385 = scalar_select %p384, %s31, 15
        %s386 = smul.addr %s385, 36
        %s387 = smul.addr %s383, 576
        %s388 = sadd.s32 %s386, %s387
        %s389 = smul.addr %s388, 4
        %s390 = scalar_lea.vmem %s6, %s389
        %p391 = pneg %p238
        %p392 = pneg %p235
        %s393 = sand.u32 %s225, 1
        %s394 = scalar_lea.sflag [#allocation3], %s393
        %s395 = sand.u32 %s225, 1
        %s396 = scalar_lea.vmem [#allocation2], %s395
        %p397 = pneg %p264
        %p398 = pneg %p261
        %s399 = sand.u32 %s251, 1
        %s400 = scalar_lea.sflag [#allocation5], %s399
        %s401 = sand.u32 %s251, 1
        %s402 = scalar_lea.vmem [#allocation4], %s401
        %p403 = scmp.lt.s32.totalorder %s30, 1
        %s404 = scalar_select %p403, %s30, 1
        %p405 = scmp.lt.s32.totalorder %s31, 17
        %s406 = scalar_select %p405, %s31, 17
        %s407 = smul.addr %s406, 41
        %s408 = smul.addr %s404, 738
        %s409 = sadd.s32 %s407, %s408
        %s410 = smul.addr %s409, 4
        %s411 = scalar_lea.vmem %s0, %s410
        %s412 = sadd.s32 %s31, 1
        %p413 = scmp.lt.s32.totalorder %s30, 1
        %s414 = scalar_select %p413, %s30, 1
        %p415 = scmp.lt.s32.totalorder %s412, 17
        %s416 = scalar_select %p415, %s412, 17
        %s417 = smul.addr %s416, 41
        %s418 = smul.addr %s414, 738
        %s419 = sadd.s32 %s417, %s418
        %s420 = smul.addr %s419, 4
        %s421 = scalar_lea.vmem %s1, %s420
        %s422 = sadd.s32 %s31, 1
        %s423 = sadd.s32 %s31, 2
        %p424 = scmp.lt.s32.totalorder %s30, 1
        %s425 = scalar_select %p424, %s30, 1
        %p426 = scmp.lt.s32.totalorder %s423, 17
        %s427 = scalar_select %p426, %s423, 17
        %s428 = smul.addr %s427, 41
        %s429 = smul.addr %s425, 738
        %s430 = sadd.s32 %s428, %s429
        %s431 = smul.addr %s430, 4
        %s432 = scalar_lea.vmem %s2, %s431
        %s433 = sadd.s32 %s31, 2
        %p434 = scmp.lt.s32.totalorder %s30, 1
        %s435 = scalar_select %p434, %s30, 1
        %p436 = scmp.lt.s32.totalorder %s31, 15
        %s437 = scalar_select %p436, %s31, 15
        %s438 = smul.addr %s437, 36
        %s439 = smul.addr %s435, 576
        %s440 = sadd.s32 %s438, %s439
        %s441 = smul.addr %s440, 4
        %s442 = scalar_lea.vmem %s6, %s441
        %v444 = vld [vmem:[%s411] sm:$0xf]
        %v445 = vld [vmem:[%s411 + $0x4] sm:$0xf]
        %v446 = vld [vmem:[%s411 + $0x8] sm:$0xf]
        %v447 = vld [vmem:[%s411 + $0xc] sm:$0xf]
        %v448 = vld [vmem:[%s411 + $0x10] sm:$0xf]
        %v449 = vld [vmem:[%s411 + $0x14] sm:$0xf]
        %v450 = vld [vmem:[%s411 + $0x18] sm:$0xf]
        %v451 = vld [vmem:[%s411 + $0x1c] sm:$0xf]
        %v452 = vld [vmem:[%s411 + $0x20] sm:$0xf]
        %v453 = vld [vmem:[%s411 + $0x24] sm:$0xf]
        %v454 = vld [vmem:[%s411 + $0x28] sm:$0xf]
        %v455 = vld [vmem:[%s411 + $0x2c] sm:$0xf]
        %v456 = vld [vmem:[%s411 + $0x30] sm:$0xf]
        %v457 = vld [vmem:[%s411 + $0x34] sm:$0xf]
        %v458 = vld [vmem:[%s411 + $0x38] sm:$0xf]
        %v459 = vld [vmem:[%s411 + $0x3c] sm:$0xf]
        %v460 = vld [vmem:[%s411 + $0x40] sm:$0xf]
        %v461 = vld [vmem:[%s411 + $0x44] sm:$0xf]
        %v462 = vld [vmem:[%s411 + $0x48] sm:$0xf]
        %v463 = vld [vmem:[%s411 + $0x4c] sm:$0xf]
        %v464 = vld [vmem:[%s411 + $0x50] sm:$0xf]
        %v465 = vld [vmem:[%s411 + $0x54] sm:$0xf]
        %v466 = vld [vmem:[%s411 + $0x58] sm:$0xf]
        %v467 = vld [vmem:[%s411 + $0x5c] sm:$0xf]
        %v468 = vld [vmem:[%s411 + $0x60] sm:$0xf]
        %v469 = vld [vmem:[%s411 + $0x64] sm:$0xf]
        %v470 = vld [vmem:[%s411 + $0x68] sm:$0xf]
        %v471 = vld [vmem:[%s411 + $0x6c] sm:$0xf]
        %v472 = vld [vmem:[%s411 + $0x70] sm:$0xf]
        %v473 = vld [vmem:[%s411 + $0x74] sm:$0xf]
        %v474 = vld [vmem:[%s411 + $0x78] sm:$0xf]
        %v475 = vld [vmem:[%s411 + $0x7c] sm:$0xf]
        %v476 = vld [vmem:[%s411 + $0x80] sm:$0xf]
        %v477 = vld [vmem:[%s411 + $0x84] sm:$0xf]
        %v478 = vld [vmem:[%s411 + $0x88] sm:$0xf]
        %v479 = vld [vmem:[%s411 + $0x8c] sm:$0xf]
        %v480 = vld [vmem:[%s3] sm:$0xf]
        %v481 = vld [vmem:[%s411 + $0x90] sm:$0x1]
        %s482 = scalar_lea.vmem %s3, 4
        %v483 = vld [vmem:[%s482] sm:$0xf]
        %v521 = vunpack.c.l.b16 %v444
        %v522 = vunpack.c.l.b16 %v445
        %v523 = vunpack.c.l.b16 %v446
        %v524 = vunpack.c.l.b16 %v447
        %v525 = vunpack.c.l.b16 %v448
        %v526 = vunpack.c.l.b16 %v449
        %v527 = vunpack.c.l.b16 %v450
        %v528 = vunpack.c.l.b16 %v451
        %v529 = vunpack.c.l.b16 %v452
        %v530 = vunpack.c.l.b16 %v453
        %v531 = vunpack.c.l.b16 %v454
        %v532 = vunpack.c.l.b16 %v455
        %v533 = vunpack.c.l.b16 %v456
        %v534 = vunpack.c.l.b16 %v457
        %v535 = vunpack.c.l.b16 %v458
        %v536 = vunpack.c.l.b16 %v459
        %v537 = vunpack.c.l.b16 %v460
        %v538 = vunpack.c.l.b16 %v461
        %v539 = vunpack.c.l.b16 %v462
        %v540 = vunpack.c.l.b16 %v463
        %v541 = vunpack.c.l.b16 %v464
        %v542 = vunpack.c.l.b16 %v465
        %v543 = vunpack.c.l.b16 %v466
        %v544 = vunpack.c.l.b16 %v467
        %v545 = vunpack.c.l.b16 %v468
        %v546 = vunpack.c.l.b16 %v469
        %v547 = vunpack.c.l.b16 %v470
        %v548 = vunpack.c.l.b16 %v471
        %v549 = vunpack.c.l.b16 %v472
        %v550 = vunpack.c.l.b16 %v473
        %v551 = vunpack.c.l.b16 %v474
        %v552 = vunpack.c.l.b16 %v475
        %v553 = vunpack.c.l.b16 %v476
        %v554 = vunpack.c.l.b16 %v477
        %v555 = vunpack.c.l.b16 %v478
        %v556 = vunpack.c.l.b16 %v479
        %v557 = vunpack.c.l.b16 %v481
        %v558 = vpack.c.b16 %v522, %v521
        %v559 = vpack.c.b16 %v524, %v523
        %v560 = vpack.c.b16 %v526, %v525
        %v561 = vpack.c.b16 %v528, %v527
        %v562 = vpack.c.b16 %v530, %v529
        %v563 = vpack.c.b16 %v532, %v531
        %v564 = vpack.c.b16 %v534, %v533
        %v565 = vpack.c.b16 %v536, %v535
        %v566 = vpack.c.b16 %v538, %v537
        %v567 = vpack.c.b16 %v540, %v539
        %v568 = vpack.c.b16 %v542, %v541
        %v569 = vpack.c.b16 %v544, %v543
        %v570 = vpack.c.b16 %v546, %v545
        %v571 = vpack.c.b16 %v548, %v547
        %v572 = vpack.c.b16 %v550, %v549
        %v573 = vpack.c.b16 %v552, %v551
        %v574 = vpack.c.b16 %v554, %v553
        %v575 = vpack.c.b16 %v556, %v555
        %v576 = vpack.c.b16 %v557, %v557
        %vm577 = vsmask.f32 7424
        %v579 = vshrl.u32 %v558, 16
        %v581 = vshll.u32 %v558, 16
        %v583 = vrot.slane %v581, 1
        %v584 = vor.u32 %v579, %v583
        %v586 = vshll.u32 %v559, 16
        %v588 = vrot.slane %v586, 1
        %v589 = vsel %vm577, %v584, %v588
        %v590 = vshrl.u32 %v559, 16
        %v592 = vor.u32 %v590, %v588
        %v594 = vshll.u32 %v560, 16
        %v596 = vrot.slane %v594, 1
        %v597 = vsel %vm577, %v592, %v596
        %v598 = vshrl.u32 %v560, 16
        %v600 = vor.u32 %v598, %v596
        %v602 = vshll.u32 %v561, 16
        %v604 = vrot.slane %v602, 1
        %v605 = vsel %vm577, %v600, %v604
        %v606 = vshrl.u32 %v561, 16
        %v608 = vor.u32 %v606, %v604
        %v610 = vshll.u32 %v562, 16
        %v612 = vrot.slane %v610, 1
        %v613 = vsel %vm577, %v608, %v612
        %v614 = vshrl.u32 %v562, 16
        %v616 = vor.u32 %v614, %v612
        %v618 = vshll.u32 %v563, 16
        %v620 = vrot.slane %v618, 1
        %v621 = vsel %vm577, %v616, %v620
        %v622 = vshrl.u32 %v563, 16
        %v624 = vor.u32 %v622, %v620
        %v626 = vshll.u32 %v564, 16
        %v628 = vrot.slane %v626, 1
        %v629 = vsel %vm577, %v624, %v628
        %v630 = vshrl.u32 %v564, 16
        %v632 = vor.u32 %v630, %v628
        %v634 = vshll.u32 %v565, 16
        %v636 = vrot.slane %v634, 1
        %v637 = vsel %vm577, %v632, %v636
        %v638 = vshrl.u32 %v565, 16
        %v640 = vor.u32 %v638, %v636
        %v642 = vshll.u32 %v566, 16
        %v644 = vrot.slane %v642, 1
        %v645 = vsel %vm577, %v640, %v644
        %v646 = vshrl.u32 %v566, 16
        %v648 = vor.u32 %v646, %v644
        %v650 = vshll.u32 %v567, 16
        %v652 = vrot.slane %v650, 1
        %v653 = vsel %vm577, %v648, %v652
        %v654 = vshrl.u32 %v567, 16
        %v656 = vor.u32 %v654, %v652
        %v658 = vshll.u32 %v568, 16
        %v660 = vrot.slane %v658, 1
        %v661 = vsel %vm577, %v656, %v660
        %v662 = vshrl.u32 %v568, 16
        %v664 = vor.u32 %v662, %v660
        %v666 = vshll.u32 %v569, 16
        %v668 = vrot.slane %v666, 1
        %v669 = vsel %vm577, %v664, %v668
        %v670 = vshrl.u32 %v569, 16
        %v672 = vor.u32 %v670, %v668
        %v674 = vshll.u32 %v570, 16
        %v676 = vrot.slane %v674, 1
        %v677 = vsel %vm577, %v672, %v676
        %v678 = vshrl.u32 %v570, 16
        %v680 = vor.u32 %v678, %v676
        %v682 = vshll.u32 %v571, 16
        %v684 = vrot.slane %v682, 1
        %v685 = vsel %vm577, %v680, %v684
        %v686 = vshrl.u32 %v571, 16
        %v688 = vor.u32 %v686, %v684
        %v690 = vshll.u32 %v572, 16
        %v692 = vrot.slane %v690, 1
        %v693 = vsel %vm577, %v688, %v692
        %v694 = vshrl.u32 %v572, 16
        %v696 = vor.u32 %v694, %v692
        %v698 = vshll.u32 %v573, 16
        %v700 = vrot.slane %v698, 1
        %v701 = vsel %vm577, %v696, %v700
        %v702 = vshrl.u32 %v573, 16
        %v704 = vor.u32 %v702, %v700
        %v706 = vshll.u32 %v574, 16
        %v708 = vrot.slane %v706, 1
        %v709 = vsel %vm577, %v704, %v708
        %v710 = vshrl.u32 %v574, 16
        %v712 = vor.u32 %v710, %v708
        %v714 = vshll.u32 %v575, 16
        %v716 = vrot.slane %v714, 1
        %v717 = vsel %vm577, %v712, %v716
        %v718 = vshrl.u32 %v575, 16
        %v720 = vor.u32 %v718, %v716
        %v722 = vshll.u32 %v576, 16
        %v724 = vrot.slane %v722, 1
        %v725 = vsel %vm577, %v720, %v724
        %vm726 = vcmask 64512
        %v728 = vsel %vm726, %v589, 0
        %v731 = vsel %vm726, %v597, 0
        %v734 = vsel %vm726, %v605, 0
        %v737 = vsel %vm726, %v613, 0
        %v740 = vsel %vm726, %v621, 0
        %v743 = vsel %vm726, %v629, 0
        %v746 = vsel %vm726, %v637, 0
        %v749 = vsel %vm726, %v645, 0
        %v752 = vsel %vm726, %v653, 0
        %v755 = vsel %vm726, %v661, 0
        %v758 = vsel %vm726, %v669, 0
        %v761 = vsel %vm726, %v677, 0
        %v764 = vsel %vm726, %v685, 0
        %v767 = vsel %vm726, %v693, 0
        %v770 = vsel %vm726, %v701, 0
        %v773 = vsel %vm726, %v709, 0
        %v776 = vsel %vm726, %v717, 0
        %v779 = vsel %vm726, %v725, 0
        %vm781 = vcmask 1043456
        %v783 = vsel %vm781, %v483, 0
        %785 = vmatpush.bf16.msra.mxu0 0
        %786 = vmatpush.bf16.msra.mxu0 0
        %787 = vmatpush.bf16.msra.mxu0 0
        %788 = vmatpush.bf16.msra.mxu0 0
        %789 = vmatpush.bf16.msra.mxu0 0
        %790 = vmatpush.bf16.msra.mxu0 0
        %791 = vmatpush.bf16.msra.mxu0 0
        %792 = vmatpush.bf16.msra.mxu0 %v783
        %793 = vmatmul.bf16.gmra.mxu0 %v728
        %v794 = vpop.f32.mrf.mxu0
        %v795 = vadd.f32 0.0, %v794
        %v796 = vpop.f32.mrf.mxu0
        %v797 = vadd.f32 0.0, %v796
        %798 = vmatmul.bf16.gmra.mxu0 %v731
        %v799 = vpop.f32.mrf.mxu0
        %v800 = vadd.f32 0.0, %v799
        %v801 = vpop.f32.mrf.mxu0
        %v802 = vadd.f32 0.0, %v801
        %803 = vmatmul.bf16.gmra.mxu0 %v734
        %v804 = vpop.f32.mrf.mxu0
        %v805 = vadd.f32 0.0, %v804
        %v806 = vpop.f32.mrf.mxu0
        %v807 = vadd.f32 0.0, %v806
        %808 = vmatmul.bf16.gmra.mxu0 %v737
        %v809 = vpop.f32.mrf.mxu0
        %v810 = vadd.f32 0.0, %v809
        %v811 = vpop.f32.mrf.mxu0
        %v812 = vadd.f32 0.0, %v811
        %813 = vmatmul.bf16.gmra.mxu0 %v740
        %v814 = vpop.f32.mrf.mxu0
        %v815 = vadd.f32 0.0, %v814
        %v816 = vpop.f32.mrf.mxu0
        %v817 = vadd.f32 0.0, %v816
        %818 = vmatmul.bf16.gmra.mxu0 %v743
        %v819 = vpop.f32.mrf.mxu0
        %v820 = vadd.f32 0.0, %v819
        %v821 = vpop.f32.mrf.mxu0
        %v822 = vadd.f32 0.0, %v821
        %823 = vmatmul.bf16.gmra.mxu0 %v746
        %v824 = vpop.f32.mrf.mxu0
        %v825 = vadd.f32 0.0, %v824
        %v826 = vpop.f32.mrf.mxu0
        %v827 = vadd.f32 0.0, %v826
        %828 = vmatmul.bf16.gmra.mxu0 %v749
        %v829 = vpop.f32.mrf.mxu0
        %v830 = vadd.f32 0.0, %v829
        %v831 = vpop.f32.mrf.mxu0
        %v832 = vadd.f32 0.0, %v831
        %833 = vmatmul.bf16.gmra.mxu0 %v752
        %v834 = vpop.f32.mrf.mxu0
        %v835 = vadd.f32 0.0, %v834
        %v836 = vpop.f32.mrf.mxu0
        %v837 = vadd.f32 0.0, %v836
        %838 = vmatmul.bf16.gmra.mxu0 %v755
        %v839 = vpop.f32.mrf.mxu0
        %v840 = vadd.f32 0.0, %v839
        %v841 = vpop.f32.mrf.mxu0
        %v842 = vadd.f32 0.0, %v841
        %843 = vmatmul.bf16.gmra.mxu0 %v758
        %v844 = vpop.f32.mrf.mxu0
        %v845 = vadd.f32 0.0, %v844
        %v846 = vpop.f32.mrf.mxu0
        %v847 = vadd.f32 0.0, %v846
        %848 = vmatmul.bf16.gmra.mxu0 %v761
        %v849 = vpop.f32.mrf.mxu0
        %v850 = vadd.f32 0.0, %v849
        %v851 = vpop.f32.mrf.mxu0
        %v852 = vadd.f32 0.0, %v851
        %853 = vmatmul.bf16.gmra.mxu0 %v764
        %v854 = vpop.f32.mrf.mxu0
        %v855 = vadd.f32 0.0, %v854
        %v856 = vpop.f32.mrf.mxu0
        %v857 = vadd.f32 0.0, %v856
        %858 = vmatmul.bf16.gmra.mxu0 %v767
        %v859 = vpop.f32.mrf.mxu0
        %v860 = vadd.f32 0.0, %v859
        %v861 = vpop.f32.mrf.mxu0
        %v862 = vadd.f32 0.0, %v861
        %863 = vmatmul.bf16.gmra.mxu0 %v770
        %v864 = vpop.f32.mrf.mxu0
        %v865 = vadd.f32 0.0, %v864
        %v866 = vpop.f32.mrf.mxu0
        %v867 = vadd.f32 0.0, %v866
        %868 = vmatmul.bf16.gmra.mxu0 %v773
        %v869 = vpop.f32.mrf.mxu0
        %v870 = vadd.f32 0.0, %v869
        %v871 = vpop.f32.mrf.mxu0
        %v872 = vadd.f32 0.0, %v871
        %873 = vmatmul.bf16.gmra.mxu0 %v776
        %v874 = vpop.f32.mrf.mxu0
        %v875 = vadd.f32 0.0, %v874
        %v876 = vpop.f32.mrf.mxu0
        %v877 = vadd.f32 0.0, %v876
        %878 = vmatmul.bf16.gmra.mxu0 %v779
        %v879 = vpop.f32.mrf.mxu0
        %v880 = vadd.f32 0.0, %v879
        %v881 = vpop.f32.mrf.mxu0
        %v882 = vadd.f32 0.0, %v881
        %883 = vdwg.mxu0
        %v884 = vsel %vm726, %v558, 0
        %v886 = vsel %vm726, %v559, 0
        %v888 = vsel %vm726, %v560, 0
        %v890 = vsel %vm726, %v561, 0
        %v892 = vsel %vm726, %v562, 0
        %v894 = vsel %vm726, %v563, 0
        %v896 = vsel %vm726, %v564, 0
        %v898 = vsel %vm726, %v565, 0
        %v900 = vsel %vm726, %v566, 0
        %v902 = vsel %vm726, %v567, 0
        %v904 = vsel %vm726, %v568, 0
        %v906 = vsel %vm726, %v569, 0
        %v908 = vsel %vm726, %v570, 0
        %v910 = vsel %vm726, %v571, 0
        %v912 = vsel %vm726, %v572, 0
        %v914 = vsel %vm726, %v573, 0
        %v916 = vsel %vm726, %v574, 0
        %v918 = vsel %vm726, %v575, 0
        %v921 = vsel %vm781, %v480, 0
        %923 = vmatpush.bf16.msra.mxu0 0
        %924 = vmatpush.bf16.msra.mxu0 0
        %925 = vmatpush.bf16.msra.mxu0 0
        %926 = vmatpush.bf16.msra.mxu0 0
        %927 = vmatpush.bf16.msra.mxu0 0
        %928 = vmatpush.bf16.msra.mxu0 0
        %929 = vmatpush.bf16.msra.mxu0 0
        %930 = vmatpush.bf16.msra.mxu0 %v921
        %931 = vmatmul.bf16.gmra.mxu0 %v884
        %v932 = vpop.f32.mrf.mxu0
        %v933 = vadd.f32 %v795, %v932
        %v934 = vpop.f32.mrf.mxu0
        %v935 = vadd.f32 %v797, %v934
        %936 = vmatmul.bf16.gmra.mxu0 %v886
        %v937 = vpop.f32.mrf.mxu0
        %v938 = vadd.f32 %v800, %v937
        %v939 = vpop.f32.mrf.mxu0
        %v940 = vadd.f32 %v802, %v939
        %941 = vmatmul.bf16.gmra.mxu0 %v888
        %v942 = vpop.f32.mrf.mxu0
        %v943 = vadd.f32 %v805, %v942
        %v944 = vpop.f32.mrf.mxu0
        %v945 = vadd.f32 %v807, %v944
        %946 = vmatmul.bf16.gmra.mxu0 %v890
        %v947 = vpop.f32.mrf.mxu0
        %v948 = vadd.f32 %v810, %v947
        %v949 = vpop.f32.mrf.mxu0
        %v950 = vadd.f32 %v812, %v949
        %951 = vmatmul.bf16.gmra.mxu0 %v892
        %v952 = vpop.f32.mrf.mxu0
        %v953 = vadd.f32 %v815, %v952
        %v954 = vpop.f32.mrf.mxu0
        %v955 = vadd.f32 %v817, %v954
        %956 = vmatmul.bf16.gmra.mxu0 %v894
        %v957 = vpop.f32.mrf.mxu0
        %v958 = vadd.f32 %v820, %v957
        %v959 = vpop.f32.mrf.mxu0
        %v960 = vadd.f32 %v822, %v959
        %961 = vmatmul.bf16.gmra.mxu0 %v896
        %v962 = vpop.f32.mrf.mxu0
        %v963 = vadd.f32 %v825, %v962
        %v964 = vpop.f32.mrf.mxu0
        %v965 = vadd.f32 %v827, %v964
        %966 = vmatmul.bf16.gmra.mxu0 %v898
        %v967 = vpop.f32.mrf.mxu0
        %v968 = vadd.f32 %v830, %v967
        %v969 = vpop.f32.mrf.mxu0
        %v970 = vadd.f32 %v832, %v969
        %971 = vmatmul.bf16.gmra.mxu0 %v900
        %v972 = vpop.f32.mrf.mxu0
        %v973 = vadd.f32 %v835, %v972
        %v974 = vpop.f32.mrf.mxu0
        %v975 = vadd.f32 %v837, %v974
        %976 = vmatmul.bf16.gmra.mxu0 %v902
        %v977 = vpop.f32.mrf.mxu0
        %v978 = vadd.f32 %v840, %v977
        %v979 = vpop.f32.mrf.mxu0
        %v980 = vadd.f32 %v842, %v979
        %981 = vmatmul.bf16.gmra.mxu0 %v904
        %v982 = vpop.f32.mrf.mxu0
        %v983 = vadd.f32 %v845, %v982
        %v984 = vpop.f32.mrf.mxu0
        %v985 = vadd.f32 %v847, %v984
        %986 = vmatmul.bf16.gmra.mxu0 %v906
        %v987 = vpop.f32.mrf.mxu0
        %v988 = vadd.f32 %v850, %v987
        %v989 = vpop.f32.mrf.mxu0
        %v990 = vadd.f32 %v852, %v989
        %991 = vmatmul.bf16.gmra.mxu0 %v908
        %v992 = vpop.f32.mrf.mxu0
        %v993 = vadd.f32 %v855, %v992
        %v994 = vpop.f32.mrf.mxu0
        %v995 = vadd.f32 %v857, %v994
        %996 = vmatmul.bf16.gmra.mxu0 %v910
        %v997 = vpop.f32.mrf.mxu0
        %v998 = vadd.f32 %v860, %v997
        %v999 = vpop.f32.mrf.mxu0
        %v1000 = vadd.f32 %v862, %v999
        %1001 = vmatmul.bf16.gmra.mxu0 %v912
        %v1002 = vpop.f32.mrf.mxu0
        %v1003 = vadd.f32 %v865, %v1002
        %v1004 = vpop.f32.mrf.mxu0
        %v1005 = vadd.f32 %v867, %v1004
        %1006 = vmatmul.bf16.gmra.mxu0 %v914
        %v1007 = vpop.f32.mrf.mxu0
        %v1008 = vadd.f32 %v870, %v1007
        %v1009 = vpop.f32.mrf.mxu0
        %v1010 = vadd.f32 %v872, %v1009
        %1011 = vmatmul.bf16.gmra.mxu0 %v916
        %v1012 = vpop.f32.mrf.mxu0
        %v1013 = vadd.f32 %v875, %v1012
        %v1014 = vpop.f32.mrf.mxu0
        %v1015 = vadd.f32 %v877, %v1014
        %1016 = vmatmul.bf16.gmra.mxu0 %v918
        %v1017 = vpop.f32.mrf.mxu0
        %v1018 = vadd.f32 %v880, %v1017
        %v1019 = vpop.f32.mrf.mxu0
        %v1020 = vadd.f32 %v882, %v1019
        %1021 = vdwg.mxu0
        %v1022 = vld [vmem:[%s411] sm:$0xe]
        %s1023 = scalar_lea.vmem %s3, 8
        %v1024 = vld [vmem:[%s1023] sm:$0xf]
        %v1026 = vunpack.c.l.b16 %v1022
        %v1027 = vpack.c.b16 %v522, %v1026
        %vm1028 = vcmask 1046528
        %v1029 = vrot.slane %v1027, 1
        %v1030 = vrot.slane %v559, 1
        %v1031 = vsel %vm1028, %v1029, %v1030
        %v1032 = vrot.slane %v560, 1
        %v1033 = vsel %vm1028, %v1030, %v1032
        %v1034 = vrot.slane %v561, 1
        %v1035 = vsel %vm1028, %v1032, %v1034
        %v1036 = vrot.slane %v562, 1
        %v1037 = vsel %vm1028, %v1034, %v1036
        %v1038 = vrot.slane %v563, 1
        %v1039 = vsel %vm1028, %v1036, %v1038
        %v1040 = vrot.slane %v564, 1
        %v1041 = vsel %vm1028, %v1038, %v1040
        %v1042 = vrot.slane %v565, 1
        %v1043 = vsel %vm1028, %v1040, %v1042
        %v1044 = vrot.slane %v566, 1
        %v1045 = vsel %vm1028, %v1042, %v1044
        %v1046 = vrot.slane %v567, 1
        %v1047 = vsel %vm1028, %v1044, %v1046
        %v1048 = vrot.slane %v568, 1
        %v1049 = vsel %vm1028, %v1046, %v1048
        %v1050 = vrot.slane %v569, 1
        %v1051 = vsel %vm1028, %v1048, %v1050
        %v1052 = vrot.slane %v570, 1
        %v1053 = vsel %vm1028, %v1050, %v1052
        %v1054 = vrot.slane %v571, 1
        %v1055 = vsel %vm1028, %v1052, %v1054
        %v1056 = vrot.slane %v572, 1
        %v1057 = vsel %vm1028, %v1054, %v1056
        %v1058 = vrot.slane %v573, 1
        %v1059 = vsel %vm1028, %v1056, %v1058
        %v1060 = vrot.slane %v574, 1
        %v1061 = vsel %vm1028, %v1058, %v1060
        %v1062 = vrot.slane %v575, 1
        %v1063 = vsel %vm1028, %v1060, %v1062
        %v1064 = vrot.slane %v576, 1
        %v1065 = vsel %vm1028, %v1062, %v1064
        %v1067 = vsel %vm726, %v1031, 0
        %v1070 = vsel %vm726, %v1033, 0
        %v1073 = vsel %vm726, %v1035, 0
        %v1076 = vsel %vm726, %v1037, 0
        %v1079 = vsel %vm726, %v1039, 0
        %v1082 = vsel %vm726, %v1041, 0
        %v1085 = vsel %vm726, %v1043, 0
        %v1088 = vsel %vm726, %v1045, 0
        %v1091 = vsel %vm726, %v1047, 0
        %v1094 = vsel %vm726, %v1049, 0
        %v1097 = vsel %vm726, %v1051, 0
        %v1100 = vsel %vm726, %v1053, 0
        %v1103 = vsel %vm726, %v1055, 0
        %v1106 = vsel %vm726, %v1057, 0
        %v1109 = vsel %vm726, %v1059, 0
        %v1112 = vsel %vm726, %v1061, 0
        %v1115 = vsel %vm726, %v1063, 0
        %v1118 = vsel %vm726, %v1065, 0
        %v1121 = vsel %vm781, %v1024, 0
        %1123 = vmatpush.bf16.msra.mxu0 0
        %1124 = vmatpush.bf16.msra.mxu0 0
        %1125 = vmatpush.bf16.msra.mxu0 0
        %1126 = vmatpush.bf16.msra.mxu0 0
        %1127 = vmatpush.bf16.msra.mxu0 0
        %1128 = vmatpush.bf16.msra.mxu0 0
        %1129 = vmatpush.bf16.msra.mxu0 0
        %1130 = vmatpush.bf16.msra.mxu0 %v1121
        %1131 = vmatmul.bf16.gmra.mxu0 %v1067
        %v1132 = vpop.f32.mrf.mxu0
        %v1133 = vadd.f32 0.0, %v1132
        %v1134 = vpop.f32.mrf.mxu0
        %v1135 = vadd.f32 0.0, %v1134
        %1136 = vmatmul.bf16.gmra.mxu0 %v1070
        %v1137 = vpop.f32.mrf.mxu0
        %v1138 = vadd.f32 0.0, %v1137
        %v1139 = vpop.f32.mrf.mxu0
        %v1140 = vadd.f32 0.0, %v1139
        %1141 = vmatmul.bf16.gmra.mxu0 %v1073
        %v1142 = vpop.f32.mrf.mxu0
        %v1143 = vadd.f32 0.0, %v1142
        %v1144 = vpop.f32.mrf.mxu0
        %v1145 = vadd.f32 0.0, %v1144
        %1146 = vmatmul.bf16.gmra.mxu0 %v1076
        %v1147 = vpop.f32.mrf.mxu0
        %v1148 = vadd.f32 0.0, %v1147
        %v1149 = vpop.f32.mrf.mxu0
        %v1150 = vadd.f32 0.0, %v1149
        %1151 = vmatmul.bf16.gmra.mxu0 %v1079
        %v1152 = vpop.f32.mrf.mxu0
        %v1153 = vadd.f32 0.0, %v1152
        %v1154 = vpop.f32.mrf.mxu0
        %v1155 = vadd.f32 0.0, %v1154
        %1156 = vmatmul.bf16.gmra.mxu0 %v1082
        %v1157 = vpop.f32.mrf.mxu0
        %v1158 = vadd.f32 0.0, %v1157
        %v1159 = vpop.f32.mrf.mxu0
        %v1160 = vadd.f32 0.0, %v1159
        %1161 = vmatmul.bf16.gmra.mxu0 %v1085
        %v1162 = vpop.f32.mrf.mxu0
        %v1163 = vadd.f32 0.0, %v1162
        %v1164 = vpop.f32.mrf.mxu0
        %v1165 = vadd.f32 0.0, %v1164
        %1166 = vmatmul.bf16.gmra.mxu0 %v1088
        %v1167 = vpop.f32.mrf.mxu0
        %v1168 = vadd.f32 0.0, %v1167
        %v1169 = vpop.f32.mrf.mxu0
        %v1170 = vadd.f32 0.0, %v1169
        %1171 = vmatmul.bf16.gmra.mxu0 %v1091
        %v1172 = vpop.f32.mrf.mxu0
        %v1173 = vadd.f32 0.0, %v1172
        %v1174 = vpop.f32.mrf.mxu0
        %v1175 = vadd.f32 0.0, %v1174
        %1176 = vmatmul.bf16.gmra.mxu0 %v1094
        %v1177 = vpop.f32.mrf.mxu0
        %v1178 = vadd.f32 0.0, %v1177
        %v1179 = vpop.f32.mrf.mxu0
        %v1180 = vadd.f32 0.0, %v1179
        %1181 = vmatmul.bf16.gmra.mxu0 %v1097
        %v1182 = vpop.f32.mrf.mxu0
        %v1183 = vadd.f32 0.0, %v1182
        %v1184 = vpop.f32.mrf.mxu0
        %v1185 = vadd.f32 0.0, %v1184
        %1186 = vmatmul.bf16.gmra.mxu0 %v1100
        %v1187 = vpop.f32.mrf.mxu0
        %v1188 = vadd.f32 0.0, %v1187
        %v1189 = vpop.f32.mrf.mxu0
        %v1190 = vadd.f32 0.0, %v1189
        %1191 = vmatmul.bf16.gmra.mxu0 %v1103
        %v1192 = vpop.f32.mrf.mxu0
        %v1193 = vadd.f32 0.0, %v1192
        %v1194 = vpop.f32.mrf.mxu0
        %v1195 = vadd.f32 0.0, %v1194
        %1196 = vmatmul.bf16.gmra.mxu0 %v1106
        %v1197 = vpop.f32.mrf.mxu0
        %v1198 = vadd.f32 0.0, %v1197
        %v1199 = vpop.f32.mrf.mxu0
        %v1200 = vadd.f32 0.0, %v1199
        %1201 = vmatmul.bf16.gmra.mxu0 %v1109
        %v1202 = vpop.f32.mrf.mxu0
        %v1203 = vadd.f32 0.0, %v1202
        %v1204 = vpop.f32.mrf.mxu0
        %v1205 = vadd.f32 0.0, %v1204
        %1206 = vmatmul.bf16.gmra.mxu0 %v1112
        %v1207 = vpop.f32.mrf.mxu0
        %v1208 = vadd.f32 0.0, %v1207
        %v1209 = vpop.f32.mrf.mxu0
        %v1210 = vadd.f32 0.0, %v1209
        %1211 = vmatmul.bf16.gmra.mxu0 %v1115
        %v1212 = vpop.f32.mrf.mxu0
        %v1213 = vadd.f32 0.0, %v1212
        %v1214 = vpop.f32.mrf.mxu0
        %v1215 = vadd.f32 0.0, %v1214
        %1216 = vmatmul.bf16.gmra.mxu0 %v1118
        %v1217 = vpop.f32.mrf.mxu0
        %v1218 = vadd.f32 0.0, %v1217
        %v1219 = vpop.f32.mrf.mxu0
        %v1220 = vadd.f32 0.0, %v1219
        %1221 = vdwg.mxu0
        %v1222 = vadd.f32 %v933, %v1133
        %v1223 = vadd.f32 %v935, %v1135
        %v1224 = vadd.f32 %v938, %v1138
        %v1225 = vadd.f32 %v940, %v1140
        %v1226 = vadd.f32 %v943, %v1143
        %v1227 = vadd.f32 %v945, %v1145
        %v1228 = vadd.f32 %v948, %v1148
        %v1229 = vadd.f32 %v950, %v1150
        %v1230 = vadd.f32 %v953, %v1153
        %v1231 = vadd.f32 %v955, %v1155
        %v1232 = vadd.f32 %v958, %v1158
        %v1233 = vadd.f32 %v960, %v1160
        %v1234 = vadd.f32 %v963, %v1163
        %v1235 = vadd.f32 %v965, %v1165
        %v1236 = vadd.f32 %v968, %v1168
        %v1237 = vadd.f32 %v970, %v1170
        %v1238 = vadd.f32 %v973, %v1173
        %v1239 = vadd.f32 %v975, %v1175
        %v1240 = vadd.f32 %v978, %v1178
        %v1241 = vadd.f32 %v980, %v1180
        %v1242 = vadd.f32 %v983, %v1183
        %v1243 = vadd.f32 %v985, %v1185
        %v1244 = vadd.f32 %v988, %v1188
        %v1245 = vadd.f32 %v990, %v1190
        %v1246 = vadd.f32 %v993, %v1193
        %v1247 = vadd.f32 %v995, %v1195
        %v1248 = vadd.f32 %v998, %v1198
        %v1249 = vadd.f32 %v1000, %v1200
        %v1250 = vadd.f32 %v1003, %v1203
        %v1251 = vadd.f32 %v1005, %v1205
        %v1252 = vadd.f32 %v1008, %v1208
        %v1253 = vadd.f32 %v1010, %v1210
        %v1254 = vadd.f32 %v1013, %v1213
        %v1255 = vadd.f32 %v1015, %v1215
        %v1256 = vadd.f32 %v1018, %v1218
        %v1257 = vadd.f32 %v1020, %v1220
        %v1258 = vld [vmem:[%s411 + $0x8] sm:$0xe]
        %v1259 = vld [vmem:[%s411 + $0xc] sm:$0xf]
        %v1260 = vld [vmem:[%s411 + $0x10] sm:$0xf]
        %v1261 = vld [vmem:[%s411 + $0x14] sm:$0xf]
        %v1262 = vld [vmem:[%s411 + $0x18] sm:$0xf]
        %v1263 = vld [vmem:[%s411 + $0x1c] sm:$0xf]
        %v1264 = vld [vmem:[%s411 + $0x20] sm:$0xf]
        %v1265 = vld [vmem:[%s411 + $0x24] sm:$0xf]
        %v1266 = vld [vmem:[%s411 + $0x28] sm:$0xf]
        %v1267 = vld [vmem:[%s411 + $0x2c] sm:$0xf]
        %v1268 = vld [vmem:[%s411 + $0x30] sm:$0xf]
        %v1269 = vld [vmem:[%s411 + $0x34] sm:$0xf]
        %v1270 = vld [vmem:[%s411 + $0x38] sm:$0xf]
        %v1271 = vld [vmem:[%s411 + $0x3c] sm:$0xf]
        %v1272 = vld [vmem:[%s411 + $0x40] sm:$0xf]
        %v1273 = vld [vmem:[%s411 + $0x44] sm:$0xf]
        %v1274 = vld [vmem:[%s411 + $0x48] sm:$0xf]
        %v1275 = vld [vmem:[%s411 + $0x4c] sm:$0xf]
        %v1276 = vld [vmem:[%s411 + $0x50] sm:$0xf]
        %v1277 = vld [vmem:[%s411 + $0x54] sm:$0xf]
        %v1278 = vld [vmem:[%s411 + $0x58] sm:$0xf]
        %v1279 = vld [vmem:[%s411 + $0x5c] sm:$0xf]
        %v1280 = vld [vmem:[%s411 + $0x60] sm:$0xf]
        %v1281 = vld [vmem:[%s411 + $0x64] sm:$0xf]
        %v1282 = vld [vmem:[%s411 + $0x68] sm:$0xf]
        %v1283 = vld [vmem:[%s411 + $0x6c] sm:$0xf]
        %v1284 = vld [vmem:[%s411 + $0x70] sm:$0xf]
        %v1285 = vld [vmem:[%s411 + $0x74] sm:$0xf]
        %v1286 = vld [vmem:[%s411 + $0x78] sm:$0xf]
        %v1287 = vld [vmem:[%s411 + $0x7c] sm:$0xf]
        %v1288 = vld [vmem:[%s411 + $0x80] sm:$0xf]
        %v1289 = vld [vmem:[%s411 + $0x84] sm:$0xf]
        %v1290 = vld [vmem:[%s411 + $0x88] sm:$0xf]
        %v1291 = vld [vmem:[%s411 + $0x8c] sm:$0xf]
        %v1292 = vld [vmem:[%s411 + $0x90] sm:$0xf]
        %v1293 = vld [vmem:[%s411 + $0x94] sm:$0xf]
        %v1294 = vld [vmem:[%s411 + $0x98] sm:$0x1]
        %s1295 = scalar_lea.vmem %s3, 12
        %v1296 = vld [vmem:[%s1295] sm:$0xf]
        %v1334 = vunpack.c.l.b16 %v1258
        %v1335 = vunpack.c.l.b16 %v1259
        %v1336 = vunpack.c.l.b16 %v1260
        %v1337 = vunpack.c.l.b16 %v1261
        %v1338 = vunpack.c.l.b16 %v1262
        %v1339 = vunpack.c.l.b16 %v1263
        %v1340 = vunpack.c.l.b16 %v1264
        %v1341 = vunpack.c.l.b16 %v1265
        %v1342 = vunpack.c.l.b16 %v1266
        %v1343 = vunpack.c.l.b16 %v1267
        %v1344 = vunpack.c.l.b16 %v1268
        %v1345 = vunpack.c.l.b16 %v1269
        %v1346 = vunpack.c.l.b16 %v1270
        %v1347 = vunpack.c.l.b16 %v1271
        %v1348 = vunpack.c.l.b16 %v1272
        %v1349 = vunpack.c.l.b16 %v1273
        %v1350 = vunpack.c.l.b16 %v1274
        %v1351 = vunpack.c.l.b16 %v1275
        %v1352 = vunpack.c.l.b16 %v1276
        %v1353 = vunpack.c.l.b16 %v1277
        %v1354 = vunpack.c.l.b16 %v1278
        %v1355 = vunpack.c.l.b16 %v1279
        %v1356 = vunpack.c.l.b16 %v1280
        %v1357 = vunpack.c.l.b16 %v1281
        %v1358 = vunpack.c.l.b16 %v1282
        %v1359 = vunpack.c.l.b16 %v1283
        %v1360 = vunpack.c.l.b16 %v1284
        %v1361 = vunpack.c.l.b16 %v1285
        %v1362 = vunpack.c.l.b16 %v1286
        %v1363 = vunpack.c.l.b16 %v1287
        %v1364 = vunpack.c.l.b16 %v1288
        %v1365 = vunpack.c.l.b16 %v1289
        %v1366 = vunpack.c.l.b16 %v1290
        %v1367 = vunpack.c.l.b16 %v1291
        %v1368 = vunpack.c.l.b16 %v1292
        %v1369 = vunpack.c.l.b16 %v1293
        %v1370 = vunpack.c.l.b16 %v1294
        %v1371 = vpack.c.b16 %v1335, %v1334
        %v1372 = vpack.c.b16 %v1337, %v1336
        %v1373 = vpack.c.b16 %v1339, %v1338
        %v1374 = vpack.c.b16 %v1341, %v1340
        %v1375 = vpack.c.b16 %v1343, %v1342
        %v1376 = vpack.c.b16 %v1345, %v1344
        %v1377 = vpack.c.b16 %v1347, %v1346
        %v1378 = vpack.c.b16 %v1349, %v1348
        %v1379 = vpack.c.b16 %v1351, %v1350
        %v1380 = vpack.c.b16 %v1353, %v1352
        %v1381 = vpack.c.b16 %v1355, %v1354
        %v1382 = vpack.c.b16 %v1357, %v1356
        %v1383 = vpack.c.b16 %v1359, %v1358
        %v1384 = vpack.c.b16 %v1361, %v1360
        %v1385 = vpack.c.b16 %v1363, %v1362
        %v1386 = vpack.c.b16 %v1365, %v1364
        %v1387 = vpack.c.b16 %v1367, %v1366
        %v1388 = vpack.c.b16 %v1369, %v1368
        %v1389 = vpack.c.b16 %v1370, %v1370
        %v1390 = vrot.slane %v1371, 1
        %v1391 = vrot.slane %v1372, 1
        %v1392 = vsel %vm1028, %v1390, %v1391
        %v1393 = vrot.slane %v1373, 1
        %v1394 = vsel %vm1028, %v1391, %v1393
        %v1395 = vrot.slane %v1374, 1
        %v1396 = vsel %vm1028, %v1393, %v1395
        %v1397 = vrot.slane %v1375, 1
        %v1398 = vsel %vm1028, %v1395, %v1397
        %v1399 = vrot.slane %v1376, 1
        %v1400 = vsel %vm1028, %v1397, %v1399
        %v1401 = vrot.slane %v1377, 1
        %v1402 = vsel %vm1028, %v1399, %v1401
        %v1403 = vrot.slane %v1378, 1
        %v1404 = vsel %vm1028, %v1401, %v1403
        %v1405 = vrot.slane %v1379, 1
        %v1406 = vsel %vm1028, %v1403, %v1405
        %v1407 = vrot.slane %v1380, 1
        %v1408 = vsel %vm1028, %v1405, %v1407
        %v1409 = vrot.slane %v1381, 1
        %v1410 = vsel %vm1028, %v1407, %v1409
        %v1411 = vrot.slane %v1382, 1
        %v1412 = vsel %vm1028, %v1409, %v1411
        %v1413 = vrot.slane %v1383, 1
        %v1414 = vsel %vm1028, %v1411, %v1413
        %v1415 = vrot.slane %v1384, 1
        %v1416 = vsel %vm1028, %v1413, %v1415
        %v1417 = vrot.slane %v1385, 1
        %v1418 = vsel %vm1028, %v1415, %v1417
        %v1419 = vrot.slane %v1386, 1
        %v1420 = vsel %vm1028, %v1417, %v1419
        %v1421 = vrot.slane %v1387, 1
        %v1422 = vsel %vm1028, %v1419, %v1421
        %v1423 = vrot.slane %v1388, 1
        %v1424 = vsel %vm1028, %v1421, %v1423
        %v1425 = vrot.slane %v1389, 1
        %v1426 = vsel %vm1028, %v1423, %v1425
        %v1428 = vsel %vm726, %v1392, 0
        %v1431 = vsel %vm726, %v1394, 0
        %v1434 = vsel %vm726, %v1396, 0
        %v1437 = vsel %vm726, %v1398, 0
        %v1440 = vsel %vm726, %v1400, 0
        %v1443 = vsel %vm726, %v1402, 0
        %v1446 = vsel %vm726, %v1404, 0
        %v1449 = vsel %vm726, %v1406, 0
        %v1452 = vsel %vm726, %v1408, 0
        %v1455 = vsel %vm726, %v1410, 0
        %v1458 = vsel %vm726, %v1412, 0
        %v1461 = vsel %vm726, %v1414, 0
        %v1464 = vsel %vm726, %v1416, 0
        %v1467 = vsel %vm726, %v1418, 0
        %v1470 = vsel %vm726, %v1420, 0
        %v1473 = vsel %vm726, %v1422, 0
        %v1476 = vsel %vm726, %v1424, 0
        %v1479 = vsel %vm726, %v1426, 0
        %v1482 = vsel %vm781, %v1296, 0
        %1484 = vmatpush.bf16.msra.mxu0 0
        %1485 = vmatpush.bf16.msra.mxu0 0
        %1486 = vmatpush.bf16.msra.mxu0 0
        %1487 = vmatpush.bf16.msra.mxu0 0
        %1488 = vmatpush.bf16.msra.mxu0 0
        %1489 = vmatpush.bf16.msra.mxu0 0
        %1490 = vmatpush.bf16.msra.mxu0 0
        %1491 = vmatpush.bf16.msra.mxu0 %v1482
        %1492 = vmatmul.bf16.gmra.mxu0 %v1428
        %v1493 = vpop.f32.mrf.mxu0
        %v1494 = vadd.f32 0.0, %v1493
        %v1495 = vpop.f32.mrf.mxu0
        %v1496 = vadd.f32 0.0, %v1495
        %1497 = vmatmul.bf16.gmra.mxu0 %v1431
        %v1498 = vpop.f32.mrf.mxu0
        %v1499 = vadd.f32 0.0, %v1498
        %v1500 = vpop.f32.mrf.mxu0
        %v1501 = vadd.f32 0.0, %v1500
        %1502 = vmatmul.bf16.gmra.mxu0 %v1434
        %v1503 = vpop.f32.mrf.mxu0
        %v1504 = vadd.f32 0.0, %v1503
        %v1505 = vpop.f32.mrf.mxu0
        %v1506 = vadd.f32 0.0, %v1505
        %1507 = vmatmul.bf16.gmra.mxu0 %v1437
        %v1508 = vpop.f32.mrf.mxu0
        %v1509 = vadd.f32 0.0, %v1508
        %v1510 = vpop.f32.mrf.mxu0
        %v1511 = vadd.f32 0.0, %v1510
        %1512 = vmatmul.bf16.gmra.mxu0 %v1440
        %v1513 = vpop.f32.mrf.mxu0
        %v1514 = vadd.f32 0.0, %v1513
        %v1515 = vpop.f32.mrf.mxu0
        %v1516 = vadd.f32 0.0, %v1515
        %1517 = vmatmul.bf16.gmra.mxu0 %v1443
        %v1518 = vpop.f32.mrf.mxu0
        %v1519 = vadd.f32 0.0, %v1518
        %v1520 = vpop.f32.mrf.mxu0
        %v1521 = vadd.f32 0.0, %v1520
        %1522 = vmatmul.bf16.gmra.mxu0 %v1446
        %v1523 = vpop.f32.mrf.mxu0
        %v1524 = vadd.f32 0.0, %v1523
        %v1525 = vpop.f32.mrf.mxu0
        %v1526 = vadd.f32 0.0, %v1525
        %1527 = vmatmul.bf16.gmra.mxu0 %v1449
        %v1528 = vpop.f32.mrf.mxu0
        %v1529 = vadd.f32 0.0, %v1528
        %v1530 = vpop.f32.mrf.mxu0
        %v1531 = vadd.f32 0.0, %v1530
        %1532 = vmatmul.bf16.gmra.mxu0 %v1452
        %v1533 = vpop.f32.mrf.mxu0
        %v1534 = vadd.f32 0.0, %v1533
        %v1535 = vpop.f32.mrf.mxu0
        %v1536 = vadd.f32 0.0, %v1535
        %1537 = vmatmul.bf16.gmra.mxu0 %v1455
        %v1538 = vpop.f32.mrf.mxu0
        %v1539 = vadd.f32 0.0, %v1538
        %v1540 = vpop.f32.mrf.mxu0
        %v1541 = vadd.f32 0.0, %v1540
        %1542 = vmatmul.bf16.gmra.mxu0 %v1458
        %v1543 = vpop.f32.mrf.mxu0
        %v1544 = vadd.f32 0.0, %v1543
        %v1545 = vpop.f32.mrf.mxu0
        %v1546 = vadd.f32 0.0, %v1545
        %1547 = vmatmul.bf16.gmra.mxu0 %v1461
        %v1548 = vpop.f32.mrf.mxu0
        %v1549 = vadd.f32 0.0, %v1548
        %v1550 = vpop.f32.mrf.mxu0
        %v1551 = vadd.f32 0.0, %v1550
        %1552 = vmatmul.bf16.gmra.mxu0 %v1464
        %v1553 = vpop.f32.mrf.mxu0
        %v1554 = vadd.f32 0.0, %v1553
        %v1555 = vpop.f32.mrf.mxu0
        %v1556 = vadd.f32 0.0, %v1555
        %1557 = vmatmul.bf16.gmra.mxu0 %v1467
        %v1558 = vpop.f32.mrf.mxu0
        %v1559 = vadd.f32 0.0, %v1558
        %v1560 = vpop.f32.mrf.mxu0
        %v1561 = vadd.f32 0.0, %v1560
        %1562 = vmatmul.bf16.gmra.mxu0 %v1470
        %v1563 = vpop.f32.mrf.mxu0
        %v1564 = vadd.f32 0.0, %v1563
        %v1565 = vpop.f32.mrf.mxu0
        %v1566 = vadd.f32 0.0, %v1565
        %1567 = vmatmul.bf16.gmra.mxu0 %v1473
        %v1568 = vpop.f32.mrf.mxu0
        %v1569 = vadd.f32 0.0, %v1568
        %v1570 = vpop.f32.mrf.mxu0
        %v1571 = vadd.f32 0.0, %v1570
        %1572 = vmatmul.bf16.gmra.mxu0 %v1476
        %v1573 = vpop.f32.mrf.mxu0
        %v1574 = vadd.f32 0.0, %v1573
        %v1575 = vpop.f32.mrf.mxu0
        %v1576 = vadd.f32 0.0, %v1575
        %1577 = vmatmul.bf16.gmra.mxu0 %v1479
        %v1578 = vpop.f32.mrf.mxu0
        %v1579 = vadd.f32 0.0, %v1578
        %v1580 = vpop.f32.mrf.mxu0
        %v1581 = vadd.f32 0.0, %v1580
        %1582 = vdwg.mxu0
        %v1583 = vadd.f32 %v1222, %v1494
        %v1584 = vadd.f32 %v1223, %v1496
        %v1585 = vadd.f32 %v1224, %v1499
        %v1586 = vadd.f32 %v1225, %v1501
        %v1587 = vadd.f32 %v1226, %v1504
        %v1588 = vadd.f32 %v1227, %v1506
        %v1589 = vadd.f32 %v1228, %v1509
        %v1590 = vadd.f32 %v1229, %v1511
        %v1591 = vadd.f32 %v1230, %v1514
        %v1592 = vadd.f32 %v1231, %v1516
        %v1593 = vadd.f32 %v1232, %v1519
        %v1594 = vadd.f32 %v1233, %v1521
        %v1595 = vadd.f32 %v1234, %v1524
        %v1596 = vadd.f32 %v1235, %v1526
        %v1597 = vadd.f32 %v1236, %v1529
        %v1598 = vadd.f32 %v1237, %v1531
        %v1599 = vadd.f32 %v1238, %v1534
        %v1600 = vadd.f32 %v1239, %v1536
        %v1601 = vadd.f32 %v1240, %v1539
        %v1602 = vadd.f32 %v1241, %v1541
        %v1603 = vadd.f32 %v1242, %v1544
        %v1604 = vadd.f32 %v1243, %v1546
        %v1605 = vadd.f32 %v1244, %v1549
        %v1606 = vadd.f32 %v1245, %v1551
        %v1607 = vadd.f32 %v1246, %v1554
        %v1608 = vadd.f32 %v1247, %v1556
        %v1609 = vadd.f32 %v1248, %v1559
        %v1610 = vadd.f32 %v1249, %v1561
        %v1611 = vadd.f32 %v1250, %v1564
        %v1612 = vadd.f32 %v1251, %v1566
        %v1613 = vadd.f32 %v1252, %v1569
        %v1614 = vadd.f32 %v1253, %v1571
        %v1615 = vadd.f32 %v1254, %v1574
        %v1616 = vadd.f32 %v1255, %v1576
        %v1617 = vadd.f32 %v1256, %v1579
        %v1618 = vadd.f32 %v1257, %v1581
        %v1619 = vld [vmem:[%s411 + $0x98] sm:$0x3]
        %s1620 = scalar_lea.vmem %s3, 16
        %v1621 = vld [vmem:[%s1620] sm:$0xf]
        %v1623 = vunpack.c.l.b16 %v1619
        %v1624 = vpack.c.b16 %v1623, %v1623
        %vm1625 = vsmask.f32 6400
        %v1627 = vshrl.u32 %v1371, 16
        %v1629 = vrot.slane %v1627, 1
        %v1630 = vshll.u32 %v1371, 16
        %v1632 = vrot.slane %v1630, 2
        %v1633 = vor.u32 %v1629, %v1632
        %v1635 = vshrl.u32 %v1372, 16
        %v1637 = vrot.slane %v1635, 1
        %v1638 = vshll.u32 %v1372, 16
        %v1640 = vrot.slane %v1638, 2
        %v1641 = vor.u32 %v1637, %v1640
        %v1642 = vsel %vm1625, %v1633, %v1641
        %v1644 = vshrl.u32 %v1373, 16
        %v1646 = vrot.slane %v1644, 1
        %v1647 = vshll.u32 %v1373, 16
        %v1649 = vrot.slane %v1647, 2
        %v1650 = vor.u32 %v1646, %v1649
        %v1651 = vsel %vm1625, %v1641, %v1650
        %v1653 = vshrl.u32 %v1374, 16
        %v1655 = vrot.slane %v1653, 1
        %v1656 = vshll.u32 %v1374, 16
        %v1658 = vrot.slane %v1656, 2
        %v1659 = vor.u32 %v1655, %v1658
        %v1660 = vsel %vm1625, %v1650, %v1659
        %v1662 = vshrl.u32 %v1375, 16
        %v1664 = vrot.slane %v1662, 1
        %v1665 = vshll.u32 %v1375, 16
        %v1667 = vrot.slane %v1665, 2
        %v1668 = vor.u32 %v1664, %v1667
        %v1669 = vsel %vm1625, %v1659, %v1668
        %v1671 = vshrl.u32 %v1376, 16
        %v1673 = vrot.slane %v1671, 1
        %v1674 = vshll.u32 %v1376, 16
        %v1676 = vrot.slane %v1674, 2
        %v1677 = vor.u32 %v1673, %v1676
        %v1678 = vsel %vm1625, %v1668, %v1677
        %v1680 = vshrl.u32 %v1377, 16
        %v1682 = vrot.slane %v1680, 1
        %v1683 = vshll.u32 %v1377, 16
        %v1685 = vrot.slane %v1683, 2
        %v1686 = vor.u32 %v1682, %v1685
        %v1687 = vsel %vm1625, %v1677, %v1686
        %v1689 = vshrl.u32 %v1378, 16
        %v1691 = vrot.slane %v1689, 1
        %v1692 = vshll.u32 %v1378, 16
        %v1694 = vrot.slane %v1692, 2
        %v1695 = vor.u32 %v1691, %v1694
        %v1696 = vsel %vm1625, %v1686, %v1695
        %v1698 = vshrl.u32 %v1379, 16
        %v1700 = vrot.slane %v1698, 1
        %v1701 = vshll.u32 %v1379, 16
        %v1703 = vrot.slane %v1701, 2
        %v1704 = vor.u32 %v1700, %v1703
        %v1705 = vsel %vm1625, %v1695, %v1704
        %v1707 = vshrl.u32 %v1380, 16
        %v1709 = vrot.slane %v1707, 1
        %v1710 = vshll.u32 %v1380, 16
        %v1712 = vrot.slane %v1710, 2
        %v1713 = vor.u32 %v1709, %v1712
        %v1714 = vsel %vm1625, %v1704, %v1713
        %v1716 = vshrl.u32 %v1381, 16
        %v1718 = vrot.slane %v1716, 1
        %v1719 = vshll.u32 %v1381, 16
        %v1721 = vrot.slane %v1719, 2
        %v1722 = vor.u32 %v1718, %v1721
        %v1723 = vsel %vm1625, %v1713, %v1722
        %v1725 = vshrl.u32 %v1382, 16
        %v1727 = vrot.slane %v1725, 1
        %v1728 = vshll.u32 %v1382, 16
        %v1730 = vrot.slane %v1728, 2
        %v1731 = vor.u32 %v1727, %v1730
        %v1732 = vsel %vm1625, %v1722, %v1731
        %v1734 = vshrl.u32 %v1383, 16
        %v1736 = vrot.slane %v1734, 1
        %v1737 = vshll.u32 %v1383, 16
        %v1739 = vrot.slane %v1737, 2
        %v1740 = vor.u32 %v1736, %v1739
        %v1741 = vsel %vm1625, %v1731, %v1740
        %v1743 = vshrl.u32 %v1384, 16
        %v1745 = vrot.slane %v1743, 1
        %v1746 = vshll.u32 %v1384, 16
        %v1748 = vrot.slane %v1746, 2
        %v1749 = vor.u32 %v1745, %v1748
        %v1750 = vsel %vm1625, %v1740, %v1749
        %v1752 = vshrl.u32 %v1385, 16
        %v1754 = vrot.slane %v1752, 1
        %v1755 = vshll.u32 %v1385, 16
        %v1757 = vrot.slane %v1755, 2
        %v1758 = vor.u32 %v1754, %v1757
        %v1759 = vsel %vm1625, %v1749, %v1758
        %v1761 = vshrl.u32 %v1386, 16
        %v1763 = vrot.slane %v1761, 1
        %v1764 = vshll.u32 %v1386, 16
        %v1766 = vrot.slane %v1764, 2
        %v1767 = vor.u32 %v1763, %v1766
        %v1768 = vsel %vm1625, %v1758, %v1767
        %v1770 = vshrl.u32 %v1387, 16
        %v1772 = vrot.slane %v1770, 1
        %v1773 = vshll.u32 %v1387, 16
        %v1775 = vrot.slane %v1773, 2
        %v1776 = vor.u32 %v1772, %v1775
        %v1777 = vsel %vm1625, %v1767, %v1776
        %v1779 = vshrl.u32 %v1388, 16
        %v1781 = vrot.slane %v1779, 1
        %v1782 = vshll.u32 %v1388, 16
        %v1784 = vrot.slane %v1782, 2
        %v1785 = vor.u32 %v1781, %v1784
        %v1786 = vsel %vm1625, %v1776, %v1785
        %v1788 = vshrl.u32 %v1624, 16
        %v1790 = vrot.slane %v1788, 1
        %v1791 = vshll.u32 %v1624, 16
        %v1793 = vrot.slane %v1791, 2
        %v1794 = vor.u32 %v1790, %v1793
        %v1795 = vsel %vm1625, %v1785, %v1794
        %v1797 = vsel %vm726, %v1642, 0
        %v1800 = vsel %vm726, %v1651, 0
        %v1803 = vsel %vm726, %v1660, 0
        %v1806 = vsel %vm726, %v1669, 0
        %v1809 = vsel %vm726, %v1678, 0
        %v1812 = vsel %vm726, %v1687, 0
        %v1815 = vsel %vm726, %v1696, 0
        %v1818 = vsel %vm726, %v1705, 0
        %v1821 = vsel %vm726, %v1714, 0
        %v1824 = vsel %vm726, %v1723, 0
        %v1827 = vsel %vm726, %v1732, 0
        %v1830 = vsel %vm726, %v1741, 0
        %v1833 = vsel %vm726, %v1750, 0
        %v1836 = vsel %vm726, %v1759, 0
        %v1839 = vsel %vm726, %v1768, 0
        %v1842 = vsel %vm726, %v1777, 0
        %v1845 = vsel %vm726, %v1786, 0
        %v1848 = vsel %vm726, %v1795, 0
        %v1851 = vsel %vm781, %v1621, 0
        %1853 = vmatpush.bf16.msra.mxu0 0
        %1854 = vmatpush.bf16.msra.mxu0 0
        %1855 = vmatpush.bf16.msra.mxu0 0
        %1856 = vmatpush.bf16.msra.mxu0 0
        %1857 = vmatpush.bf16.msra.mxu0 0
        %1858 = vmatpush.bf16.msra.mxu0 0
        %1859 = vmatpush.bf16.msra.mxu0 0
        %1860 = vmatpush.bf16.msra.mxu0 %v1851
        %1861 = vmatmul.bf16.gmra.mxu0 %v1797
        %v1862 = vpop.f32.mrf.mxu0
        %v1863 = vadd.f32 0.0, %v1862
        %v1864 = vpop.f32.mrf.mxu0
        %v1865 = vadd.f32 0.0, %v1864
        %1866 = vmatmul.bf16.gmra.mxu0 %v1800
        %v1867 = vpop.f32.mrf.mxu0
        %v1868 = vadd.f32 0.0, %v1867
        %v1869 = vpop.f32.mrf.mxu0
        %v1870 = vadd.f32 0.0, %v1869
        %1871 = vmatmul.bf16.gmra.mxu0 %v1803
        %v1872 = vpop.f32.mrf.mxu0
        %v1873 = vadd.f32 0.0, %v1872
        %v1874 = vpop.f32.mrf.mxu0
        %v1875 = vadd.f32 0.0, %v1874
        %1876 = vmatmul.bf16.gmra.mxu0 %v1806
        %v1877 = vpop.f32.mrf.mxu0
        %v1878 = vadd.f32 0.0, %v1877
        %v1879 = vpop.f32.mrf.mxu0
        %v1880 = vadd.f32 0.0, %v1879
        %1881 = vmatmul.bf16.gmra.mxu0 %v1809
        %v1882 = vpop.f32.mrf.mxu0
        %v1883 = vadd.f32 0.0, %v1882
        %v1884 = vpop.f32.mrf.mxu0
        %v1885 = vadd.f32 0.0, %v1884
        %1886 = vmatmul.bf16.gmra.mxu0 %v1812
        %v1887 = vpop.f32.mrf.mxu0
        %v1888 = vadd.f32 0.0, %v1887
        %v1889 = vpop.f32.mrf.mxu0
        %v1890 = vadd.f32 0.0, %v1889
        %1891 = vmatmul.bf16.gmra.mxu0 %v1815
        %v1892 = vpop.f32.mrf.mxu0
        %v1893 = vadd.f32 0.0, %v1892
        %v1894 = vpop.f32.mrf.mxu0
        %v1895 = vadd.f32 0.0, %v1894
        %1896 = vmatmul.bf16.gmra.mxu0 %v1818
        %v1897 = vpop.f32.mrf.mxu0
        %v1898 = vadd.f32 0.0, %v1897
        %v1899 = vpop.f32.mrf.mxu0
        %v1900 = vadd.f32 0.0, %v1899
        %1901 = vmatmul.bf16.gmra.mxu0 %v1821
        %v1902 = vpop.f32.mrf.mxu0
        %v1903 = vadd.f32 0.0, %v1902
        %v1904 = vpop.f32.mrf.mxu0
        %v1905 = vadd.f32 0.0, %v1904
        %1906 = vmatmul.bf16.gmra.mxu0 %v1824
        %v1907 = vpop.f32.mrf.mxu0
        %v1908 = vadd.f32 0.0, %v1907
        %v1909 = vpop.f32.mrf.mxu0
        %v1910 = vadd.f32 0.0, %v1909
        %1911 = vmatmul.bf16.gmra.mxu0 %v1827
        %v1912 = vpop.f32.mrf.mxu0
        %v1913 = vadd.f32 0.0, %v1912
        %v1914 = vpop.f32.mrf.mxu0
        %v1915 = vadd.f32 0.0, %v1914
        %1916 = vmatmul.bf16.gmra.mxu0 %v1830
        %v1917 = vpop.f32.mrf.mxu0
        %v1918 = vadd.f32 0.0, %v1917
        %v1919 = vpop.f32.mrf.mxu0
        %v1920 = vadd.f32 0.0, %v1919
        %1921 = vmatmul.bf16.gmra.mxu0 %v1833
        %v1922 = vpop.f32.mrf.mxu0
        %v1923 = vadd.f32 0.0, %v1922
        %v1924 = vpop.f32.mrf.mxu0
        %v1925 = vadd.f32 0.0, %v1924
        %1926 = vmatmul.bf16.gmra.mxu0 %v1836
        %v1927 = vpop.f32.mrf.mxu0
        %v1928 = vadd.f32 0.0, %v1927
        %v1929 = vpop.f32.mrf.mxu0
        %v1930 = vadd.f32 0.0, %v1929
        %1931 = vmatmul.bf16.gmra.mxu0 %v1839
        %v1932 = vpop.f32.mrf.mxu0
        %v1933 = vadd.f32 0.0, %v1932
        %v1934 = vpop.f32.mrf.mxu0
        %v1935 = vadd.f32 0.0, %v1934
        %1936 = vmatmul.bf16.gmra.mxu0 %v1842
        %v1937 = vpop.f32.mrf.mxu0
        %v1938 = vadd.f32 0.0, %v1937
        %v1939 = vpop.f32.mrf.mxu0
        %v1940 = vadd.f32 0.0, %v1939
        %1941 = vmatmul.bf16.gmra.mxu0 %v1845
        %v1942 = vpop.f32.mrf.mxu0
        %v1943 = vadd.f32 0.0, %v1942
        %v1944 = vpop.f32.mrf.mxu0
        %v1945 = vadd.f32 0.0, %v1944
        %1946 = vmatmul.bf16.gmra.mxu0 %v1848
        %v1947 = vpop.f32.mrf.mxu0
        %v1948 = vadd.f32 0.0, %v1947
        %v1949 = vpop.f32.mrf.mxu0
        %v1950 = vadd.f32 0.0, %v1949
        %1951 = vdwg.mxu0
        %v1952 = vadd.f32 %v1583, %v1863
        %v1953 = vadd.f32 %v1584, %v1865
        %v1954 = vadd.f32 %v1585, %v1868
        %v1955 = vadd.f32 %v1586, %v1870
        %v1956 = vadd.f32 %v1587, %v1873
        %v1957 = vadd.f32 %v1588, %v1875
        %v1958 = vadd.f32 %v1589, %v1878
        %v1959 = vadd.f32 %v1590, %v1880
        %v1960 = vadd.f32 %v1591, %v1883
        %v1961 = vadd.f32 %v1592, %v1885
        %v1962 = vadd.f32 %v1593, %v1888
        %v1963 = vadd.f32 %v1594, %v1890
        %v1964 = vadd.f32 %v1595, %v1893
        %v1965 = vadd.f32 %v1596, %v1895
        %v1966 = vadd.f32 %v1597, %v1898
        %v1967 = vadd.f32 %v1598, %v1900
        %v1968 = vadd.f32 %v1599, %v1903
        %v1969 = vadd.f32 %v1600, %v1905
        %v1970 = vadd.f32 %v1601, %v1908
        %v1971 = vadd.f32 %v1602, %v1910
        %v1972 = vadd.f32 %v1603, %v1913
        %v1973 = vadd.f32 %v1604, %v1915
        %v1974 = vadd.f32 %v1605, %v1918
        %v1975 = vadd.f32 %v1606, %v1920
        %v1976 = vadd.f32 %v1607, %v1923
        %v1977 = vadd.f32 %v1608, %v1925
        %v1978 = vadd.f32 %v1609, %v1928
        %v1979 = vadd.f32 %v1610, %v1930
        %v1980 = vadd.f32 %v1611, %v1933
        %v1981 = vadd.f32 %v1612, %v1935
        %v1982 = vadd.f32 %v1613, %v1938
        %v1983 = vadd.f32 %v1614, %v1940
        %v1984 = vadd.f32 %v1615, %v1943
        %v1985 = vadd.f32 %v1616, %v1945
        %v1986 = vadd.f32 %v1617, %v1948
        %v1987 = vadd.f32 %v1618, %v1950
        %v1988 = vld [vmem:[%s411 + $0x8] sm:$0xc]
        %s1989 = scalar_lea.vmem %s3, 20
        %v1990 = vld [vmem:[%s1989] sm:$0xf]
        %v1992 = vunpack.c.l.b16 %v1988
        %v1993 = vpack.c.b16 %v1335, %v1992
        %vm1994 = vcmask 1045504
        %v1995 = vrot.slane %v1993, 2
        %v1996 = vrot.slane %v1372, 2
        %v1997 = vsel %vm1994, %v1995, %v1996
        %v1998 = vrot.slane %v1373, 2
        %v1999 = vsel %vm1994, %v1996, %v1998
        %v2000 = vrot.slane %v1374, 2
        %v2001 = vsel %vm1994, %v1998, %v2000
        %v2002 = vrot.slane %v1375, 2
        %v2003 = vsel %vm1994, %v2000, %v2002
        %v2004 = vrot.slane %v1376, 2
        %v2005 = vsel %vm1994, %v2002, %v2004
        %v2006 = vrot.slane %v1377, 2
        %v2007 = vsel %vm1994, %v2004, %v2006
        %v2008 = vrot.slane %v1378, 2
        %v2009 = vsel %vm1994, %v2006, %v2008
        %v2010 = vrot.slane %v1379, 2
        %v2011 = vsel %vm1994, %v2008, %v2010
        %v2012 = vrot.slane %v1380, 2
        %v2013 = vsel %vm1994, %v2010, %v2012
        %v2014 = vrot.slane %v1381, 2
        %v2015 = vsel %vm1994, %v2012, %v2014
        %v2016 = vrot.slane %v1382, 2
        %v2017 = vsel %vm1994, %v2014, %v2016
        %v2018 = vrot.slane %v1383, 2
        %v2019 = vsel %vm1994, %v2016, %v2018
        %v2020 = vrot.slane %v1384, 2
        %v2021 = vsel %vm1994, %v2018, %v2020
        %v2022 = vrot.slane %v1385, 2
        %v2023 = vsel %vm1994, %v2020, %v2022
        %v2024 = vrot.slane %v1386, 2
        %v2025 = vsel %vm1994, %v2022, %v2024
        %v2026 = vrot.slane %v1387, 2
        %v2027 = vsel %vm1994, %v2024, %v2026
        %v2028 = vrot.slane %v1388, 2
        %v2029 = vsel %vm1994, %v2026, %v2028
        %v2030 = vrot.slane %v1624, 2
        %v2031 = vsel %vm1994, %v2028, %v2030
        %v2033 = vsel %vm726, %v1997, 0
        %v2036 = vsel %vm726, %v1999, 0
        %v2039 = vsel %vm726, %v2001, 0
        %v2042 = vsel %vm726, %v2003, 0
        %v2045 = vsel %vm726, %v2005, 0
        %v2048 = vsel %vm726, %v2007, 0
        %v2051 = vsel %vm726, %v2009, 0
        %v2054 = vsel %vm726, %v2011, 0
        %v2057 = vsel %vm726, %v2013, 0
        %v2060 = vsel %vm726, %v2015, 0
        %v2063 = vsel %vm726, %v2017, 0
        %v2066 = vsel %vm726, %v2019, 0
        %v2069 = vsel %vm726, %v2021, 0
        %v2072 = vsel %vm726, %v2023, 0
        %v2075 = vsel %vm726, %v2025, 0
        %v2078 = vsel %vm726, %v2027, 0
        %v2081 = vsel %vm726, %v2029, 0
        %v2084 = vsel %vm726, %v2031, 0
        %v2087 = vsel %vm781, %v1990, 0
        %2089 = vmatpush.bf16.msra.mxu0 0
        %2090 = vmatpush.bf16.msra.mxu0 0
        %2091 = vmatpush.bf16.msra.mxu0 0
        %2092 = vmatpush.bf16.msra.mxu0 0
        %2093 = vmatpush.bf16.msra.mxu0 0
        %2094 = vmatpush.bf16.msra.mxu0 0
        %2095 = vmatpush.bf16.msra.mxu0 0
        %2096 = vmatpush.bf16.msra.mxu0 %v2087
        %2097 = vmatmul.bf16.gmra.mxu0 %v2033
        %v2098 = vpop.f32.mrf.mxu0
        %v2099 = vadd.f32 0.0, %v2098
        %v2100 = vpop.f32.mrf.mxu0
        %v2101 = vadd.f32 0.0, %v2100
        %2102 = vmatmul.bf16.gmra.mxu0 %v2036
        %v2103 = vpop.f32.mrf.mxu0
        %v2104 = vadd.f32 0.0, %v2103
        %v2105 = vpop.f32.mrf.mxu0
        %v2106 = vadd.f32 0.0, %v2105
        %2107 = vmatmul.bf16.gmra.mxu0 %v2039
        %v2108 = vpop.f32.mrf.mxu0
        %v2109 = vadd.f32 0.0, %v2108
        %v2110 = vpop.f32.mrf.mxu0
        %v2111 = vadd.f32 0.0, %v2110
        %2112 = vmatmul.bf16.gmra.mxu0 %v2042
        %v2113 = vpop.f32.mrf.mxu0
        %v2114 = vadd.f32 0.0, %v2113
        %v2115 = vpop.f32.mrf.mxu0
        %v2116 = vadd.f32 0.0, %v2115
        %2117 = vmatmul.bf16.gmra.mxu0 %v2045
        %v2118 = vpop.f32.mrf.mxu0
        %v2119 = vadd.f32 0.0, %v2118
        %v2120 = vpop.f32.mrf.mxu0
        %v2121 = vadd.f32 0.0, %v2120
        %2122 = vmatmul.bf16.gmra.mxu0 %v2048
        %v2123 = vpop.f32.mrf.mxu0
        %v2124 = vadd.f32 0.0, %v2123
        %v2125 = vpop.f32.mrf.mxu0
        %v2126 = vadd.f32 0.0, %v2125
        %2127 = vmatmul.bf16.gmra.mxu0 %v2051
        %v2128 = vpop.f32.mrf.mxu0
        %v2129 = vadd.f32 0.0, %v2128
        %v2130 = vpop.f32.mrf.mxu0
        %v2131 = vadd.f32 0.0, %v2130
        %2132 = vmatmul.bf16.gmra.mxu0 %v2054
        %v2133 = vpop.f32.mrf.mxu0
        %v2134 = vadd.f32 0.0, %v2133
        %v2135 = vpop.f32.mrf.mxu0
        %v2136 = vadd.f32 0.0, %v2135
        %2137 = vmatmul.bf16.gmra.mxu0 %v2057
        %v2138 = vpop.f32.mrf.mxu0
        %v2139 = vadd.f32 0.0, %v2138
        %v2140 = vpop.f32.mrf.mxu0
        %v2141 = vadd.f32 0.0, %v2140
        %2142 = vmatmul.bf16.gmra.mxu0 %v2060
        %v2143 = vpop.f32.mrf.mxu0
        %v2144 = vadd.f32 0.0, %v2143
        %v2145 = vpop.f32.mrf.mxu0
        %v2146 = vadd.f32 0.0, %v2145
        %2147 = vmatmul.bf16.gmra.mxu0 %v2063
        %v2148 = vpop.f32.mrf.mxu0
        %v2149 = vadd.f32 0.0, %v2148
        %v2150 = vpop.f32.mrf.mxu0
        %v2151 = vadd.f32 0.0, %v2150
        %2152 = vmatmul.bf16.gmra.mxu0 %v2066
        %v2153 = vpop.f32.mrf.mxu0
        %v2154 = vadd.f32 0.0, %v2153
        %v2155 = vpop.f32.mrf.mxu0
        %v2156 = vadd.f32 0.0, %v2155
        %2157 = vmatmul.bf16.gmra.mxu0 %v2069
        %v2158 = vpop.f32.mrf.mxu0
        %v2159 = vadd.f32 0.0, %v2158
        %v2160 = vpop.f32.mrf.mxu0
        %v2161 = vadd.f32 0.0, %v2160
        %2162 = vmatmul.bf16.gmra.mxu0 %v2072
        %v2163 = vpop.f32.mrf.mxu0
        %v2164 = vadd.f32 0.0, %v2163
        %v2165 = vpop.f32.mrf.mxu0
        %v2166 = vadd.f32 0.0, %v2165
        %2167 = vmatmul.bf16.gmra.mxu0 %v2075
        %v2168 = vpop.f32.mrf.mxu0
        %v2169 = vadd.f32 0.0, %v2168
        %v2170 = vpop.f32.mrf.mxu0
        %v2171 = vadd.f32 0.0, %v2170
        %2172 = vmatmul.bf16.gmra.mxu0 %v2078
        %v2173 = vpop.f32.mrf.mxu0
        %v2174 = vadd.f32 0.0, %v2173
        %v2175 = vpop.f32.mrf.mxu0
        %v2176 = vadd.f32 0.0, %v2175
        %2177 = vmatmul.bf16.gmra.mxu0 %v2081
        %v2178 = vpop.f32.mrf.mxu0
        %v2179 = vadd.f32 0.0, %v2178
        %v2180 = vpop.f32.mrf.mxu0
        %v2181 = vadd.f32 0.0, %v2180
        %2182 = vmatmul.bf16.gmra.mxu0 %v2084
        %v2183 = vpop.f32.mrf.mxu0
        %v2184 = vadd.f32 0.0, %v2183
        %v2185 = vpop.f32.mrf.mxu0
        %v2186 = vadd.f32 0.0, %v2185
        %2187 = vdwg.mxu0
        %v2188 = vadd.f32 %v1952, %v2099
        %v2189 = vadd.f32 %v1953, %v2101
        %v2190 = vadd.f32 %v1954, %v2104
        %v2191 = vadd.f32 %v1955, %v2106
        %v2192 = vadd.f32 %v1956, %v2109
        %v2193 = vadd.f32 %v1957, %v2111
        %v2194 = vadd.f32 %v1958, %v2114
        %v2195 = vadd.f32 %v1959, %v2116
        %v2196 = vadd.f32 %v1960, %v2119
        %v2197 = vadd.f32 %v1961, %v2121
        %v2198 = vadd.f32 %v1962, %v2124
        %v2199 = vadd.f32 %v1963, %v2126
        %v2200 = vadd.f32 %v1964, %v2129
        %v2201 = vadd.f32 %v1965, %v2131
        %v2202 = vadd.f32 %v1966, %v2134
        %v2203 = vadd.f32 %v1967, %v2136
        %v2204 = vadd.f32 %v1968, %v2139
        %v2205 = vadd.f32 %v1969, %v2141
        %v2206 = vadd.f32 %v1970, %v2144
        %v2207 = vadd.f32 %v1971, %v2146
        %v2208 = vadd.f32 %v1972, %v2149
        %v2209 = vadd.f32 %v1973, %v2151
        %v2210 = vadd.f32 %v1974, %v2154
        %v2211 = vadd.f32 %v1975, %v2156
        %v2212 = vadd.f32 %v1976, %v2159
        %v2213 = vadd.f32 %v1977, %v2161
        %v2214 = vadd.f32 %v1978, %v2164
        %v2215 = vadd.f32 %v1979, %v2166
        %v2216 = vadd.f32 %v1980, %v2169
        %v2217 = vadd.f32 %v1981, %v2171
        %v2218 = vadd.f32 %v1982, %v2174
        %v2219 = vadd.f32 %v1983, %v2176
        %v2220 = vadd.f32 %v1984, %v2179
        %v2221 = vadd.f32 %v1985, %v2181
        %v2222 = vadd.f32 %v1986, %v2184
        %v2223 = vadd.f32 %v1987, %v2186
        %v2224 = vld [vmem:[%s411 + $0x10] sm:$0xc]
        %v2225 = vld [vmem:[%s411 + $0x14] sm:$0xf]
        %v2226 = vld [vmem:[%s411 + $0x18] sm:$0xf]
        %v2227 = vld [vmem:[%s411 + $0x1c] sm:$0xf]
        %v2228 = vld [vmem:[%s411 + $0x20] sm:$0xf]
        %v2229 = vld [vmem:[%s411 + $0x24] sm:$0xf]
        %v2230 = vld [vmem:[%s411 + $0x28] sm:$0xf]
        %v2231 = vld [vmem:[%s411 + $0x2c] sm:$0xf]
        %v2232 = vld [vmem:[%s411 + $0x30] sm:$0xf]
        %v2233 = vld [vmem:[%s411 + $0x34] sm:$0xf]
        %v2234 = vld [vmem:[%s411 + $0x38] sm:$0xf]
        %v2235 = vld [vmem:[%s411 + $0x3c] sm:$0xf]
        %v2236 = vld [vmem:[%s411 + $0x40] sm:$0xf]
        %v2237 = vld [vmem:[%s411 + $0x44] sm:$0xf]
        %v2238 = vld [vmem:[%s411 + $0x48] sm:$0xf]
        %v2239 = vld [vmem:[%s411 + $0x4c] sm:$0xf]
        %v2240 = vld [vmem:[%s411 + $0x50] sm:$0xf]
        %v2241 = vld [vmem:[%s411 + $0x54] sm:$0xf]
        %v2242 = vld [vmem:[%s411 + $0x58] sm:$0xf]
        %v2243 = vld [vmem:[%s411 + $0x5c] sm:$0xf]
        %v2244 = vld [vmem:[%s411 + $0x60] sm:$0xf]
        %v2245 = vld [vmem:[%s411 + $0x64] sm:$0xf]
        %v2246 = vld [vmem:[%s411 + $0x68] sm:$0xf]
        %v2247 = vld [vmem:[%s411 + $0x6c] sm:$0xf]
        %v2248 = vld [vmem:[%s411 + $0x70] sm:$0xf]
        %v2249 = vld [vmem:[%s411 + $0x74] sm:$0xf]
        %v2250 = vld [vmem:[%s411 + $0x78] sm:$0xf]
        %v2251 = vld [vmem:[%s411 + $0x7c] sm:$0xf]
        %v2252 = vld [vmem:[%s411 + $0x80] sm:$0xf]
        %v2253 = vld [vmem:[%s411 + $0x84] sm:$0xf]
        %v2254 = vld [vmem:[%s411 + $0x88] sm:$0xf]
        %v2255 = vld [vmem:[%s411 + $0x8c] sm:$0xf]
        %v2256 = vld [vmem:[%s411 + $0x90] sm:$0xf]
        %v2257 = vld [vmem:[%s411 + $0x94] sm:$0xf]
        %v2258 = vld [vmem:[%s411 + $0x98] sm:$0xf]
        %v2259 = vld [vmem:[%s411 + $0x9c] sm:$0xf]
        %v2260 = vld [vmem:[%s411 + $0xa0] sm:$0x3]
        %s2261 = scalar_lea.vmem %s3, 24
        %v2262 = vld [vmem:[%s2261] sm:$0xf]
        %v2300 = vunpack.c.l.b16 %v2224
        %v2301 = vunpack.c.l.b16 %v2225
        %v2302 = vunpack.c.l.b16 %v2226
        %v2303 = vunpack.c.l.b16 %v2227
        %v2304 = vunpack.c.l.b16 %v2228
        %v2305 = vunpack.c.l.b16 %v2229
        %v2306 = vunpack.c.l.b16 %v2230
        %v2307 = vunpack.c.l.b16 %v2231
        %v2308 = vunpack.c.l.b16 %v2232
        %v2309 = vunpack.c.l.b16 %v2233
        %v2310 = vunpack.c.l.b16 %v2234
        %v2311 = vunpack.c.l.b16 %v2235
        %v2312 = vunpack.c.l.b16 %v2236
        %v2313 = vunpack.c.l.b16 %v2237
        %v2314 = vunpack.c.l.b16 %v2238
        %v2315 = vunpack.c.l.b16 %v2239
        %v2316 = vunpack.c.l.b16 %v2240
        %v2317 = vunpack.c.l.b16 %v2241
        %v2318 = vunpack.c.l.b16 %v2242
        %v2319 = vunpack.c.l.b16 %v2243
        %v2320 = vunpack.c.l.b16 %v2244
        %v2321 = vunpack.c.l.b16 %v2245
        %v2322 = vunpack.c.l.b16 %v2246
        %v2323 = vunpack.c.l.b16 %v2247
        %v2324 = vunpack.c.l.b16 %v2248
        %v2325 = vunpack.c.l.b16 %v2249
        %v2326 = vunpack.c.l.b16 %v2250
        %v2327 = vunpack.c.l.b16 %v2251
        %v2328 = vunpack.c.l.b16 %v2252
        %v2329 = vunpack.c.l.b16 %v2253
        %v2330 = vunpack.c.l.b16 %v2254
        %v2331 = vunpack.c.l.b16 %v2255
        %v2332 = vunpack.c.l.b16 %v2256
        %v2333 = vunpack.c.l.b16 %v2257
        %v2334 = vunpack.c.l.b16 %v2258
        %v2335 = vunpack.c.l.b16 %v2259
        %v2336 = vunpack.c.l.b16 %v2260
        %v2337 = vpack.c.b16 %v2301, %v2300
        %v2338 = vpack.c.b16 %v2303, %v2302
        %v2339 = vpack.c.b16 %v2305, %v2304
        %v2340 = vpack.c.b16 %v2307, %v2306
        %v2341 = vpack.c.b16 %v2309, %v2308
        %v2342 = vpack.c.b16 %v2311, %v2310
        %v2343 = vpack.c.b16 %v2313, %v2312
        %v2344 = vpack.c.b16 %v2315, %v2314
        %v2345 = vpack.c.b16 %v2317, %v2316
        %v2346 = vpack.c.b16 %v2319, %v2318
        %v2347 = vpack.c.b16 %v2321, %v2320
        %v2348 = vpack.c.b16 %v2323, %v2322
        %v2349 = vpack.c.b16 %v2325, %v2324
        %v2350 = vpack.c.b16 %v2327, %v2326
        %v2351 = vpack.c.b16 %v2329, %v2328
        %v2352 = vpack.c.b16 %v2331, %v2330
        %v2353 = vpack.c.b16 %v2333, %v2332
        %v2354 = vpack.c.b16 %v2335, %v2334
        %v2355 = vpack.c.b16 %v2336, %v2336
        %v2356 = vrot.slane %v2337, 2
        %v2357 = vrot.slane %v2338, 2
        %v2358 = vsel %vm1994, %v2356, %v2357
        %v2359 = vrot.slane %v2339, 2
        %v2360 = vsel %vm1994, %v2357, %v2359
        %v2361 = vrot.slane %v2340, 2
        %v2362 = vsel %vm1994, %v2359, %v2361
        %v2363 = vrot.slane %v2341, 2
        %v2364 = vsel %vm1994, %v2361, %v2363
        %v2365 = vrot.slane %v2342, 2
        %v2366 = vsel %vm1994, %v2363, %v2365
        %v2367 = vrot.slane %v2343, 2
        %v2368 = vsel %vm1994, %v2365, %v2367
        %v2369 = vrot.slane %v2344, 2
        %v2370 = vsel %vm1994, %v2367, %v2369
        %v2371 = vrot.slane %v2345, 2
        %v2372 = vsel %vm1994, %v2369, %v2371
        %v2373 = vrot.slane %v2346, 2
        %v2374 = vsel %vm1994, %v2371, %v2373
        %v2375 = vrot.slane %v2347, 2
        %v2376 = vsel %vm1994, %v2373, %v2375
        %v2377 = vrot.slane %v2348, 2
        %v2378 = vsel %vm1994, %v2375, %v2377
        %v2379 = vrot.slane %v2349, 2
        %v2380 = vsel %vm1994, %v2377, %v2379
        %v2381 = vrot.slane %v2350, 2
        %v2382 = vsel %vm1994, %v2379, %v2381
        %v2383 = vrot.slane %v2351, 2
        %v2384 = vsel %vm1994, %v2381, %v2383
        %v2385 = vrot.slane %v2352, 2
        %v2386 = vsel %vm1994, %v2383, %v2385
        %v2387 = vrot.slane %v2353, 2
        %v2388 = vsel %vm1994, %v2385, %v2387
        %v2389 = vrot.slane %v2354, 2
        %v2390 = vsel %vm1994, %v2387, %v2389
        %v2391 = vrot.slane %v2355, 2
        %v2392 = vsel %vm1994, %v2389, %v2391
        %v2394 = vsel %vm726, %v2358, 0
        %v2397 = vsel %vm726, %v2360, 0
        %v2400 = vsel %vm726, %v2362, 0
        %v2403 = vsel %vm726, %v2364, 0
        %v2406 = vsel %vm726, %v2366, 0
        %v2409 = vsel %vm726, %v2368, 0
        %v2412 = vsel %vm726, %v2370, 0
        %v2415 = vsel %vm726, %v2372, 0
        %v2418 = vsel %vm726, %v2374, 0
        %v2421 = vsel %vm726, %v2376, 0
        %v2424 = vsel %vm726, %v2378, 0
        %v2427 = vsel %vm726, %v2380, 0
        %v2430 = vsel %vm726, %v2382, 0
        %v2433 = vsel %vm726, %v2384, 0
        %v2436 = vsel %vm726, %v2386, 0
        %v2439 = vsel %vm726, %v2388, 0
        %v2442 = vsel %vm726, %v2390, 0
        %v2445 = vsel %vm726, %v2392, 0
        %v2448 = vsel %vm781, %v2262, 0
        %2450 = vmatpush.bf16.msra.mxu0 0
        %2451 = vmatpush.bf16.msra.mxu0 0
        %2452 = vmatpush.bf16.msra.mxu0 0
        %2453 = vmatpush.bf16.msra.mxu0 0
        %2454 = vmatpush.bf16.msra.mxu0 0
        %2455 = vmatpush.bf16.msra.mxu0 0
        %2456 = vmatpush.bf16.msra.mxu0 0
        %2457 = vmatpush.bf16.msra.mxu0 %v2448
        %2458 = vmatmul.bf16.gmra.mxu0 %v2394
        %v2459 = vpop.f32.mrf.mxu0
        %v2460 = vadd.f32 0.0, %v2459
        %v2461 = vpop.f32.mrf.mxu0
        %v2462 = vadd.f32 0.0, %v2461
        %2463 = vmatmul.bf16.gmra.mxu0 %v2397
        %v2464 = vpop.f32.mrf.mxu0
        %v2465 = vadd.f32 0.0, %v2464
        %v2466 = vpop.f32.mrf.mxu0
        %v2467 = vadd.f32 0.0, %v2466
        %2468 = vmatmul.bf16.gmra.mxu0 %v2400
        %v2469 = vpop.f32.mrf.mxu0
        %v2470 = vadd.f32 0.0, %v2469
        %v2471 = vpop.f32.mrf.mxu0
        %v2472 = vadd.f32 0.0, %v2471
        %2473 = vmatmul.bf16.gmra.mxu0 %v2403
        %v2474 = vpop.f32.mrf.mxu0
        %v2475 = vadd.f32 0.0, %v2474
        %v2476 = vpop.f32.mrf.mxu0
        %v2477 = vadd.f32 0.0, %v2476
        %2478 = vmatmul.bf16.gmra.mxu0 %v2406
        %v2479 = vpop.f32.mrf.mxu0
        %v2480 = vadd.f32 0.0, %v2479
        %v2481 = vpop.f32.mrf.mxu0
        %v2482 = vadd.f32 0.0, %v2481
        %2483 = vmatmul.bf16.gmra.mxu0 %v2409
        %v2484 = vpop.f32.mrf.mxu0
        %v2485 = vadd.f32 0.0, %v2484
        %v2486 = vpop.f32.mrf.mxu0
        %v2487 = vadd.f32 0.0, %v2486
        %2488 = vmatmul.bf16.gmra.mxu0 %v2412
        %v2489 = vpop.f32.mrf.mxu0
        %v2490 = vadd.f32 0.0, %v2489
        %v2491 = vpop.f32.mrf.mxu0
        %v2492 = vadd.f32 0.0, %v2491
        %2493 = vmatmul.bf16.gmra.mxu0 %v2415
        %v2494 = vpop.f32.mrf.mxu0
        %v2495 = vadd.f32 0.0, %v2494
        %v2496 = vpop.f32.mrf.mxu0
        %v2497 = vadd.f32 0.0, %v2496
        %2498 = vmatmul.bf16.gmra.mxu0 %v2418
        %v2499 = vpop.f32.mrf.mxu0
        %v2500 = vadd.f32 0.0, %v2499
        %v2501 = vpop.f32.mrf.mxu0
        %v2502 = vadd.f32 0.0, %v2501
        %2503 = vmatmul.bf16.gmra.mxu0 %v2421
        %v2504 = vpop.f32.mrf.mxu0
        %v2505 = vadd.f32 0.0, %v2504
        %v2506 = vpop.f32.mrf.mxu0
        %v2507 = vadd.f32 0.0, %v2506
        %2508 = vmatmul.bf16.gmra.mxu0 %v2424
        %v2509 = vpop.f32.mrf.mxu0
        %v2510 = vadd.f32 0.0, %v2509
        %v2511 = vpop.f32.mrf.mxu0
        %v2512 = vadd.f32 0.0, %v2511
        %2513 = vmatmul.bf16.gmra.mxu0 %v2427
        %v2514 = vpop.f32.mrf.mxu0
        %v2515 = vadd.f32 0.0, %v2514
        %v2516 = vpop.f32.mrf.mxu0
        %v2517 = vadd.f32 0.0, %v2516
        %2518 = vmatmul.bf16.gmra.mxu0 %v2430
        %v2519 = vpop.f32.mrf.mxu0
        %v2520 = vadd.f32 0.0, %v2519
        %v2521 = vpop.f32.mrf.mxu0
        %v2522 = vadd.f32 0.0, %v2521
        %2523 = vmatmul.bf16.gmra.mxu0 %v2433
        %v2524 = vpop.f32.mrf.mxu0
        %v2525 = vadd.f32 0.0, %v2524
        %v2526 = vpop.f32.mrf.mxu0
        %v2527 = vadd.f32 0.0, %v2526
        %2528 = vmatmul.bf16.gmra.mxu0 %v2436
        %v2529 = vpop.f32.mrf.mxu0
        %v2530 = vadd.f32 0.0, %v2529
        %v2531 = vpop.f32.mrf.mxu0
        %v2532 = vadd.f32 0.0, %v2531
        %2533 = vmatmul.bf16.gmra.mxu0 %v2439
        %v2534 = vpop.f32.mrf.mxu0
        %v2535 = vadd.f32 0.0, %v2534
        %v2536 = vpop.f32.mrf.mxu0
        %v2537 = vadd.f32 0.0, %v2536
        %2538 = vmatmul.bf16.gmra.mxu0 %v2442
        %v2539 = vpop.f32.mrf.mxu0
        %v2540 = vadd.f32 0.0, %v2539
        %v2541 = vpop.f32.mrf.mxu0
        %v2542 = vadd.f32 0.0, %v2541
        %2543 = vmatmul.bf16.gmra.mxu0 %v2445
        %v2544 = vpop.f32.mrf.mxu0
        %v2545 = vadd.f32 0.0, %v2544
        %v2546 = vpop.f32.mrf.mxu0
        %v2547 = vadd.f32 0.0, %v2546
        %2548 = vdwg.mxu0
        %v2549 = vadd.f32 %v2188, %v2460
        %v2550 = vadd.f32 %v2189, %v2462
        %v2551 = vadd.f32 %v2190, %v2465
        %v2552 = vadd.f32 %v2191, %v2467
        %v2553 = vadd.f32 %v2192, %v2470
        %v2554 = vadd.f32 %v2193, %v2472
        %v2555 = vadd.f32 %v2194, %v2475
        %v2556 = vadd.f32 %v2195, %v2477
        %v2557 = vadd.f32 %v2196, %v2480
        %v2558 = vadd.f32 %v2197, %v2482
        %v2559 = vadd.f32 %v2198, %v2485
        %v2560 = vadd.f32 %v2199, %v2487
        %v2561 = vadd.f32 %v2200, %v2490
        %v2562 = vadd.f32 %v2201, %v2492
        %v2563 = vadd.f32 %v2202, %v2495
        %v2564 = vadd.f32 %v2203, %v2497
        %v2565 = vadd.f32 %v2204, %v2500
        %v2566 = vadd.f32 %v2205, %v2502
        %v2567 = vadd.f32 %v2206, %v2505
        %v2568 = vadd.f32 %v2207, %v2507
        %v2569 = vadd.f32 %v2208, %v2510
        %v2570 = vadd.f32 %v2209, %v2512
        %v2571 = vadd.f32 %v2210, %v2515
        %v2572 = vadd.f32 %v2211, %v2517
        %v2573 = vadd.f32 %v2212, %v2520
        %v2574 = vadd.f32 %v2213, %v2522
        %v2575 = vadd.f32 %v2214, %v2525
        %v2576 = vadd.f32 %v2215, %v2527
        %v2577 = vadd.f32 %v2216, %v2530
        %v2578 = vadd.f32 %v2217, %v2532
        %v2579 = vadd.f32 %v2218, %v2535
        %v2580 = vadd.f32 %v2219, %v2537
        %v2581 = vadd.f32 %v2220, %v2540
        %v2582 = vadd.f32 %v2221, %v2542
        %v2583 = vadd.f32 %v2222, %v2545
        %v2584 = vadd.f32 %v2223, %v2547
        %v2585 = vld [vmem:[%s411 + $0xa0] sm:$0x7]
        %s2586 = scalar_lea.vmem %s3, 28
        %v2587 = vld [vmem:[%s2586] sm:$0xf]
        %v2589 = vunpack.c.l.b16 %v2585
        %v2590 = vpack.c.b16 %v2589, %v2589
        %vm2591 = vsmask.f32 5376
        %v2593 = vshrl.u32 %v2337, 16
        %v2595 = vrot.slane %v2593, 2
        %v2596 = vshll.u32 %v2337, 16
        %v2598 = vrot.slane %v2596, 3
        %v2599 = vor.u32 %v2595, %v2598
        %v2601 = vshrl.u32 %v2338, 16
        %v2603 = vrot.slane %v2601, 2
        %v2604 = vshll.u32 %v2338, 16
        %v2606 = vrot.slane %v2604, 3
        %v2607 = vor.u32 %v2603, %v2606
        %v2608 = vsel %vm2591, %v2599, %v2607
        %v2610 = vshrl.u32 %v2339, 16
        %v2612 = vrot.slane %v2610, 2
        %v2613 = vshll.u32 %v2339, 16
        %v2615 = vrot.slane %v2613, 3
        %v2616 = vor.u32 %v2612, %v2615
        %v2617 = vsel %vm2591, %v2607, %v2616
        %v2619 = vshrl.u32 %v2340, 16
        %v2621 = vrot.slane %v2619, 2
        %v2622 = vshll.u32 %v2340, 16
        %v2624 = vrot.slane %v2622, 3
        %v2625 = vor.u32 %v2621, %v2624
        %v2626 = vsel %vm2591, %v2616, %v2625
        %v2628 = vshrl.u32 %v2341, 16
        %v2630 = vrot.slane %v2628, 2
        %v2631 = vshll.u32 %v2341, 16
        %v2633 = vrot.slane %v2631, 3
        %v2634 = vor.u32 %v2630, %v2633
        %v2635 = vsel %vm2591, %v2625, %v2634
        %v2637 = vshrl.u32 %v2342, 16
        %v2639 = vrot.slane %v2637, 2
        %v2640 = vshll.u32 %v2342, 16
        %v2642 = vrot.slane %v2640, 3
        %v2643 = vor.u32 %v2639, %v2642
        %v2644 = vsel %vm2591, %v2634, %v2643
        %v2646 = vshrl.u32 %v2343, 16
        %v2648 = vrot.slane %v2646, 2
        %v2649 = vshll.u32 %v2343, 16
        %v2651 = vrot.slane %v2649, 3
        %v2652 = vor.u32 %v2648, %v2651
        %v2653 = vsel %vm2591, %v2643, %v2652
        %v2655 = vshrl.u32 %v2344, 16
        %v2657 = vrot.slane %v2655, 2
        %v2658 = vshll.u32 %v2344, 16
        %v2660 = vrot.slane %v2658, 3
        %v2661 = vor.u32 %v2657, %v2660
        %v2662 = vsel %vm2591, %v2652, %v2661
        %v2664 = vshrl.u32 %v2345, 16
        %v2666 = vrot.slane %v2664, 2
        %v2667 = vshll.u32 %v2345, 16
        %v2669 = vrot.slane %v2667, 3
        %v2670 = vor.u32 %v2666, %v2669
        %v2671 = vsel %vm2591, %v2661, %v2670
        %v2673 = vshrl.u32 %v2346, 16
        %v2675 = vrot.slane %v2673, 2
        %v2676 = vshll.u32 %v2346, 16
        %v2678 = vrot.slane %v2676, 3
        %v2679 = vor.u32 %v2675, %v2678
        %v2680 = vsel %vm2591, %v2670, %v2679
        %v2682 = vshrl.u32 %v2347, 16
        %v2684 = vrot.slane %v2682, 2
        %v2685 = vshll.u32 %v2347, 16
        %v2687 = vrot.slane %v2685, 3
        %v2688 = vor.u32 %v2684, %v2687
        %v2689 = vsel %vm2591, %v2679, %v2688
        %v2691 = vshrl.u32 %v2348, 16
        %v2693 = vrot.slane %v2691, 2
        %v2694 = vshll.u32 %v2348, 16
        %v2696 = vrot.slane %v2694, 3
        %v2697 = vor.u32 %v2693, %v2696
        %v2698 = vsel %vm2591, %v2688, %v2697
        %v2700 = vshrl.u32 %v2349, 16
        %v2702 = vrot.slane %v2700, 2
        %v2703 = vshll.u32 %v2349, 16
        %v2705 = vrot.slane %v2703, 3
        %v2706 = vor.u32 %v2702, %v2705
        %v2707 = vsel %vm2591, %v2697, %v2706
        %v2709 = vshrl.u32 %v2350, 16
        %v2711 = vrot.slane %v2709, 2
        %v2712 = vshll.u32 %v2350, 16
        %v2714 = vrot.slane %v2712, 3
        %v2715 = vor.u32 %v2711, %v2714
        %v2716 = vsel %vm2591, %v2706, %v2715
        %v2718 = vshrl.u32 %v2351, 16
        %v2720 = vrot.slane %v2718, 2
        %v2721 = vshll.u32 %v2351, 16
        %v2723 = vrot.slane %v2721, 3
        %v2724 = vor.u32 %v2720, %v2723
        %v2725 = vsel %vm2591, %v2715, %v2724
        %v2727 = vshrl.u32 %v2352, 16
        %v2729 = vrot.slane %v2727, 2
        %v2730 = vshll.u32 %v2352, 16
        %v2732 = vrot.slane %v2730, 3
        %v2733 = vor.u32 %v2729, %v2732
        %v2734 = vsel %vm2591, %v2724, %v2733
        %v2736 = vshrl.u32 %v2353, 16
        %v2738 = vrot.slane %v2736, 2
        %v2739 = vshll.u32 %v2353, 16
        %v2741 = vrot.slane %v2739, 3
        %v2742 = vor.u32 %v2738, %v2741
        %v2743 = vsel %vm2591, %v2733, %v2742
        %v2745 = vshrl.u32 %v2354, 16
        %v2747 = vrot.slane %v2745, 2
        %v2748 = vshll.u32 %v2354, 16
        %v2750 = vrot.slane %v2748, 3
        %v2751 = vor.u32 %v2747, %v2750
        %v2752 = vsel %vm2591, %v2742, %v2751
        %v2754 = vshrl.u32 %v2590, 16
        %v2756 = vrot.slane %v2754, 2
        %v2757 = vshll.u32 %v2590, 16
        %v2759 = vrot.slane %v2757, 3
        %v2760 = vor.u32 %v2756, %v2759
        %v2761 = vsel %vm2591, %v2751, %v2760
        %v2763 = vsel %vm726, %v2608, 0
        %v2766 = vsel %vm726, %v2617, 0
        %v2769 = vsel %vm726, %v2626, 0
        %v2772 = vsel %vm726, %v2635, 0
        %v2775 = vsel %vm726, %v2644, 0
        %v2778 = vsel %vm726, %v2653, 0
        %v2781 = vsel %vm726, %v2662, 0
        %v2784 = vsel %vm726, %v2671, 0
        %v2787 = vsel %vm726, %v2680, 0
        %v2790 = vsel %vm726, %v2689, 0
        %v2793 = vsel %vm726, %v2698, 0
        %v2796 = vsel %vm726, %v2707, 0
        %v2799 = vsel %vm726, %v2716, 0
        %v2802 = vsel %vm726, %v2725, 0
        %v2805 = vsel %vm726, %v2734, 0
        %v2808 = vsel %vm726, %v2743, 0
        %v2811 = vsel %vm726, %v2752, 0
        %v2814 = vsel %vm726, %v2761, 0
        %v2817 = vsel %vm781, %v2587, 0
        %2819 = vmatpush.bf16.msra.mxu0 0
        %2820 = vmatpush.bf16.msra.mxu0 0
        %2821 = vmatpush.bf16.msra.mxu0 0
        %2822 = vmatpush.bf16.msra.mxu0 0
        %2823 = vmatpush.bf16.msra.mxu0 0
        %2824 = vmatpush.bf16.msra.mxu0 0
        %2825 = vmatpush.bf16.msra.mxu0 0
        %2826 = vmatpush.bf16.msra.mxu0 %v2817
        %2827 = vmatmul.bf16.gmra.mxu0 %v2763
        %v2828 = vpop.f32.mrf.mxu0
        %v2829 = vadd.f32 0.0, %v2828
        %v2830 = vpop.f32.mrf.mxu0
        %v2831 = vadd.f32 0.0, %v2830
        %2832 = vmatmul.bf16.gmra.mxu0 %v2766
        %v2833 = vpop.f32.mrf.mxu0
        %v2834 = vadd.f32 0.0, %v2833
        %v2835 = vpop.f32.mrf.mxu0
        %v2836 = vadd.f32 0.0, %v2835
        %2837 = vmatmul.bf16.gmra.mxu0 %v2769
        %v2838 = vpop.f32.mrf.mxu0
        %v2839 = vadd.f32 0.0, %v2838
        %v2840 = vpop.f32.mrf.mxu0
        %v2841 = vadd.f32 0.0, %v2840
        %2842 = vmatmul.bf16.gmra.mxu0 %v2772
        %v2843 = vpop.f32.mrf.mxu0
        %v2844 = vadd.f32 0.0, %v2843
        %v2845 = vpop.f32.mrf.mxu0
        %v2846 = vadd.f32 0.0, %v2845
        %2847 = vmatmul.bf16.gmra.mxu0 %v2775
        %v2848 = vpop.f32.mrf.mxu0
        %v2849 = vadd.f32 0.0, %v2848
        %v2850 = vpop.f32.mrf.mxu0
        %v2851 = vadd.f32 0.0, %v2850
        %2852 = vmatmul.bf16.gmra.mxu0 %v2778
        %v2853 = vpop.f32.mrf.mxu0
        %v2854 = vadd.f32 0.0, %v2853
        %v2855 = vpop.f32.mrf.mxu0
        %v2856 = vadd.f32 0.0, %v2855
        %2857 = vmatmul.bf16.gmra.mxu0 %v2781
        %v2858 = vpop.f32.mrf.mxu0
        %v2859 = vadd.f32 0.0, %v2858
        %v2860 = vpop.f32.mrf.mxu0
        %v2861 = vadd.f32 0.0, %v2860
        %2862 = vmatmul.bf16.gmra.mxu0 %v2784
        %v2863 = vpop.f32.mrf.mxu0
        %v2864 = vadd.f32 0.0, %v2863
        %v2865 = vpop.f32.mrf.mxu0
        %v2866 = vadd.f32 0.0, %v2865
        %2867 = vmatmul.bf16.gmra.mxu0 %v2787
        %v2868 = vpop.f32.mrf.mxu0
        %v2869 = vadd.f32 0.0, %v2868
        %v2870 = vpop.f32.mrf.mxu0
        %v2871 = vadd.f32 0.0, %v2870
        %2872 = vmatmul.bf16.gmra.mxu0 %v2790
        %v2873 = vpop.f32.mrf.mxu0
        %v2874 = vadd.f32 0.0, %v2873
        %v2875 = vpop.f32.mrf.mxu0
        %v2876 = vadd.f32 0.0, %v2875
        %2877 = vmatmul.bf16.gmra.mxu0 %v2793
        %v2878 = vpop.f32.mrf.mxu0
        %v2879 = vadd.f32 0.0, %v2878
        %v2880 = vpop.f32.mrf.mxu0
        %v2881 = vadd.f32 0.0, %v2880
        %2882 = vmatmul.bf16.gmra.mxu0 %v2796
        %v2883 = vpop.f32.mrf.mxu0
        %v2884 = vadd.f32 0.0, %v2883
        %v2885 = vpop.f32.mrf.mxu0
        %v2886 = vadd.f32 0.0, %v2885
        %2887 = vmatmul.bf16.gmra.mxu0 %v2799
        %v2888 = vpop.f32.mrf.mxu0
        %v2889 = vadd.f32 0.0, %v2888
        %v2890 = vpop.f32.mrf.mxu0
        %v2891 = vadd.f32 0.0, %v2890
        %2892 = vmatmul.bf16.gmra.mxu0 %v2802
        %v2893 = vpop.f32.mrf.mxu0
        %v2894 = vadd.f32 0.0, %v2893
        %v2895 = vpop.f32.mrf.mxu0
        %v2896 = vadd.f32 0.0, %v2895
        %2897 = vmatmul.bf16.gmra.mxu0 %v2805
        %v2898 = vpop.f32.mrf.mxu0
        %v2899 = vadd.f32 0.0, %v2898
        %v2900 = vpop.f32.mrf.mxu0
        %v2901 = vadd.f32 0.0, %v2900
        %2902 = vmatmul.bf16.gmra.mxu0 %v2808
        %v2903 = vpop.f32.mrf.mxu0
        %v2904 = vadd.f32 0.0, %v2903
        %v2905 = vpop.f32.mrf.mxu0
        %v2906 = vadd.f32 0.0, %v2905
        %2907 = vmatmul.bf16.gmra.mxu0 %v2811
        %v2908 = vpop.f32.mrf.mxu0
        %v2909 = vadd.f32 0.0, %v2908
        %v2910 = vpop.f32.mrf.mxu0
        %v2911 = vadd.f32 0.0, %v2910
        %2912 = vmatmul.bf16.gmra.mxu0 %v2814
        %v2913 = vpop.f32.mrf.mxu0
        %v2914 = vadd.f32 0.0, %v2913
        %v2915 = vpop.f32.mrf.mxu0
        %v2916 = vadd.f32 0.0, %v2915
        %2917 = vdwg.mxu0
        %v2918 = vadd.f32 %v2549, %v2829
        %v2919 = vadd.f32 %v2550, %v2831
        %v2920 = vadd.f32 %v2551, %v2834
        %v2921 = vadd.f32 %v2552, %v2836
        %v2922 = vadd.f32 %v2553, %v2839
        %v2923 = vadd.f32 %v2554, %v2841
        %v2924 = vadd.f32 %v2555, %v2844
        %v2925 = vadd.f32 %v2556, %v2846
        %v2926 = vadd.f32 %v2557, %v2849
        %v2927 = vadd.f32 %v2558, %v2851
        %v2928 = vadd.f32 %v2559, %v2854
        %v2929 = vadd.f32 %v2560, %v2856
        %v2930 = vadd.f32 %v2561, %v2859
        %v2931 = vadd.f32 %v2562, %v2861
        %v2932 = vadd.f32 %v2563, %v2864
        %v2933 = vadd.f32 %v2564, %v2866
        %v2934 = vadd.f32 %v2565, %v2869
        %v2935 = vadd.f32 %v2566, %v2871
        %v2936 = vadd.f32 %v2567, %v2874
        %v2937 = vadd.f32 %v2568, %v2876
        %v2938 = vadd.f32 %v2569, %v2879
        %v2939 = vadd.f32 %v2570, %v2881
        %v2940 = vadd.f32 %v2571, %v2884
        %v2941 = vadd.f32 %v2572, %v2886
        %v2942 = vadd.f32 %v2573, %v2889
        %v2943 = vadd.f32 %v2574, %v2891
        %v2944 = vadd.f32 %v2575, %v2894
        %v2945 = vadd.f32 %v2576, %v2896
        %v2946 = vadd.f32 %v2577, %v2899
        %v2947 = vadd.f32 %v2578, %v2901
        %v2948 = vadd.f32 %v2579, %v2904
        %v2949 = vadd.f32 %v2580, %v2906
        %v2950 = vadd.f32 %v2581, %v2909
        %v2951 = vadd.f32 %v2582, %v2911
        %v2952 = vadd.f32 %v2583, %v2914
        %v2953 = vadd.f32 %v2584, %v2916
        %v2954 = vld [vmem:[%s411 + $0x10] sm:$0x8]
        %s2955 = scalar_lea.vmem %s3, 32
        %v2956 = vld [vmem:[%s2955] sm:$0xf]
        %v2958 = vunpack.c.l.b16 %v2954
        %v2959 = vpack.c.b16 %v2301, %v2958
        %vm2960 = vcmask 1044480
        %v2961 = vrot.slane %v2959, 3
        %v2962 = vrot.slane %v2338, 3
        %v2963 = vsel %vm2960, %v2961, %v2962
        %v2964 = vrot.slane %v2339, 3
        %v2965 = vsel %vm2960, %v2962, %v2964
        %v2966 = vrot.slane %v2340, 3
        %v2967 = vsel %vm2960, %v2964, %v2966
        %v2968 = vrot.slane %v2341, 3
        %v2969 = vsel %vm2960, %v2966, %v2968
        %v2970 = vrot.slane %v2342, 3
        %v2971 = vsel %vm2960, %v2968, %v2970
        %v2972 = vrot.slane %v2343, 3
        %v2973 = vsel %vm2960, %v2970, %v2972
        %v2974 = vrot.slane %v2344, 3
        %v2975 = vsel %vm2960, %v2972, %v2974
        %v2976 = vrot.slane %v2345, 3
        %v2977 = vsel %vm2960, %v2974, %v2976
        %v2978 = vrot.slane %v2346, 3
        %v2979 = vsel %vm2960, %v2976, %v2978
        %v2980 = vrot.slane %v2347, 3
        %v2981 = vsel %vm2960, %v2978, %v2980
        %v2982 = vrot.slane %v2348, 3
        %v2983 = vsel %vm2960, %v2980, %v2982
        %v2984 = vrot.slane %v2349, 3
        %v2985 = vsel %vm2960, %v2982, %v2984
        %v2986 = vrot.slane %v2350, 3
        %v2987 = vsel %vm2960, %v2984, %v2986
        %v2988 = vrot.slane %v2351, 3
        %v2989 = vsel %vm2960, %v2986, %v2988
        %v2990 = vrot.slane %v2352, 3
        %v2991 = vsel %vm2960, %v2988, %v2990
        %v2992 = vrot.slane %v2353, 3
        %v2993 = vsel %vm2960, %v2990, %v2992
        %v2994 = vrot.slane %v2354, 3
        %v2995 = vsel %vm2960, %v2992, %v2994
        %v2996 = vrot.slane %v2590, 3
        %v2997 = vsel %vm2960, %v2994, %v2996
        %v2999 = vsel %vm726, %v2963, 0
        %v3002 = vsel %vm726, %v2965, 0
        %v3005 = vsel %vm726, %v2967, 0
        %v3008 = vsel %vm726, %v2969, 0
        %v3011 = vsel %vm726, %v2971, 0
        %v3014 = vsel %vm726, %v2973, 0
        %v3017 = vsel %vm726, %v2975, 0
        %v3020 = vsel %vm726, %v2977, 0
        %v3023 = vsel %vm726, %v2979, 0
        %v3026 = vsel %vm726, %v2981, 0
        %v3029 = vsel %vm726, %v2983, 0
        %v3032 = vsel %vm726, %v2985, 0
        %v3035 = vsel %vm726, %v2987, 0
        %v3038 = vsel %vm726, %v2989, 0
        %v3041 = vsel %vm726, %v2991, 0
        %v3044 = vsel %vm726, %v2993, 0
        %v3047 = vsel %vm726, %v2995, 0
        %v3050 = vsel %vm726, %v2997, 0
        %v3053 = vsel %vm781, %v2956, 0
        %3055 = vmatpush.bf16.msra.mxu0 0
        %3056 = vmatpush.bf16.msra.mxu0 0
        %3057 = vmatpush.bf16.msra.mxu0 0
        %3058 = vmatpush.bf16.msra.mxu0 0
        %3059 = vmatpush.bf16.msra.mxu0 0
        %3060 = vmatpush.bf16.msra.mxu0 0
        %3061 = vmatpush.bf16.msra.mxu0 0
        %3062 = vmatpush.bf16.msra.mxu0 %v3053
        %3063 = vmatmul.bf16.gmra.mxu0 %v2999
        %v3064 = vpop.f32.mrf.mxu0
        %v3065 = vadd.f32 0.0, %v3064
        %v3066 = vpop.f32.mrf.mxu0
        %v3067 = vadd.f32 0.0, %v3066
        %3068 = vmatmul.bf16.gmra.mxu0 %v3002
        %v3069 = vpop.f32.mrf.mxu0
        %v3070 = vadd.f32 0.0, %v3069
        %v3071 = vpop.f32.mrf.mxu0
        %v3072 = vadd.f32 0.0, %v3071
        %3073 = vmatmul.bf16.gmra.mxu0 %v3005
        %v3074 = vpop.f32.mrf.mxu0
        %v3075 = vadd.f32 0.0, %v3074
        %v3076 = vpop.f32.mrf.mxu0
        %v3077 = vadd.f32 0.0, %v3076
        %3078 = vmatmul.bf16.gmra.mxu0 %v3008
        %v3079 = vpop.f32.mrf.mxu0
        %v3080 = vadd.f32 0.0, %v3079
        %v3081 = vpop.f32.mrf.mxu0
        %v3082 = vadd.f32 0.0, %v3081
        %3083 = vmatmul.bf16.gmra.mxu0 %v3011
        %v3084 = vpop.f32.mrf.mxu0
        %v3085 = vadd.f32 0.0, %v3084
        %v3086 = vpop.f32.mrf.mxu0
        %v3087 = vadd.f32 0.0, %v3086
        %3088 = vmatmul.bf16.gmra.mxu0 %v3014
        %v3089 = vpop.f32.mrf.mxu0
        %v3090 = vadd.f32 0.0, %v3089
        %v3091 = vpop.f32.mrf.mxu0
        %v3092 = vadd.f32 0.0, %v3091
        %3093 = vmatmul.bf16.gmra.mxu0 %v3017
        %v3094 = vpop.f32.mrf.mxu0
        %v3095 = vadd.f32 0.0, %v3094
        %v3096 = vpop.f32.mrf.mxu0
        %v3097 = vadd.f32 0.0, %v3096
        %3098 = vmatmul.bf16.gmra.mxu0 %v3020
        %v3099 = vpop.f32.mrf.mxu0
        %v3100 = vadd.f32 0.0, %v3099
        %v3101 = vpop.f32.mrf.mxu0
        %v3102 = vadd.f32 0.0, %v3101
        %3103 = vmatmul.bf16.gmra.mxu0 %v3023
        %v3104 = vpop.f32.mrf.mxu0
        %v3105 = vadd.f32 0.0, %v3104
        %v3106 = vpop.f32.mrf.mxu0
        %v3107 = vadd.f32 0.0, %v3106
        %3108 = vmatmul.bf16.gmra.mxu0 %v3026
        %v3109 = vpop.f32.mrf.mxu0
        %v3110 = vadd.f32 0.0, %v3109
        %v3111 = vpop.f32.mrf.mxu0
        %v3112 = vadd.f32 0.0, %v3111
        %3113 = vmatmul.bf16.gmra.mxu0 %v3029
        %v3114 = vpop.f32.mrf.mxu0
        %v3115 = vadd.f32 0.0, %v3114
        %v3116 = vpop.f32.mrf.mxu0
        %v3117 = vadd.f32 0.0, %v3116
        %3118 = vmatmul.bf16.gmra.mxu0 %v3032
        %v3119 = vpop.f32.mrf.mxu0
        %v3120 = vadd.f32 0.0, %v3119
        %v3121 = vpop.f32.mrf.mxu0
        %v3122 = vadd.f32 0.0, %v3121
        %3123 = vmatmul.bf16.gmra.mxu0 %v3035
        %v3124 = vpop.f32.mrf.mxu0
        %v3125 = vadd.f32 0.0, %v3124
        %v3126 = vpop.f32.mrf.mxu0
        %v3127 = vadd.f32 0.0, %v3126
        %3128 = vmatmul.bf16.gmra.mxu0 %v3038
        %v3129 = vpop.f32.mrf.mxu0
        %v3130 = vadd.f32 0.0, %v3129
        %v3131 = vpop.f32.mrf.mxu0
        %v3132 = vadd.f32 0.0, %v3131
        %3133 = vmatmul.bf16.gmra.mxu0 %v3041
        %v3134 = vpop.f32.mrf.mxu0
        %v3135 = vadd.f32 0.0, %v3134
        %v3136 = vpop.f32.mrf.mxu0
        %v3137 = vadd.f32 0.0, %v3136
        %3138 = vmatmul.bf16.gmra.mxu0 %v3044
        %v3139 = vpop.f32.mrf.mxu0
        %v3140 = vadd.f32 0.0, %v3139
        %v3141 = vpop.f32.mrf.mxu0
        %v3142 = vadd.f32 0.0, %v3141
        %3143 = vmatmul.bf16.gmra.mxu0 %v3047
        %v3144 = vpop.f32.mrf.mxu0
        %v3145 = vadd.f32 0.0, %v3144
        %v3146 = vpop.f32.mrf.mxu0
        %v3147 = vadd.f32 0.0, %v3146
        %3148 = vmatmul.bf16.gmra.mxu0 %v3050
        %v3149 = vpop.f32.mrf.mxu0
        %v3150 = vadd.f32 0.0, %v3149
        %v3151 = vpop.f32.mrf.mxu0
        %v3152 = vadd.f32 0.0, %v3151
        %3153 = vdwg.mxu0
        %v3154 = vadd.f32 %v2918, %v3065
        %v3155 = vadd.f32 %v2919, %v3067
        %v3156 = vadd.f32 %v2920, %v3070
        %v3157 = vadd.f32 %v2921, %v3072
        %v3158 = vadd.f32 %v2922, %v3075
        %v3159 = vadd.f32 %v2923, %v3077
        %v3160 = vadd.f32 %v2924, %v3080
        %v3161 = vadd.f32 %v2925, %v3082
        %v3162 = vadd.f32 %v2926, %v3085
        %v3163 = vadd.f32 %v2927, %v3087
        %v3164 = vadd.f32 %v2928, %v3090
        %v3165 = vadd.f32 %v2929, %v3092
        %v3166 = vadd.f32 %v2930, %v3095
        %v3167 = vadd.f32 %v2931, %v3097
        %v3168 = vadd.f32 %v2932, %v3100
        %v3169 = vadd.f32 %v2933, %v3102
        %v3170 = vadd.f32 %v2934, %v3105
        %v3171 = vadd.f32 %v2935, %v3107
        %v3172 = vadd.f32 %v2936, %v3110
        %v3173 = vadd.f32 %v2937, %v3112
        %v3174 = vadd.f32 %v2938, %v3115
        %v3175 = vadd.f32 %v2939, %v3117
        %v3176 = vadd.f32 %v2940, %v3120
        %v3177 = vadd.f32 %v2941, %v3122
        %v3178 = vadd.f32 %v2942, %v3125
        %v3179 = vadd.f32 %v2943, %v3127
        %v3180 = vadd.f32 %v2944, %v3130
        %v3181 = vadd.f32 %v2945, %v3132
        %v3182 = vadd.f32 %v2946, %v3135
        %v3183 = vadd.f32 %v2947, %v3137
        %v3184 = vadd.f32 %v2948, %v3140
        %v3185 = vadd.f32 %v2949, %v3142
        %v3186 = vadd.f32 %v2950, %v3145
        %v3187 = vadd.f32 %v2951, %v3147
        %v3188 = vadd.f32 %v2952, %v3150
        %v3189 = vadd.f32 %v2953, %v3152
        %v3190 = vld [vmem:[%s421] sm:$0xf]
        %v3191 = vld [vmem:[%s421 + $0x4] sm:$0xf]
        %v3192 = vld [vmem:[%s421 + $0x8] sm:$0xf]
        %v3193 = vld [vmem:[%s421 + $0xc] sm:$0xf]
        %v3194 = vld [vmem:[%s421 + $0x10] sm:$0xf]
        %v3195 = vld [vmem:[%s421 + $0x14] sm:$0xf]
        %v3196 = vld [vmem:[%s421 + $0x18] sm:$0xf]
        %v3197 = vld [vmem:[%s421 + $0x1c] sm:$0xf]
        %v3198 = vld [vmem:[%s421 + $0x20] sm:$0xf]
        %v3199 = vld [vmem:[%s421 + $0x24] sm:$0xf]
        %v3200 = vld [vmem:[%s421 + $0x28] sm:$0xf]
        %v3201 = vld [vmem:[%s421 + $0x2c] sm:$0xf]
        %v3202 = vld [vmem:[%s421 + $0x30] sm:$0xf]
        %v3203 = vld [vmem:[%s421 + $0x34] sm:$0xf]
        %v3204 = vld [vmem:[%s421 + $0x38] sm:$0xf]
        %v3205 = vld [vmem:[%s421 + $0x3c] sm:$0xf]
        %v3206 = vld [vmem:[%s421 + $0x40] sm:$0xf]
        %v3207 = vld [vmem:[%s421 + $0x44] sm:$0xf]
        %v3208 = vld [vmem:[%s421 + $0x48] sm:$0xf]
        %v3209 = vld [vmem:[%s421 + $0x4c] sm:$0xf]
        %v3210 = vld [vmem:[%s421 + $0x50] sm:$0xf]
        %v3211 = vld [vmem:[%s421 + $0x54] sm:$0xf]
        %v3212 = vld [vmem:[%s421 + $0x58] sm:$0xf]
        %v3213 = vld [vmem:[%s421 + $0x5c] sm:$0xf]
        %v3214 = vld [vmem:[%s421 + $0x60] sm:$0xf]
        %v3215 = vld [vmem:[%s421 + $0x64] sm:$0xf]
        %v3216 = vld [vmem:[%s421 + $0x68] sm:$0xf]
        %v3217 = vld [vmem:[%s421 + $0x6c] sm:$0xf]
        %v3218 = vld [vmem:[%s421 + $0x70] sm:$0xf]
        %v3219 = vld [vmem:[%s421 + $0x74] sm:$0xf]
        %v3220 = vld [vmem:[%s421 + $0x78] sm:$0xf]
        %v3221 = vld [vmem:[%s421 + $0x7c] sm:$0xf]
        %v3222 = vld [vmem:[%s421 + $0x80] sm:$0xf]
        %v3223 = vld [vmem:[%s421 + $0x84] sm:$0xf]
        %v3224 = vld [vmem:[%s421 + $0x88] sm:$0xf]
        %v3225 = vld [vmem:[%s421 + $0x8c] sm:$0xf]
        %s3226 = scalar_lea.vmem %s3, 36
        %v3227 = vld [vmem:[%s3226] sm:$0xf]
        %v3264 = vunpack.c.l.b16 %v3190
        %v3265 = vunpack.c.l.b16 %v3191
        %v3266 = vunpack.c.l.b16 %v3192
        %v3267 = vunpack.c.l.b16 %v3193
        %v3268 = vunpack.c.l.b16 %v3194
        %v3269 = vunpack.c.l.b16 %v3195
        %v3270 = vunpack.c.l.b16 %v3196
        %v3271 = vunpack.c.l.b16 %v3197
        %v3272 = vunpack.c.l.b16 %v3198
        %v3273 = vunpack.c.l.b16 %v3199
        %v3274 = vunpack.c.l.b16 %v3200
        %v3275 = vunpack.c.l.b16 %v3201
        %v3276 = vunpack.c.l.b16 %v3202
        %v3277 = vunpack.c.l.b16 %v3203
        %v3278 = vunpack.c.l.b16 %v3204
        %v3279 = vunpack.c.l.b16 %v3205
        %v3280 = vunpack.c.l.b16 %v3206
        %v3281 = vunpack.c.l.b16 %v3207
        %v3282 = vunpack.c.l.b16 %v3208
        %v3283 = vunpack.c.l.b16 %v3209
        %v3284 = vunpack.c.l.b16 %v3210
        %v3285 = vunpack.c.l.b16 %v3211
        %v3286 = vunpack.c.l.b16 %v3212
        %v3287 = vunpack.c.l.b16 %v3213
        %v3288 = vunpack.c.l.b16 %v3214
        %v3289 = vunpack.c.l.b16 %v3215
        %v3290 = vunpack.c.l.b16 %v3216
        %v3291 = vunpack.c.l.b16 %v3217
        %v3292 = vunpack.c.l.b16 %v3218
        %v3293 = vunpack.c.l.b16 %v3219
        %v3294 = vunpack.c.l.b16 %v3220
        %v3295 = vunpack.c.l.b16 %v3221
        %v3296 = vunpack.c.l.b16 %v3222
        %v3297 = vunpack.c.l.b16 %v3223
        %v3298 = vunpack.c.l.b16 %v3224
        %v3299 = vunpack.c.l.b16 %v3225
        %v3300 = vpack.c.b16 %v3265, %v3264
        %v3301 = vpack.c.b16 %v3267, %v3266
        %v3302 = vpack.c.b16 %v3269, %v3268
        %v3303 = vpack.c.b16 %v3271, %v3270
        %v3304 = vpack.c.b16 %v3273, %v3272
        %v3305 = vpack.c.b16 %v3275, %v3274
        %v3306 = vpack.c.b16 %v3277, %v3276
        %v3307 = vpack.c.b16 %v3279, %v3278
        %v3308 = vpack.c.b16 %v3281, %v3280
        %v3309 = vpack.c.b16 %v3283, %v3282
        %v3310 = vpack.c.b16 %v3285, %v3284
        %v3311 = vpack.c.b16 %v3287, %v3286
        %v3312 = vpack.c.b16 %v3289, %v3288
        %v3313 = vpack.c.b16 %v3291, %v3290
        %v3314 = vpack.c.b16 %v3293, %v3292
        %v3315 = vpack.c.b16 %v3295, %v3294
        %v3316 = vpack.c.b16 %v3297, %v3296
        %v3317 = vpack.c.b16 %v3299, %v3298
        %v3319 = vsel %vm726, %v3300, 0
        %v3322 = vsel %vm726, %v3301, 0
        %v3325 = vsel %vm726, %v3302, 0
        %v3328 = vsel %vm726, %v3303, 0
        %v3331 = vsel %vm726, %v3304, 0
        %v3334 = vsel %vm726, %v3305, 0
        %v3337 = vsel %vm726, %v3306, 0
        %v3340 = vsel %vm726, %v3307, 0
        %v3343 = vsel %vm726, %v3308, 0
        %v3346 = vsel %vm726, %v3309, 0
        %v3349 = vsel %vm726, %v3310, 0
        %v3352 = vsel %vm726, %v3311, 0
        %v3355 = vsel %vm726, %v3312, 0
        %v3358 = vsel %vm726, %v3313, 0
        %v3361 = vsel %vm726, %v3314, 0
        %v3364 = vsel %vm726, %v3315, 0
        %v3367 = vsel %vm726, %v3316, 0
        %v3370 = vsel %vm726, %v3317, 0
        %v3373 = vsel %vm781, %v3227, 0
        %3375 = vmatpush.bf16.msra.mxu0 0
        %3376 = vmatpush.bf16.msra.mxu0 0
        %3377 = vmatpush.bf16.msra.mxu0 0
        %3378 = vmatpush.bf16.msra.mxu0 0
        %3379 = vmatpush.bf16.msra.mxu0 0
        %3380 = vmatpush.bf16.msra.mxu0 0
        %3381 = vmatpush.bf16.msra.mxu0 0
        %3382 = vmatpush.bf16.msra.mxu0 %v3373
        %3383 = vmatmul.bf16.gmra.mxu0 %v3319
        %v3384 = vpop.f32.mrf.mxu0
        %v3385 = vadd.f32 0.0, %v3384
        %v3386 = vpop.f32.mrf.mxu0
        %v3387 = vadd.f32 0.0, %v3386
        %3388 = vmatmul.bf16.gmra.mxu0 %v3322
        %v3389 = vpop.f32.mrf.mxu0
        %v3390 = vadd.f32 0.0, %v3389
        %v3391 = vpop.f32.mrf.mxu0
        %v3392 = vadd.f32 0.0, %v3391
        %3393 = vmatmul.bf16.gmra.mxu0 %v3325
        %v3394 = vpop.f32.mrf.mxu0
        %v3395 = vadd.f32 0.0, %v3394
        %v3396 = vpop.f32.mrf.mxu0
        %v3397 = vadd.f32 0.0, %v3396
        %3398 = vmatmul.bf16.gmra.mxu0 %v3328
        %v3399 = vpop.f32.mrf.mxu0
        %v3400 = vadd.f32 0.0, %v3399
        %v3401 = vpop.f32.mrf.mxu0
        %v3402 = vadd.f32 0.0, %v3401
        %3403 = vmatmul.bf16.gmra.mxu0 %v3331
        %v3404 = vpop.f32.mrf.mxu0
        %v3405 = vadd.f32 0.0, %v3404
        %v3406 = vpop.f32.mrf.mxu0
        %v3407 = vadd.f32 0.0, %v3406
        %3408 = vmatmul.bf16.gmra.mxu0 %v3334
        %v3409 = vpop.f32.mrf.mxu0
        %v3410 = vadd.f32 0.0, %v3409
        %v3411 = vpop.f32.mrf.mxu0
        %v3412 = vadd.f32 0.0, %v3411
        %3413 = vmatmul.bf16.gmra.mxu0 %v3337
        %v3414 = vpop.f32.mrf.mxu0
        %v3415 = vadd.f32 0.0, %v3414
        %v3416 = vpop.f32.mrf.mxu0
        %v3417 = vadd.f32 0.0, %v3416
        %3418 = vmatmul.bf16.gmra.mxu0 %v3340
        %v3419 = vpop.f32.mrf.mxu0
        %v3420 = vadd.f32 0.0, %v3419
        %v3421 = vpop.f32.mrf.mxu0
        %v3422 = vadd.f32 0.0, %v3421
        %3423 = vmatmul.bf16.gmra.mxu0 %v3343
        %v3424 = vpop.f32.mrf.mxu0
        %v3425 = vadd.f32 0.0, %v3424
        %v3426 = vpop.f32.mrf.mxu0
        %v3427 = vadd.f32 0.0, %v3426
        %3428 = vmatmul.bf16.gmra.mxu0 %v3346
        %v3429 = vpop.f32.mrf.mxu0
        %v3430 = vadd.f32 0.0, %v3429
        %v3431 = vpop.f32.mrf.mxu0
        %v3432 = vadd.f32 0.0, %v3431
        %3433 = vmatmul.bf16.gmra.mxu0 %v3349
        %v3434 = vpop.f32.mrf.mxu0
        %v3435 = vadd.f32 0.0, %v3434
        %v3436 = vpop.f32.mrf.mxu0
        %v3437 = vadd.f32 0.0, %v3436
        %3438 = vmatmul.bf16.gmra.mxu0 %v3352
        %v3439 = vpop.f32.mrf.mxu0
        %v3440 = vadd.f32 0.0, %v3439
        %v3441 = vpop.f32.mrf.mxu0
        %v3442 = vadd.f32 0.0, %v3441
        %3443 = vmatmul.bf16.gmra.mxu0 %v3355
        %v3444 = vpop.f32.mrf.mxu0
        %v3445 = vadd.f32 0.0, %v3444
        %v3446 = vpop.f32.mrf.mxu0
        %v3447 = vadd.f32 0.0, %v3446
        %3448 = vmatmul.bf16.gmra.mxu0 %v3358
        %v3449 = vpop.f32.mrf.mxu0
        %v3450 = vadd.f32 0.0, %v3449
        %v3451 = vpop.f32.mrf.mxu0
        %v3452 = vadd.f32 0.0, %v3451
        %3453 = vmatmul.bf16.gmra.mxu0 %v3361
        %v3454 = vpop.f32.mrf.mxu0
        %v3455 = vadd.f32 0.0, %v3454
        %v3456 = vpop.f32.mrf.mxu0
        %v3457 = vadd.f32 0.0, %v3456
        %3458 = vmatmul.bf16.gmra.mxu0 %v3364
        %v3459 = vpop.f32.mrf.mxu0
        %v3460 = vadd.f32 0.0, %v3459
        %v3461 = vpop.f32.mrf.mxu0
        %v3462 = vadd.f32 0.0, %v3461
        %3463 = vmatmul.bf16.gmra.mxu0 %v3367
        %v3464 = vpop.f32.mrf.mxu0
        %v3465 = vadd.f32 0.0, %v3464
        %v3466 = vpop.f32.mrf.mxu0
        %v3467 = vadd.f32 0.0, %v3466
        %3468 = vmatmul.bf16.gmra.mxu0 %v3370
        %v3469 = vpop.f32.mrf.mxu0
        %v3470 = vadd.f32 0.0, %v3469
        %v3471 = vpop.f32.mrf.mxu0
        %v3472 = vadd.f32 0.0, %v3471
        %3473 = vdwg.mxu0
        %v3474 = vadd.f32 %v3154, %v3385
        %v3475 = vadd.f32 %v3155, %v3387
        %v3476 = vadd.f32 %v3156, %v3390
        %v3477 = vadd.f32 %v3157, %v3392
        %v3478 = vadd.f32 %v3158, %v3395
        %v3479 = vadd.f32 %v3159, %v3397
        %v3480 = vadd.f32 %v3160, %v3400
        %v3481 = vadd.f32 %v3161, %v3402
        %v3482 = vadd.f32 %v3162, %v3405
        %v3483 = vadd.f32 %v3163, %v3407
        %v3484 = vadd.f32 %v3164, %v3410
        %v3485 = vadd.f32 %v3165, %v3412
        %v3486 = vadd.f32 %v3166, %v3415
        %v3487 = vadd.f32 %v3167, %v3417
        %v3488 = vadd.f32 %v3168, %v3420
        %v3489 = vadd.f32 %v3169, %v3422
        %v3490 = vadd.f32 %v3170, %v3425
        %v3491 = vadd.f32 %v3171, %v3427
        %v3492 = vadd.f32 %v3172, %v3430
        %v3493 = vadd.f32 %v3173, %v3432
        %v3494 = vadd.f32 %v3174, %v3435
        %v3495 = vadd.f32 %v3175, %v3437
        %v3496 = vadd.f32 %v3176, %v3440
        %v3497 = vadd.f32 %v3177, %v3442
        %v3498 = vadd.f32 %v3178, %v3445
        %v3499 = vadd.f32 %v3179, %v3447
        %v3500 = vadd.f32 %v3180, %v3450
        %v3501 = vadd.f32 %v3181, %v3452
        %v3502 = vadd.f32 %v3182, %v3455
        %v3503 = vadd.f32 %v3183, %v3457
        %v3504 = vadd.f32 %v3184, %v3460
        %v3505 = vadd.f32 %v3185, %v3462
        %v3506 = vadd.f32 %v3186, %v3465
        %v3507 = vadd.f32 %v3187, %v3467
        %v3508 = vadd.f32 %v3188, %v3470
        %v3509 = vadd.f32 %v3189, %v3472
        %v3510 = vld [vmem:[%s421] sm:$0xf]
        %v3511 = vld [vmem:[%s421 + $0x4] sm:$0xf]
        %v3512 = vld [vmem:[%s421 + $0x8] sm:$0xf]
        %v3513 = vld [vmem:[%s421 + $0xc] sm:$0xf]
        %v3514 = vld [vmem:[%s421 + $0x10] sm:$0xf]
        %v3515 = vld [vmem:[%s421 + $0x14] sm:$0xf]
        %v3516 = vld [vmem:[%s421 + $0x18] sm:$0xf]
        %v3517 = vld [vmem:[%s421 + $0x1c] sm:$0xf]
        %v3518 = vld [vmem:[%s421 + $0x20] sm:$0xf]
        %v3519 = vld [vmem:[%s421 + $0x24] sm:$0xf]
        %v3520 = vld [vmem:[%s421 + $0x28] sm:$0xf]
        %v3521 = vld [vmem:[%s421 + $0x2c] sm:$0xf]
        %v3522 = vld [vmem:[%s421 + $0x30] sm:$0xf]
        %v3523 = vld [vmem:[%s421 + $0x34] sm:$0xf]
        %v3524 = vld [vmem:[%s421 + $0x38] sm:$0xf]
        %v3525 = vld [vmem:[%s421 + $0x3c] sm:$0xf]
        %v3526 = vld [vmem:[%s421 + $0x40] sm:$0xf]
        %v3527 = vld [vmem:[%s421 + $0x44] sm:$0xf]
        %v3528 = vld [vmem:[%s421 + $0x48] sm:$0xf]
        %v3529 = vld [vmem:[%s421 + $0x4c] sm:$0xf]
        %v3530 = vld [vmem:[%s421 + $0x50] sm:$0xf]
        %v3531 = vld [vmem:[%s421 + $0x54] sm:$0xf]
        %v3532 = vld [vmem:[%s421 + $0x58] sm:$0xf]
        %v3533 = vld [vmem:[%s421 + $0x5c] sm:$0xf]
        %v3534 = vld [vmem:[%s421 + $0x60] sm:$0xf]
        %v3535 = vld [vmem:[%s421 + $0x64] sm:$0xf]
        %v3536 = vld [vmem:[%s421 + $0x68] sm:$0xf]
        %v3537 = vld [vmem:[%s421 + $0x6c] sm:$0xf]
        %v3538 = vld [vmem:[%s421 + $0x70] sm:$0xf]
        %v3539 = vld [vmem:[%s421 + $0x74] sm:$0xf]
        %v3540 = vld [vmem:[%s421 + $0x78] sm:$0xf]
        %v3541 = vld [vmem:[%s421 + $0x7c] sm:$0xf]
        %v3542 = vld [vmem:[%s421 + $0x80] sm:$0xf]
        %v3543 = vld [vmem:[%s421 + $0x84] sm:$0xf]
        %v3544 = vld [vmem:[%s421 + $0x88] sm:$0xf]
        %v3545 = vld [vmem:[%s421 + $0x8c] sm:$0xf]
        %v3546 = vld [vmem:[%s421 + $0x90] sm:$0x1]
        %s3547 = scalar_lea.vmem %s3, 40
        %v3548 = vld [vmem:[%s3547] sm:$0xf]
        %v3586 = vunpack.c.l.b16 %v3510
        %v3587 = vunpack.c.l.b16 %v3511
        %v3588 = vunpack.c.l.b16 %v3512
        %v3589 = vunpack.c.l.b16 %v3513
        %v3590 = vunpack.c.l.b16 %v3514
        %v3591 = vunpack.c.l.b16 %v3515
        %v3592 = vunpack.c.l.b16 %v3516
        %v3593 = vunpack.c.l.b16 %v3517
        %v3594 = vunpack.c.l.b16 %v3518
        %v3595 = vunpack.c.l.b16 %v3519
        %v3596 = vunpack.c.l.b16 %v3520
        %v3597 = vunpack.c.l.b16 %v3521
        %v3598 = vunpack.c.l.b16 %v3522
        %v3599 = vunpack.c.l.b16 %v3523
        %v3600 = vunpack.c.l.b16 %v3524
        %v3601 = vunpack.c.l.b16 %v3525
        %v3602 = vunpack.c.l.b16 %v3526
        %v3603 = vunpack.c.l.b16 %v3527
        %v3604 = vunpack.c.l.b16 %v3528
        %v3605 = vunpack.c.l.b16 %v3529
        %v3606 = vunpack.c.l.b16 %v3530
        %v3607 = vunpack.c.l.b16 %v3531
        %v3608 = vunpack.c.l.b16 %v3532
        %v3609 = vunpack.c.l.b16 %v3533
        %v3610 = vunpack.c.l.b16 %v3534
        %v3611 = vunpack.c.l.b16 %v3535
        %v3612 = vunpack.c.l.b16 %v3536
        %v3613 = vunpack.c.l.b16 %v3537
        %v3614 = vunpack.c.l.b16 %v3538
        %v3615 = vunpack.c.l.b16 %v3539
        %v3616 = vunpack.c.l.b16 %v3540
        %v3617 = vunpack.c.l.b16 %v3541
        %v3618 = vunpack.c.l.b16 %v3542
        %v3619 = vunpack.c.l.b16 %v3543
        %v3620 = vunpack.c.l.b16 %v3544
        %v3621 = vunpack.c.l.b16 %v3545
        %v3622 = vunpack.c.l.b16 %v3546
        %v3623 = vpack.c.b16 %v3587, %v3586
        %v3624 = vpack.c.b16 %v3589, %v3588
        %v3625 = vpack.c.b16 %v3591, %v3590
        %v3626 = vpack.c.b16 %v3593, %v3592
        %v3627 = vpack.c.b16 %v3595, %v3594
        %v3628 = vpack.c.b16 %v3597, %v3596
        %v3629 = vpack.c.b16 %v3599, %v3598
        %v3630 = vpack.c.b16 %v3601, %v3600
        %v3631 = vpack.c.b16 %v3603, %v3602
        %v3632 = vpack.c.b16 %v3605, %v3604
        %v3633 = vpack.c.b16 %v3607, %v3606
        %v3634 = vpack.c.b16 %v3609, %v3608
        %v3635 = vpack.c.b16 %v3611, %v3610
        %v3636 = vpack.c.b16 %v3613, %v3612
        %v3637 = vpack.c.b16 %v3615, %v3614
        %v3638 = vpack.c.b16 %v3617, %v3616
        %v3639 = vpack.c.b16 %v3619, %v3618
        %v3640 = vpack.c.b16 %v3621, %v3620
        %v3641 = vpack.c.b16 %v3622, %v3622
        %v3643 = vshrl.u32 %v3623, 16
        %v3645 = vshll.u32 %v3623, 16
        %v3647 = vrot.slane %v3645, 1
        %v3648 = vor.u32 %v3643, %v3647
        %v3650 = vshll.u32 %v3624, 16
        %v3652 = vrot.slane %v3650, 1
        %v3653 = vsel %vm577, %v3648, %v3652
        %v3654 = vshrl.u32 %v3624, 16
        %v3656 = vor.u32 %v3654, %v3652
        %v3658 = vshll.u32 %v3625, 16
        %v3660 = vrot.slane %v3658, 1
        %v3661 = vsel %vm577, %v3656, %v3660
        %v3662 = vshrl.u32 %v3625, 16
        %v3664 = vor.u32 %v3662, %v3660
        %v3666 = vshll.u32 %v3626, 16
        %v3668 = vrot.slane %v3666, 1
        %v3669 = vsel %vm577, %v3664, %v3668
        %v3670 = vshrl.u32 %v3626, 16
        %v3672 = vor.u32 %v3670, %v3668
        %v3674 = vshll.u32 %v3627, 16
        %v3676 = vrot.slane %v3674, 1
        %v3677 = vsel %vm577, %v3672, %v3676
        %v3678 = vshrl.u32 %v3627, 16
        %v3680 = vor.u32 %v3678, %v3676
        %v3682 = vshll.u32 %v3628, 16
        %v3684 = vrot.slane %v3682, 1
        %v3685 = vsel %vm577, %v3680, %v3684
        %v3686 = vshrl.u32 %v3628, 16
        %v3688 = vor.u32 %v3686, %v3684
        %v3690 = vshll.u32 %v3629, 16
        %v3692 = vrot.slane %v3690, 1
        %v3693 = vsel %vm577, %v3688, %v3692
        %v3694 = vshrl.u32 %v3629, 16
        %v3696 = vor.u32 %v3694, %v3692
        %v3698 = vshll.u32 %v3630, 16
        %v3700 = vrot.slane %v3698, 1
        %v3701 = vsel %vm577, %v3696, %v3700
        %v3702 = vshrl.u32 %v3630, 16
        %v3704 = vor.u32 %v3702, %v3700
        %v3706 = vshll.u32 %v3631, 16
        %v3708 = vrot.slane %v3706, 1
        %v3709 = vsel %vm577, %v3704, %v3708
        %v3710 = vshrl.u32 %v3631, 16
        %v3712 = vor.u32 %v3710, %v3708
        %v3714 = vshll.u32 %v3632, 16
        %v3716 = vrot.slane %v3714, 1
        %v3717 = vsel %vm577, %v3712, %v3716
        %v3718 = vshrl.u32 %v3632, 16
        %v3720 = vor.u32 %v3718, %v3716
        %v3722 = vshll.u32 %v3633, 16
        %v3724 = vrot.slane %v3722, 1
        %v3725 = vsel %vm577, %v3720, %v3724
        %v3726 = vshrl.u32 %v3633, 16
        %v3728 = vor.u32 %v3726, %v3724
        %v3730 = vshll.u32 %v3634, 16
        %v3732 = vrot.slane %v3730, 1
        %v3733 = vsel %vm577, %v3728, %v3732
        %v3734 = vshrl.u32 %v3634, 16
        %v3736 = vor.u32 %v3734, %v3732
        %v3738 = vshll.u32 %v3635, 16
        %v3740 = vrot.slane %v3738, 1
        %v3741 = vsel %vm577, %v3736, %v3740
        %v3742 = vshrl.u32 %v3635, 16
        %v3744 = vor.u32 %v3742, %v3740
        %v3746 = vshll.u32 %v3636, 16
        %v3748 = vrot.slane %v3746, 1
        %v3749 = vsel %vm577, %v3744, %v3748
        %v3750 = vshrl.u32 %v3636, 16
        %v3752 = vor.u32 %v3750, %v3748
        %v3754 = vshll.u32 %v3637, 16
        %v3756 = vrot.slane %v3754, 1
        %v3757 = vsel %vm577, %v3752, %v3756
        %v3758 = vshrl.u32 %v3637, 16
        %v3760 = vor.u32 %v3758, %v3756
        %v3762 = vshll.u32 %v3638, 16
        %v3764 = vrot.slane %v3762, 1
        %v3765 = vsel %vm577, %v3760, %v3764
        %v3766 = vshrl.u32 %v3638, 16
        %v3768 = vor.u32 %v3766, %v3764
        %v3770 = vshll.u32 %v3639, 16
        %v3772 = vrot.slane %v3770, 1
        %v3773 = vsel %vm577, %v3768, %v3772
        %v3774 = vshrl.u32 %v3639, 16
        %v3776 = vor.u32 %v3774, %v3772
        %v3778 = vshll.u32 %v3640, 16
        %v3780 = vrot.slane %v3778, 1
        %v3781 = vsel %vm577, %v3776, %v3780
        %v3782 = vshrl.u32 %v3640, 16
        %v3784 = vor.u32 %v3782, %v3780
        %v3786 = vshll.u32 %v3641, 16
        %v3788 = vrot.slane %v3786, 1
        %v3789 = vsel %vm577, %v3784, %v3788
        %v3791 = vsel %vm726, %v3653, 0
        %v3794 = vsel %vm726, %v3661, 0
        %v3797 = vsel %vm726, %v3669, 0
        %v3800 = vsel %vm726, %v3677, 0
        %v3803 = vsel %vm726, %v3685, 0
        %v3806 = vsel %vm726, %v3693, 0
        %v3809 = vsel %vm726, %v3701, 0
        %v3812 = vsel %vm726, %v3709, 0
        %v3815 = vsel %vm726, %v3717, 0
        %v3818 = vsel %vm726, %v3725, 0
        %v3821 = vsel %vm726, %v3733, 0
        %v3824 = vsel %vm726, %v3741, 0
        %v3827 = vsel %vm726, %v3749, 0
        %v3830 = vsel %vm726, %v3757, 0
        %v3833 = vsel %vm726, %v3765, 0
        %v3836 = vsel %vm726, %v3773, 0
        %v3839 = vsel %vm726, %v3781, 0
        %v3842 = vsel %vm726, %v3789, 0
        %v3845 = vsel %vm781, %v3548, 0
        %3847 = vmatpush.bf16.msra.mxu0 0
        %3848 = vmatpush.bf16.msra.mxu0 0
        %3849 = vmatpush.bf16.msra.mxu0 0
        %3850 = vmatpush.bf16.msra.mxu0 0
        %3851 = vmatpush.bf16.msra.mxu0 0
        %3852 = vmatpush.bf16.msra.mxu0 0
        %3853 = vmatpush.bf16.msra.mxu0 0
        %3854 = vmatpush.bf16.msra.mxu0 %v3845
        %3855 = vmatmul.bf16.gmra.mxu0 %v3791
        %v3856 = vpop.f32.mrf.mxu0
        %v3857 = vadd.f32 0.0, %v3856
        %v3858 = vpop.f32.mrf.mxu0
        %v3859 = vadd.f32 0.0, %v3858
        %3860 = vmatmul.bf16.gmra.mxu0 %v3794
        %v3861 = vpop.f32.mrf.mxu0
        %v3862 = vadd.f32 0.0, %v3861
        %v3863 = vpop.f32.mrf.mxu0
        %v3864 = vadd.f32 0.0, %v3863
        %3865 = vmatmul.bf16.gmra.mxu0 %v3797
        %v3866 = vpop.f32.mrf.mxu0
        %v3867 = vadd.f32 0.0, %v3866
        %v3868 = vpop.f32.mrf.mxu0
        %v3869 = vadd.f32 0.0, %v3868
        %3870 = vmatmul.bf16.gmra.mxu0 %v3800
        %v3871 = vpop.f32.mrf.mxu0
        %v3872 = vadd.f32 0.0, %v3871
        %v3873 = vpop.f32.mrf.mxu0
        %v3874 = vadd.f32 0.0, %v3873
        %3875 = vmatmul.bf16.gmra.mxu0 %v3803
        %v3876 = vpop.f32.mrf.mxu0
        %v3877 = vadd.f32 0.0, %v3876
        %v3878 = vpop.f32.mrf.mxu0
        %v3879 = vadd.f32 0.0, %v3878
        %3880 = vmatmul.bf16.gmra.mxu0 %v3806
        %v3881 = vpop.f32.mrf.mxu0
        %v3882 = vadd.f32 0.0, %v3881
        %v3883 = vpop.f32.mrf.mxu0
        %v3884 = vadd.f32 0.0, %v3883
        %3885 = vmatmul.bf16.gmra.mxu0 %v3809
        %v3886 = vpop.f32.mrf.mxu0
        %v3887 = vadd.f32 0.0, %v3886
        %v3888 = vpop.f32.mrf.mxu0
        %v3889 = vadd.f32 0.0, %v3888
        %3890 = vmatmul.bf16.gmra.mxu0 %v3812
        %v3891 = vpop.f32.mrf.mxu0
        %v3892 = vadd.f32 0.0, %v3891
        %v3893 = vpop.f32.mrf.mxu0
        %v3894 = vadd.f32 0.0, %v3893
        %3895 = vmatmul.bf16.gmra.mxu0 %v3815
        %v3896 = vpop.f32.mrf.mxu0
        %v3897 = vadd.f32 0.0, %v3896
        %v3898 = vpop.f32.mrf.mxu0
        %v3899 = vadd.f32 0.0, %v3898
        %3900 = vmatmul.bf16.gmra.mxu0 %v3818
        %v3901 = vpop.f32.mrf.mxu0
        %v3902 = vadd.f32 0.0, %v3901
        %v3903 = vpop.f32.mrf.mxu0
        %v3904 = vadd.f32 0.0, %v3903
        %3905 = vmatmul.bf16.gmra.mxu0 %v3821
        %v3906 = vpop.f32.mrf.mxu0
        %v3907 = vadd.f32 0.0, %v3906
        %v3908 = vpop.f32.mrf.mxu0
        %v3909 = vadd.f32 0.0, %v3908
        %3910 = vmatmul.bf16.gmra.mxu0 %v3824
        %v3911 = vpop.f32.mrf.mxu0
        %v3912 = vadd.f32 0.0, %v3911
        %v3913 = vpop.f32.mrf.mxu0
        %v3914 = vadd.f32 0.0, %v3913
        %3915 = vmatmul.bf16.gmra.mxu0 %v3827
        %v3916 = vpop.f32.mrf.mxu0
        %v3917 = vadd.f32 0.0, %v3916
        %v3918 = vpop.f32.mrf.mxu0
        %v3919 = vadd.f32 0.0, %v3918
        %3920 = vmatmul.bf16.gmra.mxu0 %v3830
        %v3921 = vpop.f32.mrf.mxu0
        %v3922 = vadd.f32 0.0, %v3921
        %v3923 = vpop.f32.mrf.mxu0
        %v3924 = vadd.f32 0.0, %v3923
        %3925 = vmatmul.bf16.gmra.mxu0 %v3833
        %v3926 = vpop.f32.mrf.mxu0
        %v3927 = vadd.f32 0.0, %v3926
        %v3928 = vpop.f32.mrf.mxu0
        %v3929 = vadd.f32 0.0, %v3928
        %3930 = vmatmul.bf16.gmra.mxu0 %v3836
        %v3931 = vpop.f32.mrf.mxu0
        %v3932 = vadd.f32 0.0, %v3931
        %v3933 = vpop.f32.mrf.mxu0
        %v3934 = vadd.f32 0.0, %v3933
        %3935 = vmatmul.bf16.gmra.mxu0 %v3839
        %v3936 = vpop.f32.mrf.mxu0
        %v3937 = vadd.f32 0.0, %v3936
        %v3938 = vpop.f32.mrf.mxu0
        %v3939 = vadd.f32 0.0, %v3938
        %3940 = vmatmul.bf16.gmra.mxu0 %v3842
        %v3941 = vpop.f32.mrf.mxu0
        %v3942 = vadd.f32 0.0, %v3941
        %v3943 = vpop.f32.mrf.mxu0
        %v3944 = vadd.f32 0.0, %v3943
        %3945 = vdwg.mxu0
        %v3946 = vadd.f32 %v3474, %v3857
        %v3947 = vadd.f32 %v3475, %v3859
        %v3948 = vadd.f32 %v3476, %v3862
        %v3949 = vadd.f32 %v3477, %v3864
        %v3950 = vadd.f32 %v3478, %v3867
        %v3951 = vadd.f32 %v3479, %v3869
        %v3952 = vadd.f32 %v3480, %v3872
        %v3953 = vadd.f32 %v3481, %v3874
        %v3954 = vadd.f32 %v3482, %v3877
        %v3955 = vadd.f32 %v3483, %v3879
        %v3956 = vadd.f32 %v3484, %v3882
        %v3957 = vadd.f32 %v3485, %v3884
        %v3958 = vadd.f32 %v3486, %v3887
        %v3959 = vadd.f32 %v3487, %v3889
        %v3960 = vadd.f32 %v3488, %v3892
        %v3961 = vadd.f32 %v3489, %v3894
        %v3962 = vadd.f32 %v3490, %v3897
        %v3963 = vadd.f32 %v3491, %v3899
        %v3964 = vadd.f32 %v3492, %v3902
        %v3965 = vadd.f32 %v3493, %v3904
        %v3966 = vadd.f32 %v3494, %v3907
        %v3967 = vadd.f32 %v3495, %v3909
        %v3968 = vadd.f32 %v3496, %v3912
        %v3969 = vadd.f32 %v3497, %v3914
        %v3970 = vadd.f32 %v3498, %v3917
        %v3971 = vadd.f32 %v3499, %v3919
        %v3972 = vadd.f32 %v3500, %v3922
        %v3973 = vadd.f32 %v3501, %v3924
        %v3974 = vadd.f32 %v3502, %v3927
        %v3975 = vadd.f32 %v3503, %v3929
        %v3976 = vadd.f32 %v3504, %v3932
        %v3977 = vadd.f32 %v3505, %v3934
        %v3978 = vadd.f32 %v3506, %v3937
        %v3979 = vadd.f32 %v3507, %v3939
        %v3980 = vadd.f32 %v3508, %v3942
        %v3981 = vadd.f32 %v3509, %v3944
        %v3982 = vld [vmem:[%s421] sm:$0xe]
        %s3983 = scalar_lea.vmem %s3, 44
        %v3984 = vld [vmem:[%s3983] sm:$0xf]
        %v3986 = vunpack.c.l.b16 %v3982
        %v3987 = vpack.c.b16 %v3587, %v3986
        %v3988 = vrot.slane %v3987, 1
        %v3989 = vrot.slane %v3624, 1
        %v3990 = vsel %vm1028, %v3988, %v3989
        %v3991 = vrot.slane %v3625, 1
        %v3992 = vsel %vm1028, %v3989, %v3991
        %v3993 = vrot.slane %v3626, 1
        %v3994 = vsel %vm1028, %v3991, %v3993
        %v3995 = vrot.slane %v3627, 1
        %v3996 = vsel %vm1028, %v3993, %v3995
        %v3997 = vrot.slane %v3628, 1
        %v3998 = vsel %vm1028, %v3995, %v3997
        %v3999 = vrot.slane %v3629, 1
        %v4000 = vsel %vm1028, %v3997, %v3999
        %v4001 = vrot.slane %v3630, 1
        %v4002 = vsel %vm1028, %v3999, %v4001
        %v4003 = vrot.slane %v3631, 1
        %v4004 = vsel %vm1028, %v4001, %v4003
        %v4005 = vrot.slane %v3632, 1
        %v4006 = vsel %vm1028, %v4003, %v4005
        %v4007 = vrot.slane %v3633, 1
        %v4008 = vsel %vm1028, %v4005, %v4007
        %v4009 = vrot.slane %v3634, 1
        %v4010 = vsel %vm1028, %v4007, %v4009
        %v4011 = vrot.slane %v3635, 1
        %v4012 = vsel %vm1028, %v4009, %v4011
        %v4013 = vrot.slane %v3636, 1
        %v4014 = vsel %vm1028, %v4011, %v4013
        %v4015 = vrot.slane %v3637, 1
        %v4016 = vsel %vm1028, %v4013, %v4015
        %v4017 = vrot.slane %v3638, 1
        %v4018 = vsel %vm1028, %v4015, %v4017
        %v4019 = vrot.slane %v3639, 1
        %v4020 = vsel %vm1028, %v4017, %v4019
        %v4021 = vrot.slane %v3640, 1
        %v4022 = vsel %vm1028, %v4019, %v4021
        %v4023 = vrot.slane %v3641, 1
        %v4024 = vsel %vm1028, %v4021, %v4023
        %v4026 = vsel %vm726, %v3990, 0
        %v4029 = vsel %vm726, %v3992, 0
        %v4032 = vsel %vm726, %v3994, 0
        %v4035 = vsel %vm726, %v3996, 0
        %v4038 = vsel %vm726, %v3998, 0
        %v4041 = vsel %vm726, %v4000, 0
        %v4044 = vsel %vm726, %v4002, 0
        %v4047 = vsel %vm726, %v4004, 0
        %v4050 = vsel %vm726, %v4006, 0
        %v4053 = vsel %vm726, %v4008, 0
        %v4056 = vsel %vm726, %v4010, 0
        %v4059 = vsel %vm726, %v4012, 0
        %v4062 = vsel %vm726, %v4014, 0
        %v4065 = vsel %vm726, %v4016, 0
        %v4068 = vsel %vm726, %v4018, 0
        %v4071 = vsel %vm726, %v4020, 0
        %v4074 = vsel %vm726, %v4022, 0
        %v4077 = vsel %vm726, %v4024, 0
        %v4080 = vsel %vm781, %v3984, 0
        %4082 = vmatpush.bf16.msra.mxu0 0
        %4083 = vmatpush.bf16.msra.mxu0 0
        %4084 = vmatpush.bf16.msra.mxu0 0
        %4085 = vmatpush.bf16.msra.mxu0 0
        %4086 = vmatpush.bf16.msra.mxu0 0
        %4087 = vmatpush.bf16.msra.mxu0 0
        %4088 = vmatpush.bf16.msra.mxu0 0
        %4089 = vmatpush.bf16.msra.mxu0 %v4080
        %4090 = vmatmul.bf16.gmra.mxu0 %v4026
        %v4091 = vpop.f32.mrf.mxu0
        %v4092 = vadd.f32 0.0, %v4091
        %v4093 = vpop.f32.mrf.mxu0
        %v4094 = vadd.f32 0.0, %v4093
        %4095 = vmatmul.bf16.gmra.mxu0 %v4029
        %v4096 = vpop.f32.mrf.mxu0
        %v4097 = vadd.f32 0.0, %v4096
        %v4098 = vpop.f32.mrf.mxu0
        %v4099 = vadd.f32 0.0, %v4098
        %4100 = vmatmul.bf16.gmra.mxu0 %v4032
        %v4101 = vpop.f32.mrf.mxu0
        %v4102 = vadd.f32 0.0, %v4101
        %v4103 = vpop.f32.mrf.mxu0
        %v4104 = vadd.f32 0.0, %v4103
        %4105 = vmatmul.bf16.gmra.mxu0 %v4035
        %v4106 = vpop.f32.mrf.mxu0
        %v4107 = vadd.f32 0.0, %v4106
        %v4108 = vpop.f32.mrf.mxu0
        %v4109 = vadd.f32 0.0, %v4108
        %4110 = vmatmul.bf16.gmra.mxu0 %v4038
        %v4111 = vpop.f32.mrf.mxu0
        %v4112 = vadd.f32 0.0, %v4111
        %v4113 = vpop.f32.mrf.mxu0
        %v4114 = vadd.f32 0.0, %v4113
        %4115 = vmatmul.bf16.gmra.mxu0 %v4041
        %v4116 = vpop.f32.mrf.mxu0
        %v4117 = vadd.f32 0.0, %v4116
        %v4118 = vpop.f32.mrf.mxu0
        %v4119 = vadd.f32 0.0, %v4118
        %4120 = vmatmul.bf16.gmra.mxu0 %v4044
        %v4121 = vpop.f32.mrf.mxu0
        %v4122 = vadd.f32 0.0, %v4121
        %v4123 = vpop.f32.mrf.mxu0
        %v4124 = vadd.f32 0.0, %v4123
        %4125 = vmatmul.bf16.gmra.mxu0 %v4047
        %v4126 = vpop.f32.mrf.mxu0
        %v4127 = vadd.f32 0.0, %v4126
        %v4128 = vpop.f32.mrf.mxu0
        %v4129 = vadd.f32 0.0, %v4128
        %4130 = vmatmul.bf16.gmra.mxu0 %v4050
        %v4131 = vpop.f32.mrf.mxu0
        %v4132 = vadd.f32 0.0, %v4131
        %v4133 = vpop.f32.mrf.mxu0
        %v4134 = vadd.f32 0.0, %v4133
        %4135 = vmatmul.bf16.gmra.mxu0 %v4053
        %v4136 = vpop.f32.mrf.mxu0
        %v4137 = vadd.f32 0.0, %v4136
        %v4138 = vpop.f32.mrf.mxu0
        %v4139 = vadd.f32 0.0, %v4138
        %4140 = vmatmul.bf16.gmra.mxu0 %v4056
        %v4141 = vpop.f32.mrf.mxu0
        %v4142 = vadd.f32 0.0, %v4141
        %v4143 = vpop.f32.mrf.mxu0
        %v4144 = vadd.f32 0.0, %v4143
        %4145 = vmatmul.bf16.gmra.mxu0 %v4059
        %v4146 = vpop.f32.mrf.mxu0
        %v4147 = vadd.f32 0.0, %v4146
        %v4148 = vpop.f32.mrf.mxu0
        %v4149 = vadd.f32 0.0, %v4148
        %4150 = vmatmul.bf16.gmra.mxu0 %v4062
        %v4151 = vpop.f32.mrf.mxu0
        %v4152 = vadd.f32 0.0, %v4151
        %v4153 = vpop.f32.mrf.mxu0
        %v4154 = vadd.f32 0.0, %v4153
        %4155 = vmatmul.bf16.gmra.mxu0 %v4065
        %v4156 = vpop.f32.mrf.mxu0
        %v4157 = vadd.f32 0.0, %v4156
        %v4158 = vpop.f32.mrf.mxu0
        %v4159 = vadd.f32 0.0, %v4158
        %4160 = vmatmul.bf16.gmra.mxu0 %v4068
        %v4161 = vpop.f32.mrf.mxu0
        %v4162 = vadd.f32 0.0, %v4161
        %v4163 = vpop.f32.mrf.mxu0
        %v4164 = vadd.f32 0.0, %v4163
        %4165 = vmatmul.bf16.gmra.mxu0 %v4071
        %v4166 = vpop.f32.mrf.mxu0
        %v4167 = vadd.f32 0.0, %v4166
        %v4168 = vpop.f32.mrf.mxu0
        %v4169 = vadd.f32 0.0, %v4168
        %4170 = vmatmul.bf16.gmra.mxu0 %v4074
        %v4171 = vpop.f32.mrf.mxu0
        %v4172 = vadd.f32 0.0, %v4171
        %v4173 = vpop.f32.mrf.mxu0
        %v4174 = vadd.f32 0.0, %v4173
        %4175 = vmatmul.bf16.gmra.mxu0 %v4077
        %v4176 = vpop.f32.mrf.mxu0
        %v4177 = vadd.f32 0.0, %v4176
        %v4178 = vpop.f32.mrf.mxu0
        %v4179 = vadd.f32 0.0, %v4178
        %4180 = vdwg.mxu0
        %v4181 = vadd.f32 %v3946, %v4092
        %v4182 = vadd.f32 %v3947, %v4094
        %v4183 = vadd.f32 %v3948, %v4097
        %v4184 = vadd.f32 %v3949, %v4099
        %v4185 = vadd.f32 %v3950, %v4102
        %v4186 = vadd.f32 %v3951, %v4104
        %v4187 = vadd.f32 %v3952, %v4107
        %v4188 = vadd.f32 %v3953, %v4109
        %v4189 = vadd.f32 %v3954, %v4112
        %v4190 = vadd.f32 %v3955, %v4114
        %v4191 = vadd.f32 %v3956, %v4117
        %v4192 = vadd.f32 %v3957, %v4119
        %v4193 = vadd.f32 %v3958, %v4122
        %v4194 = vadd.f32 %v3959, %v4124
        %v4195 = vadd.f32 %v3960, %v4127
        %v4196 = vadd.f32 %v3961, %v4129
        %v4197 = vadd.f32 %v3962, %v4132
        %v4198 = vadd.f32 %v3963, %v4134
        %v4199 = vadd.f32 %v3964, %v4137
        %v4200 = vadd.f32 %v3965, %v4139
        %v4201 = vadd.f32 %v3966, %v4142
        %v4202 = vadd.f32 %v3967, %v4144
        %v4203 = vadd.f32 %v3968, %v4147
        %v4204 = vadd.f32 %v3969, %v4149
        %v4205 = vadd.f32 %v3970, %v4152
        %v4206 = vadd.f32 %v3971, %v4154
        %v4207 = vadd.f32 %v3972, %v4157
        %v4208 = vadd.f32 %v3973, %v4159
        %v4209 = vadd.f32 %v3974, %v4162
        %v4210 = vadd.f32 %v3975, %v4164
        %v4211 = vadd.f32 %v3976, %v4167
        %v4212 = vadd.f32 %v3977, %v4169
        %v4213 = vadd.f32 %v3978, %v4172
        %v4214 = vadd.f32 %v3979, %v4174
        %v4215 = vadd.f32 %v3980, %v4177
        %v4216 = vadd.f32 %v3981, %v4179
        %v4217 = vld [vmem:[%s421 + $0x8] sm:$0xe]
        %v4218 = vld [vmem:[%s421 + $0xc] sm:$0xf]
        %v4219 = vld [vmem:[%s421 + $0x10] sm:$0xf]
        %v4220 = vld [vmem:[%s421 + $0x14] sm:$0xf]
        %v4221 = vld [vmem:[%s421 + $0x18] sm:$0xf]
        %v4222 = vld [vmem:[%s421 + $0x1c] sm:$0xf]
        %v4223 = vld [vmem:[%s421 + $0x20] sm:$0xf]
        %v4224 = vld [vmem:[%s421 + $0x24] sm:$0xf]
        %v4225 = vld [vmem:[%s421 + $0x28] sm:$0xf]
        %v4226 = vld [vmem:[%s421 + $0x2c] sm:$0xf]
        %v4227 = vld [vmem:[%s421 + $0x30] sm:$0xf]
        %v4228 = vld [vmem:[%s421 + $0x34] sm:$0xf]
        %v4229 = vld [vmem:[%s421 + $0x38] sm:$0xf]
        %v4230 = vld [vmem:[%s421 + $0x3c] sm:$0xf]
        %v4231 = vld [vmem:[%s421 + $0x40] sm:$0xf]
        %v4232 = vld [vmem:[%s421 + $0x44] sm:$0xf]
        %v4233 = vld [vmem:[%s421 + $0x48] sm:$0xf]
        %v4234 = vld [vmem:[%s421 + $0x4c] sm:$0xf]
        %v4235 = vld [vmem:[%s421 + $0x50] sm:$0xf]
        %v4236 = vld [vmem:[%s421 + $0x54] sm:$0xf]
        %v4237 = vld [vmem:[%s421 + $0x58] sm:$0xf]
        %v4238 = vld [vmem:[%s421 + $0x5c] sm:$0xf]
        %v4239 = vld [vmem:[%s421 + $0x60] sm:$0xf]
        %v4240 = vld [vmem:[%s421 + $0x64] sm:$0xf]
        %v4241 = vld [vmem:[%s421 + $0x68] sm:$0xf]
        %v4242 = vld [vmem:[%s421 + $0x6c] sm:$0xf]
        %v4243 = vld [vmem:[%s421 + $0x70] sm:$0xf]
        %v4244 = vld [vmem:[%s421 + $0x74] sm:$0xf]
        %v4245 = vld [vmem:[%s421 + $0x78] sm:$0xf]
        %v4246 = vld [vmem:[%s421 + $0x7c] sm:$0xf]
        %v4247 = vld [vmem:[%s421 + $0x80] sm:$0xf]
        %v4248 = vld [vmem:[%s421 + $0x84] sm:$0xf]
        %v4249 = vld [vmem:[%s421 + $0x88] sm:$0xf]
        %v4250 = vld [vmem:[%s421 + $0x8c] sm:$0xf]
        %v4251 = vld [vmem:[%s421 + $0x90] sm:$0xf]
        %v4252 = vld [vmem:[%s421 + $0x94] sm:$0xf]
        %v4253 = vld [vmem:[%s421 + $0x98] sm:$0x1]
        %s4254 = scalar_lea.vmem %s3, 48
        %v4255 = vld [vmem:[%s4254] sm:$0xf]
        %v4293 = vunpack.c.l.b16 %v4217
        %v4294 = vunpack.c.l.b16 %v4218
        %v4295 = vunpack.c.l.b16 %v4219
        %v4296 = vunpack.c.l.b16 %v4220
        %v4297 = vunpack.c.l.b16 %v4221
        %v4298 = vunpack.c.l.b16 %v4222
        %v4299 = vunpack.c.l.b16 %v4223
        %v4300 = vunpack.c.l.b16 %v4224
        %v4301 = vunpack.c.l.b16 %v4225
        %v4302 = vunpack.c.l.b16 %v4226
        %v4303 = vunpack.c.l.b16 %v4227
        %v4304 = vunpack.c.l.b16 %v4228
        %v4305 = vunpack.c.l.b16 %v4229
        %v4306 = vunpack.c.l.b16 %v4230
        %v4307 = vunpack.c.l.b16 %v4231
        %v4308 = vunpack.c.l.b16 %v4232
        %v4309 = vunpack.c.l.b16 %v4233
        %v4310 = vunpack.c.l.b16 %v4234
        %v4311 = vunpack.c.l.b16 %v4235
        %v4312 = vunpack.c.l.b16 %v4236
        %v4313 = vunpack.c.l.b16 %v4237
        %v4314 = vunpack.c.l.b16 %v4238
        %v4315 = vunpack.c.l.b16 %v4239
        %v4316 = vunpack.c.l.b16 %v4240
        %v4317 = vunpack.c.l.b16 %v4241
        %v4318 = vunpack.c.l.b16 %v4242
        %v4319 = vunpack.c.l.b16 %v4243
        %v4320 = vunpack.c.l.b16 %v4244
        %v4321 = vunpack.c.l.b16 %v4245
        %v4322 = vunpack.c.l.b16 %v4246
        %v4323 = vunpack.c.l.b16 %v4247
        %v4324 = vunpack.c.l.b16 %v4248
        %v4325 = vunpack.c.l.b16 %v4249
        %v4326 = vunpack.c.l.b16 %v4250
        %v4327 = vunpack.c.l.b16 %v4251
        %v4328 = vunpack.c.l.b16 %v4252
        %v4329 = vunpack.c.l.b16 %v4253
        %v4330 = vpack.c.b16 %v4294, %v4293
        %v4331 = vpack.c.b16 %v4296, %v4295
        %v4332 = vpack.c.b16 %v4298, %v4297
        %v4333 = vpack.c.b16 %v4300, %v4299
        %v4334 = vpack.c.b16 %v4302, %v4301
        %v4335 = vpack.c.b16 %v4304, %v4303
        %v4336 = vpack.c.b16 %v4306, %v4305
        %v4337 = vpack.c.b16 %v4308, %v4307
        %v4338 = vpack.c.b16 %v4310, %v4309
        %v4339 = vpack.c.b16 %v4312, %v4311
        %v4340 = vpack.c.b16 %v4314, %v4313
        %v4341 = vpack.c.b16 %v4316, %v4315
        %v4342 = vpack.c.b16 %v4318, %v4317
        %v4343 = vpack.c.b16 %v4320, %v4319
        %v4344 = vpack.c.b16 %v4322, %v4321
        %v4345 = vpack.c.b16 %v4324, %v4323
        %v4346 = vpack.c.b16 %v4326, %v4325
        %v4347 = vpack.c.b16 %v4328, %v4327
        %v4348 = vpack.c.b16 %v4329, %v4329
        %v4349 = vrot.slane %v4330, 1
        %v4350 = vrot.slane %v4331, 1
        %v4351 = vsel %vm1028, %v4349, %v4350
        %v4352 = vrot.slane %v4332, 1
        %v4353 = vsel %vm1028, %v4350, %v4352
        %v4354 = vrot.slane %v4333, 1
        %v4355 = vsel %vm1028, %v4352, %v4354
        %v4356 = vrot.slane %v4334, 1
        %v4357 = vsel %vm1028, %v4354, %v4356
        %v4358 = vrot.slane %v4335, 1
        %v4359 = vsel %vm1028, %v4356, %v4358
        %v4360 = vrot.slane %v4336, 1
        %v4361 = vsel %vm1028, %v4358, %v4360
        %v4362 = vrot.slane %v4337, 1
        %v4363 = vsel %vm1028, %v4360, %v4362
        %v4364 = vrot.slane %v4338, 1
        %v4365 = vsel %vm1028, %v4362, %v4364
        %v4366 = vrot.slane %v4339, 1
        %v4367 = vsel %vm1028, %v4364, %v4366
        %v4368 = vrot.slane %v4340, 1
        %v4369 = vsel %vm1028, %v4366, %v4368
        %v4370 = vrot.slane %v4341, 1
        %v4371 = vsel %vm1028, %v4368, %v4370
        %v4372 = vrot.slane %v4342, 1
        %v4373 = vsel %vm1028, %v4370, %v4372
        %v4374 = vrot.slane %v4343, 1
        %v4375 = vsel %vm1028, %v4372, %v4374
        %v4376 = vrot.slane %v4344, 1
        %v4377 = vsel %vm1028, %v4374, %v4376
        %v4378 = vrot.slane %v4345, 1
        %v4379 = vsel %vm1028, %v4376, %v4378
        %v4380 = vrot.slane %v4346, 1
        %v4381 = vsel %vm1028, %v4378, %v4380
        %v4382 = vrot.slane %v4347, 1
        %v4383 = vsel %vm1028, %v4380, %v4382
        %v4384 = vrot.slane %v4348, 1
        %v4385 = vsel %vm1028, %v4382, %v4384
        %v4387 = vsel %vm726, %v4351, 0
        %v4390 = vsel %vm726, %v4353, 0
        %v4393 = vsel %vm726, %v4355, 0
        %v4396 = vsel %vm726, %v4357, 0
        %v4399 = vsel %vm726, %v4359, 0
        %v4402 = vsel %vm726, %v4361, 0
        %v4405 = vsel %vm726, %v4363, 0
        %v4408 = vsel %vm726, %v4365, 0
        %v4411 = vsel %vm726, %v4367, 0
        %v4414 = vsel %vm726, %v4369, 0
        %v4417 = vsel %vm726, %v4371, 0
        %v4420 = vsel %vm726, %v4373, 0
        %v4423 = vsel %vm726, %v4375, 0
        %v4426 = vsel %vm726, %v4377, 0
        %v4429 = vsel %vm726, %v4379, 0
        %v4432 = vsel %vm726, %v4381, 0
        %v4435 = vsel %vm726, %v4383, 0
        %v4438 = vsel %vm726, %v4385, 0
        %v4441 = vsel %vm781, %v4255, 0
        %4443 = vmatpush.bf16.msra.mxu0 0
        %4444 = vmatpush.bf16.msra.mxu0 0
        %4445 = vmatpush.bf16.msra.mxu0 0
        %4446 = vmatpush.bf16.msra.mxu0 0
        %4447 = vmatpush.bf16.msra.mxu0 0
        %4448 = vmatpush.bf16.msra.mxu0 0
        %4449 = vmatpush.bf16.msra.mxu0 0
        %4450 = vmatpush.bf16.msra.mxu0 %v4441
        %4451 = vmatmul.bf16.gmra.mxu0 %v4387
        %v4452 = vpop.f32.mrf.mxu0
        %v4453 = vadd.f32 0.0, %v4452
        %v4454 = vpop.f32.mrf.mxu0
        %v4455 = vadd.f32 0.0, %v4454
        %4456 = vmatmul.bf16.gmra.mxu0 %v4390
        %v4457 = vpop.f32.mrf.mxu0
        %v4458 = vadd.f32 0.0, %v4457
        %v4459 = vpop.f32.mrf.mxu0
        %v4460 = vadd.f32 0.0, %v4459
        %4461 = vmatmul.bf16.gmra.mxu0 %v4393
        %v4462 = vpop.f32.mrf.mxu0
        %v4463 = vadd.f32 0.0, %v4462
        %v4464 = vpop.f32.mrf.mxu0
        %v4465 = vadd.f32 0.0, %v4464
        %4466 = vmatmul.bf16.gmra.mxu0 %v4396
        %v4467 = vpop.f32.mrf.mxu0
        %v4468 = vadd.f32 0.0, %v4467
        %v4469 = vpop.f32.mrf.mxu0
        %v4470 = vadd.f32 0.0, %v4469
        %4471 = vmatmul.bf16.gmra.mxu0 %v4399
        %v4472 = vpop.f32.mrf.mxu0
        %v4473 = vadd.f32 0.0, %v4472
        %v4474 = vpop.f32.mrf.mxu0
        %v4475 = vadd.f32 0.0, %v4474
        %4476 = vmatmul.bf16.gmra.mxu0 %v4402
        %v4477 = vpop.f32.mrf.mxu0
        %v4478 = vadd.f32 0.0, %v4477
        %v4479 = vpop.f32.mrf.mxu0
        %v4480 = vadd.f32 0.0, %v4479
        %4481 = vmatmul.bf16.gmra.mxu0 %v4405
        %v4482 = vpop.f32.mrf.mxu0
        %v4483 = vadd.f32 0.0, %v4482
        %v4484 = vpop.f32.mrf.mxu0
        %v4485 = vadd.f32 0.0, %v4484
        %4486 = vmatmul.bf16.gmra.mxu0 %v4408
        %v4487 = vpop.f32.mrf.mxu0
        %v4488 = vadd.f32 0.0, %v4487
        %v4489 = vpop.f32.mrf.mxu0
        %v4490 = vadd.f32 0.0, %v4489
        %4491 = vmatmul.bf16.gmra.mxu0 %v4411
        %v4492 = vpop.f32.mrf.mxu0
        %v4493 = vadd.f32 0.0, %v4492
        %v4494 = vpop.f32.mrf.mxu0
        %v4495 = vadd.f32 0.0, %v4494
        %4496 = vmatmul.bf16.gmra.mxu0 %v4414
        %v4497 = vpop.f32.mrf.mxu0
        %v4498 = vadd.f32 0.0, %v4497
        %v4499 = vpop.f32.mrf.mxu0
        %v4500 = vadd.f32 0.0, %v4499
        %4501 = vmatmul.bf16.gmra.mxu0 %v4417
        %v4502 = vpop.f32.mrf.mxu0
        %v4503 = vadd.f32 0.0, %v4502
        %v4504 = vpop.f32.mrf.mxu0
        %v4505 = vadd.f32 0.0, %v4504
        %4506 = vmatmul.bf16.gmra.mxu0 %v4420
        %v4507 = vpop.f32.mrf.mxu0
        %v4508 = vadd.f32 0.0, %v4507
        %v4509 = vpop.f32.mrf.mxu0
        %v4510 = vadd.f32 0.0, %v4509
        %4511 = vmatmul.bf16.gmra.mxu0 %v4423
        %v4512 = vpop.f32.mrf.mxu0
        %v4513 = vadd.f32 0.0, %v4512
        %v4514 = vpop.f32.mrf.mxu0
        %v4515 = vadd.f32 0.0, %v4514
        %4516 = vmatmul.bf16.gmra.mxu0 %v4426
        %v4517 = vpop.f32.mrf.mxu0
        %v4518 = vadd.f32 0.0, %v4517
        %v4519 = vpop.f32.mrf.mxu0
        %v4520 = vadd.f32 0.0, %v4519
        %4521 = vmatmul.bf16.gmra.mxu0 %v4429
        %v4522 = vpop.f32.mrf.mxu0
        %v4523 = vadd.f32 0.0, %v4522
        %v4524 = vpop.f32.mrf.mxu0
        %v4525 = vadd.f32 0.0, %v4524
        %4526 = vmatmul.bf16.gmra.mxu0 %v4432
        %v4527 = vpop.f32.mrf.mxu0
        %v4528 = vadd.f32 0.0, %v4527
        %v4529 = vpop.f32.mrf.mxu0
        %v4530 = vadd.f32 0.0, %v4529
        %4531 = vmatmul.bf16.gmra.mxu0 %v4435
        %v4532 = vpop.f32.mrf.mxu0
        %v4533 = vadd.f32 0.0, %v4532
        %v4534 = vpop.f32.mrf.mxu0
        %v4535 = vadd.f32 0.0, %v4534
        %4536 = vmatmul.bf16.gmra.mxu0 %v4438
        %v4537 = vpop.f32.mrf.mxu0
        %v4538 = vadd.f32 0.0, %v4537
        %v4539 = vpop.f32.mrf.mxu0
        %v4540 = vadd.f32 0.0, %v4539
        %4541 = vdwg.mxu0
        %v4542 = vadd.f32 %v4181, %v4453
        %v4543 = vadd.f32 %v4182, %v4455
        %v4544 = vadd.f32 %v4183, %v4458
        %v4545 = vadd.f32 %v4184, %v4460
        %v4546 = vadd.f32 %v4185, %v4463
        %v4547 = vadd.f32 %v4186, %v4465
        %v4548 = vadd.f32 %v4187, %v4468
        %v4549 = vadd.f32 %v4188, %v4470
        %v4550 = vadd.f32 %v4189, %v4473
        %v4551 = vadd.f32 %v4190, %v4475
        %v4552 = vadd.f32 %v4191, %v4478
        %v4553 = vadd.f32 %v4192, %v4480
        %v4554 = vadd.f32 %v4193, %v4483
        %v4555 = vadd.f32 %v4194, %v4485
        %v4556 = vadd.f32 %v4195, %v4488
        %v4557 = vadd.f32 %v4196, %v4490
        %v4558 = vadd.f32 %v4197, %v4493
        %v4559 = vadd.f32 %v4198, %v4495
        %v4560 = vadd.f32 %v4199, %v4498
        %v4561 = vadd.f32 %v4200, %v4500
        %v4562 = vadd.f32 %v4201, %v4503
        %v4563 = vadd.f32 %v4202, %v4505
        %v4564 = vadd.f32 %v4203, %v4508
        %v4565 = vadd.f32 %v4204, %v4510
        %v4566 = vadd.f32 %v4205, %v4513
        %v4567 = vadd.f32 %v4206, %v4515
        %v4568 = vadd.f32 %v4207, %v4518
        %v4569 = vadd.f32 %v4208, %v4520
        %v4570 = vadd.f32 %v4209, %v4523
        %v4571 = vadd.f32 %v4210, %v4525
        %v4572 = vadd.f32 %v4211, %v4528
        %v4573 = vadd.f32 %v4212, %v4530
        %v4574 = vadd.f32 %v4213, %v4533
        %v4575 = vadd.f32 %v4214, %v4535
        %v4576 = vadd.f32 %v4215, %v4538
        %v4577 = vadd.f32 %v4216, %v4540
        %v4578 = vld [vmem:[%s421 + $0x98] sm:$0x3]
        %s4579 = scalar_lea.vmem %s3, 52
        %v4580 = vld [vmem:[%s4579] sm:$0xf]
        %v4582 = vunpack.c.l.b16 %v4578
        %v4583 = vpack.c.b16 %v4582, %v4582
        %v4585 = vshrl.u32 %v4330, 16
        %v4587 = vrot.slane %v4585, 1
        %v4588 = vshll.u32 %v4330, 16
        %v4590 = vrot.slane %v4588, 2
        %v4591 = vor.u32 %v4587, %v4590
        %v4593 = vshrl.u32 %v4331, 16
        %v4595 = vrot.slane %v4593, 1
        %v4596 = vshll.u32 %v4331, 16
        %v4598 = vrot.slane %v4596, 2
        %v4599 = vor.u32 %v4595, %v4598
        %v4600 = vsel %vm1625, %v4591, %v4599
        %v4602 = vshrl.u32 %v4332, 16
        %v4604 = vrot.slane %v4602, 1
        %v4605 = vshll.u32 %v4332, 16
        %v4607 = vrot.slane %v4605, 2
        %v4608 = vor.u32 %v4604, %v4607
        %v4609 = vsel %vm1625, %v4599, %v4608
        %v4611 = vshrl.u32 %v4333, 16
        %v4613 = vrot.slane %v4611, 1
        %v4614 = vshll.u32 %v4333, 16
        %v4616 = vrot.slane %v4614, 2
        %v4617 = vor.u32 %v4613, %v4616
        %v4618 = vsel %vm1625, %v4608, %v4617
        %v4620 = vshrl.u32 %v4334, 16
        %v4622 = vrot.slane %v4620, 1
        %v4623 = vshll.u32 %v4334, 16
        %v4625 = vrot.slane %v4623, 2
        %v4626 = vor.u32 %v4622, %v4625
        %v4627 = vsel %vm1625, %v4617, %v4626
        %v4629 = vshrl.u32 %v4335, 16
        %v4631 = vrot.slane %v4629, 1
        %v4632 = vshll.u32 %v4335, 16
        %v4634 = vrot.slane %v4632, 2
        %v4635 = vor.u32 %v4631, %v4634
        %v4636 = vsel %vm1625, %v4626, %v4635
        %v4638 = vshrl.u32 %v4336, 16
        %v4640 = vrot.slane %v4638, 1
        %v4641 = vshll.u32 %v4336, 16
        %v4643 = vrot.slane %v4641, 2
        %v4644 = vor.u32 %v4640, %v4643
        %v4645 = vsel %vm1625, %v4635, %v4644
        %v4647 = vshrl.u32 %v4337, 16
        %v4649 = vrot.slane %v4647, 1
        %v4650 = vshll.u32 %v4337, 16
        %v4652 = vrot.slane %v4650, 2
        %v4653 = vor.u32 %v4649, %v4652
        %v4654 = vsel %vm1625, %v4644, %v4653
        %v4656 = vshrl.u32 %v4338, 16
        %v4658 = vrot.slane %v4656, 1
        %v4659 = vshll.u32 %v4338, 16
        %v4661 = vrot.slane %v4659, 2
        %v4662 = vor.u32 %v4658, %v4661
        %v4663 = vsel %vm1625, %v4653, %v4662
        %v4665 = vshrl.u32 %v4339, 16
        %v4667 = vrot.slane %v4665, 1
        %v4668 = vshll.u32 %v4339, 16
        %v4670 = vrot.slane %v4668, 2
        %v4671 = vor.u32 %v4667, %v4670
        %v4672 = vsel %vm1625, %v4662, %v4671
        %v4674 = vshrl.u32 %v4340, 16
        %v4676 = vrot.slane %v4674, 1
        %v4677 = vshll.u32 %v4340, 16
        %v4679 = vrot.slane %v4677, 2
        %v4680 = vor.u32 %v4676, %v4679
        %v4681 = vsel %vm1625, %v4671, %v4680
        %v4683 = vshrl.u32 %v4341, 16
        %v4685 = vrot.slane %v4683, 1
        %v4686 = vshll.u32 %v4341, 16
        %v4688 = vrot.slane %v4686, 2
        %v4689 = vor.u32 %v4685, %v4688
        %v4690 = vsel %vm1625, %v4680, %v4689
        %v4692 = vshrl.u32 %v4342, 16
        %v4694 = vrot.slane %v4692, 1
        %v4695 = vshll.u32 %v4342, 16
        %v4697 = vrot.slane %v4695, 2
        %v4698 = vor.u32 %v4694, %v4697
        %v4699 = vsel %vm1625, %v4689, %v4698
        %v4701 = vshrl.u32 %v4343, 16
        %v4703 = vrot.slane %v4701, 1
        %v4704 = vshll.u32 %v4343, 16
        %v4706 = vrot.slane %v4704, 2
        %v4707 = vor.u32 %v4703, %v4706
        %v4708 = vsel %vm1625, %v4698, %v4707
        %v4710 = vshrl.u32 %v4344, 16
        %v4712 = vrot.slane %v4710, 1
        %v4713 = vshll.u32 %v4344, 16
        %v4715 = vrot.slane %v4713, 2
        %v4716 = vor.u32 %v4712, %v4715
        %v4717 = vsel %vm1625, %v4707, %v4716
        %v4719 = vshrl.u32 %v4345, 16
        %v4721 = vrot.slane %v4719, 1
        %v4722 = vshll.u32 %v4345, 16
        %v4724 = vrot.slane %v4722, 2
        %v4725 = vor.u32 %v4721, %v4724
        %v4726 = vsel %vm1625, %v4716, %v4725
        %v4728 = vshrl.u32 %v4346, 16
        %v4730 = vrot.slane %v4728, 1
        %v4731 = vshll.u32 %v4346, 16
        %v4733 = vrot.slane %v4731, 2
        %v4734 = vor.u32 %v4730, %v4733
        %v4735 = vsel %vm1625, %v4725, %v4734
        %v4737 = vshrl.u32 %v4347, 16
        %v4739 = vrot.slane %v4737, 1
        %v4740 = vshll.u32 %v4347, 16
        %v4742 = vrot.slane %v4740, 2
        %v4743 = vor.u32 %v4739, %v4742
        %v4744 = vsel %vm1625, %v4734, %v4743
        %v4746 = vshrl.u32 %v4583, 16
        %v4748 = vrot.slane %v4746, 1
        %v4749 = vshll.u32 %v4583, 16
        %v4751 = vrot.slane %v4749, 2
        %v4752 = vor.u32 %v4748, %v4751
        %v4753 = vsel %vm1625, %v4743, %v4752
        %v4755 = vsel %vm726, %v4600, 0
        %v4758 = vsel %vm726, %v4609, 0
        %v4761 = vsel %vm726, %v4618, 0
        %v4764 = vsel %vm726, %v4627, 0
        %v4767 = vsel %vm726, %v4636, 0
        %v4770 = vsel %vm726, %v4645, 0
        %v4773 = vsel %vm726, %v4654, 0
        %v4776 = vsel %vm726, %v4663, 0
        %v4779 = vsel %vm726, %v4672, 0
        %v4782 = vsel %vm726, %v4681, 0
        %v4785 = vsel %vm726, %v4690, 0
        %v4788 = vsel %vm726, %v4699, 0
        %v4791 = vsel %vm726, %v4708, 0
        %v4794 = vsel %vm726, %v4717, 0
        %v4797 = vsel %vm726, %v4726, 0
        %v4800 = vsel %vm726, %v4735, 0
        %v4803 = vsel %vm726, %v4744, 0
        %v4806 = vsel %vm726, %v4753, 0
        %v4809 = vsel %vm781, %v4580, 0
        %4811 = vmatpush.bf16.msra.mxu0 0
        %4812 = vmatpush.bf16.msra.mxu0 0
        %4813 = vmatpush.bf16.msra.mxu0 0
        %4814 = vmatpush.bf16.msra.mxu0 0
        %4815 = vmatpush.bf16.msra.mxu0 0
        %4816 = vmatpush.bf16.msra.mxu0 0
        %4817 = vmatpush.bf16.msra.mxu0 0
        %4818 = vmatpush.bf16.msra.mxu0 %v4809
        %4819 = vmatmul.bf16.gmra.mxu0 %v4755
        %v4820 = vpop.f32.mrf.mxu0
        %v4821 = vadd.f32 0.0, %v4820
        %v4822 = vpop.f32.mrf.mxu0
        %v4823 = vadd.f32 0.0, %v4822
        %4824 = vmatmul.bf16.gmra.mxu0 %v4758
        %v4825 = vpop.f32.mrf.mxu0
        %v4826 = vadd.f32 0.0, %v4825
        %v4827 = vpop.f32.mrf.mxu0
        %v4828 = vadd.f32 0.0, %v4827
        %4829 = vmatmul.bf16.gmra.mxu0 %v4761
        %v4830 = vpop.f32.mrf.mxu0
        %v4831 = vadd.f32 0.0, %v4830
        %v4832 = vpop.f32.mrf.mxu0
        %v4833 = vadd.f32 0.0, %v4832
        %4834 = vmatmul.bf16.gmra.mxu0 %v4764
        %v4835 = vpop.f32.mrf.mxu0
        %v4836 = vadd.f32 0.0, %v4835
        %v4837 = vpop.f32.mrf.mxu0
        %v4838 = vadd.f32 0.0, %v4837
        %4839 = vmatmul.bf16.gmra.mxu0 %v4767
        %v4840 = vpop.f32.mrf.mxu0
        %v4841 = vadd.f32 0.0, %v4840
        %v4842 = vpop.f32.mrf.mxu0
        %v4843 = vadd.f32 0.0, %v4842
        %4844 = vmatmul.bf16.gmra.mxu0 %v4770
        %v4845 = vpop.f32.mrf.mxu0
        %v4846 = vadd.f32 0.0, %v4845
        %v4847 = vpop.f32.mrf.mxu0
        %v4848 = vadd.f32 0.0, %v4847
        %4849 = vmatmul.bf16.gmra.mxu0 %v4773
        %v4850 = vpop.f32.mrf.mxu0
        %v4851 = vadd.f32 0.0, %v4850
        %v4852 = vpop.f32.mrf.mxu0
        %v4853 = vadd.f32 0.0, %v4852
        %4854 = vmatmul.bf16.gmra.mxu0 %v4776
        %v4855 = vpop.f32.mrf.mxu0
        %v4856 = vadd.f32 0.0, %v4855
        %v4857 = vpop.f32.mrf.mxu0
        %v4858 = vadd.f32 0.0, %v4857
        %4859 = vmatmul.bf16.gmra.mxu0 %v4779
        %v4860 = vpop.f32.mrf.mxu0
        %v4861 = vadd.f32 0.0, %v4860
        %v4862 = vpop.f32.mrf.mxu0
        %v4863 = vadd.f32 0.0, %v4862
        %4864 = vmatmul.bf16.gmra.mxu0 %v4782
        %v4865 = vpop.f32.mrf.mxu0
        %v4866 = vadd.f32 0.0, %v4865
        %v4867 = vpop.f32.mrf.mxu0
        %v4868 = vadd.f32 0.0, %v4867
        %4869 = vmatmul.bf16.gmra.mxu0 %v4785
        %v4870 = vpop.f32.mrf.mxu0
        %v4871 = vadd.f32 0.0, %v4870
        %v4872 = vpop.f32.mrf.mxu0
        %v4873 = vadd.f32 0.0, %v4872
        %4874 = vmatmul.bf16.gmra.mxu0 %v4788
        %v4875 = vpop.f32.mrf.mxu0
        %v4876 = vadd.f32 0.0, %v4875
        %v4877 = vpop.f32.mrf.mxu0
        %v4878 = vadd.f32 0.0, %v4877
        %4879 = vmatmul.bf16.gmra.mxu0 %v4791
        %v4880 = vpop.f32.mrf.mxu0
        %v4881 = vadd.f32 0.0, %v4880
        %v4882 = vpop.f32.mrf.mxu0
        %v4883 = vadd.f32 0.0, %v4882
        %4884 = vmatmul.bf16.gmra.mxu0 %v4794
        %v4885 = vpop.f32.mrf.mxu0
        %v4886 = vadd.f32 0.0, %v4885
        %v4887 = vpop.f32.mrf.mxu0
        %v4888 = vadd.f32 0.0, %v4887
        %4889 = vmatmul.bf16.gmra.mxu0 %v4797
        %v4890 = vpop.f32.mrf.mxu0
        %v4891 = vadd.f32 0.0, %v4890
        %v4892 = vpop.f32.mrf.mxu0
        %v4893 = vadd.f32 0.0, %v4892
        %4894 = vmatmul.bf16.gmra.mxu0 %v4800
        %v4895 = vpop.f32.mrf.mxu0
        %v4896 = vadd.f32 0.0, %v4895
        %v4897 = vpop.f32.mrf.mxu0
        %v4898 = vadd.f32 0.0, %v4897
        %4899 = vmatmul.bf16.gmra.mxu0 %v4803
        %v4900 = vpop.f32.mrf.mxu0
        %v4901 = vadd.f32 0.0, %v4900
        %v4902 = vpop.f32.mrf.mxu0
        %v4903 = vadd.f32 0.0, %v4902
        %4904 = vmatmul.bf16.gmra.mxu0 %v4806
        %v4905 = vpop.f32.mrf.mxu0
        %v4906 = vadd.f32 0.0, %v4905
        %v4907 = vpop.f32.mrf.mxu0
        %v4908 = vadd.f32 0.0, %v4907
        %4909 = vdwg.mxu0
        %v4910 = vadd.f32 %v4542, %v4821
        %v4911 = vadd.f32 %v4543, %v4823
        %v4912 = vadd.f32 %v4544, %v4826
        %v4913 = vadd.f32 %v4545, %v4828
        %v4914 = vadd.f32 %v4546, %v4831
        %v4915 = vadd.f32 %v4547, %v4833
        %v4916 = vadd.f32 %v4548, %v4836
        %v4917 = vadd.f32 %v4549, %v4838
        %v4918 = vadd.f32 %v4550, %v4841
        %v4919 = vadd.f32 %v4551, %v4843
        %v4920 = vadd.f32 %v4552, %v4846
        %v4921 = vadd.f32 %v4553, %v4848
        %v4922 = vadd.f32 %v4554, %v4851
        %v4923 = vadd.f32 %v4555, %v4853
        %v4924 = vadd.f32 %v4556, %v4856
        %v4925 = vadd.f32 %v4557, %v4858
        %v4926 = vadd.f32 %v4558, %v4861
        %v4927 = vadd.f32 %v4559, %v4863
        %v4928 = vadd.f32 %v4560, %v4866
        %v4929 = vadd.f32 %v4561, %v4868
        %v4930 = vadd.f32 %v4562, %v4871
        %v4931 = vadd.f32 %v4563, %v4873
        %v4932 = vadd.f32 %v4564, %v4876
        %v4933 = vadd.f32 %v4565, %v4878
        %v4934 = vadd.f32 %v4566, %v4881
        %v4935 = vadd.f32 %v4567, %v4883
        %v4936 = vadd.f32 %v4568, %v4886
        %v4937 = vadd.f32 %v4569, %v4888
        %v4938 = vadd.f32 %v4570, %v4891
        %v4939 = vadd.f32 %v4571, %v4893
        %v4940 = vadd.f32 %v4572, %v4896
        %v4941 = vadd.f32 %v4573, %v4898
        %v4942 = vadd.f32 %v4574, %v4901
        %v4943 = vadd.f32 %v4575, %v4903
        %v4944 = vadd.f32 %v4576, %v4906
        %v4945 = vadd.f32 %v4577, %v4908
        %v4946 = vld [vmem:[%s421 + $0x8] sm:$0xc]
        %s4947 = scalar_lea.vmem %s3, 56
        %v4948 = vld [vmem:[%s4947] sm:$0xf]
        %v4950 = vunpack.c.l.b16 %v4946
        %v4951 = vpack.c.b16 %v4294, %v4950
        %v4952 = vrot.slane %v4951, 2
        %v4953 = vrot.slane %v4331, 2
        %v4954 = vsel %vm1994, %v4952, %v4953
        %v4955 = vrot.slane %v4332, 2
        %v4956 = vsel %vm1994, %v4953, %v4955
        %v4957 = vrot.slane %v4333, 2
        %v4958 = vsel %vm1994, %v4955, %v4957
        %v4959 = vrot.slane %v4334, 2
        %v4960 = vsel %vm1994, %v4957, %v4959
        %v4961 = vrot.slane %v4335, 2
        %v4962 = vsel %vm1994, %v4959, %v4961
        %v4963 = vrot.slane %v4336, 2
        %v4964 = vsel %vm1994, %v4961, %v4963
        %v4965 = vrot.slane %v4337, 2
        %v4966 = vsel %vm1994, %v4963, %v4965
        %v4967 = vrot.slane %v4338, 2
        %v4968 = vsel %vm1994, %v4965, %v4967
        %v4969 = vrot.slane %v4339, 2
        %v4970 = vsel %vm1994, %v4967, %v4969
        %v4971 = vrot.slane %v4340, 2
        %v4972 = vsel %vm1994, %v4969, %v4971
        %v4973 = vrot.slane %v4341, 2
        %v4974 = vsel %vm1994, %v4971, %v4973
        %v4975 = vrot.slane %v4342, 2
        %v4976 = vsel %vm1994, %v4973, %v4975
        %v4977 = vrot.slane %v4343, 2
        %v4978 = vsel %vm1994, %v4975, %v4977
        %v4979 = vrot.slane %v4344, 2
        %v4980 = vsel %vm1994, %v4977, %v4979
        %v4981 = vrot.slane %v4345, 2
        %v4982 = vsel %vm1994, %v4979, %v4981
        %v4983 = vrot.slane %v4346, 2
        %v4984 = vsel %vm1994, %v4981, %v4983
        %v4985 = vrot.slane %v4347, 2
        %v4986 = vsel %vm1994, %v4983, %v4985
        %v4987 = vrot.slane %v4583, 2
        %v4988 = vsel %vm1994, %v4985, %v4987
        %v4990 = vsel %vm726, %v4954, 0
        %v4993 = vsel %vm726, %v4956, 0
        %v4996 = vsel %vm726, %v4958, 0
        %v4999 = vsel %vm726, %v4960, 0
        %v5002 = vsel %vm726, %v4962, 0
        %v5005 = vsel %vm726, %v4964, 0
        %v5008 = vsel %vm726, %v4966, 0
        %v5011 = vsel %vm726, %v4968, 0
        %v5014 = vsel %vm726, %v4970, 0
        %v5017 = vsel %vm726, %v4972, 0
        %v5020 = vsel %vm726, %v4974, 0
        %v5023 = vsel %vm726, %v4976, 0
        %v5026 = vsel %vm726, %v4978, 0
        %v5029 = vsel %vm726, %v4980, 0
        %v5032 = vsel %vm726, %v4982, 0
        %v5035 = vsel %vm726, %v4984, 0
        %v5038 = vsel %vm726, %v4986, 0
        %v5041 = vsel %vm726, %v4988, 0
        %v5044 = vsel %vm781, %v4948, 0
        %5046 = vmatpush.bf16.msra.mxu0 0
        %5047 = vmatpush.bf16.msra.mxu0 0
        %5048 = vmatpush.bf16.msra.mxu0 0
        %5049 = vmatpush.bf16.msra.mxu0 0
        %5050 = vmatpush.bf16.msra.mxu0 0
        %5051 = vmatpush.bf16.msra.mxu0 0
        %5052 = vmatpush.bf16.msra.mxu0 0
        %5053 = vmatpush.bf16.msra.mxu0 %v5044
        %5054 = vmatmul.bf16.gmra.mxu0 %v4990
        %v5055 = vpop.f32.mrf.mxu0
        %v5056 = vadd.f32 0.0, %v5055
        %v5057 = vpop.f32.mrf.mxu0
        %v5058 = vadd.f32 0.0, %v5057
        %5059 = vmatmul.bf16.gmra.mxu0 %v4993
        %v5060 = vpop.f32.mrf.mxu0
        %v5061 = vadd.f32 0.0, %v5060
        %v5062 = vpop.f32.mrf.mxu0
        %v5063 = vadd.f32 0.0, %v5062
        %5064 = vmatmul.bf16.gmra.mxu0 %v4996
        %v5065 = vpop.f32.mrf.mxu0
        %v5066 = vadd.f32 0.0, %v5065
        %v5067 = vpop.f32.mrf.mxu0
        %v5068 = vadd.f32 0.0, %v5067
        %5069 = vmatmul.bf16.gmra.mxu0 %v4999
        %v5070 = vpop.f32.mrf.mxu0
        %v5071 = vadd.f32 0.0, %v5070
        %v5072 = vpop.f32.mrf.mxu0
        %v5073 = vadd.f32 0.0, %v5072
        %5074 = vmatmul.bf16.gmra.mxu0 %v5002
        %v5075 = vpop.f32.mrf.mxu0
        %v5076 = vadd.f32 0.0, %v5075
        %v5077 = vpop.f32.mrf.mxu0
        %v5078 = vadd.f32 0.0, %v5077
        %5079 = vmatmul.bf16.gmra.mxu0 %v5005
        %v5080 = vpop.f32.mrf.mxu0
        %v5081 = vadd.f32 0.0, %v5080
        %v5082 = vpop.f32.mrf.mxu0
        %v5083 = vadd.f32 0.0, %v5082
        %5084 = vmatmul.bf16.gmra.mxu0 %v5008
        %v5085 = vpop.f32.mrf.mxu0
        %v5086 = vadd.f32 0.0, %v5085
        %v5087 = vpop.f32.mrf.mxu0
        %v5088 = vadd.f32 0.0, %v5087
        %5089 = vmatmul.bf16.gmra.mxu0 %v5011
        %v5090 = vpop.f32.mrf.mxu0
        %v5091 = vadd.f32 0.0, %v5090
        %v5092 = vpop.f32.mrf.mxu0
        %v5093 = vadd.f32 0.0, %v5092
        %5094 = vmatmul.bf16.gmra.mxu0 %v5014
        %v5095 = vpop.f32.mrf.mxu0
        %v5096 = vadd.f32 0.0, %v5095
        %v5097 = vpop.f32.mrf.mxu0
        %v5098 = vadd.f32 0.0, %v5097
        %5099 = vmatmul.bf16.gmra.mxu0 %v5017
        %v5100 = vpop.f32.mrf.mxu0
        %v5101 = vadd.f32 0.0, %v5100
        %v5102 = vpop.f32.mrf.mxu0
        %v5103 = vadd.f32 0.0, %v5102
        %5104 = vmatmul.bf16.gmra.mxu0 %v5020
        %v5105 = vpop.f32.mrf.mxu0
        %v5106 = vadd.f32 0.0, %v5105
        %v5107 = vpop.f32.mrf.mxu0
        %v5108 = vadd.f32 0.0, %v5107
        %5109 = vmatmul.bf16.gmra.mxu0 %v5023
        %v5110 = vpop.f32.mrf.mxu0
        %v5111 = vadd.f32 0.0, %v5110
        %v5112 = vpop.f32.mrf.mxu0
        %v5113 = vadd.f32 0.0, %v5112
        %5114 = vmatmul.bf16.gmra.mxu0 %v5026
        %v5115 = vpop.f32.mrf.mxu0
        %v5116 = vadd.f32 0.0, %v5115
        %v5117 = vpop.f32.mrf.mxu0
        %v5118 = vadd.f32 0.0, %v5117
        %5119 = vmatmul.bf16.gmra.mxu0 %v5029
        %v5120 = vpop.f32.mrf.mxu0
        %v5121 = vadd.f32 0.0, %v5120
        %v5122 = vpop.f32.mrf.mxu0
        %v5123 = vadd.f32 0.0, %v5122
        %5124 = vmatmul.bf16.gmra.mxu0 %v5032
        %v5125 = vpop.f32.mrf.mxu0
        %v5126 = vadd.f32 0.0, %v5125
        %v5127 = vpop.f32.mrf.mxu0
        %v5128 = vadd.f32 0.0, %v5127
        %5129 = vmatmul.bf16.gmra.mxu0 %v5035
        %v5130 = vpop.f32.mrf.mxu0
        %v5131 = vadd.f32 0.0, %v5130
        %v5132 = vpop.f32.mrf.mxu0
        %v5133 = vadd.f32 0.0, %v5132
        %5134 = vmatmul.bf16.gmra.mxu0 %v5038
        %v5135 = vpop.f32.mrf.mxu0
        %v5136 = vadd.f32 0.0, %v5135
        %v5137 = vpop.f32.mrf.mxu0
        %v5138 = vadd.f32 0.0, %v5137
        %5139 = vmatmul.bf16.gmra.mxu0 %v5041
        %v5140 = vpop.f32.mrf.mxu0
        %v5141 = vadd.f32 0.0, %v5140
        %v5142 = vpop.f32.mrf.mxu0
        %v5143 = vadd.f32 0.0, %v5142
        %5144 = vdwg.mxu0
        %v5145 = vadd.f32 %v4910, %v5056
        %v5146 = vadd.f32 %v4911, %v5058
        %v5147 = vadd.f32 %v4912, %v5061
        %v5148 = vadd.f32 %v4913, %v5063
        %v5149 = vadd.f32 %v4914, %v5066
        %v5150 = vadd.f32 %v4915, %v5068
        %v5151 = vadd.f32 %v4916, %v5071
        %v5152 = vadd.f32 %v4917, %v5073
        %v5153 = vadd.f32 %v4918, %v5076
        %v5154 = vadd.f32 %v4919, %v5078
        %v5155 = vadd.f32 %v4920, %v5081
        %v5156 = vadd.f32 %v4921, %v5083
        %v5157 = vadd.f32 %v4922, %v5086
        %v5158 = vadd.f32 %v4923, %v5088
        %v5159 = vadd.f32 %v4924, %v5091
        %v5160 = vadd.f32 %v4925, %v5093
        %v5161 = vadd.f32 %v4926, %v5096
        %v5162 = vadd.f32 %v4927, %v5098
        %v5163 = vadd.f32 %v4928, %v5101
        %v5164 = vadd.f32 %v4929, %v5103
        %v5165 = vadd.f32 %v4930, %v5106
        %v5166 = vadd.f32 %v4931, %v5108
        %v5167 = vadd.f32 %v4932, %v5111
        %v5168 = vadd.f32 %v4933, %v5113
        %v5169 = vadd.f32 %v4934, %v5116
        %v5170 = vadd.f32 %v4935, %v5118
        %v5171 = vadd.f32 %v4936, %v5121
        %v5172 = vadd.f32 %v4937, %v5123
        %v5173 = vadd.f32 %v4938, %v5126
        %v5174 = vadd.f32 %v4939, %v5128
        %v5175 = vadd.f32 %v4940, %v5131
        %v5176 = vadd.f32 %v4941, %v5133
        %v5177 = vadd.f32 %v4942, %v5136
        %v5178 = vadd.f32 %v4943, %v5138
        %v5179 = vadd.f32 %v4944, %v5141
        %v5180 = vadd.f32 %v4945, %v5143
        %v5181 = vld [vmem:[%s421 + $0x10] sm:$0xc]
        %v5182 = vld [vmem:[%s421 + $0x14] sm:$0xf]
        %v5183 = vld [vmem:[%s421 + $0x18] sm:$0xf]
        %v5184 = vld [vmem:[%s421 + $0x1c] sm:$0xf]
        %v5185 = vld [vmem:[%s421 + $0x20] sm:$0xf]
        %v5186 = vld [vmem:[%s421 + $0x24] sm:$0xf]
        %v5187 = vld [vmem:[%s421 + $0x28] sm:$0xf]
        %v5188 = vld [vmem:[%s421 + $0x2c] sm:$0xf]
        %v5189 = vld [vmem:[%s421 + $0x30] sm:$0xf]
        %v5190 = vld [vmem:[%s421 + $0x34] sm:$0xf]
        %v5191 = vld [vmem:[%s421 + $0x38] sm:$0xf]
        %v5192 = vld [vmem:[%s421 + $0x3c] sm:$0xf]
        %v5193 = vld [vmem:[%s421 + $0x40] sm:$0xf]
        %v5194 = vld [vmem:[%s421 + $0x44] sm:$0xf]
        %v5195 = vld [vmem:[%s421 + $0x48] sm:$0xf]
        %v5196 = vld [vmem:[%s421 + $0x4c] sm:$0xf]
        %v5197 = vld [vmem:[%s421 + $0x50] sm:$0xf]
        %v5198 = vld [vmem:[%s421 + $0x54] sm:$0xf]
        %v5199 = vld [vmem:[%s421 + $0x58] sm:$0xf]
        %v5200 = vld [vmem:[%s421 + $0x5c] sm:$0xf]
        %v5201 = vld [vmem:[%s421 + $0x60] sm:$0xf]
        %v5202 = vld [vmem:[%s421 + $0x64] sm:$0xf]
        %v5203 = vld [vmem:[%s421 + $0x68] sm:$0xf]
        %v5204 = vld [vmem:[%s421 + $0x6c] sm:$0xf]
        %v5205 = vld [vmem:[%s421 + $0x70] sm:$0xf]
        %v5206 = vld [vmem:[%s421 + $0x74] sm:$0xf]
        %v5207 = vld [vmem:[%s421 + $0x78] sm:$0xf]
        %v5208 = vld [vmem:[%s421 + $0x7c] sm:$0xf]
        %v5209 = vld [vmem:[%s421 + $0x80] sm:$0xf]
        %v5210 = vld [vmem:[%s421 + $0x84] sm:$0xf]
        %v5211 = vld [vmem:[%s421 + $0x88] sm:$0xf]
        %v5212 = vld [vmem:[%s421 + $0x8c] sm:$0xf]
        %v5213 = vld [vmem:[%s421 + $0x90] sm:$0xf]
        %v5214 = vld [vmem:[%s421 + $0x94] sm:$0xf]
        %v5215 = vld [vmem:[%s421 + $0x98] sm:$0xf]
        %v5216 = vld [vmem:[%s421 + $0x9c] sm:$0xf]
        %v5217 = vld [vmem:[%s421 + $0xa0] sm:$0x3]
        %s5218 = scalar_lea.vmem %s3, 60
        %v5219 = vld [vmem:[%s5218] sm:$0xf]
        %v5257 = vunpack.c.l.b16 %v5181
        %v5258 = vunpack.c.l.b16 %v5182
        %v5259 = vunpack.c.l.b16 %v5183
        %v5260 = vunpack.c.l.b16 %v5184
        %v5261 = vunpack.c.l.b16 %v5185
        %v5262 = vunpack.c.l.b16 %v5186
        %v5263 = vunpack.c.l.b16 %v5187
        %v5264 = vunpack.c.l.b16 %v5188
        %v5265 = vunpack.c.l.b16 %v5189
        %v5266 = vunpack.c.l.b16 %v5190
        %v5267 = vunpack.c.l.b16 %v5191
        %v5268 = vunpack.c.l.b16 %v5192
        %v5269 = vunpack.c.l.b16 %v5193
        %v5270 = vunpack.c.l.b16 %v5194
        %v5271 = vunpack.c.l.b16 %v5195
        %v5272 = vunpack.c.l.b16 %v5196
        %v5273 = vunpack.c.l.b16 %v5197
        %v5274 = vunpack.c.l.b16 %v5198
        %v5275 = vunpack.c.l.b16 %v5199
        %v5276 = vunpack.c.l.b16 %v5200
        %v5277 = vunpack.c.l.b16 %v5201
        %v5278 = vunpack.c.l.b16 %v5202
        %v5279 = vunpack.c.l.b16 %v5203
        %v5280 = vunpack.c.l.b16 %v5204
        %v5281 = vunpack.c.l.b16 %v5205
        %v5282 = vunpack.c.l.b16 %v5206
        %v5283 = vunpack.c.l.b16 %v5207
        %v5284 = vunpack.c.l.b16 %v5208
        %v5285 = vunpack.c.l.b16 %v5209
        %v5286 = vunpack.c.l.b16 %v5210
        %v5287 = vunpack.c.l.b16 %v5211
        %v5288 = vunpack.c.l.b16 %v5212
        %v5289 = vunpack.c.l.b16 %v5213
        %v5290 = vunpack.c.l.b16 %v5214
        %v5291 = vunpack.c.l.b16 %v5215
        %v5292 = vunpack.c.l.b16 %v5216
        %v5293 = vunpack.c.l.b16 %v5217
        %v5294 = vpack.c.b16 %v5258, %v5257
        %v5295 = vpack.c.b16 %v5260, %v5259
        %v5296 = vpack.c.b16 %v5262, %v5261
        %v5297 = vpack.c.b16 %v5264, %v5263
        %v5298 = vpack.c.b16 %v5266, %v5265
        %v5299 = vpack.c.b16 %v5268, %v5267
        %v5300 = vpack.c.b16 %v5270, %v5269
        %v5301 = vpack.c.b16 %v5272, %v5271
        %v5302 = vpack.c.b16 %v5274, %v5273
        %v5303 = vpack.c.b16 %v5276, %v5275
        %v5304 = vpack.c.b16 %v5278, %v5277
        %v5305 = vpack.c.b16 %v5280, %v5279
        %v5306 = vpack.c.b16 %v5282, %v5281
        %v5307 = vpack.c.b16 %v5284, %v5283
        %v5308 = vpack.c.b16 %v5286, %v5285
        %v5309 = vpack.c.b16 %v5288, %v5287
        %v5310 = vpack.c.b16 %v5290, %v5289
        %v5311 = vpack.c.b16 %v5292, %v5291
        %v5312 = vpack.c.b16 %v5293, %v5293
        %v5313 = vrot.slane %v5294, 2
        %v5314 = vrot.slane %v5295, 2
        %v5315 = vsel %vm1994, %v5313, %v5314
        %v5316 = vrot.slane %v5296, 2
        %v5317 = vsel %vm1994, %v5314, %v5316
        %v5318 = vrot.slane %v5297, 2
        %v5319 = vsel %vm1994, %v5316, %v5318
        %v5320 = vrot.slane %v5298, 2
        %v5321 = vsel %vm1994, %v5318, %v5320
        %v5322 = vrot.slane %v5299, 2
        %v5323 = vsel %vm1994, %v5320, %v5322
        %v5324 = vrot.slane %v5300, 2
        %v5325 = vsel %vm1994, %v5322, %v5324
        %v5326 = vrot.slane %v5301, 2
        %v5327 = vsel %vm1994, %v5324, %v5326
        %v5328 = vrot.slane %v5302, 2
        %v5329 = vsel %vm1994, %v5326, %v5328
        %v5330 = vrot.slane %v5303, 2
        %v5331 = vsel %vm1994, %v5328, %v5330
        %v5332 = vrot.slane %v5304, 2
        %v5333 = vsel %vm1994, %v5330, %v5332
        %v5334 = vrot.slane %v5305, 2
        %v5335 = vsel %vm1994, %v5332, %v5334
        %v5336 = vrot.slane %v5306, 2
        %v5337 = vsel %vm1994, %v5334, %v5336
        %v5338 = vrot.slane %v5307, 2
        %v5339 = vsel %vm1994, %v5336, %v5338
        %v5340 = vrot.slane %v5308, 2
        %v5341 = vsel %vm1994, %v5338, %v5340
        %v5342 = vrot.slane %v5309, 2
        %v5343 = vsel %vm1994, %v5340, %v5342
        %v5344 = vrot.slane %v5310, 2
        %v5345 = vsel %vm1994, %v5342, %v5344
        %v5346 = vrot.slane %v5311, 2
        %v5347 = vsel %vm1994, %v5344, %v5346
        %v5348 = vrot.slane %v5312, 2
        %v5349 = vsel %vm1994, %v5346, %v5348
        %v5351 = vsel %vm726, %v5315, 0
        %v5354 = vsel %vm726, %v5317, 0
        %v5357 = vsel %vm726, %v5319, 0
        %v5360 = vsel %vm726, %v5321, 0
        %v5363 = vsel %vm726, %v5323, 0
        %v5366 = vsel %vm726, %v5325, 0
        %v5369 = vsel %vm726, %v5327, 0
        %v5372 = vsel %vm726, %v5329, 0
        %v5375 = vsel %vm726, %v5331, 0
        %v5378 = vsel %vm726, %v5333, 0
        %v5381 = vsel %vm726, %v5335, 0
        %v5384 = vsel %vm726, %v5337, 0
        %v5387 = vsel %vm726, %v5339, 0
        %v5390 = vsel %vm726, %v5341, 0
        %v5393 = vsel %vm726, %v5343, 0
        %v5396 = vsel %vm726, %v5345, 0
        %v5399 = vsel %vm726, %v5347, 0
        %v5402 = vsel %vm726, %v5349, 0
        %v5405 = vsel %vm781, %v5219, 0
        %5407 = vmatpush.bf16.msra.mxu0 0
        %5408 = vmatpush.bf16.msra.mxu0 0
        %5409 = vmatpush.bf16.msra.mxu0 0
        %5410 = vmatpush.bf16.msra.mxu0 0
        %5411 = vmatpush.bf16.msra.mxu0 0
        %5412 = vmatpush.bf16.msra.mxu0 0
        %5413 = vmatpush.bf16.msra.mxu0 0
        %5414 = vmatpush.bf16.msra.mxu0 %v5405
        %5415 = vmatmul.bf16.gmra.mxu0 %v5351
        %v5416 = vpop.f32.mrf.mxu0
        %v5417 = vadd.f32 0.0, %v5416
        %v5418 = vpop.f32.mrf.mxu0
        %v5419 = vadd.f32 0.0, %v5418
        %5420 = vmatmul.bf16.gmra.mxu0 %v5354
        %v5421 = vpop.f32.mrf.mxu0
        %v5422 = vadd.f32 0.0, %v5421
        %v5423 = vpop.f32.mrf.mxu0
        %v5424 = vadd.f32 0.0, %v5423
        %5425 = vmatmul.bf16.gmra.mxu0 %v5357
        %v5426 = vpop.f32.mrf.mxu0
        %v5427 = vadd.f32 0.0, %v5426
        %v5428 = vpop.f32.mrf.mxu0
        %v5429 = vadd.f32 0.0, %v5428
        %5430 = vmatmul.bf16.gmra.mxu0 %v5360
        %v5431 = vpop.f32.mrf.mxu0
        %v5432 = vadd.f32 0.0, %v5431
        %v5433 = vpop.f32.mrf.mxu0
        %v5434 = vadd.f32 0.0, %v5433
        %5435 = vmatmul.bf16.gmra.mxu0 %v5363
        %v5436 = vpop.f32.mrf.mxu0
        %v5437 = vadd.f32 0.0, %v5436
        %v5438 = vpop.f32.mrf.mxu0
        %v5439 = vadd.f32 0.0, %v5438
        %5440 = vmatmul.bf16.gmra.mxu0 %v5366
        %v5441 = vpop.f32.mrf.mxu0
        %v5442 = vadd.f32 0.0, %v5441
        %v5443 = vpop.f32.mrf.mxu0
        %v5444 = vadd.f32 0.0, %v5443
        %5445 = vmatmul.bf16.gmra.mxu0 %v5369
        %v5446 = vpop.f32.mrf.mxu0
        %v5447 = vadd.f32 0.0, %v5446
        %v5448 = vpop.f32.mrf.mxu0
        %v5449 = vadd.f32 0.0, %v5448
        %5450 = vmatmul.bf16.gmra.mxu0 %v5372
        %v5451 = vpop.f32.mrf.mxu0
        %v5452 = vadd.f32 0.0, %v5451
        %v5453 = vpop.f32.mrf.mxu0
        %v5454 = vadd.f32 0.0, %v5453
        %5455 = vmatmul.bf16.gmra.mxu0 %v5375
        %v5456 = vpop.f32.mrf.mxu0
        %v5457 = vadd.f32 0.0, %v5456
        %v5458 = vpop.f32.mrf.mxu0
        %v5459 = vadd.f32 0.0, %v5458
        %5460 = vmatmul.bf16.gmra.mxu0 %v5378
        %v5461 = vpop.f32.mrf.mxu0
        %v5462 = vadd.f32 0.0, %v5461
        %v5463 = vpop.f32.mrf.mxu0
        %v5464 = vadd.f32 0.0, %v5463
        %5465 = vmatmul.bf16.gmra.mxu0 %v5381
        %v5466 = vpop.f32.mrf.mxu0
        %v5467 = vadd.f32 0.0, %v5466
        %v5468 = vpop.f32.mrf.mxu0
        %v5469 = vadd.f32 0.0, %v5468
        %5470 = vmatmul.bf16.gmra.mxu0 %v5384
        %v5471 = vpop.f32.mrf.mxu0
        %v5472 = vadd.f32 0.0, %v5471
        %v5473 = vpop.f32.mrf.mxu0
        %v5474 = vadd.f32 0.0, %v5473
        %5475 = vmatmul.bf16.gmra.mxu0 %v5387
        %v5476 = vpop.f32.mrf.mxu0
        %v5477 = vadd.f32 0.0, %v5476
        %v5478 = vpop.f32.mrf.mxu0
        %v5479 = vadd.f32 0.0, %v5478
        %5480 = vmatmul.bf16.gmra.mxu0 %v5390
        %v5481 = vpop.f32.mrf.mxu0
        %v5482 = vadd.f32 0.0, %v5481
        %v5483 = vpop.f32.mrf.mxu0
        %v5484 = vadd.f32 0.0, %v5483
        %5485 = vmatmul.bf16.gmra.mxu0 %v5393
        %v5486 = vpop.f32.mrf.mxu0
        %v5487 = vadd.f32 0.0, %v5486
        %v5488 = vpop.f32.mrf.mxu0
        %v5489 = vadd.f32 0.0, %v5488
        %5490 = vmatmul.bf16.gmra.mxu0 %v5396
        %v5491 = vpop.f32.mrf.mxu0
        %v5492 = vadd.f32 0.0, %v5491
        %v5493 = vpop.f32.mrf.mxu0
        %v5494 = vadd.f32 0.0, %v5493
        %5495 = vmatmul.bf16.gmra.mxu0 %v5399
        %v5496 = vpop.f32.mrf.mxu0
        %v5497 = vadd.f32 0.0, %v5496
        %v5498 = vpop.f32.mrf.mxu0
        %v5499 = vadd.f32 0.0, %v5498
        %5500 = vmatmul.bf16.gmra.mxu0 %v5402
        %v5501 = vpop.f32.mrf.mxu0
        %v5502 = vadd.f32 0.0, %v5501
        %v5503 = vpop.f32.mrf.mxu0
        %v5504 = vadd.f32 0.0, %v5503
        %5505 = vdwg.mxu0
        %v5506 = vadd.f32 %v5145, %v5417
        %v5507 = vadd.f32 %v5146, %v5419
        %v5508 = vadd.f32 %v5147, %v5422
        %v5509 = vadd.f32 %v5148, %v5424
        %v5510 = vadd.f32 %v5149, %v5427
        %v5511 = vadd.f32 %v5150, %v5429
        %v5512 = vadd.f32 %v5151, %v5432
        %v5513 = vadd.f32 %v5152, %v5434
        %v5514 = vadd.f32 %v5153, %v5437
        %v5515 = vadd.f32 %v5154, %v5439
        %v5516 = vadd.f32 %v5155, %v5442
        %v5517 = vadd.f32 %v5156, %v5444
        %v5518 = vadd.f32 %v5157, %v5447
        %v5519 = vadd.f32 %v5158, %v5449
        %v5520 = vadd.f32 %v5159, %v5452
        %v5521 = vadd.f32 %v5160, %v5454
        %v5522 = vadd.f32 %v5161, %v5457
        %v5523 = vadd.f32 %v5162, %v5459
        %v5524 = vadd.f32 %v5163, %v5462
        %v5525 = vadd.f32 %v5164, %v5464
        %v5526 = vadd.f32 %v5165, %v5467
        %v5527 = vadd.f32 %v5166, %v5469
        %v5528 = vadd.f32 %v5167, %v5472
        %v5529 = vadd.f32 %v5168, %v5474
        %v5530 = vadd.f32 %v5169, %v5477
        %v5531 = vadd.f32 %v5170, %v5479
        %v5532 = vadd.f32 %v5171, %v5482
        %v5533 = vadd.f32 %v5172, %v5484
        %v5534 = vadd.f32 %v5173, %v5487
        %v5535 = vadd.f32 %v5174, %v5489
        %v5536 = vadd.f32 %v5175, %v5492
        %v5537 = vadd.f32 %v5176, %v5494
        %v5538 = vadd.f32 %v5177, %v5497
        %v5539 = vadd.f32 %v5178, %v5499
        %v5540 = vadd.f32 %v5179, %v5502
        %v5541 = vadd.f32 %v5180, %v5504
        %v5542 = vld [vmem:[%s421 + $0xa0] sm:$0x7]
        %s5543 = scalar_lea.vmem %s3, 64
        %v5544 = vld [vmem:[%s5543] sm:$0xf]
        %v5546 = vunpack.c.l.b16 %v5542
        %v5547 = vpack.c.b16 %v5546, %v5546
        %v5549 = vshrl.u32 %v5294, 16
        %v5551 = vrot.slane %v5549, 2
        %v5552 = vshll.u32 %v5294, 16
        %v5554 = vrot.slane %v5552, 3
        %v5555 = vor.u32 %v5551, %v5554
        %v5557 = vshrl.u32 %v5295, 16
        %v5559 = vrot.slane %v5557, 2
        %v5560 = vshll.u32 %v5295, 16
        %v5562 = vrot.slane %v5560, 3
        %v5563 = vor.u32 %v5559, %v5562
        %v5564 = vsel %vm2591, %v5555, %v5563
        %v5566 = vshrl.u32 %v5296, 16
        %v5568 = vrot.slane %v5566, 2
        %v5569 = vshll.u32 %v5296, 16
        %v5571 = vrot.slane %v5569, 3
        %v5572 = vor.u32 %v5568, %v5571
        %v5573 = vsel %vm2591, %v5563, %v5572
        %v5575 = vshrl.u32 %v5297, 16
        %v5577 = vrot.slane %v5575, 2
        %v5578 = vshll.u32 %v5297, 16
        %v5580 = vrot.slane %v5578, 3
        %v5581 = vor.u32 %v5577, %v5580
        %v5582 = vsel %vm2591, %v5572, %v5581
        %v5584 = vshrl.u32 %v5298, 16
        %v5586 = vrot.slane %v5584, 2
        %v5587 = vshll.u32 %v5298, 16
        %v5589 = vrot.slane %v5587, 3
        %v5590 = vor.u32 %v5586, %v5589
        %v5591 = vsel %vm2591, %v5581, %v5590
        %v5593 = vshrl.u32 %v5299, 16
        %v5595 = vrot.slane %v5593, 2
        %v5596 = vshll.u32 %v5299, 16
        %v5598 = vrot.slane %v5596, 3
        %v5599 = vor.u32 %v5595, %v5598
        %v5600 = vsel %vm2591, %v5590, %v5599
        %v5602 = vshrl.u32 %v5300, 16
        %v5604 = vrot.slane %v5602, 2
        %v5605 = vshll.u32 %v5300, 16
        %v5607 = vrot.slane %v5605, 3
        %v5608 = vor.u32 %v5604, %v5607
        %v5609 = vsel %vm2591, %v5599, %v5608
        %v5611 = vshrl.u32 %v5301, 16
        %v5613 = vrot.slane %v5611, 2
        %v5614 = vshll.u32 %v5301, 16
        %v5616 = vrot.slane %v5614, 3
        %v5617 = vor.u32 %v5613, %v5616
        %v5618 = vsel %vm2591, %v5608, %v5617
        %v5620 = vshrl.u32 %v5302, 16
        %v5622 = vrot.slane %v5620, 2
        %v5623 = vshll.u32 %v5302, 16
        %v5625 = vrot.slane %v5623, 3
        %v5626 = vor.u32 %v5622, %v5625
        %v5627 = vsel %vm2591, %v5617, %v5626
        %v5629 = vshrl.u32 %v5303, 16
        %v5631 = vrot.slane %v5629, 2
        %v5632 = vshll.u32 %v5303, 16
        %v5634 = vrot.slane %v5632, 3
        %v5635 = vor.u32 %v5631, %v5634
        %v5636 = vsel %vm2591, %v5626, %v5635
        %v5638 = vshrl.u32 %v5304, 16
        %v5640 = vrot.slane %v5638, 2
        %v5641 = vshll.u32 %v5304, 16
        %v5643 = vrot.slane %v5641, 3
        %v5644 = vor.u32 %v5640, %v5643
        %v5645 = vsel %vm2591, %v5635, %v5644
        %v5647 = vshrl.u32 %v5305, 16
        %v5649 = vrot.slane %v5647, 2
        %v5650 = vshll.u32 %v5305, 16
        %v5652 = vrot.slane %v5650, 3
        %v5653 = vor.u32 %v5649, %v5652
        %v5654 = vsel %vm2591, %v5644, %v5653
        %v5656 = vshrl.u32 %v5306, 16
        %v5658 = vrot.slane %v5656, 2
        %v5659 = vshll.u32 %v5306, 16
        %v5661 = vrot.slane %v5659, 3
        %v5662 = vor.u32 %v5658, %v5661
        %v5663 = vsel %vm2591, %v5653, %v5662
        %v5665 = vshrl.u32 %v5307, 16
        %v5667 = vrot.slane %v5665, 2
        %v5668 = vshll.u32 %v5307, 16
        %v5670 = vrot.slane %v5668, 3
        %v5671 = vor.u32 %v5667, %v5670
        %v5672 = vsel %vm2591, %v5662, %v5671
        %v5674 = vshrl.u32 %v5308, 16
        %v5676 = vrot.slane %v5674, 2
        %v5677 = vshll.u32 %v5308, 16
        %v5679 = vrot.slane %v5677, 3
        %v5680 = vor.u32 %v5676, %v5679
        %v5681 = vsel %vm2591, %v5671, %v5680
        %v5683 = vshrl.u32 %v5309, 16
        %v5685 = vrot.slane %v5683, 2
        %v5686 = vshll.u32 %v5309, 16
        %v5688 = vrot.slane %v5686, 3
        %v5689 = vor.u32 %v5685, %v5688
        %v5690 = vsel %vm2591, %v5680, %v5689
        %v5692 = vshrl.u32 %v5310, 16
        %v5694 = vrot.slane %v5692, 2
        %v5695 = vshll.u32 %v5310, 16
        %v5697 = vrot.slane %v5695, 3
        %v5698 = vor.u32 %v5694, %v5697
        %v5699 = vsel %vm2591, %v5689, %v5698
        %v5701 = vshrl.u32 %v5311, 16
        %v5703 = vrot.slane %v5701, 2
        %v5704 = vshll.u32 %v5311, 16
        %v5706 = vrot.slane %v5704, 3
        %v5707 = vor.u32 %v5703, %v5706
        %v5708 = vsel %vm2591, %v5698, %v5707
        %v5710 = vshrl.u32 %v5547, 16
        %v5712 = vrot.slane %v5710, 2
        %v5713 = vshll.u32 %v5547, 16
        %v5715 = vrot.slane %v5713, 3
        %v5716 = vor.u32 %v5712, %v5715
        %v5717 = vsel %vm2591, %v5707, %v5716
        %v5719 = vsel %vm726, %v5564, 0
        %v5722 = vsel %vm726, %v5573, 0
        %v5725 = vsel %vm726, %v5582, 0
        %v5728 = vsel %vm726, %v5591, 0
        %v5731 = vsel %vm726, %v5600, 0
        %v5734 = vsel %vm726, %v5609, 0
        %v5737 = vsel %vm726, %v5618, 0
        %v5740 = vsel %vm726, %v5627, 0
        %v5743 = vsel %vm726, %v5636, 0
        %v5746 = vsel %vm726, %v5645, 0
        %v5749 = vsel %vm726, %v5654, 0
        %v5752 = vsel %vm726, %v5663, 0
        %v5755 = vsel %vm726, %v5672, 0
        %v5758 = vsel %vm726, %v5681, 0
        %v5761 = vsel %vm726, %v5690, 0
        %v5764 = vsel %vm726, %v5699, 0
        %v5767 = vsel %vm726, %v5708, 0
        %v5770 = vsel %vm726, %v5717, 0
        %v5773 = vsel %vm781, %v5544, 0
        %5775 = vmatpush.bf16.msra.mxu0 0
        %5776 = vmatpush.bf16.msra.mxu0 0
        %5777 = vmatpush.bf16.msra.mxu0 0
        %5778 = vmatpush.bf16.msra.mxu0 0
        %5779 = vmatpush.bf16.msra.mxu0 0
        %5780 = vmatpush.bf16.msra.mxu0 0
        %5781 = vmatpush.bf16.msra.mxu0 0
        %5782 = vmatpush.bf16.msra.mxu0 %v5773
        %5783 = vmatmul.bf16.gmra.mxu0 %v5719
        %v5784 = vpop.f32.mrf.mxu0
        %v5785 = vadd.f32 0.0, %v5784
        %v5786 = vpop.f32.mrf.mxu0
        %v5787 = vadd.f32 0.0, %v5786
        %5788 = vmatmul.bf16.gmra.mxu0 %v5722
        %v5789 = vpop.f32.mrf.mxu0
        %v5790 = vadd.f32 0.0, %v5789
        %v5791 = vpop.f32.mrf.mxu0
        %v5792 = vadd.f32 0.0, %v5791
        %5793 = vmatmul.bf16.gmra.mxu0 %v5725
        %v5794 = vpop.f32.mrf.mxu0
        %v5795 = vadd.f32 0.0, %v5794
        %v5796 = vpop.f32.mrf.mxu0
        %v5797 = vadd.f32 0.0, %v5796
        %5798 = vmatmul.bf16.gmra.mxu0 %v5728
        %v5799 = vpop.f32.mrf.mxu0
        %v5800 = vadd.f32 0.0, %v5799
        %v5801 = vpop.f32.mrf.mxu0
        %v5802 = vadd.f32 0.0, %v5801
        %5803 = vmatmul.bf16.gmra.mxu0 %v5731
        %v5804 = vpop.f32.mrf.mxu0
        %v5805 = vadd.f32 0.0, %v5804
        %v5806 = vpop.f32.mrf.mxu0
        %v5807 = vadd.f32 0.0, %v5806
        %5808 = vmatmul.bf16.gmra.mxu0 %v5734
        %v5809 = vpop.f32.mrf.mxu0
        %v5810 = vadd.f32 0.0, %v5809
        %v5811 = vpop.f32.mrf.mxu0
        %v5812 = vadd.f32 0.0, %v5811
        %5813 = vmatmul.bf16.gmra.mxu0 %v5737
        %v5814 = vpop.f32.mrf.mxu0
        %v5815 = vadd.f32 0.0, %v5814
        %v5816 = vpop.f32.mrf.mxu0
        %v5817 = vadd.f32 0.0, %v5816
        %5818 = vmatmul.bf16.gmra.mxu0 %v5740
        %v5819 = vpop.f32.mrf.mxu0
        %v5820 = vadd.f32 0.0, %v5819
        %v5821 = vpop.f32.mrf.mxu0
        %v5822 = vadd.f32 0.0, %v5821
        %5823 = vmatmul.bf16.gmra.mxu0 %v5743
        %v5824 = vpop.f32.mrf.mxu0
        %v5825 = vadd.f32 0.0, %v5824
        %v5826 = vpop.f32.mrf.mxu0
        %v5827 = vadd.f32 0.0, %v5826
        %5828 = vmatmul.bf16.gmra.mxu0 %v5746
        %v5829 = vpop.f32.mrf.mxu0
        %v5830 = vadd.f32 0.0, %v5829
        %v5831 = vpop.f32.mrf.mxu0
        %v5832 = vadd.f32 0.0, %v5831
        %5833 = vmatmul.bf16.gmra.mxu0 %v5749
        %v5834 = vpop.f32.mrf.mxu0
        %v5835 = vadd.f32 0.0, %v5834
        %v5836 = vpop.f32.mrf.mxu0
        %v5837 = vadd.f32 0.0, %v5836
        %5838 = vmatmul.bf16.gmra.mxu0 %v5752
        %v5839 = vpop.f32.mrf.mxu0
        %v5840 = vadd.f32 0.0, %v5839
        %v5841 = vpop.f32.mrf.mxu0
        %v5842 = vadd.f32 0.0, %v5841
        %5843 = vmatmul.bf16.gmra.mxu0 %v5755
        %v5844 = vpop.f32.mrf.mxu0
        %v5845 = vadd.f32 0.0, %v5844
        %v5846 = vpop.f32.mrf.mxu0
        %v5847 = vadd.f32 0.0, %v5846
        %5848 = vmatmul.bf16.gmra.mxu0 %v5758
        %v5849 = vpop.f32.mrf.mxu0
        %v5850 = vadd.f32 0.0, %v5849
        %v5851 = vpop.f32.mrf.mxu0
        %v5852 = vadd.f32 0.0, %v5851
        %5853 = vmatmul.bf16.gmra.mxu0 %v5761
        %v5854 = vpop.f32.mrf.mxu0
        %v5855 = vadd.f32 0.0, %v5854
        %v5856 = vpop.f32.mrf.mxu0
        %v5857 = vadd.f32 0.0, %v5856
        %5858 = vmatmul.bf16.gmra.mxu0 %v5764
        %v5859 = vpop.f32.mrf.mxu0
        %v5860 = vadd.f32 0.0, %v5859
        %v5861 = vpop.f32.mrf.mxu0
        %v5862 = vadd.f32 0.0, %v5861
        %5863 = vmatmul.bf16.gmra.mxu0 %v5767
        %v5864 = vpop.f32.mrf.mxu0
        %v5865 = vadd.f32 0.0, %v5864
        %v5866 = vpop.f32.mrf.mxu0
        %v5867 = vadd.f32 0.0, %v5866
        %5868 = vmatmul.bf16.gmra.mxu0 %v5770
        %v5869 = vpop.f32.mrf.mxu0
        %v5870 = vadd.f32 0.0, %v5869
        %v5871 = vpop.f32.mrf.mxu0
        %v5872 = vadd.f32 0.0, %v5871
        %5873 = vdwg.mxu0
        %v5874 = vadd.f32 %v5506, %v5785
        %v5875 = vadd.f32 %v5507, %v5787
        %v5876 = vadd.f32 %v5508, %v5790
        %v5877 = vadd.f32 %v5509, %v5792
        %v5878 = vadd.f32 %v5510, %v5795
        %v5879 = vadd.f32 %v5511, %v5797
        %v5880 = vadd.f32 %v5512, %v5800
        %v5881 = vadd.f32 %v5513, %v5802
        %v5882 = vadd.f32 %v5514, %v5805
        %v5883 = vadd.f32 %v5515, %v5807
        %v5884 = vadd.f32 %v5516, %v5810
        %v5885 = vadd.f32 %v5517, %v5812
        %v5886 = vadd.f32 %v5518, %v5815
        %v5887 = vadd.f32 %v5519, %v5817
        %v5888 = vadd.f32 %v5520, %v5820
        %v5889 = vadd.f32 %v5521, %v5822
        %v5890 = vadd.f32 %v5522, %v5825
        %v5891 = vadd.f32 %v5523, %v5827
        %v5892 = vadd.f32 %v5524, %v5830
        %v5893 = vadd.f32 %v5525, %v5832
        %v5894 = vadd.f32 %v5526, %v5835
        %v5895 = vadd.f32 %v5527, %v5837
        %v5896 = vadd.f32 %v5528, %v5840
        %v5897 = vadd.f32 %v5529, %v5842
        %v5898 = vadd.f32 %v5530, %v5845
        %v5899 = vadd.f32 %v5531, %v5847
        %v5900 = vadd.f32 %v5532, %v5850
        %v5901 = vadd.f32 %v5533, %v5852
        %v5902 = vadd.f32 %v5534, %v5855
        %v5903 = vadd.f32 %v5535, %v5857
        %v5904 = vadd.f32 %v5536, %v5860
        %v5905 = vadd.f32 %v5537, %v5862
        %v5906 = vadd.f32 %v5538, %v5865
        %v5907 = vadd.f32 %v5539, %v5867
        %v5908 = vadd.f32 %v5540, %v5870
        %v5909 = vadd.f32 %v5541, %v5872
        %v5910 = vld [vmem:[%s421 + $0x10] sm:$0x8]
        %s5911 = scalar_lea.vmem %s3, 68
        %v5912 = vld [vmem:[%s5911] sm:$0xf]
        %v5914 = vunpack.c.l.b16 %v5910
        %v5915 = vpack.c.b16 %v5258, %v5914
        %v5916 = vrot.slane %v5915, 3
        %v5917 = vrot.slane %v5295, 3
        %v5918 = vsel %vm2960, %v5916, %v5917
        %v5919 = vrot.slane %v5296, 3
        %v5920 = vsel %vm2960, %v5917, %v5919
        %v5921 = vrot.slane %v5297, 3
        %v5922 = vsel %vm2960, %v5919, %v5921
        %v5923 = vrot.slane %v5298, 3
        %v5924 = vsel %vm2960, %v5921, %v5923
        %v5925 = vrot.slane %v5299, 3
        %v5926 = vsel %vm2960, %v5923, %v5925
        %v5927 = vrot.slane %v5300, 3
        %v5928 = vsel %vm2960, %v5925, %v5927
        %v5929 = vrot.slane %v5301, 3
        %v5930 = vsel %vm2960, %v5927, %v5929
        %v5931 = vrot.slane %v5302, 3
        %v5932 = vsel %vm2960, %v5929, %v5931
        %v5933 = vrot.slane %v5303, 3
        %v5934 = vsel %vm2960, %v5931, %v5933
        %v5935 = vrot.slane %v5304, 3
        %v5936 = vsel %vm2960, %v5933, %v5935
        %v5937 = vrot.slane %v5305, 3
        %v5938 = vsel %vm2960, %v5935, %v5937
        %v5939 = vrot.slane %v5306, 3
        %v5940 = vsel %vm2960, %v5937, %v5939
        %v5941 = vrot.slane %v5307, 3
        %v5942 = vsel %vm2960, %v5939, %v5941
        %v5943 = vrot.slane %v5308, 3
        %v5944 = vsel %vm2960, %v5941, %v5943
        %v5945 = vrot.slane %v5309, 3
        %v5946 = vsel %vm2960, %v5943, %v5945
        %v5947 = vrot.slane %v5310, 3
        %v5948 = vsel %vm2960, %v5945, %v5947
        %v5949 = vrot.slane %v5311, 3
        %v5950 = vsel %vm2960, %v5947, %v5949
        %v5951 = vrot.slane %v5547, 3
        %v5952 = vsel %vm2960, %v5949, %v5951
        %v5954 = vsel %vm726, %v5918, 0
        %v5957 = vsel %vm726, %v5920, 0
        %v5960 = vsel %vm726, %v5922, 0
        %v5963 = vsel %vm726, %v5924, 0
        %v5966 = vsel %vm726, %v5926, 0
        %v5969 = vsel %vm726, %v5928, 0
        %v5972 = vsel %vm726, %v5930, 0
        %v5975 = vsel %vm726, %v5932, 0
        %v5978 = vsel %vm726, %v5934, 0
        %v5981 = vsel %vm726, %v5936, 0
        %v5984 = vsel %vm726, %v5938, 0
        %v5987 = vsel %vm726, %v5940, 0
        %v5990 = vsel %vm726, %v5942, 0
        %v5993 = vsel %vm726, %v5944, 0
        %v5996 = vsel %vm726, %v5946, 0
        %v5999 = vsel %vm726, %v5948, 0
        %v6002 = vsel %vm726, %v5950, 0
        %v6005 = vsel %vm726, %v5952, 0
        %v6008 = vsel %vm781, %v5912, 0
        %6010 = vmatpush.bf16.msra.mxu0 0
        %6011 = vmatpush.bf16.msra.mxu0 0
        %6012 = vmatpush.bf16.msra.mxu0 0
        %6013 = vmatpush.bf16.msra.mxu0 0
        %6014 = vmatpush.bf16.msra.mxu0 0
        %6015 = vmatpush.bf16.msra.mxu0 0
        %6016 = vmatpush.bf16.msra.mxu0 0
        %6017 = vmatpush.bf16.msra.mxu0 %v6008
        %6018 = vmatmul.bf16.gmra.mxu0 %v5954
        %v6019 = vpop.f32.mrf.mxu0
        %v6020 = vadd.f32 0.0, %v6019
        %v6021 = vpop.f32.mrf.mxu0
        %v6022 = vadd.f32 0.0, %v6021
        %6023 = vmatmul.bf16.gmra.mxu0 %v5957
        %v6024 = vpop.f32.mrf.mxu0
        %v6025 = vadd.f32 0.0, %v6024
        %v6026 = vpop.f32.mrf.mxu0
        %v6027 = vadd.f32 0.0, %v6026
        %6028 = vmatmul.bf16.gmra.mxu0 %v5960
        %v6029 = vpop.f32.mrf.mxu0
        %v6030 = vadd.f32 0.0, %v6029
        %v6031 = vpop.f32.mrf.mxu0
        %v6032 = vadd.f32 0.0, %v6031
        %6033 = vmatmul.bf16.gmra.mxu0 %v5963
        %v6034 = vpop.f32.mrf.mxu0
        %v6035 = vadd.f32 0.0, %v6034
        %v6036 = vpop.f32.mrf.mxu0
        %v6037 = vadd.f32 0.0, %v6036
        %6038 = vmatmul.bf16.gmra.mxu0 %v5966
        %v6039 = vpop.f32.mrf.mxu0
        %v6040 = vadd.f32 0.0, %v6039
        %v6041 = vpop.f32.mrf.mxu0
        %v6042 = vadd.f32 0.0, %v6041
        %6043 = vmatmul.bf16.gmra.mxu0 %v5969
        %v6044 = vpop.f32.mrf.mxu0
        %v6045 = vadd.f32 0.0, %v6044
        %v6046 = vpop.f32.mrf.mxu0
        %v6047 = vadd.f32 0.0, %v6046
        %6048 = vmatmul.bf16.gmra.mxu0 %v5972
        %v6049 = vpop.f32.mrf.mxu0
        %v6050 = vadd.f32 0.0, %v6049
        %v6051 = vpop.f32.mrf.mxu0
        %v6052 = vadd.f32 0.0, %v6051
        %6053 = vmatmul.bf16.gmra.mxu0 %v5975
        %v6054 = vpop.f32.mrf.mxu0
        %v6055 = vadd.f32 0.0, %v6054
        %v6056 = vpop.f32.mrf.mxu0
        %v6057 = vadd.f32 0.0, %v6056
        %6058 = vmatmul.bf16.gmra.mxu0 %v5978
        %v6059 = vpop.f32.mrf.mxu0
        %v6060 = vadd.f32 0.0, %v6059
        %v6061 = vpop.f32.mrf.mxu0
        %v6062 = vadd.f32 0.0, %v6061
        %6063 = vmatmul.bf16.gmra.mxu0 %v5981
        %v6064 = vpop.f32.mrf.mxu0
        %v6065 = vadd.f32 0.0, %v6064
        %v6066 = vpop.f32.mrf.mxu0
        %v6067 = vadd.f32 0.0, %v6066
        %6068 = vmatmul.bf16.gmra.mxu0 %v5984
        %v6069 = vpop.f32.mrf.mxu0
        %v6070 = vadd.f32 0.0, %v6069
        %v6071 = vpop.f32.mrf.mxu0
        %v6072 = vadd.f32 0.0, %v6071
        %6073 = vmatmul.bf16.gmra.mxu0 %v5987
        %v6074 = vpop.f32.mrf.mxu0
        %v6075 = vadd.f32 0.0, %v6074
        %v6076 = vpop.f32.mrf.mxu0
        %v6077 = vadd.f32 0.0, %v6076
        %6078 = vmatmul.bf16.gmra.mxu0 %v5990
        %v6079 = vpop.f32.mrf.mxu0
        %v6080 = vadd.f32 0.0, %v6079
        %v6081 = vpop.f32.mrf.mxu0
        %v6082 = vadd.f32 0.0, %v6081
        %6083 = vmatmul.bf16.gmra.mxu0 %v5993
        %v6084 = vpop.f32.mrf.mxu0
        %v6085 = vadd.f32 0.0, %v6084
        %v6086 = vpop.f32.mrf.mxu0
        %v6087 = vadd.f32 0.0, %v6086
        %6088 = vmatmul.bf16.gmra.mxu0 %v5996
        %v6089 = vpop.f32.mrf.mxu0
        %v6090 = vadd.f32 0.0, %v6089
        %v6091 = vpop.f32.mrf.mxu0
        %v6092 = vadd.f32 0.0, %v6091
        %6093 = vmatmul.bf16.gmra.mxu0 %v5999
        %v6094 = vpop.f32.mrf.mxu0
        %v6095 = vadd.f32 0.0, %v6094
        %v6096 = vpop.f32.mrf.mxu0
        %v6097 = vadd.f32 0.0, %v6096
        %6098 = vmatmul.bf16.gmra.mxu0 %v6002
        %v6099 = vpop.f32.mrf.mxu0
        %v6100 = vadd.f32 0.0, %v6099
        %v6101 = vpop.f32.mrf.mxu0
        %v6102 = vadd.f32 0.0, %v6101
        %6103 = vmatmul.bf16.gmra.mxu0 %v6005
        %v6104 = vpop.f32.mrf.mxu0
        %v6105 = vadd.f32 0.0, %v6104
        %v6106 = vpop.f32.mrf.mxu0
        %v6107 = vadd.f32 0.0, %v6106
        %6108 = vdwg.mxu0
        %v6109 = vadd.f32 %v5874, %v6020
        %v6110 = vadd.f32 %v5875, %v6022
        %v6111 = vadd.f32 %v5876, %v6025
        %v6112 = vadd.f32 %v5877, %v6027
        %v6113 = vadd.f32 %v5878, %v6030
        %v6114 = vadd.f32 %v5879, %v6032
        %v6115 = vadd.f32 %v5880, %v6035
        %v6116 = vadd.f32 %v5881, %v6037
        %v6117 = vadd.f32 %v5882, %v6040
        %v6118 = vadd.f32 %v5883, %v6042
        %v6119 = vadd.f32 %v5884, %v6045
        %v6120 = vadd.f32 %v5885, %v6047
        %v6121 = vadd.f32 %v5886, %v6050
        %v6122 = vadd.f32 %v5887, %v6052
        %v6123 = vadd.f32 %v5888, %v6055
        %v6124 = vadd.f32 %v5889, %v6057
        %v6125 = vadd.f32 %v5890, %v6060
        %v6126 = vadd.f32 %v5891, %v6062
        %v6127 = vadd.f32 %v5892, %v6065
        %v6128 = vadd.f32 %v5893, %v6067
        %v6129 = vadd.f32 %v5894, %v6070
        %v6130 = vadd.f32 %v5895, %v6072
        %v6131 = vadd.f32 %v5896, %v6075
        %v6132 = vadd.f32 %v5897, %v6077
        %v6133 = vadd.f32 %v5898, %v6080
        %v6134 = vadd.f32 %v5899, %v6082
        %v6135 = vadd.f32 %v5900, %v6085
        %v6136 = vadd.f32 %v5901, %v6087
        %v6137 = vadd.f32 %v5902, %v6090
        %v6138 = vadd.f32 %v5903, %v6092
        %v6139 = vadd.f32 %v5904, %v6095
        %v6140 = vadd.f32 %v5905, %v6097
        %v6141 = vadd.f32 %v5906, %v6100
        %v6142 = vadd.f32 %v5907, %v6102
        %v6143 = vadd.f32 %v5908, %v6105
        %v6144 = vadd.f32 %v5909, %v6107
        %v6145 = vld [vmem:[%s432] sm:$0xf]
        %v6146 = vld [vmem:[%s432 + $0x4] sm:$0xf]
        %v6147 = vld [vmem:[%s432 + $0x8] sm:$0xf]
        %v6148 = vld [vmem:[%s432 + $0xc] sm:$0xf]
        %v6149 = vld [vmem:[%s432 + $0x10] sm:$0xf]
        %v6150 = vld [vmem:[%s432 + $0x14] sm:$0xf]
        %v6151 = vld [vmem:[%s432 + $0x18] sm:$0xf]
        %v6152 = vld [vmem:[%s432 + $0x1c] sm:$0xf]
        %v6153 = vld [vmem:[%s432 + $0x20] sm:$0xf]
        %v6154 = vld [vmem:[%s432 + $0x24] sm:$0xf]
        %v6155 = vld [vmem:[%s432 + $0x28] sm:$0xf]
        %v6156 = vld [vmem:[%s432 + $0x2c] sm:$0xf]
        %v6157 = vld [vmem:[%s432 + $0x30] sm:$0xf]
        %v6158 = vld [vmem:[%s432 + $0x34] sm:$0xf]
        %v6159 = vld [vmem:[%s432 + $0x38] sm:$0xf]
        %v6160 = vld [vmem:[%s432 + $0x3c] sm:$0xf]
        %v6161 = vld [vmem:[%s432 + $0x40] sm:$0xf]
        %v6162 = vld [vmem:[%s432 + $0x44] sm:$0xf]
        %v6163 = vld [vmem:[%s432 + $0x48] sm:$0xf]
        %v6164 = vld [vmem:[%s432 + $0x4c] sm:$0xf]
        %v6165 = vld [vmem:[%s432 + $0x50] sm:$0xf]
        %v6166 = vld [vmem:[%s432 + $0x54] sm:$0xf]
        %v6167 = vld [vmem:[%s432 + $0x58] sm:$0xf]
        %v6168 = vld [vmem:[%s432 + $0x5c] sm:$0xf]
        %v6169 = vld [vmem:[%s432 + $0x60] sm:$0xf]
        %v6170 = vld [vmem:[%s432 + $0x64] sm:$0xf]
        %v6171 = vld [vmem:[%s432 + $0x68] sm:$0xf]
        %v6172 = vld [vmem:[%s432 + $0x6c] sm:$0xf]
        %v6173 = vld [vmem:[%s432 + $0x70] sm:$0xf]
        %v6174 = vld [vmem:[%s432 + $0x74] sm:$0xf]
        %v6175 = vld [vmem:[%s432 + $0x78] sm:$0xf]
        %v6176 = vld [vmem:[%s432 + $0x7c] sm:$0xf]
        %v6177 = vld [vmem:[%s432 + $0x80] sm:$0xf]
        %v6178 = vld [vmem:[%s432 + $0x84] sm:$0xf]
        %v6179 = vld [vmem:[%s432 + $0x88] sm:$0xf]
        %v6180 = vld [vmem:[%s432 + $0x8c] sm:$0xf]
        %s6181 = scalar_lea.vmem %s3, 72
        %v6182 = vld [vmem:[%s6181] sm:$0xf]
        %v6219 = vunpack.c.l.b16 %v6145
        %v6220 = vunpack.c.l.b16 %v6146
        %v6221 = vunpack.c.l.b16 %v6147
        %v6222 = vunpack.c.l.b16 %v6148
        %v6223 = vunpack.c.l.b16 %v6149
        %v6224 = vunpack.c.l.b16 %v6150
        %v6225 = vunpack.c.l.b16 %v6151
        %v6226 = vunpack.c.l.b16 %v6152
        %v6227 = vunpack.c.l.b16 %v6153
        %v6228 = vunpack.c.l.b16 %v6154
        %v6229 = vunpack.c.l.b16 %v6155
        %v6230 = vunpack.c.l.b16 %v6156
        %v6231 = vunpack.c.l.b16 %v6157
        %v6232 = vunpack.c.l.b16 %v6158
        %v6233 = vunpack.c.l.b16 %v6159
        %v6234 = vunpack.c.l.b16 %v6160
        %v6235 = vunpack.c.l.b16 %v6161
        %v6236 = vunpack.c.l.b16 %v6162
        %v6237 = vunpack.c.l.b16 %v6163
        %v6238 = vunpack.c.l.b16 %v6164
        %v6239 = vunpack.c.l.b16 %v6165
        %v6240 = vunpack.c.l.b16 %v6166
        %v6241 = vunpack.c.l.b16 %v6167
        %v6242 = vunpack.c.l.b16 %v6168
        %v6243 = vunpack.c.l.b16 %v6169
        %v6244 = vunpack.c.l.b16 %v6170
        %v6245 = vunpack.c.l.b16 %v6171
        %v6246 = vunpack.c.l.b16 %v6172
        %v6247 = vunpack.c.l.b16 %v6173
        %v6248 = vunpack.c.l.b16 %v6174
        %v6249 = vunpack.c.l.b16 %v6175
        %v6250 = vunpack.c.l.b16 %v6176
        %v6251 = vunpack.c.l.b16 %v6177
        %v6252 = vunpack.c.l.b16 %v6178
        %v6253 = vunpack.c.l.b16 %v6179
        %v6254 = vunpack.c.l.b16 %v6180
        %v6255 = vpack.c.b16 %v6220, %v6219
        %v6256 = vpack.c.b16 %v6222, %v6221
        %v6257 = vpack.c.b16 %v6224, %v6223
        %v6258 = vpack.c.b16 %v6226, %v6225
        %v6259 = vpack.c.b16 %v6228, %v6227
        %v6260 = vpack.c.b16 %v6230, %v6229
        %v6261 = vpack.c.b16 %v6232, %v6231
        %v6262 = vpack.c.b16 %v6234, %v6233
        %v6263 = vpack.c.b16 %v6236, %v6235
        %v6264 = vpack.c.b16 %v6238, %v6237
        %v6265 = vpack.c.b16 %v6240, %v6239
        %v6266 = vpack.c.b16 %v6242, %v6241
        %v6267 = vpack.c.b16 %v6244, %v6243
        %v6268 = vpack.c.b16 %v6246, %v6245
        %v6269 = vpack.c.b16 %v6248, %v6247
        %v6270 = vpack.c.b16 %v6250, %v6249
        %v6271 = vpack.c.b16 %v6252, %v6251
        %v6272 = vpack.c.b16 %v6254, %v6253
        %v6274 = vsel %vm726, %v6255, 0
        %v6277 = vsel %vm726, %v6256, 0
        %v6280 = vsel %vm726, %v6257, 0
        %v6283 = vsel %vm726, %v6258, 0
        %v6286 = vsel %vm726, %v6259, 0
        %v6289 = vsel %vm726, %v6260, 0
        %v6292 = vsel %vm726, %v6261, 0
        %v6295 = vsel %vm726, %v6262, 0
        %v6298 = vsel %vm726, %v6263, 0
        %v6301 = vsel %vm726, %v6264, 0
        %v6304 = vsel %vm726, %v6265, 0
        %v6307 = vsel %vm726, %v6266, 0
        %v6310 = vsel %vm726, %v6267, 0
        %v6313 = vsel %vm726, %v6268, 0
        %v6316 = vsel %vm726, %v6269, 0
        %v6319 = vsel %vm726, %v6270, 0
        %v6322 = vsel %vm726, %v6271, 0
        %v6325 = vsel %vm726, %v6272, 0
        %v6328 = vsel %vm781, %v6182, 0
        %6330 = vmatpush.bf16.msra.mxu0 0
        %6331 = vmatpush.bf16.msra.mxu0 0
        %6332 = vmatpush.bf16.msra.mxu0 0
        %6333 = vmatpush.bf16.msra.mxu0 0
        %6334 = vmatpush.bf16.msra.mxu0 0
        %6335 = vmatpush.bf16.msra.mxu0 0
        %6336 = vmatpush.bf16.msra.mxu0 0
        %6337 = vmatpush.bf16.msra.mxu0 %v6328
        %6338 = vmatmul.bf16.gmra.mxu0 %v6274
        %v6339 = vpop.f32.mrf.mxu0
        %v6340 = vadd.f32 0.0, %v6339
        %v6341 = vpop.f32.mrf.mxu0
        %v6342 = vadd.f32 0.0, %v6341
        %6343 = vmatmul.bf16.gmra.mxu0 %v6277
        %v6344 = vpop.f32.mrf.mxu0
        %v6345 = vadd.f32 0.0, %v6344
        %v6346 = vpop.f32.mrf.mxu0
        %v6347 = vadd.f32 0.0, %v6346
        %6348 = vmatmul.bf16.gmra.mxu0 %v6280
        %v6349 = vpop.f32.mrf.mxu0
        %v6350 = vadd.f32 0.0, %v6349
        %v6351 = vpop.f32.mrf.mxu0
        %v6352 = vadd.f32 0.0, %v6351
        %6353 = vmatmul.bf16.gmra.mxu0 %v6283
        %v6354 = vpop.f32.mrf.mxu0
        %v6355 = vadd.f32 0.0, %v6354
        %v6356 = vpop.f32.mrf.mxu0
        %v6357 = vadd.f32 0.0, %v6356
        %6358 = vmatmul.bf16.gmra.mxu0 %v6286
        %v6359 = vpop.f32.mrf.mxu0
        %v6360 = vadd.f32 0.0, %v6359
        %v6361 = vpop.f32.mrf.mxu0
        %v6362 = vadd.f32 0.0, %v6361
        %6363 = vmatmul.bf16.gmra.mxu0 %v6289
        %v6364 = vpop.f32.mrf.mxu0
        %v6365 = vadd.f32 0.0, %v6364
        %v6366 = vpop.f32.mrf.mxu0
        %v6367 = vadd.f32 0.0, %v6366
        %6368 = vmatmul.bf16.gmra.mxu0 %v6292
        %v6369 = vpop.f32.mrf.mxu0
        %v6370 = vadd.f32 0.0, %v6369
        %v6371 = vpop.f32.mrf.mxu0
        %v6372 = vadd.f32 0.0, %v6371
        %6373 = vmatmul.bf16.gmra.mxu0 %v6295
        %v6374 = vpop.f32.mrf.mxu0
        %v6375 = vadd.f32 0.0, %v6374
        %v6376 = vpop.f32.mrf.mxu0
        %v6377 = vadd.f32 0.0, %v6376
        %6378 = vmatmul.bf16.gmra.mxu0 %v6298
        %v6379 = vpop.f32.mrf.mxu0
        %v6380 = vadd.f32 0.0, %v6379
        %v6381 = vpop.f32.mrf.mxu0
        %v6382 = vadd.f32 0.0, %v6381
        %6383 = vmatmul.bf16.gmra.mxu0 %v6301
        %v6384 = vpop.f32.mrf.mxu0
        %v6385 = vadd.f32 0.0, %v6384
        %v6386 = vpop.f32.mrf.mxu0
        %v6387 = vadd.f32 0.0, %v6386
        %6388 = vmatmul.bf16.gmra.mxu0 %v6304
        %v6389 = vpop.f32.mrf.mxu0
        %v6390 = vadd.f32 0.0, %v6389
        %v6391 = vpop.f32.mrf.mxu0
        %v6392 = vadd.f32 0.0, %v6391
        %6393 = vmatmul.bf16.gmra.mxu0 %v6307
        %v6394 = vpop.f32.mrf.mxu0
        %v6395 = vadd.f32 0.0, %v6394
        %v6396 = vpop.f32.mrf.mxu0
        %v6397 = vadd.f32 0.0, %v6396
        %6398 = vmatmul.bf16.gmra.mxu0 %v6310
        %v6399 = vpop.f32.mrf.mxu0
        %v6400 = vadd.f32 0.0, %v6399
        %v6401 = vpop.f32.mrf.mxu0
        %v6402 = vadd.f32 0.0, %v6401
        %6403 = vmatmul.bf16.gmra.mxu0 %v6313
        %v6404 = vpop.f32.mrf.mxu0
        %v6405 = vadd.f32 0.0, %v6404
        %v6406 = vpop.f32.mrf.mxu0
        %v6407 = vadd.f32 0.0, %v6406
        %6408 = vmatmul.bf16.gmra.mxu0 %v6316
        %v6409 = vpop.f32.mrf.mxu0
        %v6410 = vadd.f32 0.0, %v6409
        %v6411 = vpop.f32.mrf.mxu0
        %v6412 = vadd.f32 0.0, %v6411
        %6413 = vmatmul.bf16.gmra.mxu0 %v6319
        %v6414 = vpop.f32.mrf.mxu0
        %v6415 = vadd.f32 0.0, %v6414
        %v6416 = vpop.f32.mrf.mxu0
        %v6417 = vadd.f32 0.0, %v6416
        %6418 = vmatmul.bf16.gmra.mxu0 %v6322
        %v6419 = vpop.f32.mrf.mxu0
        %v6420 = vadd.f32 0.0, %v6419
        %v6421 = vpop.f32.mrf.mxu0
        %v6422 = vadd.f32 0.0, %v6421
        %6423 = vmatmul.bf16.gmra.mxu0 %v6325
        %v6424 = vpop.f32.mrf.mxu0
        %v6425 = vadd.f32 0.0, %v6424
        %v6426 = vpop.f32.mrf.mxu0
        %v6427 = vadd.f32 0.0, %v6426
        %6428 = vdwg.mxu0
        %v6429 = vadd.f32 %v6109, %v6340
        %v6430 = vadd.f32 %v6110, %v6342
        %v6431 = vadd.f32 %v6111, %v6345
        %v6432 = vadd.f32 %v6112, %v6347
        %v6433 = vadd.f32 %v6113, %v6350
        %v6434 = vadd.f32 %v6114, %v6352
        %v6435 = vadd.f32 %v6115, %v6355
        %v6436 = vadd.f32 %v6116, %v6357
        %v6437 = vadd.f32 %v6117, %v6360
        %v6438 = vadd.f32 %v6118, %v6362
        %v6439 = vadd.f32 %v6119, %v6365
        %v6440 = vadd.f32 %v6120, %v6367
        %v6441 = vadd.f32 %v6121, %v6370
        %v6442 = vadd.f32 %v6122, %v6372
        %v6443 = vadd.f32 %v6123, %v6375
        %v6444 = vadd.f32 %v6124, %v6377
        %v6445 = vadd.f32 %v6125, %v6380
        %v6446 = vadd.f32 %v6126, %v6382
        %v6447 = vadd.f32 %v6127, %v6385
        %v6448 = vadd.f32 %v6128, %v6387
        %v6449 = vadd.f32 %v6129, %v6390
        %v6450 = vadd.f32 %v6130, %v6392
        %v6451 = vadd.f32 %v6131, %v6395
        %v6452 = vadd.f32 %v6132, %v6397
        %v6453 = vadd.f32 %v6133, %v6400
        %v6454 = vadd.f32 %v6134, %v6402
        %v6455 = vadd.f32 %v6135, %v6405
        %v6456 = vadd.f32 %v6136, %v6407
        %v6457 = vadd.f32 %v6137, %v6410
        %v6458 = vadd.f32 %v6138, %v6412
        %v6459 = vadd.f32 %v6139, %v6415
        %v6460 = vadd.f32 %v6140, %v6417
        %v6461 = vadd.f32 %v6141, %v6420
        %v6462 = vadd.f32 %v6142, %v6422
        %v6463 = vadd.f32 %v6143, %v6425
        %v6464 = vadd.f32 %v6144, %v6427
        %v6465 = vld [vmem:[%s432] sm:$0xf]
        %v6466 = vld [vmem:[%s432 + $0x4] sm:$0xf]
        %v6467 = vld [vmem:[%s432 + $0x8] sm:$0xf]
        %v6468 = vld [vmem:[%s432 + $0xc] sm:$0xf]
        %v6469 = vld [vmem:[%s432 + $0x10] sm:$0xf]
        %v6470 = vld [vmem:[%s432 + $0x14] sm:$0xf]
        %v6471 = vld [vmem:[%s432 + $0x18] sm:$0xf]
        %v6472 = vld [vmem:[%s432 + $0x1c] sm:$0xf]
        %v6473 = vld [vmem:[%s432 + $0x20] sm:$0xf]
        %v6474 = vld [vmem:[%s432 + $0x24] sm:$0xf]
        %v6475 = vld [vmem:[%s432 + $0x28] sm:$0xf]
        %v6476 = vld [vmem:[%s432 + $0x2c] sm:$0xf]
        %v6477 = vld [vmem:[%s432 + $0x30] sm:$0xf]
        %v6478 = vld [vmem:[%s432 + $0x34] sm:$0xf]
        %v6479 = vld [vmem:[%s432 + $0x38] sm:$0xf]
        %v6480 = vld [vmem:[%s432 + $0x3c] sm:$0xf]
        %v6481 = vld [vmem:[%s432 + $0x40] sm:$0xf]
        %v6482 = vld [vmem:[%s432 + $0x44] sm:$0xf]
        %v6483 = vld [vmem:[%s432 + $0x48] sm:$0xf]
        %v6484 = vld [vmem:[%s432 + $0x4c] sm:$0xf]
        %v6485 = vld [vmem:[%s432 + $0x50] sm:$0xf]
        %v6486 = vld [vmem:[%s432 + $0x54] sm:$0xf]
        %v6487 = vld [vmem:[%s432 + $0x58] sm:$0xf]
        %v6488 = vld [vmem:[%s432 + $0x5c] sm:$0xf]
        %v6489 = vld [vmem:[%s432 + $0x60] sm:$0xf]
        %v6490 = vld [vmem:[%s432 + $0x64] sm:$0xf]
        %v6491 = vld [vmem:[%s432 + $0x68] sm:$0xf]
        %v6492 = vld [vmem:[%s432 + $0x6c] sm:$0xf]
        %v6493 = vld [vmem:[%s432 + $0x70] sm:$0xf]
        %v6494 = vld [vmem:[%s432 + $0x74] sm:$0xf]
        %v6495 = vld [vmem:[%s432 + $0x78] sm:$0xf]
        %v6496 = vld [vmem:[%s432 + $0x7c] sm:$0xf]
        %v6497 = vld [vmem:[%s432 + $0x80] sm:$0xf]
        %v6498 = vld [vmem:[%s432 + $0x84] sm:$0xf]
        %v6499 = vld [vmem:[%s432 + $0x88] sm:$0xf]
        %v6500 = vld [vmem:[%s432 + $0x8c] sm:$0xf]
        %v6501 = vld [vmem:[%s432 + $0x90] sm:$0x1]
        %s6502 = scalar_lea.vmem %s3, 76
        %v6503 = vld [vmem:[%s6502] sm:$0xf]
        %v6541 = vunpack.c.l.b16 %v6465
        %v6542 = vunpack.c.l.b16 %v6466
        %v6543 = vunpack.c.l.b16 %v6467
        %v6544 = vunpack.c.l.b16 %v6468
        %v6545 = vunpack.c.l.b16 %v6469
        %v6546 = vunpack.c.l.b16 %v6470
        %v6547 = vunpack.c.l.b16 %v6471
        %v6548 = vunpack.c.l.b16 %v6472
        %v6549 = vunpack.c.l.b16 %v6473
        %v6550 = vunpack.c.l.b16 %v6474
        %v6551 = vunpack.c.l.b16 %v6475
        %v6552 = vunpack.c.l.b16 %v6476
        %v6553 = vunpack.c.l.b16 %v6477
        %v6554 = vunpack.c.l.b16 %v6478
        %v6555 = vunpack.c.l.b16 %v6479
        %v6556 = vunpack.c.l.b16 %v6480
        %v6557 = vunpack.c.l.b16 %v6481
        %v6558 = vunpack.c.l.b16 %v6482
        %v6559 = vunpack.c.l.b16 %v6483
        %v6560 = vunpack.c.l.b16 %v6484
        %v6561 = vunpack.c.l.b16 %v6485
        %v6562 = vunpack.c.l.b16 %v6486
        %v6563 = vunpack.c.l.b16 %v6487
        %v6564 = vunpack.c.l.b16 %v6488
        %v6565 = vunpack.c.l.b16 %v6489
        %v6566 = vunpack.c.l.b16 %v6490
        %v6567 = vunpack.c.l.b16 %v6491
        %v6568 = vunpack.c.l.b16 %v6492
        %v6569 = vunpack.c.l.b16 %v6493
        %v6570 = vunpack.c.l.b16 %v6494
        %v6571 = vunpack.c.l.b16 %v6495
        %v6572 = vunpack.c.l.b16 %v6496
        %v6573 = vunpack.c.l.b16 %v6497
        %v6574 = vunpack.c.l.b16 %v6498
        %v6575 = vunpack.c.l.b16 %v6499
        %v6576 = vunpack.c.l.b16 %v6500
        %v6577 = vunpack.c.l.b16 %v6501
        %v6578 = vpack.c.b16 %v6542, %v6541
        %v6579 = vpack.c.b16 %v6544, %v6543
        %v6580 = vpack.c.b16 %v6546, %v6545
        %v6581 = vpack.c.b16 %v6548, %v6547
        %v6582 = vpack.c.b16 %v6550, %v6549
        %v6583 = vpack.c.b16 %v6552, %v6551
        %v6584 = vpack.c.b16 %v6554, %v6553
        %v6585 = vpack.c.b16 %v6556, %v6555
        %v6586 = vpack.c.b16 %v6558, %v6557
        %v6587 = vpack.c.b16 %v6560, %v6559
        %v6588 = vpack.c.b16 %v6562, %v6561
        %v6589 = vpack.c.b16 %v6564, %v6563
        %v6590 = vpack.c.b16 %v6566, %v6565
        %v6591 = vpack.c.b16 %v6568, %v6567
        %v6592 = vpack.c.b16 %v6570, %v6569
        %v6593 = vpack.c.b16 %v6572, %v6571
        %v6594 = vpack.c.b16 %v6574, %v6573
        %v6595 = vpack.c.b16 %v6576, %v6575
        %v6596 = vpack.c.b16 %v6577, %v6577
        %v6598 = vshrl.u32 %v6578, 16
        %v6600 = vshll.u32 %v6578, 16
        %v6602 = vrot.slane %v6600, 1
        %v6603 = vor.u32 %v6598, %v6602
        %v6605 = vshll.u32 %v6579, 16
        %v6607 = vrot.slane %v6605, 1
        %v6608 = vsel %vm577, %v6603, %v6607
        %v6609 = vshrl.u32 %v6579, 16
        %v6611 = vor.u32 %v6609, %v6607
        %v6613 = vshll.u32 %v6580, 16
        %v6615 = vrot.slane %v6613, 1
        %v6616 = vsel %vm577, %v6611, %v6615
        %v6617 = vshrl.u32 %v6580, 16
        %v6619 = vor.u32 %v6617, %v6615
        %v6621 = vshll.u32 %v6581, 16
        %v6623 = vrot.slane %v6621, 1
        %v6624 = vsel %vm577, %v6619, %v6623
        %v6625 = vshrl.u32 %v6581, 16
        %v6627 = vor.u32 %v6625, %v6623
        %v6629 = vshll.u32 %v6582, 16
        %v6631 = vrot.slane %v6629, 1
        %v6632 = vsel %vm577, %v6627, %v6631
        %v6633 = vshrl.u32 %v6582, 16
        %v6635 = vor.u32 %v6633, %v6631
        %v6637 = vshll.u32 %v6583, 16
        %v6639 = vrot.slane %v6637, 1
        %v6640 = vsel %vm577, %v6635, %v6639
        %v6641 = vshrl.u32 %v6583, 16
        %v6643 = vor.u32 %v6641, %v6639
        %v6645 = vshll.u32 %v6584, 16
        %v6647 = vrot.slane %v6645, 1
        %v6648 = vsel %vm577, %v6643, %v6647
        %v6649 = vshrl.u32 %v6584, 16
        %v6651 = vor.u32 %v6649, %v6647
        %v6653 = vshll.u32 %v6585, 16
        %v6655 = vrot.slane %v6653, 1
        %v6656 = vsel %vm577, %v6651, %v6655
        %v6657 = vshrl.u32 %v6585, 16
        %v6659 = vor.u32 %v6657, %v6655
        %v6661 = vshll.u32 %v6586, 16
        %v6663 = vrot.slane %v6661, 1
        %v6664 = vsel %vm577, %v6659, %v6663
        %v6665 = vshrl.u32 %v6586, 16
        %v6667 = vor.u32 %v6665, %v6663
        %v6669 = vshll.u32 %v6587, 16
        %v6671 = vrot.slane %v6669, 1
        %v6672 = vsel %vm577, %v6667, %v6671
        %v6673 = vshrl.u32 %v6587, 16
        %v6675 = vor.u32 %v6673, %v6671
        %v6677 = vshll.u32 %v6588, 16
        %v6679 = vrot.slane %v6677, 1
        %v6680 = vsel %vm577, %v6675, %v6679
        %v6681 = vshrl.u32 %v6588, 16
        %v6683 = vor.u32 %v6681, %v6679
        %v6685 = vshll.u32 %v6589, 16
        %v6687 = vrot.slane %v6685, 1
        %v6688 = vsel %vm577, %v6683, %v6687
        %v6689 = vshrl.u32 %v6589, 16
        %v6691 = vor.u32 %v6689, %v6687
        %v6693 = vshll.u32 %v6590, 16
        %v6695 = vrot.slane %v6693, 1
        %v6696 = vsel %vm577, %v6691, %v6695
        %v6697 = vshrl.u32 %v6590, 16
        %v6699 = vor.u32 %v6697, %v6695
        %v6701 = vshll.u32 %v6591, 16
        %v6703 = vrot.slane %v6701, 1
        %v6704 = vsel %vm577, %v6699, %v6703
        %v6705 = vshrl.u32 %v6591, 16
        %v6707 = vor.u32 %v6705, %v6703
        %v6709 = vshll.u32 %v6592, 16
        %v6711 = vrot.slane %v6709, 1
        %v6712 = vsel %vm577, %v6707, %v6711
        %v6713 = vshrl.u32 %v6592, 16
        %v6715 = vor.u32 %v6713, %v6711
        %v6717 = vshll.u32 %v6593, 16
        %v6719 = vrot.slane %v6717, 1
        %v6720 = vsel %vm577, %v6715, %v6719
        %v6721 = vshrl.u32 %v6593, 16
        %v6723 = vor.u32 %v6721, %v6719
        %v6725 = vshll.u32 %v6594, 16
        %v6727 = vrot.slane %v6725, 1
        %v6728 = vsel %vm577, %v6723, %v6727
        %v6729 = vshrl.u32 %v6594, 16
        %v6731 = vor.u32 %v6729, %v6727
        %v6733 = vshll.u32 %v6595, 16
        %v6735 = vrot.slane %v6733, 1
        %v6736 = vsel %vm577, %v6731, %v6735
        %v6737 = vshrl.u32 %v6595, 16
        %v6739 = vor.u32 %v6737, %v6735
        %v6741 = vshll.u32 %v6596, 16
        %v6743 = vrot.slane %v6741, 1
        %v6744 = vsel %vm577, %v6739, %v6743
        %v6746 = vsel %vm726, %v6608, 0
        %v6749 = vsel %vm726, %v6616, 0
        %v6752 = vsel %vm726, %v6624, 0
        %v6755 = vsel %vm726, %v6632, 0
        %v6758 = vsel %vm726, %v6640, 0
        %v6761 = vsel %vm726, %v6648, 0
        %v6764 = vsel %vm726, %v6656, 0
        %v6767 = vsel %vm726, %v6664, 0
        %v6770 = vsel %vm726, %v6672, 0
        %v6773 = vsel %vm726, %v6680, 0
        %v6776 = vsel %vm726, %v6688, 0
        %v6779 = vsel %vm726, %v6696, 0
        %v6782 = vsel %vm726, %v6704, 0
        %v6785 = vsel %vm726, %v6712, 0
        %v6788 = vsel %vm726, %v6720, 0
        %v6791 = vsel %vm726, %v6728, 0
        %v6794 = vsel %vm726, %v6736, 0
        %v6797 = vsel %vm726, %v6744, 0
        %v6800 = vsel %vm781, %v6503, 0
        %6802 = vmatpush.bf16.msra.mxu0 0
        %6803 = vmatpush.bf16.msra.mxu0 0
        %6804 = vmatpush.bf16.msra.mxu0 0
        %6805 = vmatpush.bf16.msra.mxu0 0
        %6806 = vmatpush.bf16.msra.mxu0 0
        %6807 = vmatpush.bf16.msra.mxu0 0
        %6808 = vmatpush.bf16.msra.mxu0 0
        %6809 = vmatpush.bf16.msra.mxu0 %v6800
        %6810 = vmatmul.bf16.gmra.mxu0 %v6746
        %v6811 = vpop.f32.mrf.mxu0
        %v6812 = vadd.f32 0.0, %v6811
        %v6813 = vpop.f32.mrf.mxu0
        %v6814 = vadd.f32 0.0, %v6813
        %6815 = vmatmul.bf16.gmra.mxu0 %v6749
        %v6816 = vpop.f32.mrf.mxu0
        %v6817 = vadd.f32 0.0, %v6816
        %v6818 = vpop.f32.mrf.mxu0
        %v6819 = vadd.f32 0.0, %v6818
        %6820 = vmatmul.bf16.gmra.mxu0 %v6752
        %v6821 = vpop.f32.mrf.mxu0
        %v6822 = vadd.f32 0.0, %v6821
        %v6823 = vpop.f32.mrf.mxu0
        %v6824 = vadd.f32 0.0, %v6823
        %6825 = vmatmul.bf16.gmra.mxu0 %v6755
        %v6826 = vpop.f32.mrf.mxu0
        %v6827 = vadd.f32 0.0, %v6826
        %v6828 = vpop.f32.mrf.mxu0
        %v6829 = vadd.f32 0.0, %v6828
        %6830 = vmatmul.bf16.gmra.mxu0 %v6758
        %v6831 = vpop.f32.mrf.mxu0
        %v6832 = vadd.f32 0.0, %v6831
        %v6833 = vpop.f32.mrf.mxu0
        %v6834 = vadd.f32 0.0, %v6833
        %6835 = vmatmul.bf16.gmra.mxu0 %v6761
        %v6836 = vpop.f32.mrf.mxu0
        %v6837 = vadd.f32 0.0, %v6836
        %v6838 = vpop.f32.mrf.mxu0
        %v6839 = vadd.f32 0.0, %v6838
        %6840 = vmatmul.bf16.gmra.mxu0 %v6764
        %v6841 = vpop.f32.mrf.mxu0
        %v6842 = vadd.f32 0.0, %v6841
        %v6843 = vpop.f32.mrf.mxu0
        %v6844 = vadd.f32 0.0, %v6843
        %6845 = vmatmul.bf16.gmra.mxu0 %v6767
        %v6846 = vpop.f32.mrf.mxu0
        %v6847 = vadd.f32 0.0, %v6846
        %v6848 = vpop.f32.mrf.mxu0
        %v6849 = vadd.f32 0.0, %v6848
        %6850 = vmatmul.bf16.gmra.mxu0 %v6770
        %v6851 = vpop.f32.mrf.mxu0
        %v6852 = vadd.f32 0.0, %v6851
        %v6853 = vpop.f32.mrf.mxu0
        %v6854 = vadd.f32 0.0, %v6853
        %6855 = vmatmul.bf16.gmra.mxu0 %v6773
        %v6856 = vpop.f32.mrf.mxu0
        %v6857 = vadd.f32 0.0, %v6856
        %v6858 = vpop.f32.mrf.mxu0
        %v6859 = vadd.f32 0.0, %v6858
        %6860 = vmatmul.bf16.gmra.mxu0 %v6776
        %v6861 = vpop.f32.mrf.mxu0
        %v6862 = vadd.f32 0.0, %v6861
        %v6863 = vpop.f32.mrf.mxu0
        %v6864 = vadd.f32 0.0, %v6863
        %6865 = vmatmul.bf16.gmra.mxu0 %v6779
        %v6866 = vpop.f32.mrf.mxu0
        %v6867 = vadd.f32 0.0, %v6866
        %v6868 = vpop.f32.mrf.mxu0
        %v6869 = vadd.f32 0.0, %v6868
        %6870 = vmatmul.bf16.gmra.mxu0 %v6782
        %v6871 = vpop.f32.mrf.mxu0
        %v6872 = vadd.f32 0.0, %v6871
        %v6873 = vpop.f32.mrf.mxu0
        %v6874 = vadd.f32 0.0, %v6873
        %6875 = vmatmul.bf16.gmra.mxu0 %v6785
        %v6876 = vpop.f32.mrf.mxu0
        %v6877 = vadd.f32 0.0, %v6876
        %v6878 = vpop.f32.mrf.mxu0
        %v6879 = vadd.f32 0.0, %v6878
        %6880 = vmatmul.bf16.gmra.mxu0 %v6788
        %v6881 = vpop.f32.mrf.mxu0
        %v6882 = vadd.f32 0.0, %v6881
        %v6883 = vpop.f32.mrf.mxu0
        %v6884 = vadd.f32 0.0, %v6883
        %6885 = vmatmul.bf16.gmra.mxu0 %v6791
        %v6886 = vpop.f32.mrf.mxu0
        %v6887 = vadd.f32 0.0, %v6886
        %v6888 = vpop.f32.mrf.mxu0
        %v6889 = vadd.f32 0.0, %v6888
        %6890 = vmatmul.bf16.gmra.mxu0 %v6794
        %v6891 = vpop.f32.mrf.mxu0
        %v6892 = vadd.f32 0.0, %v6891
        %v6893 = vpop.f32.mrf.mxu0
        %v6894 = vadd.f32 0.0, %v6893
        %6895 = vmatmul.bf16.gmra.mxu0 %v6797
        %v6896 = vpop.f32.mrf.mxu0
        %v6897 = vadd.f32 0.0, %v6896
        %v6898 = vpop.f32.mrf.mxu0
        %v6899 = vadd.f32 0.0, %v6898
        %6900 = vdwg.mxu0
        %v6901 = vadd.f32 %v6429, %v6812
        %v6902 = vadd.f32 %v6430, %v6814
        %v6903 = vadd.f32 %v6431, %v6817
        %v6904 = vadd.f32 %v6432, %v6819
        %v6905 = vadd.f32 %v6433, %v6822
        %v6906 = vadd.f32 %v6434, %v6824
        %v6907 = vadd.f32 %v6435, %v6827
        %v6908 = vadd.f32 %v6436, %v6829
        %v6909 = vadd.f32 %v6437, %v6832
        %v6910 = vadd.f32 %v6438, %v6834
        %v6911 = vadd.f32 %v6439, %v6837
        %v6912 = vadd.f32 %v6440, %v6839
        %v6913 = vadd.f32 %v6441, %v6842
        %v6914 = vadd.f32 %v6442, %v6844
        %v6915 = vadd.f32 %v6443, %v6847
        %v6916 = vadd.f32 %v6444, %v6849
        %v6917 = vadd.f32 %v6445, %v6852
        %v6918 = vadd.f32 %v6446, %v6854
        %v6919 = vadd.f32 %v6447, %v6857
        %v6920 = vadd.f32 %v6448, %v6859
        %v6921 = vadd.f32 %v6449, %v6862
        %v6922 = vadd.f32 %v6450, %v6864
        %v6923 = vadd.f32 %v6451, %v6867
        %v6924 = vadd.f32 %v6452, %v6869
        %v6925 = vadd.f32 %v6453, %v6872
        %v6926 = vadd.f32 %v6454, %v6874
        %v6927 = vadd.f32 %v6455, %v6877
        %v6928 = vadd.f32 %v6456, %v6879
        %v6929 = vadd.f32 %v6457, %v6882
        %v6930 = vadd.f32 %v6458, %v6884
        %v6931 = vadd.f32 %v6459, %v6887
        %v6932 = vadd.f32 %v6460, %v6889
        %v6933 = vadd.f32 %v6461, %v6892
        %v6934 = vadd.f32 %v6462, %v6894
        %v6935 = vadd.f32 %v6463, %v6897
        %v6936 = vadd.f32 %v6464, %v6899
        %v6937 = vld [vmem:[%s432] sm:$0xe]
        %s6938 = scalar_lea.vmem %s3, 80
        %v6939 = vld [vmem:[%s6938] sm:$0xf]
        %v6941 = vunpack.c.l.b16 %v6937
        %v6942 = vpack.c.b16 %v6542, %v6941
        %v6943 = vrot.slane %v6942, 1
        %v6944 = vrot.slane %v6579, 1
        %v6945 = vsel %vm1028, %v6943, %v6944
        %v6946 = vrot.slane %v6580, 1
        %v6947 = vsel %vm1028, %v6944, %v6946
        %v6948 = vrot.slane %v6581, 1
        %v6949 = vsel %vm1028, %v6946, %v6948
        %v6950 = vrot.slane %v6582, 1
        %v6951 = vsel %vm1028, %v6948, %v6950
        %v6952 = vrot.slane %v6583, 1
        %v6953 = vsel %vm1028, %v6950, %v6952
        %v6954 = vrot.slane %v6584, 1
        %v6955 = vsel %vm1028, %v6952, %v6954
        %v6956 = vrot.slane %v6585, 1
        %v6957 = vsel %vm1028, %v6954, %v6956
        %v6958 = vrot.slane %v6586, 1
        %v6959 = vsel %vm1028, %v6956, %v6958
        %v6960 = vrot.slane %v6587, 1
        %v6961 = vsel %vm1028, %v6958, %v6960
        %v6962 = vrot.slane %v6588, 1
        %v6963 = vsel %vm1028, %v6960, %v6962
        %v6964 = vrot.slane %v6589, 1
        %v6965 = vsel %vm1028, %v6962, %v6964
        %v6966 = vrot.slane %v6590, 1
        %v6967 = vsel %vm1028, %v6964, %v6966
        %v6968 = vrot.slane %v6591, 1
        %v6969 = vsel %vm1028, %v6966, %v6968
        %v6970 = vrot.slane %v6592, 1
        %v6971 = vsel %vm1028, %v6968, %v6970
        %v6972 = vrot.slane %v6593, 1
        %v6973 = vsel %vm1028, %v6970, %v6972
        %v6974 = vrot.slane %v6594, 1
        %v6975 = vsel %vm1028, %v6972, %v6974
        %v6976 = vrot.slane %v6595, 1
        %v6977 = vsel %vm1028, %v6974, %v6976
        %v6978 = vrot.slane %v6596, 1
        %v6979 = vsel %vm1028, %v6976, %v6978
        %v6981 = vsel %vm726, %v6945, 0
        %v6984 = vsel %vm726, %v6947, 0
        %v6987 = vsel %vm726, %v6949, 0
        %v6990 = vsel %vm726, %v6951, 0
        %v6993 = vsel %vm726, %v6953, 0
        %v6996 = vsel %vm726, %v6955, 0
        %v6999 = vsel %vm726, %v6957, 0
        %v7002 = vsel %vm726, %v6959, 0
        %v7005 = vsel %vm726, %v6961, 0
        %v7008 = vsel %vm726, %v6963, 0
        %v7011 = vsel %vm726, %v6965, 0
        %v7014 = vsel %vm726, %v6967, 0
        %v7017 = vsel %vm726, %v6969, 0
        %v7020 = vsel %vm726, %v6971, 0
        %v7023 = vsel %vm726, %v6973, 0
        %v7026 = vsel %vm726, %v6975, 0
        %v7029 = vsel %vm726, %v6977, 0
        %v7032 = vsel %vm726, %v6979, 0
        %v7035 = vsel %vm781, %v6939, 0
        %7037 = vmatpush.bf16.msra.mxu0 0
        %7038 = vmatpush.bf16.msra.mxu0 0
        %7039 = vmatpush.bf16.msra.mxu0 0
        %7040 = vmatpush.bf16.msra.mxu0 0
        %7041 = vmatpush.bf16.msra.mxu0 0
        %7042 = vmatpush.bf16.msra.mxu0 0
        %7043 = vmatpush.bf16.msra.mxu0 0
        %7044 = vmatpush.bf16.msra.mxu0 %v7035
        %7045 = vmatmul.bf16.gmra.mxu0 %v6981
        %v7046 = vpop.f32.mrf.mxu0
        %v7047 = vadd.f32 0.0, %v7046
        %v7048 = vpop.f32.mrf.mxu0
        %v7049 = vadd.f32 0.0, %v7048
        %7050 = vmatmul.bf16.gmra.mxu0 %v6984
        %v7051 = vpop.f32.mrf.mxu0
        %v7052 = vadd.f32 0.0, %v7051
        %v7053 = vpop.f32.mrf.mxu0
        %v7054 = vadd.f32 0.0, %v7053
        %7055 = vmatmul.bf16.gmra.mxu0 %v6987
        %v7056 = vpop.f32.mrf.mxu0
        %v7057 = vadd.f32 0.0, %v7056
        %v7058 = vpop.f32.mrf.mxu0
        %v7059 = vadd.f32 0.0, %v7058
        %7060 = vmatmul.bf16.gmra.mxu0 %v6990
        %v7061 = vpop.f32.mrf.mxu0
        %v7062 = vadd.f32 0.0, %v7061
        %v7063 = vpop.f32.mrf.mxu0
        %v7064 = vadd.f32 0.0, %v7063
        %7065 = vmatmul.bf16.gmra.mxu0 %v6993
        %v7066 = vpop.f32.mrf.mxu0
        %v7067 = vadd.f32 0.0, %v7066
        %v7068 = vpop.f32.mrf.mxu0
        %v7069 = vadd.f32 0.0, %v7068
        %7070 = vmatmul.bf16.gmra.mxu0 %v6996
        %v7071 = vpop.f32.mrf.mxu0
        %v7072 = vadd.f32 0.0, %v7071
        %v7073 = vpop.f32.mrf.mxu0
        %v7074 = vadd.f32 0.0, %v7073
        %7075 = vmatmul.bf16.gmra.mxu0 %v6999
        %v7076 = vpop.f32.mrf.mxu0
        %v7077 = vadd.f32 0.0, %v7076
        %v7078 = vpop.f32.mrf.mxu0
        %v7079 = vadd.f32 0.0, %v7078
        %7080 = vmatmul.bf16.gmra.mxu0 %v7002
        %v7081 = vpop.f32.mrf.mxu0
        %v7082 = vadd.f32 0.0, %v7081
        %v7083 = vpop.f32.mrf.mxu0
        %v7084 = vadd.f32 0.0, %v7083
        %7085 = vmatmul.bf16.gmra.mxu0 %v7005
        %v7086 = vpop.f32.mrf.mxu0
        %v7087 = vadd.f32 0.0, %v7086
        %v7088 = vpop.f32.mrf.mxu0
        %v7089 = vadd.f32 0.0, %v7088
        %7090 = vmatmul.bf16.gmra.mxu0 %v7008
        %v7091 = vpop.f32.mrf.mxu0
        %v7092 = vadd.f32 0.0, %v7091
        %v7093 = vpop.f32.mrf.mxu0
        %v7094 = vadd.f32 0.0, %v7093
        %7095 = vmatmul.bf16.gmra.mxu0 %v7011
        %v7096 = vpop.f32.mrf.mxu0
        %v7097 = vadd.f32 0.0, %v7096
        %v7098 = vpop.f32.mrf.mxu0
        %v7099 = vadd.f32 0.0, %v7098
        %7100 = vmatmul.bf16.gmra.mxu0 %v7014
        %v7101 = vpop.f32.mrf.mxu0
        %v7102 = vadd.f32 0.0, %v7101
        %v7103 = vpop.f32.mrf.mxu0
        %v7104 = vadd.f32 0.0, %v7103
        %7105 = vmatmul.bf16.gmra.mxu0 %v7017
        %v7106 = vpop.f32.mrf.mxu0
        %v7107 = vadd.f32 0.0, %v7106
        %v7108 = vpop.f32.mrf.mxu0
        %v7109 = vadd.f32 0.0, %v7108
        %7110 = vmatmul.bf16.gmra.mxu0 %v7020
        %v7111 = vpop.f32.mrf.mxu0
        %v7112 = vadd.f32 0.0, %v7111
        %v7113 = vpop.f32.mrf.mxu0
        %v7114 = vadd.f32 0.0, %v7113
        %7115 = vmatmul.bf16.gmra.mxu0 %v7023
        %v7116 = vpop.f32.mrf.mxu0
        %v7117 = vadd.f32 0.0, %v7116
        %v7118 = vpop.f32.mrf.mxu0
        %v7119 = vadd.f32 0.0, %v7118
        %7120 = vmatmul.bf16.gmra.mxu0 %v7026
        %v7121 = vpop.f32.mrf.mxu0
        %v7122 = vadd.f32 0.0, %v7121
        %v7123 = vpop.f32.mrf.mxu0
        %v7124 = vadd.f32 0.0, %v7123
        %7125 = vmatmul.bf16.gmra.mxu0 %v7029
        %v7126 = vpop.f32.mrf.mxu0
        %v7127 = vadd.f32 0.0, %v7126
        %v7128 = vpop.f32.mrf.mxu0
        %v7129 = vadd.f32 0.0, %v7128
        %7130 = vmatmul.bf16.gmra.mxu0 %v7032
        %v7131 = vpop.f32.mrf.mxu0
        %v7132 = vadd.f32 0.0, %v7131
        %v7133 = vpop.f32.mrf.mxu0
        %v7134 = vadd.f32 0.0, %v7133
        %7135 = vdwg.mxu0
        %v7136 = vadd.f32 %v6901, %v7047
        %v7137 = vadd.f32 %v6902, %v7049
        %v7138 = vadd.f32 %v6903, %v7052
        %v7139 = vadd.f32 %v6904, %v7054
        %v7140 = vadd.f32 %v6905, %v7057
        %v7141 = vadd.f32 %v6906, %v7059
        %v7142 = vadd.f32 %v6907, %v7062
        %v7143 = vadd.f32 %v6908, %v7064
        %v7144 = vadd.f32 %v6909, %v7067
        %v7145 = vadd.f32 %v6910, %v7069
        %v7146 = vadd.f32 %v6911, %v7072
        %v7147 = vadd.f32 %v6912, %v7074
        %v7148 = vadd.f32 %v6913, %v7077
        %v7149 = vadd.f32 %v6914, %v7079
        %v7150 = vadd.f32 %v6915, %v7082
        %v7151 = vadd.f32 %v6916, %v7084
        %v7152 = vadd.f32 %v6917, %v7087
        %v7153 = vadd.f32 %v6918, %v7089
        %v7154 = vadd.f32 %v6919, %v7092
        %v7155 = vadd.f32 %v6920, %v7094
        %v7156 = vadd.f32 %v6921, %v7097
        %v7157 = vadd.f32 %v6922, %v7099
        %v7158 = vadd.f32 %v6923, %v7102
        %v7159 = vadd.f32 %v6924, %v7104
        %v7160 = vadd.f32 %v6925, %v7107
        %v7161 = vadd.f32 %v6926, %v7109
        %v7162 = vadd.f32 %v6927, %v7112
        %v7163 = vadd.f32 %v6928, %v7114
        %v7164 = vadd.f32 %v6929, %v7117
        %v7165 = vadd.f32 %v6930, %v7119
        %v7166 = vadd.f32 %v6931, %v7122
        %v7167 = vadd.f32 %v6932, %v7124
        %v7168 = vadd.f32 %v6933, %v7127
        %v7169 = vadd.f32 %v6934, %v7129
        %v7170 = vadd.f32 %v6935, %v7132
        %v7171 = vadd.f32 %v6936, %v7134
        %v7172 = vld [vmem:[%s432 + $0x8] sm:$0xe]
        %v7173 = vld [vmem:[%s432 + $0xc] sm:$0xf]
        %v7174 = vld [vmem:[%s432 + $0x10] sm:$0xf]
        %v7175 = vld [vmem:[%s432 + $0x14] sm:$0xf]
        %v7176 = vld [vmem:[%s432 + $0x18] sm:$0xf]
        %v7177 = vld [vmem:[%s432 + $0x1c] sm:$0xf]
        %v7178 = vld [vmem:[%s432 + $0x20] sm:$0xf]
        %v7179 = vld [vmem:[%s432 + $0x24] sm:$0xf]
        %v7180 = vld [vmem:[%s432 + $0x28] sm:$0xf]
        %v7181 = vld [vmem:[%s432 + $0x2c] sm:$0xf]
        %v7182 = vld [vmem:[%s432 + $0x30] sm:$0xf]
        %v7183 = vld [vmem:[%s432 + $0x34] sm:$0xf]
        %v7184 = vld [vmem:[%s432 + $0x38] sm:$0xf]
        %v7185 = vld [vmem:[%s432 + $0x3c] sm:$0xf]
        %v7186 = vld [vmem:[%s432 + $0x40] sm:$0xf]
        %v7187 = vld [vmem:[%s432 + $0x44] sm:$0xf]
        %v7188 = vld [vmem:[%s432 + $0x48] sm:$0xf]
        %v7189 = vld [vmem:[%s432 + $0x4c] sm:$0xf]
        %v7190 = vld [vmem:[%s432 + $0x50] sm:$0xf]
        %v7191 = vld [vmem:[%s432 + $0x54] sm:$0xf]
        %v7192 = vld [vmem:[%s432 + $0x58] sm:$0xf]
        %v7193 = vld [vmem:[%s432 + $0x5c] sm:$0xf]
        %v7194 = vld [vmem:[%s432 + $0x60] sm:$0xf]
        %v7195 = vld [vmem:[%s432 + $0x64] sm:$0xf]
        %v7196 = vld [vmem:[%s432 + $0x68] sm:$0xf]
        %v7197 = vld [vmem:[%s432 + $0x6c] sm:$0xf]
        %v7198 = vld [vmem:[%s432 + $0x70] sm:$0xf]
        %v7199 = vld [vmem:[%s432 + $0x74] sm:$0xf]
        %v7200 = vld [vmem:[%s432 + $0x78] sm:$0xf]
        %v7201 = vld [vmem:[%s432 + $0x7c] sm:$0xf]
        %v7202 = vld [vmem:[%s432 + $0x80] sm:$0xf]
        %v7203 = vld [vmem:[%s432 + $0x84] sm:$0xf]
        %v7204 = vld [vmem:[%s432 + $0x88] sm:$0xf]
        %v7205 = vld [vmem:[%s432 + $0x8c] sm:$0xf]
        %v7206 = vld [vmem:[%s432 + $0x90] sm:$0xf]
        %v7207 = vld [vmem:[%s432 + $0x94] sm:$0xf]
        %v7208 = vld [vmem:[%s432 + $0x98] sm:$0x1]
        %s7209 = scalar_lea.vmem %s3, 84
        %v7210 = vld [vmem:[%s7209] sm:$0xf]
        %v7248 = vunpack.c.l.b16 %v7172
        %v7249 = vunpack.c.l.b16 %v7173
        %v7250 = vunpack.c.l.b16 %v7174
        %v7251 = vunpack.c.l.b16 %v7175
        %v7252 = vunpack.c.l.b16 %v7176
        %v7253 = vunpack.c.l.b16 %v7177
        %v7254 = vunpack.c.l.b16 %v7178
        %v7255 = vunpack.c.l.b16 %v7179
        %v7256 = vunpack.c.l.b16 %v7180
        %v7257 = vunpack.c.l.b16 %v7181
        %v7258 = vunpack.c.l.b16 %v7182
        %v7259 = vunpack.c.l.b16 %v7183
        %v7260 = vunpack.c.l.b16 %v7184
        %v7261 = vunpack.c.l.b16 %v7185
        %v7262 = vunpack.c.l.b16 %v7186
        %v7263 = vunpack.c.l.b16 %v7187
        %v7264 = vunpack.c.l.b16 %v7188
        %v7265 = vunpack.c.l.b16 %v7189
        %v7266 = vunpack.c.l.b16 %v7190
        %v7267 = vunpack.c.l.b16 %v7191
        %v7268 = vunpack.c.l.b16 %v7192
        %v7269 = vunpack.c.l.b16 %v7193
        %v7270 = vunpack.c.l.b16 %v7194
        %v7271 = vunpack.c.l.b16 %v7195
        %v7272 = vunpack.c.l.b16 %v7196
        %v7273 = vunpack.c.l.b16 %v7197
        %v7274 = vunpack.c.l.b16 %v7198
        %v7275 = vunpack.c.l.b16 %v7199
        %v7276 = vunpack.c.l.b16 %v7200
        %v7277 = vunpack.c.l.b16 %v7201
        %v7278 = vunpack.c.l.b16 %v7202
        %v7279 = vunpack.c.l.b16 %v7203
        %v7280 = vunpack.c.l.b16 %v7204
        %v7281 = vunpack.c.l.b16 %v7205
        %v7282 = vunpack.c.l.b16 %v7206
        %v7283 = vunpack.c.l.b16 %v7207
        %v7284 = vunpack.c.l.b16 %v7208
        %v7285 = vpack.c.b16 %v7249, %v7248
        %v7286 = vpack.c.b16 %v7251, %v7250
        %v7287 = vpack.c.b16 %v7253, %v7252
        %v7288 = vpack.c.b16 %v7255, %v7254
        %v7289 = vpack.c.b16 %v7257, %v7256
        %v7290 = vpack.c.b16 %v7259, %v7258
        %v7291 = vpack.c.b16 %v7261, %v7260
        %v7292 = vpack.c.b16 %v7263, %v7262
        %v7293 = vpack.c.b16 %v7265, %v7264
        %v7294 = vpack.c.b16 %v7267, %v7266
        %v7295 = vpack.c.b16 %v7269, %v7268
        %v7296 = vpack.c.b16 %v7271, %v7270
        %v7297 = vpack.c.b16 %v7273, %v7272
        %v7298 = vpack.c.b16 %v7275, %v7274
        %v7299 = vpack.c.b16 %v7277, %v7276
        %v7300 = vpack.c.b16 %v7279, %v7278
        %v7301 = vpack.c.b16 %v7281, %v7280
        %v7302 = vpack.c.b16 %v7283, %v7282
        %v7303 = vpack.c.b16 %v7284, %v7284
        %v7304 = vrot.slane %v7285, 1
        %v7305 = vrot.slane %v7286, 1
        %v7306 = vsel %vm1028, %v7304, %v7305
        %v7307 = vrot.slane %v7287, 1
        %v7308 = vsel %vm1028, %v7305, %v7307
        %v7309 = vrot.slane %v7288, 1
        %v7310 = vsel %vm1028, %v7307, %v7309
        %v7311 = vrot.slane %v7289, 1
        %v7312 = vsel %vm1028, %v7309, %v7311
        %v7313 = vrot.slane %v7290, 1
        %v7314 = vsel %vm1028, %v7311, %v7313
        %v7315 = vrot.slane %v7291, 1
        %v7316 = vsel %vm1028, %v7313, %v7315
        %v7317 = vrot.slane %v7292, 1
        %v7318 = vsel %vm1028, %v7315, %v7317
        %v7319 = vrot.slane %v7293, 1
        %v7320 = vsel %vm1028, %v7317, %v7319
        %v7321 = vrot.slane %v7294, 1
        %v7322 = vsel %vm1028, %v7319, %v7321
        %v7323 = vrot.slane %v7295, 1
        %v7324 = vsel %vm1028, %v7321, %v7323
        %v7325 = vrot.slane %v7296, 1
        %v7326 = vsel %vm1028, %v7323, %v7325
        %v7327 = vrot.slane %v7297, 1
        %v7328 = vsel %vm1028, %v7325, %v7327
        %v7329 = vrot.slane %v7298, 1
        %v7330 = vsel %vm1028, %v7327, %v7329
        %v7331 = vrot.slane %v7299, 1
        %v7332 = vsel %vm1028, %v7329, %v7331
        %v7333 = vrot.slane %v7300, 1
        %v7334 = vsel %vm1028, %v7331, %v7333
        %v7335 = vrot.slane %v7301, 1
        %v7336 = vsel %vm1028, %v7333, %v7335
        %v7337 = vrot.slane %v7302, 1
        %v7338 = vsel %vm1028, %v7335, %v7337
        %v7339 = vrot.slane %v7303, 1
        %v7340 = vsel %vm1028, %v7337, %v7339
        %v7342 = vsel %vm726, %v7306, 0
        %v7345 = vsel %vm726, %v7308, 0
        %v7348 = vsel %vm726, %v7310, 0
        %v7351 = vsel %vm726, %v7312, 0
        %v7354 = vsel %vm726, %v7314, 0
        %v7357 = vsel %vm726, %v7316, 0
        %v7360 = vsel %vm726, %v7318, 0
        %v7363 = vsel %vm726, %v7320, 0
        %v7366 = vsel %vm726, %v7322, 0
        %v7369 = vsel %vm726, %v7324, 0
        %v7372 = vsel %vm726, %v7326, 0
        %v7375 = vsel %vm726, %v7328, 0
        %v7378 = vsel %vm726, %v7330, 0
        %v7381 = vsel %vm726, %v7332, 0
        %v7384 = vsel %vm726, %v7334, 0
        %v7387 = vsel %vm726, %v7336, 0
        %v7390 = vsel %vm726, %v7338, 0
        %v7393 = vsel %vm726, %v7340, 0
        %v7396 = vsel %vm781, %v7210, 0
        %7398 = vmatpush.bf16.msra.mxu0 0
        %7399 = vmatpush.bf16.msra.mxu0 0
        %7400 = vmatpush.bf16.msra.mxu0 0
        %7401 = vmatpush.bf16.msra.mxu0 0
        %7402 = vmatpush.bf16.msra.mxu0 0
        %7403 = vmatpush.bf16.msra.mxu0 0
        %7404 = vmatpush.bf16.msra.mxu0 0
        %7405 = vmatpush.bf16.msra.mxu0 %v7396
        %7406 = vmatmul.bf16.gmra.mxu0 %v7342
        %v7407 = vpop.f32.mrf.mxu0
        %v7408 = vadd.f32 0.0, %v7407
        %v7409 = vpop.f32.mrf.mxu0
        %v7410 = vadd.f32 0.0, %v7409
        %7411 = vmatmul.bf16.gmra.mxu0 %v7345
        %v7412 = vpop.f32.mrf.mxu0
        %v7413 = vadd.f32 0.0, %v7412
        %v7414 = vpop.f32.mrf.mxu0
        %v7415 = vadd.f32 0.0, %v7414
        %7416 = vmatmul.bf16.gmra.mxu0 %v7348
        %v7417 = vpop.f32.mrf.mxu0
        %v7418 = vadd.f32 0.0, %v7417
        %v7419 = vpop.f32.mrf.mxu0
        %v7420 = vadd.f32 0.0, %v7419
        %7421 = vmatmul.bf16.gmra.mxu0 %v7351
        %v7422 = vpop.f32.mrf.mxu0
        %v7423 = vadd.f32 0.0, %v7422
        %v7424 = vpop.f32.mrf.mxu0
        %v7425 = vadd.f32 0.0, %v7424
        %7426 = vmatmul.bf16.gmra.mxu0 %v7354
        %v7427 = vpop.f32.mrf.mxu0
        %v7428 = vadd.f32 0.0, %v7427
        %v7429 = vpop.f32.mrf.mxu0
        %v7430 = vadd.f32 0.0, %v7429
        %7431 = vmatmul.bf16.gmra.mxu0 %v7357
        %v7432 = vpop.f32.mrf.mxu0
        %v7433 = vadd.f32 0.0, %v7432
        %v7434 = vpop.f32.mrf.mxu0
        %v7435 = vadd.f32 0.0, %v7434
        %7436 = vmatmul.bf16.gmra.mxu0 %v7360
        %v7437 = vpop.f32.mrf.mxu0
        %v7438 = vadd.f32 0.0, %v7437
        %v7439 = vpop.f32.mrf.mxu0
        %v7440 = vadd.f32 0.0, %v7439
        %7441 = vmatmul.bf16.gmra.mxu0 %v7363
        %v7442 = vpop.f32.mrf.mxu0
        %v7443 = vadd.f32 0.0, %v7442
        %v7444 = vpop.f32.mrf.mxu0
        %v7445 = vadd.f32 0.0, %v7444
        %7446 = vmatmul.bf16.gmra.mxu0 %v7366
        %v7447 = vpop.f32.mrf.mxu0
        %v7448 = vadd.f32 0.0, %v7447
        %v7449 = vpop.f32.mrf.mxu0
        %v7450 = vadd.f32 0.0, %v7449
        %7451 = vmatmul.bf16.gmra.mxu0 %v7369
        %v7452 = vpop.f32.mrf.mxu0
        %v7453 = vadd.f32 0.0, %v7452
        %v7454 = vpop.f32.mrf.mxu0
        %v7455 = vadd.f32 0.0, %v7454
        %7456 = vmatmul.bf16.gmra.mxu0 %v7372
        %v7457 = vpop.f32.mrf.mxu0
        %v7458 = vadd.f32 0.0, %v7457
        %v7459 = vpop.f32.mrf.mxu0
        %v7460 = vadd.f32 0.0, %v7459
        %7461 = vmatmul.bf16.gmra.mxu0 %v7375
        %v7462 = vpop.f32.mrf.mxu0
        %v7463 = vadd.f32 0.0, %v7462
        %v7464 = vpop.f32.mrf.mxu0
        %v7465 = vadd.f32 0.0, %v7464
        %7466 = vmatmul.bf16.gmra.mxu0 %v7378
        %v7467 = vpop.f32.mrf.mxu0
        %v7468 = vadd.f32 0.0, %v7467
        %v7469 = vpop.f32.mrf.mxu0
        %v7470 = vadd.f32 0.0, %v7469
        %7471 = vmatmul.bf16.gmra.mxu0 %v7381
        %v7472 = vpop.f32.mrf.mxu0
        %v7473 = vadd.f32 0.0, %v7472
        %v7474 = vpop.f32.mrf.mxu0
        %v7475 = vadd.f32 0.0, %v7474
        %7476 = vmatmul.bf16.gmra.mxu0 %v7384
        %v7477 = vpop.f32.mrf.mxu0
        %v7478 = vadd.f32 0.0, %v7477
        %v7479 = vpop.f32.mrf.mxu0
        %v7480 = vadd.f32 0.0, %v7479
        %7481 = vmatmul.bf16.gmra.mxu0 %v7387
        %v7482 = vpop.f32.mrf.mxu0
        %v7483 = vadd.f32 0.0, %v7482
        %v7484 = vpop.f32.mrf.mxu0
        %v7485 = vadd.f32 0.0, %v7484
        %7486 = vmatmul.bf16.gmra.mxu0 %v7390
        %v7487 = vpop.f32.mrf.mxu0
        %v7488 = vadd.f32 0.0, %v7487
        %v7489 = vpop.f32.mrf.mxu0
        %v7490 = vadd.f32 0.0, %v7489
        %7491 = vmatmul.bf16.gmra.mxu0 %v7393
        %v7492 = vpop.f32.mrf.mxu0
        %v7493 = vadd.f32 0.0, %v7492
        %v7494 = vpop.f32.mrf.mxu0
        %v7495 = vadd.f32 0.0, %v7494
        %7496 = vdwg.mxu0
        %v7497 = vadd.f32 %v7136, %v7408
        %v7498 = vadd.f32 %v7137, %v7410
        %v7499 = vadd.f32 %v7138, %v7413
        %v7500 = vadd.f32 %v7139, %v7415
        %v7501 = vadd.f32 %v7140, %v7418
        %v7502 = vadd.f32 %v7141, %v7420
        %v7503 = vadd.f32 %v7142, %v7423
        %v7504 = vadd.f32 %v7143, %v7425
        %v7505 = vadd.f32 %v7144, %v7428
        %v7506 = vadd.f32 %v7145, %v7430
        %v7507 = vadd.f32 %v7146, %v7433
        %v7508 = vadd.f32 %v7147, %v7435
        %v7509 = vadd.f32 %v7148, %v7438
        %v7510 = vadd.f32 %v7149, %v7440
        %v7511 = vadd.f32 %v7150, %v7443
        %v7512 = vadd.f32 %v7151, %v7445
        %v7513 = vadd.f32 %v7152, %v7448
        %v7514 = vadd.f32 %v7153, %v7450
        %v7515 = vadd.f32 %v7154, %v7453
        %v7516 = vadd.f32 %v7155, %v7455
        %v7517 = vadd.f32 %v7156, %v7458
        %v7518 = vadd.f32 %v7157, %v7460
        %v7519 = vadd.f32 %v7158, %v7463
        %v7520 = vadd.f32 %v7159, %v7465
        %v7521 = vadd.f32 %v7160, %v7468
        %v7522 = vadd.f32 %v7161, %v7470
        %v7523 = vadd.f32 %v7162, %v7473
        %v7524 = vadd.f32 %v7163, %v7475
        %v7525 = vadd.f32 %v7164, %v7478
        %v7526 = vadd.f32 %v7165, %v7480
        %v7527 = vadd.f32 %v7166, %v7483
        %v7528 = vadd.f32 %v7167, %v7485
        %v7529 = vadd.f32 %v7168, %v7488
        %v7530 = vadd.f32 %v7169, %v7490
        %v7531 = vadd.f32 %v7170, %v7493
        %v7532 = vadd.f32 %v7171, %v7495
        %v7533 = vld [vmem:[%s432 + $0x98] sm:$0x3]
        %s7534 = scalar_lea.vmem %s3, 88
        %v7535 = vld [vmem:[%s7534] sm:$0xf]
        %v7537 = vunpack.c.l.b16 %v7533
        %v7538 = vpack.c.b16 %v7537, %v7537
        %v7540 = vshrl.u32 %v7285, 16
        %v7542 = vrot.slane %v7540, 1
        %v7543 = vshll.u32 %v7285, 16
        %v7545 = vrot.slane %v7543, 2
        %v7546 = vor.u32 %v7542, %v7545
        %v7548 = vshrl.u32 %v7286, 16
        %v7550 = vrot.slane %v7548, 1
        %v7551 = vshll.u32 %v7286, 16
        %v7553 = vrot.slane %v7551, 2
        %v7554 = vor.u32 %v7550, %v7553
        %v7555 = vsel %vm1625, %v7546, %v7554
        %v7557 = vshrl.u32 %v7287, 16
        %v7559 = vrot.slane %v7557, 1
        %v7560 = vshll.u32 %v7287, 16
        %v7562 = vrot.slane %v7560, 2
        %v7563 = vor.u32 %v7559, %v7562
        %v7564 = vsel %vm1625, %v7554, %v7563
        %v7566 = vshrl.u32 %v7288, 16
        %v7568 = vrot.slane %v7566, 1
        %v7569 = vshll.u32 %v7288, 16
        %v7571 = vrot.slane %v7569, 2
        %v7572 = vor.u32 %v7568, %v7571
        %v7573 = vsel %vm1625, %v7563, %v7572
        %v7575 = vshrl.u32 %v7289, 16
        %v7577 = vrot.slane %v7575, 1
        %v7578 = vshll.u32 %v7289, 16
        %v7580 = vrot.slane %v7578, 2
        %v7581 = vor.u32 %v7577, %v7580
        %v7582 = vsel %vm1625, %v7572, %v7581
        %v7584 = vshrl.u32 %v7290, 16
        %v7586 = vrot.slane %v7584, 1
        %v7587 = vshll.u32 %v7290, 16
        %v7589 = vrot.slane %v7587, 2
        %v7590 = vor.u32 %v7586, %v7589
        %v7591 = vsel %vm1625, %v7581, %v7590
        %v7593 = vshrl.u32 %v7291, 16
        %v7595 = vrot.slane %v7593, 1
        %v7596 = vshll.u32 %v7291, 16
        %v7598 = vrot.slane %v7596, 2
        %v7599 = vor.u32 %v7595, %v7598
        %v7600 = vsel %vm1625, %v7590, %v7599
        %v7602 = vshrl.u32 %v7292, 16
        %v7604 = vrot.slane %v7602, 1
        %v7605 = vshll.u32 %v7292, 16
        %v7607 = vrot.slane %v7605, 2
        %v7608 = vor.u32 %v7604, %v7607
        %v7609 = vsel %vm1625, %v7599, %v7608
        %v7611 = vshrl.u32 %v7293, 16
        %v7613 = vrot.slane %v7611, 1
        %v7614 = vshll.u32 %v7293, 16
        %v7616 = vrot.slane %v7614, 2
        %v7617 = vor.u32 %v7613, %v7616
        %v7618 = vsel %vm1625, %v7608, %v7617
        %v7620 = vshrl.u32 %v7294, 16
        %v7622 = vrot.slane %v7620, 1
        %v7623 = vshll.u32 %v7294, 16
        %v7625 = vrot.slane %v7623, 2
        %v7626 = vor.u32 %v7622, %v7625
        %v7627 = vsel %vm1625, %v7617, %v7626
        %v7629 = vshrl.u32 %v7295, 16
        %v7631 = vrot.slane %v7629, 1
        %v7632 = vshll.u32 %v7295, 16
        %v7634 = vrot.slane %v7632, 2
        %v7635 = vor.u32 %v7631, %v7634
        %v7636 = vsel %vm1625, %v7626, %v7635
        %v7638 = vshrl.u32 %v7296, 16
        %v7640 = vrot.slane %v7638, 1
        %v7641 = vshll.u32 %v7296, 16
        %v7643 = vrot.slane %v7641, 2
        %v7644 = vor.u32 %v7640, %v7643
        %v7645 = vsel %vm1625, %v7635, %v7644
        %v7647 = vshrl.u32 %v7297, 16
        %v7649 = vrot.slane %v7647, 1
        %v7650 = vshll.u32 %v7297, 16
        %v7652 = vrot.slane %v7650, 2
        %v7653 = vor.u32 %v7649, %v7652
        %v7654 = vsel %vm1625, %v7644, %v7653
        %v7656 = vshrl.u32 %v7298, 16
        %v7658 = vrot.slane %v7656, 1
        %v7659 = vshll.u32 %v7298, 16
        %v7661 = vrot.slane %v7659, 2
        %v7662 = vor.u32 %v7658, %v7661
        %v7663 = vsel %vm1625, %v7653, %v7662
        %v7665 = vshrl.u32 %v7299, 16
        %v7667 = vrot.slane %v7665, 1
        %v7668 = vshll.u32 %v7299, 16
        %v7670 = vrot.slane %v7668, 2
        %v7671 = vor.u32 %v7667, %v7670
        %v7672 = vsel %vm1625, %v7662, %v7671
        %v7674 = vshrl.u32 %v7300, 16
        %v7676 = vrot.slane %v7674, 1
        %v7677 = vshll.u32 %v7300, 16
        %v7679 = vrot.slane %v7677, 2
        %v7680 = vor.u32 %v7676, %v7679
        %v7681 = vsel %vm1625, %v7671, %v7680
        %v7683 = vshrl.u32 %v7301, 16
        %v7685 = vrot.slane %v7683, 1
        %v7686 = vshll.u32 %v7301, 16
        %v7688 = vrot.slane %v7686, 2
        %v7689 = vor.u32 %v7685, %v7688
        %v7690 = vsel %vm1625, %v7680, %v7689
        %v7692 = vshrl.u32 %v7302, 16
        %v7694 = vrot.slane %v7692, 1
        %v7695 = vshll.u32 %v7302, 16
        %v7697 = vrot.slane %v7695, 2
        %v7698 = vor.u32 %v7694, %v7697
        %v7699 = vsel %vm1625, %v7689, %v7698
        %v7701 = vshrl.u32 %v7538, 16
        %v7703 = vrot.slane %v7701, 1
        %v7704 = vshll.u32 %v7538, 16
        %v7706 = vrot.slane %v7704, 2
        %v7707 = vor.u32 %v7703, %v7706
        %v7708 = vsel %vm1625, %v7698, %v7707
        %v7710 = vsel %vm726, %v7555, 0
        %v7713 = vsel %vm726, %v7564, 0
        %v7716 = vsel %vm726, %v7573, 0
        %v7719 = vsel %vm726, %v7582, 0
        %v7722 = vsel %vm726, %v7591, 0
        %v7725 = vsel %vm726, %v7600, 0
        %v7728 = vsel %vm726, %v7609, 0
        %v7731 = vsel %vm726, %v7618, 0
        %v7734 = vsel %vm726, %v7627, 0
        %v7737 = vsel %vm726, %v7636, 0
        %v7740 = vsel %vm726, %v7645, 0
        %v7743 = vsel %vm726, %v7654, 0
        %v7746 = vsel %vm726, %v7663, 0
        %v7749 = vsel %vm726, %v7672, 0
        %v7752 = vsel %vm726, %v7681, 0
        %v7755 = vsel %vm726, %v7690, 0
        %v7758 = vsel %vm726, %v7699, 0
        %v7761 = vsel %vm726, %v7708, 0
        %v7764 = vsel %vm781, %v7535, 0
        %7766 = vmatpush.bf16.msra.mxu0 0
        %7767 = vmatpush.bf16.msra.mxu0 0
        %7768 = vmatpush.bf16.msra.mxu0 0
        %7769 = vmatpush.bf16.msra.mxu0 0
        %7770 = vmatpush.bf16.msra.mxu0 0
        %7771 = vmatpush.bf16.msra.mxu0 0
        %7772 = vmatpush.bf16.msra.mxu0 0
        %7773 = vmatpush.bf16.msra.mxu0 %v7764
        %7774 = vmatmul.bf16.gmra.mxu0 %v7710
        %v7775 = vpop.f32.mrf.mxu0
        %v7776 = vadd.f32 0.0, %v7775
        %v7777 = vpop.f32.mrf.mxu0
        %v7778 = vadd.f32 0.0, %v7777
        %7779 = vmatmul.bf16.gmra.mxu0 %v7713
        %v7780 = vpop.f32.mrf.mxu0
        %v7781 = vadd.f32 0.0, %v7780
        %v7782 = vpop.f32.mrf.mxu0
        %v7783 = vadd.f32 0.0, %v7782
        %7784 = vmatmul.bf16.gmra.mxu0 %v7716
        %v7785 = vpop.f32.mrf.mxu0
        %v7786 = vadd.f32 0.0, %v7785
        %v7787 = vpop.f32.mrf.mxu0
        %v7788 = vadd.f32 0.0, %v7787
        %7789 = vmatmul.bf16.gmra.mxu0 %v7719
        %v7790 = vpop.f32.mrf.mxu0
        %v7791 = vadd.f32 0.0, %v7790
        %v7792 = vpop.f32.mrf.mxu0
        %v7793 = vadd.f32 0.0, %v7792
        %7794 = vmatmul.bf16.gmra.mxu0 %v7722
        %v7795 = vpop.f32.mrf.mxu0
        %v7796 = vadd.f32 0.0, %v7795
        %v7797 = vpop.f32.mrf.mxu0
        %v7798 = vadd.f32 0.0, %v7797
        %7799 = vmatmul.bf16.gmra.mxu0 %v7725
        %v7800 = vpop.f32.mrf.mxu0
        %v7801 = vadd.f32 0.0, %v7800
        %v7802 = vpop.f32.mrf.mxu0
        %v7803 = vadd.f32 0.0, %v7802
        %7804 = vmatmul.bf16.gmra.mxu0 %v7728
        %v7805 = vpop.f32.mrf.mxu0
        %v7806 = vadd.f32 0.0, %v7805
        %v7807 = vpop.f32.mrf.mxu0
        %v7808 = vadd.f32 0.0, %v7807
        %7809 = vmatmul.bf16.gmra.mxu0 %v7731
        %v7810 = vpop.f32.mrf.mxu0
        %v7811 = vadd.f32 0.0, %v7810
        %v7812 = vpop.f32.mrf.mxu0
        %v7813 = vadd.f32 0.0, %v7812
        %7814 = vmatmul.bf16.gmra.mxu0 %v7734
        %v7815 = vpop.f32.mrf.mxu0
        %v7816 = vadd.f32 0.0, %v7815
        %v7817 = vpop.f32.mrf.mxu0
        %v7818 = vadd.f32 0.0, %v7817
        %7819 = vmatmul.bf16.gmra.mxu0 %v7737
        %v7820 = vpop.f32.mrf.mxu0
        %v7821 = vadd.f32 0.0, %v7820
        %v7822 = vpop.f32.mrf.mxu0
        %v7823 = vadd.f32 0.0, %v7822
        %7824 = vmatmul.bf16.gmra.mxu0 %v7740
        %v7825 = vpop.f32.mrf.mxu0
        %v7826 = vadd.f32 0.0, %v7825
        %v7827 = vpop.f32.mrf.mxu0
        %v7828 = vadd.f32 0.0, %v7827
        %7829 = vmatmul.bf16.gmra.mxu0 %v7743
        %v7830 = vpop.f32.mrf.mxu0
        %v7831 = vadd.f32 0.0, %v7830
        %v7832 = vpop.f32.mrf.mxu0
        %v7833 = vadd.f32 0.0, %v7832
        %7834 = vmatmul.bf16.gmra.mxu0 %v7746
        %v7835 = vpop.f32.mrf.mxu0
        %v7836 = vadd.f32 0.0, %v7835
        %v7837 = vpop.f32.mrf.mxu0
        %v7838 = vadd.f32 0.0, %v7837
        %7839 = vmatmul.bf16.gmra.mxu0 %v7749
        %v7840 = vpop.f32.mrf.mxu0
        %v7841 = vadd.f32 0.0, %v7840
        %v7842 = vpop.f32.mrf.mxu0
        %v7843 = vadd.f32 0.0, %v7842
        %7844 = vmatmul.bf16.gmra.mxu0 %v7752
        %v7845 = vpop.f32.mrf.mxu0
        %v7846 = vadd.f32 0.0, %v7845
        %v7847 = vpop.f32.mrf.mxu0
        %v7848 = vadd.f32 0.0, %v7847
        %7849 = vmatmul.bf16.gmra.mxu0 %v7755
        %v7850 = vpop.f32.mrf.mxu0
        %v7851 = vadd.f32 0.0, %v7850
        %v7852 = vpop.f32.mrf.mxu0
        %v7853 = vadd.f32 0.0, %v7852
        %7854 = vmatmul.bf16.gmra.mxu0 %v7758
        %v7855 = vpop.f32.mrf.mxu0
        %v7856 = vadd.f32 0.0, %v7855
        %v7857 = vpop.f32.mrf.mxu0
        %v7858 = vadd.f32 0.0, %v7857
        %7859 = vmatmul.bf16.gmra.mxu0 %v7761
        %v7860 = vpop.f32.mrf.mxu0
        %v7861 = vadd.f32 0.0, %v7860
        %v7862 = vpop.f32.mrf.mxu0
        %v7863 = vadd.f32 0.0, %v7862
        %7864 = vdwg.mxu0
        %v7865 = vadd.f32 %v7497, %v7776
        %v7866 = vadd.f32 %v7498, %v7778
        %v7867 = vadd.f32 %v7499, %v7781
        %v7868 = vadd.f32 %v7500, %v7783
        %v7869 = vadd.f32 %v7501, %v7786
        %v7870 = vadd.f32 %v7502, %v7788
        %v7871 = vadd.f32 %v7503, %v7791
        %v7872 = vadd.f32 %v7504, %v7793
        %v7873 = vadd.f32 %v7505, %v7796
        %v7874 = vadd.f32 %v7506, %v7798
        %v7875 = vadd.f32 %v7507, %v7801
        %v7876 = vadd.f32 %v7508, %v7803
        %v7877 = vadd.f32 %v7509, %v7806
        %v7878 = vadd.f32 %v7510, %v7808
        %v7879 = vadd.f32 %v7511, %v7811
        %v7880 = vadd.f32 %v7512, %v7813
        %v7881 = vadd.f32 %v7513, %v7816
        %v7882 = vadd.f32 %v7514, %v7818
        %v7883 = vadd.f32 %v7515, %v7821
        %v7884 = vadd.f32 %v7516, %v7823
        %v7885 = vadd.f32 %v7517, %v7826
        %v7886 = vadd.f32 %v7518, %v7828
        %v7887 = vadd.f32 %v7519, %v7831
        %v7888 = vadd.f32 %v7520, %v7833
        %v7889 = vadd.f32 %v7521, %v7836
        %v7890 = vadd.f32 %v7522, %v7838
        %v7891 = vadd.f32 %v7523, %v7841
        %v7892 = vadd.f32 %v7524, %v7843
        %v7893 = vadd.f32 %v7525, %v7846
        %v7894 = vadd.f32 %v7526, %v7848
        %v7895 = vadd.f32 %v7527, %v7851
        %v7896 = vadd.f32 %v7528, %v7853
        %v7897 = vadd.f32 %v7529, %v7856
        %v7898 = vadd.f32 %v7530, %v7858
        %v7899 = vadd.f32 %v7531, %v7861
        %v7900 = vadd.f32 %v7532, %v7863
        %v7901 = vld [vmem:[%s432 + $0x8] sm:$0xc]
        %s7902 = scalar_lea.vmem %s3, 92
        %v7903 = vld [vmem:[%s7902] sm:$0xf]
        %v7905 = vunpack.c.l.b16 %v7901
        %v7906 = vpack.c.b16 %v7249, %v7905
        %v7907 = vrot.slane %v7906, 2
        %v7908 = vrot.slane %v7286, 2
        %v7909 = vsel %vm1994, %v7907, %v7908
        %v7910 = vrot.slane %v7287, 2
        %v7911 = vsel %vm1994, %v7908, %v7910
        %v7912 = vrot.slane %v7288, 2
        %v7913 = vsel %vm1994, %v7910, %v7912
        %v7914 = vrot.slane %v7289, 2
        %v7915 = vsel %vm1994, %v7912, %v7914
        %v7916 = vrot.slane %v7290, 2
        %v7917 = vsel %vm1994, %v7914, %v7916
        %v7918 = vrot.slane %v7291, 2
        %v7919 = vsel %vm1994, %v7916, %v7918
        %v7920 = vrot.slane %v7292, 2
        %v7921 = vsel %vm1994, %v7918, %v7920
        %v7922 = vrot.slane %v7293, 2
        %v7923 = vsel %vm1994, %v7920, %v7922
        %v7924 = vrot.slane %v7294, 2
        %v7925 = vsel %vm1994, %v7922, %v7924
        %v7926 = vrot.slane %v7295, 2
        %v7927 = vsel %vm1994, %v7924, %v7926
        %v7928 = vrot.slane %v7296, 2
        %v7929 = vsel %vm1994, %v7926, %v7928
        %v7930 = vrot.slane %v7297, 2
        %v7931 = vsel %vm1994, %v7928, %v7930
        %v7932 = vrot.slane %v7298, 2
        %v7933 = vsel %vm1994, %v7930, %v7932
        %v7934 = vrot.slane %v7299, 2
        %v7935 = vsel %vm1994, %v7932, %v7934
        %v7936 = vrot.slane %v7300, 2
        %v7937 = vsel %vm1994, %v7934, %v7936
        %v7938 = vrot.slane %v7301, 2
        %v7939 = vsel %vm1994, %v7936, %v7938
        %v7940 = vrot.slane %v7302, 2
        %v7941 = vsel %vm1994, %v7938, %v7940
        %v7942 = vrot.slane %v7538, 2
        %v7943 = vsel %vm1994, %v7940, %v7942
        %v7945 = vsel %vm726, %v7909, 0
        %v7948 = vsel %vm726, %v7911, 0
        %v7951 = vsel %vm726, %v7913, 0
        %v7954 = vsel %vm726, %v7915, 0
        %v7957 = vsel %vm726, %v7917, 0
        %v7960 = vsel %vm726, %v7919, 0
        %v7963 = vsel %vm726, %v7921, 0
        %v7966 = vsel %vm726, %v7923, 0
        %v7969 = vsel %vm726, %v7925, 0
        %v7972 = vsel %vm726, %v7927, 0
        %v7975 = vsel %vm726, %v7929, 0
        %v7978 = vsel %vm726, %v7931, 0
        %v7981 = vsel %vm726, %v7933, 0
        %v7984 = vsel %vm726, %v7935, 0
        %v7987 = vsel %vm726, %v7937, 0
        %v7990 = vsel %vm726, %v7939, 0
        %v7993 = vsel %vm726, %v7941, 0
        %v7996 = vsel %vm726, %v7943, 0
        %v7999 = vsel %vm781, %v7903, 0
        %8001 = vmatpush.bf16.msra.mxu0 0
        %8002 = vmatpush.bf16.msra.mxu0 0
        %8003 = vmatpush.bf16.msra.mxu0 0
        %8004 = vmatpush.bf16.msra.mxu0 0
        %8005 = vmatpush.bf16.msra.mxu0 0
        %8006 = vmatpush.bf16.msra.mxu0 0
        %8007 = vmatpush.bf16.msra.mxu0 0
        %8008 = vmatpush.bf16.msra.mxu0 %v7999
        %8009 = vmatmul.bf16.gmra.mxu0 %v7945
        %v8010 = vpop.f32.mrf.mxu0
        %v8011 = vadd.f32 0.0, %v8010
        %v8012 = vpop.f32.mrf.mxu0
        %v8013 = vadd.f32 0.0, %v8012
        %8014 = vmatmul.bf16.gmra.mxu0 %v7948
        %v8015 = vpop.f32.mrf.mxu0
        %v8016 = vadd.f32 0.0, %v8015
        %v8017 = vpop.f32.mrf.mxu0
        %v8018 = vadd.f32 0.0, %v8017
        %8019 = vmatmul.bf16.gmra.mxu0 %v7951
        %v8020 = vpop.f32.mrf.mxu0
        %v8021 = vadd.f32 0.0, %v8020
        %v8022 = vpop.f32.mrf.mxu0
        %v8023 = vadd.f32 0.0, %v8022
        %8024 = vmatmul.bf16.gmra.mxu0 %v7954
        %v8025 = vpop.f32.mrf.mxu0
        %v8026 = vadd.f32 0.0, %v8025
        %v8027 = vpop.f32.mrf.mxu0
        %v8028 = vadd.f32 0.0, %v8027
        %8029 = vmatmul.bf16.gmra.mxu0 %v7957
        %v8030 = vpop.f32.mrf.mxu0
        %v8031 = vadd.f32 0.0, %v8030
        %v8032 = vpop.f32.mrf.mxu0
        %v8033 = vadd.f32 0.0, %v8032
        %8034 = vmatmul.bf16.gmra.mxu0 %v7960
        %v8035 = vpop.f32.mrf.mxu0
        %v8036 = vadd.f32 0.0, %v8035
        %v8037 = vpop.f32.mrf.mxu0
        %v8038 = vadd.f32 0.0, %v8037
        %8039 = vmatmul.bf16.gmra.mxu0 %v7963
        %v8040 = vpop.f32.mrf.mxu0
        %v8041 = vadd.f32 0.0, %v8040
        %v8042 = vpop.f32.mrf.mxu0
        %v8043 = vadd.f32 0.0, %v8042
        %8044 = vmatmul.bf16.gmra.mxu0 %v7966
        %v8045 = vpop.f32.mrf.mxu0
        %v8046 = vadd.f32 0.0, %v8045
        %v8047 = vpop.f32.mrf.mxu0
        %v8048 = vadd.f32 0.0, %v8047
        %8049 = vmatmul.bf16.gmra.mxu0 %v7969
        %v8050 = vpop.f32.mrf.mxu0
        %v8051 = vadd.f32 0.0, %v8050
        %v8052 = vpop.f32.mrf.mxu0
        %v8053 = vadd.f32 0.0, %v8052
        %8054 = vmatmul.bf16.gmra.mxu0 %v7972
        %v8055 = vpop.f32.mrf.mxu0
        %v8056 = vadd.f32 0.0, %v8055
        %v8057 = vpop.f32.mrf.mxu0
        %v8058 = vadd.f32 0.0, %v8057
        %8059 = vmatmul.bf16.gmra.mxu0 %v7975
        %v8060 = vpop.f32.mrf.mxu0
        %v8061 = vadd.f32 0.0, %v8060
        %v8062 = vpop.f32.mrf.mxu0
        %v8063 = vadd.f32 0.0, %v8062
        %8064 = vmatmul.bf16.gmra.mxu0 %v7978
        %v8065 = vpop.f32.mrf.mxu0
        %v8066 = vadd.f32 0.0, %v8065
        %v8067 = vpop.f32.mrf.mxu0
        %v8068 = vadd.f32 0.0, %v8067
        %8069 = vmatmul.bf16.gmra.mxu0 %v7981
        %v8070 = vpop.f32.mrf.mxu0
        %v8071 = vadd.f32 0.0, %v8070
        %v8072 = vpop.f32.mrf.mxu0
        %v8073 = vadd.f32 0.0, %v8072
        %8074 = vmatmul.bf16.gmra.mxu0 %v7984
        %v8075 = vpop.f32.mrf.mxu0
        %v8076 = vadd.f32 0.0, %v8075
        %v8077 = vpop.f32.mrf.mxu0
        %v8078 = vadd.f32 0.0, %v8077
        %8079 = vmatmul.bf16.gmra.mxu0 %v7987
        %v8080 = vpop.f32.mrf.mxu0
        %v8081 = vadd.f32 0.0, %v8080
        %v8082 = vpop.f32.mrf.mxu0
        %v8083 = vadd.f32 0.0, %v8082
        %8084 = vmatmul.bf16.gmra.mxu0 %v7990
        %v8085 = vpop.f32.mrf.mxu0
        %v8086 = vadd.f32 0.0, %v8085
        %v8087 = vpop.f32.mrf.mxu0
        %v8088 = vadd.f32 0.0, %v8087
        %8089 = vmatmul.bf16.gmra.mxu0 %v7993
        %v8090 = vpop.f32.mrf.mxu0
        %v8091 = vadd.f32 0.0, %v8090
        %v8092 = vpop.f32.mrf.mxu0
        %v8093 = vadd.f32 0.0, %v8092
        %8094 = vmatmul.bf16.gmra.mxu0 %v7996
        %v8095 = vpop.f32.mrf.mxu0
        %v8096 = vadd.f32 0.0, %v8095
        %v8097 = vpop.f32.mrf.mxu0
        %v8098 = vadd.f32 0.0, %v8097
        %8099 = vdwg.mxu0
        %v8100 = vadd.f32 %v7865, %v8011
        %v8101 = vadd.f32 %v7866, %v8013
        %v8102 = vadd.f32 %v7867, %v8016
        %v8103 = vadd.f32 %v7868, %v8018
        %v8104 = vadd.f32 %v7869, %v8021
        %v8105 = vadd.f32 %v7870, %v8023
        %v8106 = vadd.f32 %v7871, %v8026
        %v8107 = vadd.f32 %v7872, %v8028
        %v8108 = vadd.f32 %v7873, %v8031
        %v8109 = vadd.f32 %v7874, %v8033
        %v8110 = vadd.f32 %v7875, %v8036
        %v8111 = vadd.f32 %v7876, %v8038
        %v8112 = vadd.f32 %v7877, %v8041
        %v8113 = vadd.f32 %v7878, %v8043
        %v8114 = vadd.f32 %v7879, %v8046
        %v8115 = vadd.f32 %v7880, %v8048
        %v8116 = vadd.f32 %v7881, %v8051
        %v8117 = vadd.f32 %v7882, %v8053
        %v8118 = vadd.f32 %v7883, %v8056
        %v8119 = vadd.f32 %v7884, %v8058
        %v8120 = vadd.f32 %v7885, %v8061
        %v8121 = vadd.f32 %v7886, %v8063
        %v8122 = vadd.f32 %v7887, %v8066
        %v8123 = vadd.f32 %v7888, %v8068
        %v8124 = vadd.f32 %v7889, %v8071
        %v8125 = vadd.f32 %v7890, %v8073
        %v8126 = vadd.f32 %v7891, %v8076
        %v8127 = vadd.f32 %v7892, %v8078
        %v8128 = vadd.f32 %v7893, %v8081
        %v8129 = vadd.f32 %v7894, %v8083
        %v8130 = vadd.f32 %v7895, %v8086
        %v8131 = vadd.f32 %v7896, %v8088
        %v8132 = vadd.f32 %v7897, %v8091
        %v8133 = vadd.f32 %v7898, %v8093
        %v8134 = vadd.f32 %v7899, %v8096
        %v8135 = vadd.f32 %v7900, %v8098
        %v8136 = vld [vmem:[%s432 + $0x10] sm:$0xc]
        %v8137 = vld [vmem:[%s432 + $0x14] sm:$0xf]
        %v8138 = vld [vmem:[%s432 + $0x18] sm:$0xf]
        %v8139 = vld [vmem:[%s432 + $0x1c] sm:$0xf]
        %v8140 = vld [vmem:[%s432 + $0x20] sm:$0xf]
        %v8141 = vld [vmem:[%s432 + $0x24] sm:$0xf]
        %v8142 = vld [vmem:[%s432 + $0x28] sm:$0xf]
        %v8143 = vld [vmem:[%s432 + $0x2c] sm:$0xf]
        %v8144 = vld [vmem:[%s432 + $0x30] sm:$0xf]
        %v8145 = vld [vmem:[%s432 + $0x34] sm:$0xf]
        %v8146 = vld [vmem:[%s432 + $0x38] sm:$0xf]
        %v8147 = vld [vmem:[%s432 + $0x3c] sm:$0xf]
        %v8148 = vld [vmem:[%s432 + $0x40] sm:$0xf]
        %v8149 = vld [vmem:[%s432 + $0x44] sm:$0xf]
        %v8150 = vld [vmem:[%s432 + $0x48] sm:$0xf]
        %v8151 = vld [vmem:[%s432 + $0x4c] sm:$0xf]
        %v8152 = vld [vmem:[%s432 + $0x50] sm:$0xf]
        %v8153 = vld [vmem:[%s432 + $0x54] sm:$0xf]
        %v8154 = vld [vmem:[%s432 + $0x58] sm:$0xf]
        %v8155 = vld [vmem:[%s432 + $0x5c] sm:$0xf]
        %v8156 = vld [vmem:[%s432 + $0x60] sm:$0xf]
        %v8157 = vld [vmem:[%s432 + $0x64] sm:$0xf]
        %v8158 = vld [vmem:[%s432 + $0x68] sm:$0xf]
        %v8159 = vld [vmem:[%s432 + $0x6c] sm:$0xf]
        %v8160 = vld [vmem:[%s432 + $0x70] sm:$0xf]
        %v8161 = vld [vmem:[%s432 + $0x74] sm:$0xf]
        %v8162 = vld [vmem:[%s432 + $0x78] sm:$0xf]
        %v8163 = vld [vmem:[%s432 + $0x7c] sm:$0xf]
        %v8164 = vld [vmem:[%s432 + $0x80] sm:$0xf]
        %v8165 = vld [vmem:[%s432 + $0x84] sm:$0xf]
        %v8166 = vld [vmem:[%s432 + $0x88] sm:$0xf]
        %v8167 = vld [vmem:[%s432 + $0x8c] sm:$0xf]
        %v8168 = vld [vmem:[%s432 + $0x90] sm:$0xf]
        %v8169 = vld [vmem:[%s432 + $0x94] sm:$0xf]
        %v8170 = vld [vmem:[%s432 + $0x98] sm:$0xf]
        %v8171 = vld [vmem:[%s432 + $0x9c] sm:$0xf]
        %v8172 = vld [vmem:[%s432 + $0xa0] sm:$0x3]
        %s8173 = scalar_lea.vmem %s3, 96
        %v8174 = vld [vmem:[%s8173] sm:$0xf]
        %v8212 = vunpack.c.l.b16 %v8136
        %v8213 = vunpack.c.l.b16 %v8137
        %v8214 = vunpack.c.l.b16 %v8138
        %v8215 = vunpack.c.l.b16 %v8139
        %v8216 = vunpack.c.l.b16 %v8140
        %v8217 = vunpack.c.l.b16 %v8141
        %v8218 = vunpack.c.l.b16 %v8142
        %v8219 = vunpack.c.l.b16 %v8143
        %v8220 = vunpack.c.l.b16 %v8144
        %v8221 = vunpack.c.l.b16 %v8145
        %v8222 = vunpack.c.l.b16 %v8146
        %v8223 = vunpack.c.l.b16 %v8147
        %v8224 = vunpack.c.l.b16 %v8148
        %v8225 = vunpack.c.l.b16 %v8149
        %v8226 = vunpack.c.l.b16 %v8150
        %v8227 = vunpack.c.l.b16 %v8151
        %v8228 = vunpack.c.l.b16 %v8152
        %v8229 = vunpack.c.l.b16 %v8153
        %v8230 = vunpack.c.l.b16 %v8154
        %v8231 = vunpack.c.l.b16 %v8155
        %v8232 = vunpack.c.l.b16 %v8156
        %v8233 = vunpack.c.l.b16 %v8157
        %v8234 = vunpack.c.l.b16 %v8158
        %v8235 = vunpack.c.l.b16 %v8159
        %v8236 = vunpack.c.l.b16 %v8160
        %v8237 = vunpack.c.l.b16 %v8161
        %v8238 = vunpack.c.l.b16 %v8162
        %v8239 = vunpack.c.l.b16 %v8163
        %v8240 = vunpack.c.l.b16 %v8164
        %v8241 = vunpack.c.l.b16 %v8165
        %v8242 = vunpack.c.l.b16 %v8166
        %v8243 = vunpack.c.l.b16 %v8167
        %v8244 = vunpack.c.l.b16 %v8168
        %v8245 = vunpack.c.l.b16 %v8169
        %v8246 = vunpack.c.l.b16 %v8170
        %v8247 = vunpack.c.l.b16 %v8171
        %v8248 = vunpack.c.l.b16 %v8172
        %v8249 = vpack.c.b16 %v8213, %v8212
        %v8250 = vpack.c.b16 %v8215, %v8214
        %v8251 = vpack.c.b16 %v8217, %v8216
        %v8252 = vpack.c.b16 %v8219, %v8218
        %v8253 = vpack.c.b16 %v8221, %v8220
        %v8254 = vpack.c.b16 %v8223, %v8222
        %v8255 = vpack.c.b16 %v8225, %v8224
        %v8256 = vpack.c.b16 %v8227, %v8226
        %v8257 = vpack.c.b16 %v8229, %v8228
        %v8258 = vpack.c.b16 %v8231, %v8230
        %v8259 = vpack.c.b16 %v8233, %v8232
        %v8260 = vpack.c.b16 %v8235, %v8234
        %v8261 = vpack.c.b16 %v8237, %v8236
        %v8262 = vpack.c.b16 %v8239, %v8238
        %v8263 = vpack.c.b16 %v8241, %v8240
        %v8264 = vpack.c.b16 %v8243, %v8242
        %v8265 = vpack.c.b16 %v8245, %v8244
        %v8266 = vpack.c.b16 %v8247, %v8246
        %v8267 = vpack.c.b16 %v8248, %v8248
        %v8268 = vrot.slane %v8249, 2
        %v8269 = vrot.slane %v8250, 2
        %v8270 = vsel %vm1994, %v8268, %v8269
        %v8271 = vrot.slane %v8251, 2
        %v8272 = vsel %vm1994, %v8269, %v8271
        %v8273 = vrot.slane %v8252, 2
        %v8274 = vsel %vm1994, %v8271, %v8273
        %v8275 = vrot.slane %v8253, 2
        %v8276 = vsel %vm1994, %v8273, %v8275
        %v8277 = vrot.slane %v8254, 2
        %v8278 = vsel %vm1994, %v8275, %v8277
        %v8279 = vrot.slane %v8255, 2
        %v8280 = vsel %vm1994, %v8277, %v8279
        %v8281 = vrot.slane %v8256, 2
        %v8282 = vsel %vm1994, %v8279, %v8281
        %v8283 = vrot.slane %v8257, 2
        %v8284 = vsel %vm1994, %v8281, %v8283
        %v8285 = vrot.slane %v8258, 2
        %v8286 = vsel %vm1994, %v8283, %v8285
        %v8287 = vrot.slane %v8259, 2
        %v8288 = vsel %vm1994, %v8285, %v8287
        %v8289 = vrot.slane %v8260, 2
        %v8290 = vsel %vm1994, %v8287, %v8289
        %v8291 = vrot.slane %v8261, 2
        %v8292 = vsel %vm1994, %v8289, %v8291
        %v8293 = vrot.slane %v8262, 2
        %v8294 = vsel %vm1994, %v8291, %v8293
        %v8295 = vrot.slane %v8263, 2
        %v8296 = vsel %vm1994, %v8293, %v8295
        %v8297 = vrot.slane %v8264, 2
        %v8298 = vsel %vm1994, %v8295, %v8297
        %v8299 = vrot.slane %v8265, 2
        %v8300 = vsel %vm1994, %v8297, %v8299
        %v8301 = vrot.slane %v8266, 2
        %v8302 = vsel %vm1994, %v8299, %v8301
        %v8303 = vrot.slane %v8267, 2
        %v8304 = vsel %vm1994, %v8301, %v8303
        %v8306 = vsel %vm726, %v8270, 0
        %v8309 = vsel %vm726, %v8272, 0
        %v8312 = vsel %vm726, %v8274, 0
        %v8315 = vsel %vm726, %v8276, 0
        %v8318 = vsel %vm726, %v8278, 0
        %v8321 = vsel %vm726, %v8280, 0
        %v8324 = vsel %vm726, %v8282, 0
        %v8327 = vsel %vm726, %v8284, 0
        %v8330 = vsel %vm726, %v8286, 0
        %v8333 = vsel %vm726, %v8288, 0
        %v8336 = vsel %vm726, %v8290, 0
        %v8339 = vsel %vm726, %v8292, 0
        %v8342 = vsel %vm726, %v8294, 0
        %v8345 = vsel %vm726, %v8296, 0
        %v8348 = vsel %vm726, %v8298, 0
        %v8351 = vsel %vm726, %v8300, 0
        %v8354 = vsel %vm726, %v8302, 0
        %v8357 = vsel %vm726, %v8304, 0
        %v8360 = vsel %vm781, %v8174, 0
        %8362 = vmatpush.bf16.msra.mxu0 0
        %8363 = vmatpush.bf16.msra.mxu0 0
        %8364 = vmatpush.bf16.msra.mxu0 0
        %8365 = vmatpush.bf16.msra.mxu0 0
        %8366 = vmatpush.bf16.msra.mxu0 0
        %8367 = vmatpush.bf16.msra.mxu0 0
        %8368 = vmatpush.bf16.msra.mxu0 0
        %8369 = vmatpush.bf16.msra.mxu0 %v8360
        %8370 = vmatmul.bf16.gmra.mxu0 %v8306
        %v8371 = vpop.f32.mrf.mxu0
        %v8372 = vadd.f32 0.0, %v8371
        %v8373 = vpop.f32.mrf.mxu0
        %v8374 = vadd.f32 0.0, %v8373
        %8375 = vmatmul.bf16.gmra.mxu0 %v8309
        %v8376 = vpop.f32.mrf.mxu0
        %v8377 = vadd.f32 0.0, %v8376
        %v8378 = vpop.f32.mrf.mxu0
        %v8379 = vadd.f32 0.0, %v8378
        %8380 = vmatmul.bf16.gmra.mxu0 %v8312
        %v8381 = vpop.f32.mrf.mxu0
        %v8382 = vadd.f32 0.0, %v8381
        %v8383 = vpop.f32.mrf.mxu0
        %v8384 = vadd.f32 0.0, %v8383
        %8385 = vmatmul.bf16.gmra.mxu0 %v8315
        %v8386 = vpop.f32.mrf.mxu0
        %v8387 = vadd.f32 0.0, %v8386
        %v8388 = vpop.f32.mrf.mxu0
        %v8389 = vadd.f32 0.0, %v8388
        %8390 = vmatmul.bf16.gmra.mxu0 %v8318
        %v8391 = vpop.f32.mrf.mxu0
        %v8392 = vadd.f32 0.0, %v8391
        %v8393 = vpop.f32.mrf.mxu0
        %v8394 = vadd.f32 0.0, %v8393
        %8395 = vmatmul.bf16.gmra.mxu0 %v8321
        %v8396 = vpop.f32.mrf.mxu0
        %v8397 = vadd.f32 0.0, %v8396
        %v8398 = vpop.f32.mrf.mxu0
        %v8399 = vadd.f32 0.0, %v8398
        %8400 = vmatmul.bf16.gmra.mxu0 %v8324
        %v8401 = vpop.f32.mrf.mxu0
        %v8402 = vadd.f32 0.0, %v8401
        %v8403 = vpop.f32.mrf.mxu0
        %v8404 = vadd.f32 0.0, %v8403
        %8405 = vmatmul.bf16.gmra.mxu0 %v8327
        %v8406 = vpop.f32.mrf.mxu0
        %v8407 = vadd.f32 0.0, %v8406
        %v8408 = vpop.f32.mrf.mxu0
        %v8409 = vadd.f32 0.0, %v8408
        %8410 = vmatmul.bf16.gmra.mxu0 %v8330
        %v8411 = vpop.f32.mrf.mxu0
        %v8412 = vadd.f32 0.0, %v8411
        %v8413 = vpop.f32.mrf.mxu0
        %v8414 = vadd.f32 0.0, %v8413
        %8415 = vmatmul.bf16.gmra.mxu0 %v8333
        %v8416 = vpop.f32.mrf.mxu0
        %v8417 = vadd.f32 0.0, %v8416
        %v8418 = vpop.f32.mrf.mxu0
        %v8419 = vadd.f32 0.0, %v8418
        %8420 = vmatmul.bf16.gmra.mxu0 %v8336
        %v8421 = vpop.f32.mrf.mxu0
        %v8422 = vadd.f32 0.0, %v8421
        %v8423 = vpop.f32.mrf.mxu0
        %v8424 = vadd.f32 0.0, %v8423
        %8425 = vmatmul.bf16.gmra.mxu0 %v8339
        %v8426 = vpop.f32.mrf.mxu0
        %v8427 = vadd.f32 0.0, %v8426
        %v8428 = vpop.f32.mrf.mxu0
        %v8429 = vadd.f32 0.0, %v8428
        %8430 = vmatmul.bf16.gmra.mxu0 %v8342
        %v8431 = vpop.f32.mrf.mxu0
        %v8432 = vadd.f32 0.0, %v8431
        %v8433 = vpop.f32.mrf.mxu0
        %v8434 = vadd.f32 0.0, %v8433
        %8435 = vmatmul.bf16.gmra.mxu0 %v8345
        %v8436 = vpop.f32.mrf.mxu0
        %v8437 = vadd.f32 0.0, %v8436
        %v8438 = vpop.f32.mrf.mxu0
        %v8439 = vadd.f32 0.0, %v8438
        %8440 = vmatmul.bf16.gmra.mxu0 %v8348
        %v8441 = vpop.f32.mrf.mxu0
        %v8442 = vadd.f32 0.0, %v8441
        %v8443 = vpop.f32.mrf.mxu0
        %v8444 = vadd.f32 0.0, %v8443
        %8445 = vmatmul.bf16.gmra.mxu0 %v8351
        %v8446 = vpop.f32.mrf.mxu0
        %v8447 = vadd.f32 0.0, %v8446
        %v8448 = vpop.f32.mrf.mxu0
        %v8449 = vadd.f32 0.0, %v8448
        %8450 = vmatmul.bf16.gmra.mxu0 %v8354
        %v8451 = vpop.f32.mrf.mxu0
        %v8452 = vadd.f32 0.0, %v8451
        %v8453 = vpop.f32.mrf.mxu0
        %v8454 = vadd.f32 0.0, %v8453
        %8455 = vmatmul.bf16.gmra.mxu0 %v8357
        %v8456 = vpop.f32.mrf.mxu0
        %v8457 = vadd.f32 0.0, %v8456
        %v8458 = vpop.f32.mrf.mxu0
        %v8459 = vadd.f32 0.0, %v8458
        %8460 = vdwg.mxu0
        %v8461 = vadd.f32 %v8100, %v8372
        %v8462 = vadd.f32 %v8101, %v8374
        %v8463 = vadd.f32 %v8102, %v8377
        %v8464 = vadd.f32 %v8103, %v8379
        %v8465 = vadd.f32 %v8104, %v8382
        %v8466 = vadd.f32 %v8105, %v8384
        %v8467 = vadd.f32 %v8106, %v8387
        %v8468 = vadd.f32 %v8107, %v8389
        %v8469 = vadd.f32 %v8108, %v8392
        %v8470 = vadd.f32 %v8109, %v8394
        %v8471 = vadd.f32 %v8110, %v8397
        %v8472 = vadd.f32 %v8111, %v8399
        %v8473 = vadd.f32 %v8112, %v8402
        %v8474 = vadd.f32 %v8113, %v8404
        %v8475 = vadd.f32 %v8114, %v8407
        %v8476 = vadd.f32 %v8115, %v8409
        %v8477 = vadd.f32 %v8116, %v8412
        %v8478 = vadd.f32 %v8117, %v8414
        %v8479 = vadd.f32 %v8118, %v8417
        %v8480 = vadd.f32 %v8119, %v8419
        %v8481 = vadd.f32 %v8120, %v8422
        %v8482 = vadd.f32 %v8121, %v8424
        %v8483 = vadd.f32 %v8122, %v8427
        %v8484 = vadd.f32 %v8123, %v8429
        %v8485 = vadd.f32 %v8124, %v8432
        %v8486 = vadd.f32 %v8125, %v8434
        %v8487 = vadd.f32 %v8126, %v8437
        %v8488 = vadd.f32 %v8127, %v8439
        %v8489 = vadd.f32 %v8128, %v8442
        %v8490 = vadd.f32 %v8129, %v8444
        %v8491 = vadd.f32 %v8130, %v8447
        %v8492 = vadd.f32 %v8131, %v8449
        %v8493 = vadd.f32 %v8132, %v8452
        %v8494 = vadd.f32 %v8133, %v8454
        %v8495 = vadd.f32 %v8134, %v8457
        %v8496 = vadd.f32 %v8135, %v8459
        %v8497 = vld [vmem:[%s432 + $0xa0] sm:$0x7]
        %s8498 = scalar_lea.vmem %s3, 100
        %v8499 = vld [vmem:[%s8498] sm:$0xf]
        %v8501 = vunpack.c.l.b16 %v8497
        %v8502 = vpack.c.b16 %v8501, %v8501
        %v8504 = vshrl.u32 %v8249, 16
        %v8506 = vrot.slane %v8504, 2
        %v8507 = vshll.u32 %v8249, 16
        %v8509 = vrot.slane %v8507, 3
        %v8510 = vor.u32 %v8506, %v8509
        %v8512 = vshrl.u32 %v8250, 16
        %v8514 = vrot.slane %v8512, 2
        %v8515 = vshll.u32 %v8250, 16
        %v8517 = vrot.slane %v8515, 3
        %v8518 = vor.u32 %v8514, %v8517
        %v8519 = vsel %vm2591, %v8510, %v8518
        %v8521 = vshrl.u32 %v8251, 16
        %v8523 = vrot.slane %v8521, 2
        %v8524 = vshll.u32 %v8251, 16
        %v8526 = vrot.slane %v8524, 3
        %v8527 = vor.u32 %v8523, %v8526
        %v8528 = vsel %vm2591, %v8518, %v8527
        %v8530 = vshrl.u32 %v8252, 16
        %v8532 = vrot.slane %v8530, 2
        %v8533 = vshll.u32 %v8252, 16
        %v8535 = vrot.slane %v8533, 3
        %v8536 = vor.u32 %v8532, %v8535
        %v8537 = vsel %vm2591, %v8527, %v8536
        %v8539 = vshrl.u32 %v8253, 16
        %v8541 = vrot.slane %v8539, 2
        %v8542 = vshll.u32 %v8253, 16
        %v8544 = vrot.slane %v8542, 3
        %v8545 = vor.u32 %v8541, %v8544
        %v8546 = vsel %vm2591, %v8536, %v8545
        %v8548 = vshrl.u32 %v8254, 16
        %v8550 = vrot.slane %v8548, 2
        %v8551 = vshll.u32 %v8254, 16
        %v8553 = vrot.slane %v8551, 3
        %v8554 = vor.u32 %v8550, %v8553
        %v8555 = vsel %vm2591, %v8545, %v8554
        %v8557 = vshrl.u32 %v8255, 16
        %v8559 = vrot.slane %v8557, 2
        %v8560 = vshll.u32 %v8255, 16
        %v8562 = vrot.slane %v8560, 3
        %v8563 = vor.u32 %v8559, %v8562
        %v8564 = vsel %vm2591, %v8554, %v8563
        %v8566 = vshrl.u32 %v8256, 16
        %v8568 = vrot.slane %v8566, 2
        %v8569 = vshll.u32 %v8256, 16
        %v8571 = vrot.slane %v8569, 3
        %v8572 = vor.u32 %v8568, %v8571
        %v8573 = vsel %vm2591, %v8563, %v8572
        %v8575 = vshrl.u32 %v8257, 16
        %v8577 = vrot.slane %v8575, 2
        %v8578 = vshll.u32 %v8257, 16
        %v8580 = vrot.slane %v8578, 3
        %v8581 = vor.u32 %v8577, %v8580
        %v8582 = vsel %vm2591, %v8572, %v8581
        %v8584 = vshrl.u32 %v8258, 16
        %v8586 = vrot.slane %v8584, 2
        %v8587 = vshll.u32 %v8258, 16
        %v8589 = vrot.slane %v8587, 3
        %v8590 = vor.u32 %v8586, %v8589
        %v8591 = vsel %vm2591, %v8581, %v8590
        %v8593 = vshrl.u32 %v8259, 16
        %v8595 = vrot.slane %v8593, 2
        %v8596 = vshll.u32 %v8259, 16
        %v8598 = vrot.slane %v8596, 3
        %v8599 = vor.u32 %v8595, %v8598
        %v8600 = vsel %vm2591, %v8590, %v8599
        %v8602 = vshrl.u32 %v8260, 16
        %v8604 = vrot.slane %v8602, 2
        %v8605 = vshll.u32 %v8260, 16
        %v8607 = vrot.slane %v8605, 3
        %v8608 = vor.u32 %v8604, %v8607
        %v8609 = vsel %vm2591, %v8599, %v8608
        %v8611 = vshrl.u32 %v8261, 16
        %v8613 = vrot.slane %v8611, 2
        %v8614 = vshll.u32 %v8261, 16
        %v8616 = vrot.slane %v8614, 3
        %v8617 = vor.u32 %v8613, %v8616
        %v8618 = vsel %vm2591, %v8608, %v8617
        %v8620 = vshrl.u32 %v8262, 16
        %v8622 = vrot.slane %v8620, 2
        %v8623 = vshll.u32 %v8262, 16
        %v8625 = vrot.slane %v8623, 3
        %v8626 = vor.u32 %v8622, %v8625
        %v8627 = vsel %vm2591, %v8617, %v8626
        %v8629 = vshrl.u32 %v8263, 16
        %v8631 = vrot.slane %v8629, 2
        %v8632 = vshll.u32 %v8263, 16
        %v8634 = vrot.slane %v8632, 3
        %v8635 = vor.u32 %v8631, %v8634
        %v8636 = vsel %vm2591, %v8626, %v8635
        %v8638 = vshrl.u32 %v8264, 16
        %v8640 = vrot.slane %v8638, 2
        %v8641 = vshll.u32 %v8264, 16
        %v8643 = vrot.slane %v8641, 3
        %v8644 = vor.u32 %v8640, %v8643
        %v8645 = vsel %vm2591, %v8635, %v8644
        %v8647 = vshrl.u32 %v8265, 16
        %v8649 = vrot.slane %v8647, 2
        %v8650 = vshll.u32 %v8265, 16
        %v8652 = vrot.slane %v8650, 3
        %v8653 = vor.u32 %v8649, %v8652
        %v8654 = vsel %vm2591, %v8644, %v8653
        %v8656 = vshrl.u32 %v8266, 16
        %v8658 = vrot.slane %v8656, 2
        %v8659 = vshll.u32 %v8266, 16
        %v8661 = vrot.slane %v8659, 3
        %v8662 = vor.u32 %v8658, %v8661
        %v8663 = vsel %vm2591, %v8653, %v8662
        %v8665 = vshrl.u32 %v8502, 16
        %v8667 = vrot.slane %v8665, 2
        %v8668 = vshll.u32 %v8502, 16
        %v8670 = vrot.slane %v8668, 3
        %v8671 = vor.u32 %v8667, %v8670
        %v8672 = vsel %vm2591, %v8662, %v8671
        %v8674 = vsel %vm726, %v8519, 0
        %v8677 = vsel %vm726, %v8528, 0
        %v8680 = vsel %vm726, %v8537, 0
        %v8683 = vsel %vm726, %v8546, 0
        %v8686 = vsel %vm726, %v8555, 0
        %v8689 = vsel %vm726, %v8564, 0
        %v8692 = vsel %vm726, %v8573, 0
        %v8695 = vsel %vm726, %v8582, 0
        %v8698 = vsel %vm726, %v8591, 0
        %v8701 = vsel %vm726, %v8600, 0
        %v8704 = vsel %vm726, %v8609, 0
        %v8707 = vsel %vm726, %v8618, 0
        %v8710 = vsel %vm726, %v8627, 0
        %v8713 = vsel %vm726, %v8636, 0
        %v8716 = vsel %vm726, %v8645, 0
        %v8719 = vsel %vm726, %v8654, 0
        %v8722 = vsel %vm726, %v8663, 0
        %v8725 = vsel %vm726, %v8672, 0
        %v8728 = vsel %vm781, %v8499, 0
        %8730 = vmatpush.bf16.msra.mxu0 0
        %8731 = vmatpush.bf16.msra.mxu0 0
        %8732 = vmatpush.bf16.msra.mxu0 0
        %8733 = vmatpush.bf16.msra.mxu0 0
        %8734 = vmatpush.bf16.msra.mxu0 0
        %8735 = vmatpush.bf16.msra.mxu0 0
        %8736 = vmatpush.bf16.msra.mxu0 0
        %8737 = vmatpush.bf16.msra.mxu0 %v8728
        %8738 = vmatmul.bf16.gmra.mxu0 %v8674
        %v8739 = vpop.f32.mrf.mxu0
        %v8740 = vadd.f32 0.0, %v8739
        %v8741 = vpop.f32.mrf.mxu0
        %v8742 = vadd.f32 0.0, %v8741
        %8743 = vmatmul.bf16.gmra.mxu0 %v8677
        %v8744 = vpop.f32.mrf.mxu0
        %v8745 = vadd.f32 0.0, %v8744
        %v8746 = vpop.f32.mrf.mxu0
        %v8747 = vadd.f32 0.0, %v8746
        %8748 = vmatmul.bf16.gmra.mxu0 %v8680
        %v8749 = vpop.f32.mrf.mxu0
        %v8750 = vadd.f32 0.0, %v8749
        %v8751 = vpop.f32.mrf.mxu0
        %v8752 = vadd.f32 0.0, %v8751
        %8753 = vmatmul.bf16.gmra.mxu0 %v8683
        %v8754 = vpop.f32.mrf.mxu0
        %v8755 = vadd.f32 0.0, %v8754
        %v8756 = vpop.f32.mrf.mxu0
        %v8757 = vadd.f32 0.0, %v8756
        %8758 = vmatmul.bf16.gmra.mxu0 %v8686
        %v8759 = vpop.f32.mrf.mxu0
        %v8760 = vadd.f32 0.0, %v8759
        %v8761 = vpop.f32.mrf.mxu0
        %v8762 = vadd.f32 0.0, %v8761
        %8763 = vmatmul.bf16.gmra.mxu0 %v8689
        %v8764 = vpop.f32.mrf.mxu0
        %v8765 = vadd.f32 0.0, %v8764
        %v8766 = vpop.f32.mrf.mxu0
        %v8767 = vadd.f32 0.0, %v8766
        %8768 = vmatmul.bf16.gmra.mxu0 %v8692
        %v8769 = vpop.f32.mrf.mxu0
        %v8770 = vadd.f32 0.0, %v8769
        %v8771 = vpop.f32.mrf.mxu0
        %v8772 = vadd.f32 0.0, %v8771
        %8773 = vmatmul.bf16.gmra.mxu0 %v8695
        %v8774 = vpop.f32.mrf.mxu0
        %v8775 = vadd.f32 0.0, %v8774
        %v8776 = vpop.f32.mrf.mxu0
        %v8777 = vadd.f32 0.0, %v8776
        %8778 = vmatmul.bf16.gmra.mxu0 %v8698
        %v8779 = vpop.f32.mrf.mxu0
        %v8780 = vadd.f32 0.0, %v8779
        %v8781 = vpop.f32.mrf.mxu0
        %v8782 = vadd.f32 0.0, %v8781
        %8783 = vmatmul.bf16.gmra.mxu0 %v8701
        %v8784 = vpop.f32.mrf.mxu0
        %v8785 = vadd.f32 0.0, %v8784
        %v8786 = vpop.f32.mrf.mxu0
        %v8787 = vadd.f32 0.0, %v8786
        %8788 = vmatmul.bf16.gmra.mxu0 %v8704
        %v8789 = vpop.f32.mrf.mxu0
        %v8790 = vadd.f32 0.0, %v8789
        %v8791 = vpop.f32.mrf.mxu0
        %v8792 = vadd.f32 0.0, %v8791
        %8793 = vmatmul.bf16.gmra.mxu0 %v8707
        %v8794 = vpop.f32.mrf.mxu0
        %v8795 = vadd.f32 0.0, %v8794
        %v8796 = vpop.f32.mrf.mxu0
        %v8797 = vadd.f32 0.0, %v8796
        %8798 = vmatmul.bf16.gmra.mxu0 %v8710
        %v8799 = vpop.f32.mrf.mxu0
        %v8800 = vadd.f32 0.0, %v8799
        %v8801 = vpop.f32.mrf.mxu0
        %v8802 = vadd.f32 0.0, %v8801
        %8803 = vmatmul.bf16.gmra.mxu0 %v8713
        %v8804 = vpop.f32.mrf.mxu0
        %v8805 = vadd.f32 0.0, %v8804
        %v8806 = vpop.f32.mrf.mxu0
        %v8807 = vadd.f32 0.0, %v8806
        %8808 = vmatmul.bf16.gmra.mxu0 %v8716
        %v8809 = vpop.f32.mrf.mxu0
        %v8810 = vadd.f32 0.0, %v8809
        %v8811 = vpop.f32.mrf.mxu0
        %v8812 = vadd.f32 0.0, %v8811
        %8813 = vmatmul.bf16.gmra.mxu0 %v8719
        %v8814 = vpop.f32.mrf.mxu0
        %v8815 = vadd.f32 0.0, %v8814
        %v8816 = vpop.f32.mrf.mxu0
        %v8817 = vadd.f32 0.0, %v8816
        %8818 = vmatmul.bf16.gmra.mxu0 %v8722
        %v8819 = vpop.f32.mrf.mxu0
        %v8820 = vadd.f32 0.0, %v8819
        %v8821 = vpop.f32.mrf.mxu0
        %v8822 = vadd.f32 0.0, %v8821
        %8823 = vmatmul.bf16.gmra.mxu0 %v8725
        %v8824 = vpop.f32.mrf.mxu0
        %v8825 = vadd.f32 0.0, %v8824
        %v8826 = vpop.f32.mrf.mxu0
        %v8827 = vadd.f32 0.0, %v8826
        %8828 = vdwg.mxu0
        %v8829 = vadd.f32 %v8461, %v8740
        %v8830 = vadd.f32 %v8462, %v8742
        %v8831 = vadd.f32 %v8463, %v8745
        %v8832 = vadd.f32 %v8464, %v8747
        %v8833 = vadd.f32 %v8465, %v8750
        %v8834 = vadd.f32 %v8466, %v8752
        %v8835 = vadd.f32 %v8467, %v8755
        %v8836 = vadd.f32 %v8468, %v8757
        %v8837 = vadd.f32 %v8469, %v8760
        %v8838 = vadd.f32 %v8470, %v8762
        %v8839 = vadd.f32 %v8471, %v8765
        %v8840 = vadd.f32 %v8472, %v8767
        %v8841 = vadd.f32 %v8473, %v8770
        %v8842 = vadd.f32 %v8474, %v8772
        %v8843 = vadd.f32 %v8475, %v8775
        %v8844 = vadd.f32 %v8476, %v8777
        %v8845 = vadd.f32 %v8477, %v8780
        %v8846 = vadd.f32 %v8478, %v8782
        %v8847 = vadd.f32 %v8479, %v8785
        %v8848 = vadd.f32 %v8480, %v8787
        %v8849 = vadd.f32 %v8481, %v8790
        %v8850 = vadd.f32 %v8482, %v8792
        %v8851 = vadd.f32 %v8483, %v8795
        %v8852 = vadd.f32 %v8484, %v8797
        %v8853 = vadd.f32 %v8485, %v8800
        %v8854 = vadd.f32 %v8486, %v8802
        %v8855 = vadd.f32 %v8487, %v8805
        %v8856 = vadd.f32 %v8488, %v8807
        %v8857 = vadd.f32 %v8489, %v8810
        %v8858 = vadd.f32 %v8490, %v8812
        %v8859 = vadd.f32 %v8491, %v8815
        %v8860 = vadd.f32 %v8492, %v8817
        %v8861 = vadd.f32 %v8493, %v8820
        %v8862 = vadd.f32 %v8494, %v8822
        %v8863 = vadd.f32 %v8495, %v8825
        %v8864 = vadd.f32 %v8496, %v8827
        %v8865 = vld [vmem:[%s432 + $0x10] sm:$0x8]
        %s8866 = scalar_lea.vmem %s3, 104
        %v8867 = vld [vmem:[%s8866] sm:$0xf]
        %v8869 = vunpack.c.l.b16 %v8865
        %v8870 = vpack.c.b16 %v8213, %v8869
        %v8871 = vrot.slane %v8870, 3
        %v8872 = vrot.slane %v8250, 3
        %v8873 = vsel %vm2960, %v8871, %v8872
        %v8874 = vrot.slane %v8251, 3
        %v8875 = vsel %vm2960, %v8872, %v8874
        %v8876 = vrot.slane %v8252, 3
        %v8877 = vsel %vm2960, %v8874, %v8876
        %v8878 = vrot.slane %v8253, 3
        %v8879 = vsel %vm2960, %v8876, %v8878
        %v8880 = vrot.slane %v8254, 3
        %v8881 = vsel %vm2960, %v8878, %v8880
        %v8882 = vrot.slane %v8255, 3
        %v8883 = vsel %vm2960, %v8880, %v8882
        %v8884 = vrot.slane %v8256, 3
        %v8885 = vsel %vm2960, %v8882, %v8884
        %v8886 = vrot.slane %v8257, 3
        %v8887 = vsel %vm2960, %v8884, %v8886
        %v8888 = vrot.slane %v8258, 3
        %v8889 = vsel %vm2960, %v8886, %v8888
        %v8890 = vrot.slane %v8259, 3
        %v8891 = vsel %vm2960, %v8888, %v8890
        %v8892 = vrot.slane %v8260, 3
        %v8893 = vsel %vm2960, %v8890, %v8892
        %v8894 = vrot.slane %v8261, 3
        %v8895 = vsel %vm2960, %v8892, %v8894
        %v8896 = vrot.slane %v8262, 3
        %v8897 = vsel %vm2960, %v8894, %v8896
        %v8898 = vrot.slane %v8263, 3
        %v8899 = vsel %vm2960, %v8896, %v8898
        %v8900 = vrot.slane %v8264, 3
        %v8901 = vsel %vm2960, %v8898, %v8900
        %v8902 = vrot.slane %v8265, 3
        %v8903 = vsel %vm2960, %v8900, %v8902
        %v8904 = vrot.slane %v8266, 3
        %v8905 = vsel %vm2960, %v8902, %v8904
        %v8906 = vrot.slane %v8502, 3
        %v8907 = vsel %vm2960, %v8904, %v8906
        %v8909 = vsel %vm726, %v8873, 0
        %v8912 = vsel %vm726, %v8875, 0
        %v8915 = vsel %vm726, %v8877, 0
        %v8918 = vsel %vm726, %v8879, 0
        %v8921 = vsel %vm726, %v8881, 0
        %v8924 = vsel %vm726, %v8883, 0
        %v8927 = vsel %vm726, %v8885, 0
        %v8930 = vsel %vm726, %v8887, 0
        %v8933 = vsel %vm726, %v8889, 0
        %v8936 = vsel %vm726, %v8891, 0
        %v8939 = vsel %vm726, %v8893, 0
        %v8942 = vsel %vm726, %v8895, 0
        %v8945 = vsel %vm726, %v8897, 0
        %v8948 = vsel %vm726, %v8899, 0
        %v8951 = vsel %vm726, %v8901, 0
        %v8954 = vsel %vm726, %v8903, 0
        %v8957 = vsel %vm726, %v8905, 0
        %v8960 = vsel %vm726, %v8907, 0
        %v8963 = vsel %vm781, %v8867, 0
        %8965 = vmatpush.bf16.msra.mxu0 0
        %8966 = vmatpush.bf16.msra.mxu0 0
        %8967 = vmatpush.bf16.msra.mxu0 0
        %8968 = vmatpush.bf16.msra.mxu0 0
        %8969 = vmatpush.bf16.msra.mxu0 0
        %8970 = vmatpush.bf16.msra.mxu0 0
        %8971 = vmatpush.bf16.msra.mxu0 0
        %8972 = vmatpush.bf16.msra.mxu0 %v8963
        %8973 = vmatmul.bf16.gmra.mxu0 %v8909
        %v8974 = vpop.f32.mrf.mxu0
        %v8975 = vadd.f32 0.0, %v8974
        %v8976 = vpop.f32.mrf.mxu0
        %v8977 = vadd.f32 0.0, %v8976
        %8978 = vmatmul.bf16.gmra.mxu0 %v8912
        %v8979 = vpop.f32.mrf.mxu0
        %v8980 = vadd.f32 0.0, %v8979
        %v8981 = vpop.f32.mrf.mxu0
        %v8982 = vadd.f32 0.0, %v8981
        %8983 = vmatmul.bf16.gmra.mxu0 %v8915
        %v8984 = vpop.f32.mrf.mxu0
        %v8985 = vadd.f32 0.0, %v8984
        %v8986 = vpop.f32.mrf.mxu0
        %v8987 = vadd.f32 0.0, %v8986
        %8988 = vmatmul.bf16.gmra.mxu0 %v8918
        %v8989 = vpop.f32.mrf.mxu0
        %v8990 = vadd.f32 0.0, %v8989
        %v8991 = vpop.f32.mrf.mxu0
        %v8992 = vadd.f32 0.0, %v8991
        %8993 = vmatmul.bf16.gmra.mxu0 %v8921
        %v8994 = vpop.f32.mrf.mxu0
        %v8995 = vadd.f32 0.0, %v8994
        %v8996 = vpop.f32.mrf.mxu0
        %v8997 = vadd.f32 0.0, %v8996
        %8998 = vmatmul.bf16.gmra.mxu0 %v8924
        %v8999 = vpop.f32.mrf.mxu0
        %v9000 = vadd.f32 0.0, %v8999
        %v9001 = vpop.f32.mrf.mxu0
        %v9002 = vadd.f32 0.0, %v9001
        %9003 = vmatmul.bf16.gmra.mxu0 %v8927
        %v9004 = vpop.f32.mrf.mxu0
        %v9005 = vadd.f32 0.0, %v9004
        %v9006 = vpop.f32.mrf.mxu0
        %v9007 = vadd.f32 0.0, %v9006
        %9008 = vmatmul.bf16.gmra.mxu0 %v8930
        %v9009 = vpop.f32.mrf.mxu0
        %v9010 = vadd.f32 0.0, %v9009
        %v9011 = vpop.f32.mrf.mxu0
        %v9012 = vadd.f32 0.0, %v9011
        %9013 = vmatmul.bf16.gmra.mxu0 %v8933
        %v9014 = vpop.f32.mrf.mxu0
        %v9015 = vadd.f32 0.0, %v9014
        %v9016 = vpop.f32.mrf.mxu0
        %v9017 = vadd.f32 0.0, %v9016
        %9018 = vmatmul.bf16.gmra.mxu0 %v8936
        %v9019 = vpop.f32.mrf.mxu0
        %v9020 = vadd.f32 0.0, %v9019
        %v9021 = vpop.f32.mrf.mxu0
        %v9022 = vadd.f32 0.0, %v9021
        %9023 = vmatmul.bf16.gmra.mxu0 %v8939
        %v9024 = vpop.f32.mrf.mxu0
        %v9025 = vadd.f32 0.0, %v9024
        %v9026 = vpop.f32.mrf.mxu0
        %v9027 = vadd.f32 0.0, %v9026
        %9028 = vmatmul.bf16.gmra.mxu0 %v8942
        %v9029 = vpop.f32.mrf.mxu0
        %v9030 = vadd.f32 0.0, %v9029
        %v9031 = vpop.f32.mrf.mxu0
        %v9032 = vadd.f32 0.0, %v9031
        %9033 = vmatmul.bf16.gmra.mxu0 %v8945
        %v9034 = vpop.f32.mrf.mxu0
        %v9035 = vadd.f32 0.0, %v9034
        %v9036 = vpop.f32.mrf.mxu0
        %v9037 = vadd.f32 0.0, %v9036
        %9038 = vmatmul.bf16.gmra.mxu0 %v8948
        %v9039 = vpop.f32.mrf.mxu0
        %v9040 = vadd.f32 0.0, %v9039
        %v9041 = vpop.f32.mrf.mxu0
        %v9042 = vadd.f32 0.0, %v9041
        %9043 = vmatmul.bf16.gmra.mxu0 %v8951
        %v9044 = vpop.f32.mrf.mxu0
        %v9045 = vadd.f32 0.0, %v9044
        %v9046 = vpop.f32.mrf.mxu0
        %v9047 = vadd.f32 0.0, %v9046
        %9048 = vmatmul.bf16.gmra.mxu0 %v8954
        %v9049 = vpop.f32.mrf.mxu0
        %v9050 = vadd.f32 0.0, %v9049
        %v9051 = vpop.f32.mrf.mxu0
        %v9052 = vadd.f32 0.0, %v9051
        %9053 = vmatmul.bf16.gmra.mxu0 %v8957
        %v9054 = vpop.f32.mrf.mxu0
        %v9055 = vadd.f32 0.0, %v9054
        %v9056 = vpop.f32.mrf.mxu0
        %v9057 = vadd.f32 0.0, %v9056
        %9058 = vmatmul.bf16.gmra.mxu0 %v8960
        %v9059 = vpop.f32.mrf.mxu0
        %v9060 = vadd.f32 0.0, %v9059
        %v9061 = vpop.f32.mrf.mxu0
        %v9062 = vadd.f32 0.0, %v9061
        %9063 = vdwg.mxu0
        %v9064 = vadd.f32 %v8829, %v8975
        %v9065 = vadd.f32 %v8830, %v8977
        %v9066 = vadd.f32 %v8831, %v8980
        %v9067 = vadd.f32 %v8832, %v8982
        %v9068 = vadd.f32 %v8833, %v8985
        %v9069 = vadd.f32 %v8834, %v8987
        %v9070 = vadd.f32 %v8835, %v8990
        %v9071 = vadd.f32 %v8836, %v8992
        %v9072 = vadd.f32 %v8837, %v8995
        %v9073 = vadd.f32 %v8838, %v8997
        %v9074 = vadd.f32 %v8839, %v9000
        %v9075 = vadd.f32 %v8840, %v9002
        %v9076 = vadd.f32 %v8841, %v9005
        %v9077 = vadd.f32 %v8842, %v9007
        %v9078 = vadd.f32 %v8843, %v9010
        %v9079 = vadd.f32 %v8844, %v9012
        %v9080 = vadd.f32 %v8845, %v9015
        %v9081 = vadd.f32 %v8846, %v9017
        %v9082 = vadd.f32 %v8847, %v9020
        %v9083 = vadd.f32 %v8848, %v9022
        %v9084 = vadd.f32 %v8849, %v9025
        %v9085 = vadd.f32 %v8850, %v9027
        %v9086 = vadd.f32 %v8851, %v9030
        %v9087 = vadd.f32 %v8852, %v9032
        %v9088 = vadd.f32 %v8853, %v9035
        %v9089 = vadd.f32 %v8854, %v9037
        %v9090 = vadd.f32 %v8855, %v9040
        %v9091 = vadd.f32 %v8856, %v9042
        %v9092 = vadd.f32 %v8857, %v9045
        %v9093 = vadd.f32 %v8858, %v9047
        %v9094 = vadd.f32 %v8859, %v9050
        %v9095 = vadd.f32 %v8860, %v9052
        %v9096 = vadd.f32 %v8861, %v9055
        %v9097 = vadd.f32 %v8862, %v9057
        %v9098 = vadd.f32 %v8863, %v9060
        %v9099 = vadd.f32 %v8864, %v9062
        %v9100 = vld [vmem:[%s4] sm:$0x1]
        %v9102 = vperm.slane %v9100, 0
        %v9104 = vadd.f32 %v9064, %v9102
        %v9105 = vadd.f32 %v9065, %v9102
        %v9106 = vadd.f32 %v9066, %v9102
        %v9107 = vadd.f32 %v9067, %v9102
        %v9108 = vadd.f32 %v9068, %v9102
        %v9109 = vadd.f32 %v9069, %v9102
        %v9110 = vadd.f32 %v9070, %v9102
        %v9111 = vadd.f32 %v9071, %v9102
        %v9112 = vadd.f32 %v9072, %v9102
        %v9113 = vadd.f32 %v9073, %v9102
        %v9114 = vadd.f32 %v9074, %v9102
        %v9115 = vadd.f32 %v9075, %v9102
        %v9116 = vadd.f32 %v9076, %v9102
        %v9117 = vadd.f32 %v9077, %v9102
        %v9118 = vadd.f32 %v9078, %v9102
        %v9119 = vadd.f32 %v9079, %v9102
        %v9120 = vadd.f32 %v9080, %v9102
        %v9121 = vadd.f32 %v9081, %v9102
        %v9122 = vadd.f32 %v9082, %v9102
        %v9123 = vadd.f32 %v9083, %v9102
        %v9124 = vadd.f32 %v9084, %v9102
        %v9125 = vadd.f32 %v9085, %v9102
        %v9126 = vadd.f32 %v9086, %v9102
        %v9127 = vadd.f32 %v9087, %v9102
        %v9128 = vadd.f32 %v9088, %v9102
        %v9129 = vadd.f32 %v9089, %v9102
        %v9130 = vadd.f32 %v9090, %v9102
        %v9131 = vadd.f32 %v9091, %v9102
        %v9132 = vadd.f32 %v9092, %v9102
        %v9133 = vadd.f32 %v9093, %v9102
        %v9134 = vadd.f32 %v9094, %v9102
        %v9135 = vadd.f32 %v9095, %v9102
        %v9136 = vadd.f32 %v9096, %v9102
        %v9137 = vadd.f32 %v9097, %v9102
        %v9138 = vadd.f32 %v9098, %v9102
        %v9139 = vadd.f32 %v9099, %v9102
        %v9140 = vpack.c.bf16 %v9104, %v9104
        %v9141 = vpack.c.bf16 %v9105, %v9105
        %v9142 = vpack.c.bf16 %v9106, %v9106
        %v9143 = vpack.c.bf16 %v9107, %v9107
        %v9144 = vpack.c.bf16 %v9108, %v9108
        %v9145 = vpack.c.bf16 %v9109, %v9109
        %v9146 = vpack.c.bf16 %v9110, %v9110
        %v9147 = vpack.c.bf16 %v9111, %v9111
        %v9148 = vpack.c.bf16 %v9112, %v9112
        %v9149 = vpack.c.bf16 %v9113, %v9113
        %v9150 = vpack.c.bf16 %v9114, %v9114
        %v9151 = vpack.c.bf16 %v9115, %v9115
        %v9152 = vpack.c.bf16 %v9116, %v9116
        %v9153 = vpack.c.bf16 %v9117, %v9117
        %v9154 = vpack.c.bf16 %v9118, %v9118
        %v9155 = vpack.c.bf16 %v9119, %v9119
        %v9156 = vpack.c.bf16 %v9120, %v9120
        %v9157 = vpack.c.bf16 %v9121, %v9121
        %v9158 = vpack.c.bf16 %v9122, %v9122
        %v9159 = vpack.c.bf16 %v9123, %v9123
        %v9160 = vpack.c.bf16 %v9124, %v9124
        %v9161 = vpack.c.bf16 %v9125, %v9125
        %v9162 = vpack.c.bf16 %v9126, %v9126
        %v9163 = vpack.c.bf16 %v9127, %v9127
        %v9164 = vpack.c.bf16 %v9128, %v9128
        %v9165 = vpack.c.bf16 %v9129, %v9129
        %v9166 = vpack.c.bf16 %v9130, %v9130
        %v9167 = vpack.c.bf16 %v9131, %v9131
        %v9168 = vpack.c.bf16 %v9132, %v9132
        %v9169 = vpack.c.bf16 %v9133, %v9133
        %v9170 = vpack.c.bf16 %v9134, %v9134
        %v9171 = vpack.c.bf16 %v9135, %v9135
        %v9172 = vpack.c.bf16 %v9136, %v9136
        %v9173 = vpack.c.bf16 %v9137, %v9137
        %v9174 = vpack.c.bf16 %v9138, %v9138
        %v9175 = vpack.c.bf16 %v9139, %v9139
        %vm9176 = vcmask 257024
        %9177 = vst.msk [vmem:[%s442] sm:$0xf] %vm9176, %v9140
        %9178 = vst.msk [vmem:[%s442 + $0x4] sm:$0xf] %vm9176, %v9141
        %9179 = vst.msk [vmem:[%s442 + $0x8] sm:$0xf] %vm9176, %v9142
        %9180 = vst.msk [vmem:[%s442 + $0xc] sm:$0xf] %vm9176, %v9143
        %9181 = vst.msk [vmem:[%s442 + $0x10] sm:$0xf] %vm9176, %v9144
        %9182 = vst.msk [vmem:[%s442 + $0x14] sm:$0xf] %vm9176, %v9145
        %9183 = vst.msk [vmem:[%s442 + $0x18] sm:$0xf] %vm9176, %v9146
        %9184 = vst.msk [vmem:[%s442 + $0x1c] sm:$0xf] %vm9176, %v9147
        %9185 = vst.msk [vmem:[%s442 + $0x20] sm:$0xf] %vm9176, %v9148
        %9186 = vst.msk [vmem:[%s442 + $0x24] sm:$0xf] %vm9176, %v9149
        %9187 = vst.msk [vmem:[%s442 + $0x28] sm:$0xf] %vm9176, %v9150
        %9188 = vst.msk [vmem:[%s442 + $0x2c] sm:$0xf] %vm9176, %v9151
        %9189 = vst.msk [vmem:[%s442 + $0x30] sm:$0xf] %vm9176, %v9152
        %9190 = vst.msk [vmem:[%s442 + $0x34] sm:$0xf] %vm9176, %v9153
        %9191 = vst.msk [vmem:[%s442 + $0x38] sm:$0xf] %vm9176, %v9154
        %9192 = vst.msk [vmem:[%s442 + $0x3c] sm:$0xf] %vm9176, %v9155
        %9193 = vst.msk [vmem:[%s442 + $0x40] sm:$0xf] %vm9176, %v9156
        %9194 = vst.msk [vmem:[%s442 + $0x44] sm:$0xf] %vm9176, %v9157
        %9195 = vst.msk [vmem:[%s442 + $0x48] sm:$0xf] %vm9176, %v9158
        %9196 = vst.msk [vmem:[%s442 + $0x4c] sm:$0xf] %vm9176, %v9159
        %9197 = vst.msk [vmem:[%s442 + $0x50] sm:$0xf] %vm9176, %v9160
        %9198 = vst.msk [vmem:[%s442 + $0x54] sm:$0xf] %vm9176, %v9161
        %9199 = vst.msk [vmem:[%s442 + $0x58] sm:$0xf] %vm9176, %v9162
        %9200 = vst.msk [vmem:[%s442 + $0x5c] sm:$0xf] %vm9176, %v9163
        %9201 = vst.msk [vmem:[%s442 + $0x60] sm:$0xf] %vm9176, %v9164
        %9202 = vst.msk [vmem:[%s442 + $0x64] sm:$0xf] %vm9176, %v9165
        %9203 = vst.msk [vmem:[%s442 + $0x68] sm:$0xf] %vm9176, %v9166
        %9204 = vst.msk [vmem:[%s442 + $0x6c] sm:$0xf] %vm9176, %v9167
        %9205 = vst.msk [vmem:[%s442 + $0x70] sm:$0xf] %vm9176, %v9168
        %9206 = vst.msk [vmem:[%s442 + $0x74] sm:$0xf] %vm9176, %v9169
        %9207 = vst.msk [vmem:[%s442 + $0x78] sm:$0xf] %vm9176, %v9170
        %9208 = vst.msk [vmem:[%s442 + $0x7c] sm:$0xf] %vm9176, %v9171
        %9209 = vst.msk [vmem:[%s442 + $0x80] sm:$0xf] %vm9176, %v9172
        %9210 = vst.msk [vmem:[%s442 + $0x84] sm:$0xf] %vm9176, %v9173
        %9211 = vst.msk [vmem:[%s442 + $0x88] sm:$0xf] %vm9176, %v9174
        %9212 = vst.msk [vmem:[%s442 + $0x8c] sm:$0xf] %vm9176, %v9175
        %p9213 = scmp.eq.s32.totalorder %s31, 0
        // Predicated region
        $region45: #{tpu_custom_call.1} parent=43 // pred_check
          %p9214 = pneg %p9213
        $region46: #{tpu_custom_call.1} parent=43 // pred_check_branch
          %9216 = sbr.rel (%p9214) target = $region48
        $region47: #{tpu_custom_call.1} parent=43 // pred_region
          %vm9217 = vcmask 253952
          %9218 = vst.msk [vmem:[%s396] sm:$0x1] %vm9217, 0.0
          %9219 = vst.msk [vmem:[%s402] sm:$0x1] %vm9217, 0.0
        $region48: #{tpu_custom_call.1} parent=43 // pred_fallthru
          _
        %v9220 = vld [vmem:[%s5] sm:$0xff]
        %v9221 = vld [vmem:[%s5 + $0x8] sm:$0xff]
        %v9222 = vld [vmem:[%s5 + $0x10] sm:$0xff]
        %v9223 = vld [vmem:[%s5 + $0x18] sm:$0xff]
        %v9224 = vld [vmem:[%s5 + $0x20] sm:$0xff]
        %v9225 = vld [vmem:[%s5 + $0x28] sm:$0xff]
        %v9226 = vld [vmem:[%s5 + $0x30] sm:$0xff]
        %v9227 = vld [vmem:[%s5 + $0x38] sm:$0xff]
        %v9228 = vld [vmem:[%s5 + $0x40] sm:$0xff]
        %v9229 = vld [vmem:[%s5 + $0x48] sm:$0xff]
        %v9230 = vld [vmem:[%s5 + $0x50] sm:$0xff]
        %v9231 = vld [vmem:[%s5 + $0x58] sm:$0xff]
        %v9232 = vld [vmem:[%s5 + $0x60] sm:$0xff]
        %v9233 = vld [vmem:[%s5 + $0x68] sm:$0xff]
        %v9234 = vld [vmem:[%s5 + $0x70] sm:$0xff]
        %v9235 = vld [vmem:[%s5 + $0x78] sm:$0xff]
        %v9236 = vld [vmem:[%s5 + $0x80] sm:$0xff]
        %v9237 = vld [vmem:[%s5 + $0x88] sm:$0xff]
        %v9238 = vld [vmem:[%s5 + $0x90] sm:$0xff]
        %v9239 = vld [vmem:[%s5 + $0x98] sm:$0xff]
        %v9240 = vld [vmem:[%s5 + $0xa0] sm:$0xff]
        %v9241 = vld [vmem:[%s5 + $0xa8] sm:$0xff]
        %v9242 = vld [vmem:[%s5 + $0xb0] sm:$0xff]
        %v9243 = vld [vmem:[%s5 + $0xb8] sm:$0xff]
        %v9244 = vld [vmem:[%s5 + $0xc0] sm:$0xff]
        %v9245 = vld [vmem:[%s5 + $0xc8] sm:$0xff]
        %v9246 = vld [vmem:[%s5 + $0xd0] sm:$0xff]
        %v9247 = vld [vmem:[%s5 + $0xd8] sm:$0xff]
        %v9248 = vld [vmem:[%s5 + $0xe0] sm:$0xff]
        %v9249 = vld [vmem:[%s5 + $0xe8] sm:$0xff]
        %v9250 = vld [vmem:[%s5 + $0xf0] sm:$0xff]
        %v9251 = vld [vmem:[%s5 + $0xf8] sm:$0xff]
        %v9252 = vld [vmem:[%s5 + $0x100] sm:$0xff]
        %v9253 = vld [vmem:[%s5 + $0x108] sm:$0xff]
        %v9254 = vld [vmem:[%s5 + $0x110] sm:$0xff]
        %v9255 = vld [vmem:[%s5 + $0x118] sm:$0xff]
        %9257 = vset.pattern.permute.xlu0 0
        %9258 = vperm.xlu0 %9257, %v9220
        %v9259 = vpop.permute.xlu0 %9258
        %9262 = vset.pattern.permute.xlu0 0
        %9263 = vperm.xlu0 %9262, %v9221
        %v9264 = vpop.permute.xlu0 %9263
        %9267 = vset.pattern.permute.xlu0 0
        %9268 = vperm.xlu0 %9267, %v9222
        %v9269 = vpop.permute.xlu0 %9268
        %9272 = vset.pattern.permute.xlu0 0
        %9273 = vperm.xlu0 %9272, %v9223
        %v9274 = vpop.permute.xlu0 %9273
        %9277 = vset.pattern.permute.xlu0 0
        %9278 = vperm.xlu0 %9277, %v9224
        %v9279 = vpop.permute.xlu0 %9278
        %9282 = vset.pattern.permute.xlu0 0
        %9283 = vperm.xlu0 %9282, %v9225
        %v9284 = vpop.permute.xlu0 %9283
        %9287 = vset.pattern.permute.xlu0 0
        %9288 = vperm.xlu0 %9287, %v9226
        %v9289 = vpop.permute.xlu0 %9288
        %9292 = vset.pattern.permute.xlu0 0
        %9293 = vperm.xlu0 %9292, %v9227
        %v9294 = vpop.permute.xlu0 %9293
        %9297 = vset.pattern.permute.xlu0 0
        %9298 = vperm.xlu0 %9297, %v9228
        %v9299 = vpop.permute.xlu0 %9298
        %9302 = vset.pattern.permute.xlu0 0
        %9303 = vperm.xlu0 %9302, %v9229
        %v9304 = vpop.permute.xlu0 %9303
        %9307 = vset.pattern.permute.xlu0 0
        %9308 = vperm.xlu0 %9307, %v9230
        %v9309 = vpop.permute.xlu0 %9308
        %9312 = vset.pattern.permute.xlu0 0
        %9313 = vperm.xlu0 %9312, %v9231
        %v9314 = vpop.permute.xlu0 %9313
        %9317 = vset.pattern.permute.xlu0 0
        %9318 = vperm.xlu0 %9317, %v9232
        %v9319 = vpop.permute.xlu0 %9318
        %9322 = vset.pattern.permute.xlu0 0
        %9323 = vperm.xlu0 %9322, %v9233
        %v9324 = vpop.permute.xlu0 %9323
        %9327 = vset.pattern.permute.xlu0 0
        %9328 = vperm.xlu0 %9327, %v9234
        %v9329 = vpop.permute.xlu0 %9328
        %9332 = vset.pattern.permute.xlu0 0
        %9333 = vperm.xlu0 %9332, %v9235
        %v9334 = vpop.permute.xlu0 %9333
        %9337 = vset.pattern.permute.xlu0 0
        %9338 = vperm.xlu0 %9337, %v9236
        %v9339 = vpop.permute.xlu0 %9338
        %9342 = vset.pattern.permute.xlu0 0
        %9343 = vperm.xlu0 %9342, %v9237
        %v9344 = vpop.permute.xlu0 %9343
        %9347 = vset.pattern.permute.xlu0 0
        %9348 = vperm.xlu0 %9347, %v9238
        %v9349 = vpop.permute.xlu0 %9348
        %9352 = vset.pattern.permute.xlu0 0
        %9353 = vperm.xlu0 %9352, %v9239
        %v9354 = vpop.permute.xlu0 %9353
        %9357 = vset.pattern.permute.xlu0 0
        %9358 = vperm.xlu0 %9357, %v9240
        %v9359 = vpop.permute.xlu0 %9358
        %9362 = vset.pattern.permute.xlu0 0
        %9363 = vperm.xlu0 %9362, %v9241
        %v9364 = vpop.permute.xlu0 %9363
        %9367 = vset.pattern.permute.xlu0 0
        %9368 = vperm.xlu0 %9367, %v9242
        %v9369 = vpop.permute.xlu0 %9368
        %9372 = vset.pattern.permute.xlu0 0
        %9373 = vperm.xlu0 %9372, %v9243
        %v9374 = vpop.permute.xlu0 %9373
        %9377 = vset.pattern.permute.xlu0 0
        %9378 = vperm.xlu0 %9377, %v9244
        %v9379 = vpop.permute.xlu0 %9378
        %9382 = vset.pattern.permute.xlu0 0
        %9383 = vperm.xlu0 %9382, %v9245
        %v9384 = vpop.permute.xlu0 %9383
        %9387 = vset.pattern.permute.xlu0 0
        %9388 = vperm.xlu0 %9387, %v9246
        %v9389 = vpop.permute.xlu0 %9388
        %9392 = vset.pattern.permute.xlu0 0
        %9393 = vperm.xlu0 %9392, %v9247
        %v9394 = vpop.permute.xlu0 %9393
        %9397 = vset.pattern.permute.xlu0 0
        %9398 = vperm.xlu0 %9397, %v9248
        %v9399 = vpop.permute.xlu0 %9398
        %9402 = vset.pattern.permute.xlu0 0
        %9403 = vperm.xlu0 %9402, %v9249
        %v9404 = vpop.permute.xlu0 %9403
        %9407 = vset.pattern.permute.xlu0 0
        %9408 = vperm.xlu0 %9407, %v9250
        %v9409 = vpop.permute.xlu0 %9408
        %9412 = vset.pattern.permute.xlu0 0
        %9413 = vperm.xlu0 %9412, %v9251
        %v9414 = vpop.permute.xlu0 %9413
        %9417 = vset.pattern.permute.xlu0 0
        %9418 = vperm.xlu0 %9417, %v9252
        %v9419 = vpop.permute.xlu0 %9418
        %9422 = vset.pattern.permute.xlu0 0
        %9423 = vperm.xlu0 %9422, %v9253
        %v9424 = vpop.permute.xlu0 %9423
        %9427 = vset.pattern.permute.xlu0 0
        %9428 = vperm.xlu0 %9427, %v9254
        %v9429 = vpop.permute.xlu0 %9428
        %9432 = vset.pattern.permute.xlu0 0
        %9433 = vperm.xlu0 %9432, %v9255
        %v9434 = vpop.permute.xlu0 %9433
        %v9436 = vmul.f32 %v9104, %v9259
        %v9437 = vmul.f32 %v9105, %v9264
        %v9438 = vmul.f32 %v9106, %v9269
        %v9439 = vmul.f32 %v9107, %v9274
        %v9440 = vmul.f32 %v9108, %v9279
        %v9441 = vmul.f32 %v9109, %v9284
        %v9442 = vmul.f32 %v9110, %v9289
        %v9443 = vmul.f32 %v9111, %v9294
        %v9444 = vmul.f32 %v9112, %v9299
        %v9445 = vmul.f32 %v9113, %v9304
        %v9446 = vmul.f32 %v9114, %v9309
        %v9447 = vmul.f32 %v9115, %v9314
        %v9448 = vmul.f32 %v9116, %v9319
        %v9449 = vmul.f32 %v9117, %v9324
        %v9450 = vmul.f32 %v9118, %v9329
        %v9451 = vmul.f32 %v9119, %v9334
        %v9452 = vmul.f32 %v9120, %v9339
        %v9453 = vmul.f32 %v9121, %v9344
        %v9454 = vmul.f32 %v9122, %v9349
        %v9455 = vmul.f32 %v9123, %v9354
        %v9456 = vmul.f32 %v9124, %v9359
        %v9457 = vmul.f32 %v9125, %v9364
        %v9458 = vmul.f32 %v9126, %v9369
        %v9459 = vmul.f32 %v9127, %v9374
        %v9460 = vmul.f32 %v9128, %v9379
        %v9461 = vmul.f32 %v9129, %v9384
        %v9462 = vmul.f32 %v9130, %v9389
        %v9463 = vmul.f32 %v9131, %v9394
        %v9464 = vmul.f32 %v9132, %v9399
        %v9465 = vmul.f32 %v9133, %v9404
        %v9466 = vmul.f32 %v9134, %v9409
        %v9467 = vmul.f32 %v9135, %v9414
        %v9468 = vmul.f32 %v9136, %v9419
        %v9469 = vmul.f32 %v9137, %v9424
        %v9470 = vmul.f32 %v9138, %v9429
        %v9471 = vmul.f32 %v9139, %v9434
        %v9472 = vld [vmem:[%s396] sm:$0x1]
        %vm9473 = vcmask 261120
        %v9474 = vsel %vm9473, %v9436, 0.0
        %v9475 = vsel %vm9473, %v9437, 0.0
        %v9476 = vadd.f32 %v9474, %v9475
        %v9477 = vsel %vm9473, %v9438, 0.0
        %v9478 = vadd.f32 %v9476, %v9477
        %v9479 = vsel %vm9473, %v9439, 0.0
        %v9480 = vadd.f32 %v9478, %v9479
        %v9481 = vsel %vm9473, %v9440, 0.0
        %v9482 = vadd.f32 %v9480, %v9481
        %v9483 = vsel %vm9473, %v9441, 0.0
        %v9484 = vadd.f32 %v9482, %v9483
        %v9485 = vsel %vm9473, %v9442, 0.0
        %v9486 = vadd.f32 %v9484, %v9485
        %v9487 = vsel %vm9473, %v9443, 0.0
        %v9488 = vadd.f32 %v9486, %v9487
        %v9489 = vsel %vm9473, %v9444, 0.0
        %v9490 = vadd.f32 %v9488, %v9489
        %v9491 = vsel %vm9473, %v9445, 0.0
        %v9492 = vadd.f32 %v9490, %v9491
        %v9493 = vsel %vm9473, %v9446, 0.0
        %v9494 = vadd.f32 %v9492, %v9493
        %v9495 = vsel %vm9473, %v9447, 0.0
        %v9496 = vadd.f32 %v9494, %v9495
        %v9497 = vsel %vm9473, %v9448, 0.0
        %v9498 = vadd.f32 %v9496, %v9497
        %v9499 = vsel %vm9473, %v9449, 0.0
        %v9500 = vadd.f32 %v9498, %v9499
        %v9501 = vsel %vm9473, %v9450, 0.0
        %v9502 = vadd.f32 %v9500, %v9501
        %v9503 = vsel %vm9473, %v9451, 0.0
        %v9504 = vadd.f32 %v9502, %v9503
        %v9505 = vsel %vm9473, %v9452, 0.0
        %v9506 = vadd.f32 %v9504, %v9505
        %v9507 = vsel %vm9473, %v9453, 0.0
        %v9508 = vadd.f32 %v9506, %v9507
        %v9509 = vsel %vm9473, %v9454, 0.0
        %v9510 = vadd.f32 %v9508, %v9509
        %v9511 = vsel %vm9473, %v9455, 0.0
        %v9512 = vadd.f32 %v9510, %v9511
        %v9513 = vsel %vm9473, %v9456, 0.0
        %v9514 = vadd.f32 %v9512, %v9513
        %v9515 = vsel %vm9473, %v9457, 0.0
        %v9516 = vadd.f32 %v9514, %v9515
        %v9517 = vsel %vm9473, %v9458, 0.0
        %v9518 = vadd.f32 %v9516, %v9517
        %v9519 = vsel %vm9473, %v9459, 0.0
        %v9520 = vadd.f32 %v9518, %v9519
        %v9521 = vsel %vm9473, %v9460, 0.0
        %v9522 = vadd.f32 %v9520, %v9521
        %v9523 = vsel %vm9473, %v9461, 0.0
        %v9524 = vadd.f32 %v9522, %v9523
        %v9525 = vsel %vm9473, %v9462, 0.0
        %v9526 = vadd.f32 %v9524, %v9525
        %v9527 = vsel %vm9473, %v9463, 0.0
        %v9528 = vadd.f32 %v9526, %v9527
        %v9529 = vsel %vm9473, %v9464, 0.0
        %v9530 = vadd.f32 %v9528, %v9529
        %v9531 = vsel %vm9473, %v9465, 0.0
        %v9532 = vadd.f32 %v9530, %v9531
        %v9533 = vsel %vm9473, %v9466, 0.0
        %v9534 = vadd.f32 %v9532, %v9533
        %v9535 = vsel %vm9473, %v9467, 0.0
        %v9536 = vadd.f32 %v9534, %v9535
        %v9537 = vsel %vm9473, %v9468, 0.0
        %v9538 = vadd.f32 %v9536, %v9537
        %v9539 = vsel %vm9473, %v9469, 0.0
        %v9540 = vadd.f32 %v9538, %v9539
        %v9541 = vsel %vm9473, %v9470, 0.0
        %v9542 = vadd.f32 %v9540, %v9541
        %v9543 = vsel %vm9473, %v9471, 0.0
        %v9544 = vadd.f32 %v9542, %v9543
        %v9545 = vrot.slane %v9544, 4
        %v9546 = vadd.f32 %v9544, %v9545
        %v9547 = vrot.slane %v9546, 2
        %v9548 = vadd.f32 %v9546, %v9547
        %v9549 = vrot.slane %v9548, 1
        %v9550 = vadd.f32 %v9548, %v9549
        %v9551 = vadd.f32 %v9472, %v9550
        %vm9552 = vcmask 253952
        %9553 = vst.msk [vmem:[%s396] sm:$0x1] %vm9552, %v9551
        %v9554 = vld [vmem:[%s402] sm:$0x1]
        %v9555 = vmul.f32 %v9436, %v9104
        %v9556 = vmul.f32 %v9437, %v9105
        %v9557 = vmul.f32 %v9438, %v9106
        %v9558 = vmul.f32 %v9439, %v9107
        %v9559 = vmul.f32 %v9440, %v9108
        %v9560 = vmul.f32 %v9441, %v9109
        %v9561 = vmul.f32 %v9442, %v9110
        %v9562 = vmul.f32 %v9443, %v9111
        %v9563 = vmul.f32 %v9444, %v9112
        %v9564 = vmul.f32 %v9445, %v9113
        %v9565 = vmul.f32 %v9446, %v9114
        %v9566 = vmul.f32 %v9447, %v9115
        %v9567 = vmul.f32 %v9448, %v9116
        %v9568 = vmul.f32 %v9449, %v9117
        %v9569 = vmul.f32 %v9450, %v9118
        %v9570 = vmul.f32 %v9451, %v9119
        %v9571 = vmul.f32 %v9452, %v9120
        %v9572 = vmul.f32 %v9453, %v9121
        %v9573 = vmul.f32 %v9454, %v9122
        %v9574 = vmul.f32 %v9455, %v9123
        %v9575 = vmul.f32 %v9456, %v9124
        %v9576 = vmul.f32 %v9457, %v9125
        %v9577 = vmul.f32 %v9458, %v9126
        %v9578 = vmul.f32 %v9459, %v9127
        %v9579 = vmul.f32 %v9460, %v9128
        %v9580 = vmul.f32 %v9461, %v9129
        %v9581 = vmul.f32 %v9462, %v9130
        %v9582 = vmul.f32 %v9463, %v9131
        %v9583 = vmul.f32 %v9464, %v9132
        %v9584 = vmul.f32 %v9465, %v9133
        %v9585 = vmul.f32 %v9466, %v9134
        %v9586 = vmul.f32 %v9467, %v9135
        %v9587 = vmul.f32 %v9468, %v9136
        %v9588 = vmul.f32 %v9469, %v9137
        %v9589 = vmul.f32 %v9470, %v9138
        %v9590 = vmul.f32 %v9471, %v9139
        %v9591 = vsel %vm9473, %v9555, 0.0
        %v9592 = vsel %vm9473, %v9556, 0.0
        %v9593 = vadd.f32 %v9591, %v9592
        %v9594 = vsel %vm9473, %v9557, 0.0
        %v9595 = vadd.f32 %v9593, %v9594
        %v9596 = vsel %vm9473, %v9558, 0.0
        %v9597 = vadd.f32 %v9595, %v9596
        %v9598 = vsel %vm9473, %v9559, 0.0
        %v9599 = vadd.f32 %v9597, %v9598
        %v9600 = vsel %vm9473, %v9560, 0.0
        %v9601 = vadd.f32 %v9599, %v9600
        %v9602 = vsel %vm9473, %v9561, 0.0
        %v9603 = vadd.f32 %v9601, %v9602
        %v9604 = vsel %vm9473, %v9562, 0.0
        %v9605 = vadd.f32 %v9603, %v9604
        %v9606 = vsel %vm9473, %v9563, 0.0
        %v9607 = vadd.f32 %v9605, %v9606
        %v9608 = vsel %vm9473, %v9564, 0.0
        %v9609 = vadd.f32 %v9607, %v9608
        %v9610 = vsel %vm9473, %v9565, 0.0
        %v9611 = vadd.f32 %v9609, %v9610
        %v9612 = vsel %vm9473, %v9566, 0.0
        %v9613 = vadd.f32 %v9611, %v9612
        %v9614 = vsel %vm9473, %v9567, 0.0
        %v9615 = vadd.f32 %v9613, %v9614
        %v9616 = vsel %vm9473, %v9568, 0.0
        %v9617 = vadd.f32 %v9615, %v9616
        %v9618 = vsel %vm9473, %v9569, 0.0
        %v9619 = vadd.f32 %v9617, %v9618
        %v9620 = vsel %vm9473, %v9570, 0.0
        %v9621 = vadd.f32 %v9619, %v9620
        %v9622 = vsel %vm9473, %v9571, 0.0
        %v9623 = vadd.f32 %v9621, %v9622
        %v9624 = vsel %vm9473, %v9572, 0.0
        %v9625 = vadd.f32 %v9623, %v9624
        %v9626 = vsel %vm9473, %v9573, 0.0
        %v9627 = vadd.f32 %v9625, %v9626
        %v9628 = vsel %vm9473, %v9574, 0.0
        %v9629 = vadd.f32 %v9627, %v9628
        %v9630 = vsel %vm9473, %v9575, 0.0
        %v9631 = vadd.f32 %v9629, %v9630
        %v9632 = vsel %vm9473, %v9576, 0.0
        %v9633 = vadd.f32 %v9631, %v9632
        %v9634 = vsel %vm9473, %v9577, 0.0
        %v9635 = vadd.f32 %v9633, %v9634
        %v9636 = vsel %vm9473, %v9578, 0.0
        %v9637 = vadd.f32 %v9635, %v9636
        %v9638 = vsel %vm9473, %v9579, 0.0
        %v9639 = vadd.f32 %v9637, %v9638
        %v9640 = vsel %vm9473, %v9580, 0.0
        %v9641 = vadd.f32 %v9639, %v9640
        %v9642 = vsel %vm9473, %v9581, 0.0
        %v9643 = vadd.f32 %v9641, %v9642
        %v9644 = vsel %vm9473, %v9582, 0.0
        %v9645 = vadd.f32 %v9643, %v9644
        %v9646 = vsel %vm9473, %v9583, 0.0
        %v9647 = vadd.f32 %v9645, %v9646
        %v9648 = vsel %vm9473, %v9584, 0.0
        %v9649 = vadd.f32 %v9647, %v9648
        %v9650 = vsel %vm9473, %v9585, 0.0
        %v9651 = vadd.f32 %v9649, %v9650
        %v9652 = vsel %vm9473, %v9586, 0.0
        %v9653 = vadd.f32 %v9651, %v9652
        %v9654 = vsel %vm9473, %v9587, 0.0
        %v9655 = vadd.f32 %v9653, %v9654
        %v9656 = vsel %vm9473, %v9588, 0.0
        %v9657 = vadd.f32 %v9655, %v9656
        %v9658 = vsel %vm9473, %v9589, 0.0
        %v9659 = vadd.f32 %v9657, %v9658
        %v9660 = vsel %vm9473, %v9590, 0.0
        %v9661 = vadd.f32 %v9659, %v9660
        %v9662 = vrot.slane %v9661, 4
        %v9663 = vadd.f32 %v9661, %v9662
        %v9664 = vrot.slane %v9663, 2
        %v9665 = vadd.f32 %v9663, %v9664
        %v9666 = vrot.slane %v9665, 1
        %v9667 = vadd.f32 %v9665, %v9666
        %v9668 = vadd.f32 %v9554, %v9667
        %9669 = vst.msk [vmem:[%s402] sm:$0x1] %vm9552, %v9668
        %p9670 = scmp.lt.s32.totalorder %s30, 1
        %s9671 = scalar_select %p9670, %s30, 1
        %p9672 = scmp.lt.s32.totalorder %s31, 15
        %s9673 = scalar_select %p9672, %s31, 15
        %s9674 = smul.addr %s9673, 36
        %s9675 = smul.addr %s9671, 576
        %s9676 = sadd.s32 %s9674, %s9675
        %s9677 = smul.addr %s9676, 4
        %s9678 = scalar_lea.vmem %s6, %s9677
        %s9679 = sand.u32 %s225, 1
        %s9680 = scalar_lea.sflag [#allocation3], %s9679
        %s9681 = sand.u32 %s225, 1
        %s9682 = scalar_lea.vmem [#allocation2], %s9681
        %s9683 = sand.u32 %s251, 1
        %s9684 = scalar_lea.sflag [#allocation5], %s9683
        %s9685 = sand.u32 %s251, 1
        %s9686 = scalar_lea.vmem [#allocation4], %s9685
        // Predicated region
        $region49: #{tpu_custom_call.1} parent=43 // pred_check
          %p9687 = pneg %p209
        $region50: #{tpu_custom_call.1} parent=43 // pred_check_branch
          %9689 = sbr.rel (%p9687) target = $region52
        $region51: #{tpu_custom_call.1} parent=43 // pred_region
          _
        $region52: #{tpu_custom_call.1} parent=43 // pred_fallthru
          _
        // Predicated region
        $region53: #{tpu_custom_call.1} parent=43 // pred_check
          %p9690 = pneg %p235
        $region54: #{tpu_custom_call.1} parent=43 // pred_check_branch
          %9692 = sbr.rel (%p9690) target = $region56
        $region55: #{tpu_custom_call.1} parent=43 // pred_region
          %9694 = vsyncadd %s9680, 0
          %s9695 = scalar_lea.hbm %s7, %s30
          %s9697 = sshll.u32 %s9682, 4
          %s9698 = int_to_ptr.vmem [resolvable:$true] %s9697
          %s9699 = sshll.u32 %s9695, 4
          %s9700 = int_to_ptr.hbm [resolvable:$true] %s9699
          %9702 = dma.vmem_to_hbm [thread:$0]  %s9698, 16, %s9700, %s9680
        $region56: #{tpu_custom_call.1} parent=43 // pred_fallthru
          _
        // Predicated region
        $region57: #{tpu_custom_call.1} parent=43 // pred_check
          %p9703 = pneg %p261
        $region58: #{tpu_custom_call.1} parent=43 // pred_check_branch
          %9705 = sbr.rel (%p9703) target = $region60
        $region59: #{tpu_custom_call.1} parent=43 // pred_region
          %9707 = vsyncadd %s9684, 0
          %s9708 = scalar_lea.hbm %s8, %s30
          %s9710 = sshll.u32 %s9686, 4
          %s9711 = int_to_ptr.vmem [resolvable:$true] %s9710
          %s9712 = sshll.u32 %s9708, 4
          %s9713 = int_to_ptr.hbm [resolvable:$true] %s9712
          %9715 = dma.vmem_to_hbm [thread:$0]  %s9711, 16, %s9713, %s9684
        $region60: #{tpu_custom_call.1} parent=43 // pred_fallthru
          _
      $region44: #{tpu_custom_call.1} parent=5 // pred_fallthru
        _
      %p9716 = scmp.le.s32.totalorder 2, %s21
      // Predicated region
      $region61: #{tpu_custom_call.1} parent=5 // pred_check
        %p9717 = pneg %p9716
      $region62: #{tpu_custom_call.1} parent=5 // pred_check_branch
        %9719 = sbr.rel (%p9717) target = $region64
      $region63: #{tpu_custom_call.1} parent=5 // pred_region
        %s9720 = ssub.s32 %s21, 2
        // Predicated region
        $region65: #{tpu_custom_call.1} parent=63 // pred_check
          %p9721 = pneg %p215
        $region66: #{tpu_custom_call.1} parent=63 // pred_check_branch
          %9723 = sbr.rel (%p9721) target = $region68
        $region67: #{tpu_custom_call.1} parent=63 // pred_region
          %p9724 = scmp.lt.s32.totalorder %s32, 1
          %s9725 = scalar_select %p9724, %s32, 1
          %p9726 = scmp.lt.s32.totalorder %s33, 15
          %s9727 = scalar_select %p9726, %s33, 15
          %s9728 = smul.addr %s9727, 36
          %s9729 = smul.addr %s9725, 576
          %s9730 = sadd.s32 %s9728, %s9729
          %s9731 = smul.addr %s9730, 4
          %s9732 = scalar_lea.vmem %s6, %s9731
        $region68: #{tpu_custom_call.1} parent=63 // pred_fallthru
          _
        // Predicated region
        $region69: #{tpu_custom_call.1} parent=63 // pred_check
          %p9733 = pneg %p241
        $region70: #{tpu_custom_call.1} parent=63 // pred_check_branch
          %9735 = sbr.rel (%p9733) target = $region72
        $region71: #{tpu_custom_call.1} parent=63 // pred_region
          %s9736 = sand.u32 %s226, 1
          %s9737 = scalar_lea.sflag [#allocation3], %s9736
          %s9738 = sand.u32 %s226, 1
          %s9739 = scalar_lea.vmem [#allocation2], %s9738
          %9741 = dma.done %s9737, 16
        $region72: #{tpu_custom_call.1} parent=63 // pred_fallthru
          _
        // Predicated region
        $region73: #{tpu_custom_call.1} parent=63 // pred_check
          %p9742 = pneg %p267
        $region74: #{tpu_custom_call.1} parent=63 // pred_check_branch
          %9744 = sbr.rel (%p9742) target = $region76
        $region75: #{tpu_custom_call.1} parent=63 // pred_region
          %s9745 = sand.u32 %s252, 1
          %s9746 = scalar_lea.sflag [#allocation5], %s9745
          %s9747 = sand.u32 %s252, 1
          %s9748 = scalar_lea.vmem [#allocation4], %s9747
          %9750 = dma.done %s9746, 16
        $region76: #{tpu_custom_call.1} parent=63 // pred_fallthru
          _
      $region64: #{tpu_custom_call.1} parent=5 // pred_fallthru
        _
    $region6: #{tpu_custom_call.1} parent=1 // loop_footer
      %s25 = sadd.s32 1, %s21
    $region7: #{tpu_custom_call.1} parent=1 // loop_footer_branch
      %20 = sbr.rel target = $region3
    $region8: #{tpu_custom_call.1} parent=1 // loop_exit
      _
    %9751 = vsyncpa [#allocation3], 1
    %s9752 = scalar_lea.sflag [#allocation3], 1
    %9753 = vsyncpa %s9752, 1
    %9754 = vsyncpa [#allocation5], 1
    %s9755 = scalar_lea.sflag [#allocation5], 1
    %9756 = vsyncpa %s9755, 1

</llo_original>
